<compile_context>
chip_gen: v6e
topology: v6e:2x2x1
jax: 0.10.0
libtpu: 0.0.40
codegen_flags: <defaults>
</compile_context>

<pallas_src>
import functools

import jax
import jax.numpy as jnp
from jax.experimental import pallas as pl
from jax.experimental.pallas import tpu as pltpu


def _round_up(x, m):
    return ((x + m - 1) // m) * m


# ---------------------------------------------------------------------------
# Conv stage: transposed im2col (XLA glue) + fused matmul+bias+ReLU Pallas kernel
# ---------------------------------------------------------------------------
def _conv_mm_kernel(w_ref, b_ref, p_ref, o_ref):
    # w: (O, K), b: (O, 1), p: (K, block_m)  ->  o: (O, block_m)   (lane-dense output)
    y = jnp.dot(w_ref[...], p_ref[...], preferred_element_type=jnp.float32)
    o_ref[...] = jnp.maximum(y + b_ref[...], 0.0).astype(o_ref.dtype)


def _im2col_T(x_cbhw, ksize, stride):
    """Transposed im2col: (C, B, H, W) -> (ksize*ksize*C, B*OH*OW).

    Row ordering is (kh, kw, c)-major (matches the weight reshape in
    conv2d_relu_pallas).  Channels stay vectorized -> only ksize*ksize XLA slices.
    """
    C, B, H, W = x_cbhw.shape
    OH = (H - ksize) // stride + 1
    OW = (W - ksize) // stride + 1
    taps = []
    for kh in range(ksize):
        for kw in range(ksize):
            taps.append(
                x_cbhw[:, :, kh:kh + stride * OH:stride, kw:kw + stride * OW:stride]
                .reshape(C, B * OH * OW))
    patches_T = jnp.stack(taps, axis=0).reshape(ksize * ksize * C, B * OH * OW)
    return patches_T, (B, OH, OW)


def conv2d_relu_pallas(x_cbhw, w_oihw, b, stride=2):
    """relu(conv2d(x, w, stride=2, valid)); x and output in channel-major (C,B,H,W)."""
    O, I, KH, KW = w_oihw.shape
    # (O, I, KH, KW) -> (O, (kh, kw, cin)) to match the im2col row ordering (tiny op).
    w_mat = jnp.transpose(w_oihw, (0, 2, 3, 1)).reshape(O, KH * KW * I)
    patches_T, (B, OH, OW) = _im2col_T(x_cbhw, KH, stride)
    K, M = patches_T.shape

    # Lane-split the output columns: >= 2 "parallel" blocks for the large convs so both
    # v7x TensorCores are used (and DMA/compute overlap); small convs run as one block.
    if M <= 1024:
        block_m = M
    else:
        block_m = min(8192, _round_up(-(-M // 2), 128))
    grid = (pl.cdiv(M, block_m),)

    out = pl.pallas_call(
        _conv_mm_kernel,
        out_shape=jax.ShapeDtypeStruct((O, M), jnp.float32),
        grid=grid,
        in_specs=[
            pl.BlockSpec((O, K), lambda i: (0, 0)),        # weights: VMEM-resident
            pl.BlockSpec((O, 1), lambda i: (0, 0)),        # bias
            pl.BlockSpec((K, block_m), lambda i: (0, i)),  # patches (lane-dense)
        ],
        out_specs=pl.BlockSpec((O, block_m), lambda i: (0, i)),
        compiler_params=pltpu.CompilerParams(dimension_semantics=("parallel",)),
    )(w_mat, b.reshape(O, 1), patches_T)
    return out.reshape(O, B, OH, OW)


# ---------------------------------------------------------------------------
# Fused FC stack: fc1+ReLU -> fc2+ReLU -> merged (policy|value) head -> softmax
# ---------------------------------------------------------------------------
def _fc_stack_kernel(x_ref, w1_ref, b1_ref, w2_ref, b2_ref, w3_ref, b3_ref, o_ref,
                     *, n_actions):
    h = jnp.dot(x_ref[...], w1_ref[...], preferred_element_type=jnp.float32) + b1_ref[...]
    h = jnp.maximum(h, 0.0)
    h = jnp.dot(h, w2_ref[...], preferred_element_type=jnp.float32) + b2_ref[...]
    h = jnp.maximum(h, 0.0)
    z = jnp.dot(h, w3_ref[...], preferred_element_type=jnp.float32) + b3_ref[...]
    logits = z[:, :n_actions]
    m = jnp.max(logits, axis=-1, keepdims=True)
    e = jnp.exp(logits - m)
    policy = e / jnp.sum(e, axis=-1, keepdims=True)
    o_ref[:, :n_actions] = policy.astype(o_ref.dtype)
    o_ref[:, n_actions:] = z[:, n_actions:].astype(o_ref.dtype)


def fc_heads_pallas(x, w1, b1, w2, b2, wp, bp, wv, bv):
    """One kernel for the whole MLP + both heads.  Returns (policy, value)."""
    B, D = x.shape
    H1 = w1.shape[1]
    H2 = w2.shape[1]
    A = wp.shape[1]
    n_out = A + 1
    w3 = jnp.concatenate([wp, wv], axis=1)   # (H2, A+1): single head matmul
    b3 = jnp.concatenate([bp, bv], axis=0)   # (A+1,)

    out = pl.pallas_call(
        functools.partial(_fc_stack_kernel, n_actions=A),
        out_shape=jax.ShapeDtypeStruct((B, n_out), jnp.float32),
        grid=(1,),
        in_specs=[
            pl.BlockSpec((B, D), lambda i: (0, 0)),
            pl.BlockSpec((D, H1), lambda i: (0, 0)),
            pl.BlockSpec((1, H1), lambda i: (0, 0)),
            pl.BlockSpec((H1, H2), lambda i: (0, 0)),
            pl.BlockSpec((1, H2), lambda i: (0, 0)),
            pl.BlockSpec((H2, n_out), lambda i: (0, 0)),
            pl.BlockSpec((1, n_out), lambda i: (0, 0)),
        ],
        out_specs=pl.BlockSpec((B, n_out), lambda i: (0, 0)),
        compiler_params=pltpu.CompilerParams(dimension_semantics=("arbitrary",)),
    )(x, w1, b1.reshape(1, H1), w2, b2.reshape(1, H2), w3, b3.reshape(1, n_out))
    return out[:, :A], out[:, A:]


# ---------------------------------------------------------------------------
# Full forward pass (matches two_heads_net.forward)
# ---------------------------------------------------------------------------
def two_heads_forward(params, x_nchw):
    B, C, H, W = x_nchw.shape
    assert C == 1
    # NCHW with Cin == 1 -> channel-major (C, B, H, W); this reshape is free for C==1.
    x = x_nchw.reshape(1, B, H, W)
    x = conv2d_relu_pallas(x, params["conv1_w"], params["conv1_b"])   # (8, B, 103, 78)
    x = conv2d_relu_pallas(x, params["conv2_w"], params["conv2_b"])   # (8, B, 50, 37)
    x = conv2d_relu_pallas(x, params["conv3_w"], params["conv3_b"])   # (8, B, 23, 17)
    # torch's x1.view(-1, 3128) flattens NCHW (C, H, W)-major per batch element.
    x_flat = jnp.transpose(x, (1, 0, 2, 3)).reshape(B, -1)            # (B, 3128), ~25 KB
    policy, value = fc_heads_pallas(
        x_flat,
        params["fc1_w"], params["fc1_b"],
        params["fc2_w"], params["fc2_b"],
        params["fc3p_w"], params["fc3p_b"],
        params["fc3v_w"], params["fc3v_b"])
    return policy, value


def init_params(key, action_dims):
    keys = jax.random.split(key, 14)

    def u(k, shape, fan_in):
        bound = 1.0 / jnp.sqrt(jnp.float32(fan_in))
        return jax.random.uniform(k, shape, jnp.float32, -bound, bound)

    return {
        "conv1_w": u(keys[0], (8, 1, 5, 5), 1 * 25),
        "conv1_b": u(keys[1], (8,), 1 * 25),
        "conv2_w": u(keys[2], (8, 8, 5, 5), 8 * 25),
        "conv2_b": u(keys[3], (8,), 8 * 25),
        "conv3_w": u(keys[4], (8, 8, 5, 5), 8 * 25),
        "conv3_b": u(keys[5], (8,), 8 * 25),
        # fc weights stored as (in, out) == torch weight.T
        "fc1_w": u(keys[6], (3128, 256), 3128),
        "fc1_b": u(keys[7], (256,), 3128),
        "fc2_w": u(keys[8], (256, 256), 256),
        "fc2_b": u(keys[9], (256,), 256),
        "fc3p_w": u(keys[10], (256, action_dims), 256),
        "fc3p_b": u(keys[11], (action_dims,), 256),
        "fc3v_w": u(keys[12], (256, 1), 256),
        "fc3v_b": u(keys[13], (1,), 256),
    }


if __name__ == "__main__":
    key = jax.random.PRNGKey(0)
    pkey, xkey = jax.random.split(key)
    action_dims = 6
    params = init_params(pkey, action_dims)
    # Batch kept small (2); spatial 210x160 is forced by the module's hard-coded
    # flatten size 3128 (= 8 * 23 * 17 after three stride-2 5x5 convs).
    x = jax.random.uniform(xkey, (2, 1, 210, 160), dtype=jnp.float32)

    policy, value = jax.jit(two_heads_forward)(params, x)
    jax.block_until_ready((policy, value))

    assert policy.shape == (2, action_dims)
    assert value.shape == (2, 1)
    assert bool(jnp.allclose(jnp.sum(policy, axis=1), 1.0, atol=1e-5))
    print("KERNEL_OK")
</pallas_src>

<mosaic_0001>
module attributes {stable_mosaic.version = 11 : i64} {
  func.func @_conv_mm_kernel(%arg0: i32, %arg1: memref<8x25xf32, #tpu.memory_space<vmem>>, %arg2: memref<8x1xf32, #tpu.memory_space<vmem>>, %arg3: memref<25x8064xf32, #tpu.memory_space<vmem>>, %arg4: memref<8x8064xf32, #tpu.memory_space<vmem>>) attributes {dimension_semantics = [#tpu.dimension_semantics<parallel>], iteration_bounds = array<i64: 2>, scalar_prefetch = 0 : i64, scratch_operands = 0 : i64, tpu.core_type = #tpu.core_type<tc>, window_params = [{pipeline_mode = #tpu.pipeline_mode<synchronous>, transform_indices = @transform_0, window_bounds = array<i64: 8, 25>}, {pipeline_mode = #tpu.pipeline_mode<synchronous>, transform_indices = @transform_1, window_bounds = array<i64: 8, 1>}, {transform_indices = @transform_2, window_bounds = array<i64: 25, 8064>}, {transform_indices = @transform_3, window_bounds = array<i64: 8, 8064>}]} {
    %c0 = arith.constant 0 : index
    %c0_0 = arith.constant 0 : index
    %0 = vector.load %arg1[%c0, %c0_0] : memref<8x25xf32, #tpu.memory_space<vmem>>, vector<8x25xf32>
    %c0_1 = arith.constant 0 : index
    %c0_2 = arith.constant 0 : index
    %1 = vector.load %arg3[%c0_1, %c0_2] : memref<25x8064xf32, #tpu.memory_space<vmem>>, vector<25x8064xf32>
    %cst = arith.constant dense<0.000000e+00> : vector<8x8064xf32>
    %2 = tpu.matmul %0, %1, %cst {dimension_numbers = #tpu.dot_dimension_numbers<[1], [0], [0], [1], [0, 0, 1, 1], [], []>} : vector<8x25xf32>, vector<25x8064xf32>, vector<8x8064xf32> -> vector<8x8064xf32>
    %c0_3 = arith.constant 0 : index
    %c0_4 = arith.constant 0 : index
    %3 = vector.load %arg2[%c0_3, %c0_4] : memref<8x1xf32, #tpu.memory_space<vmem>>, vector<8x1xf32>
    %4 = vector.broadcast %3 : vector<8x1xf32> to vector<8x8064xf32>
    %5 = arith.addf %2, %4 : vector<8x8064xf32>
    %cst_5 = arith.constant 0.000000e+00 : f32
    %6 = vector.broadcast %cst_5 : f32 to vector<8x8064xf32>
    %7 = arith.maximumf %5, %6 : vector<8x8064xf32>
    %c0_6 = arith.constant 0 : index
    %c0_7 = arith.constant 0 : index
    %8 = vector.load %arg4[%c0_6, %c0_7] : memref<8x8064xf32, #tpu.memory_space<vmem>>, vector<8x8064xf32>
    tpu.vector_store %arg4[%c0_6, %c0_7], %7 {strides = array<i32>} : memref<8x8064xf32, #tpu.memory_space<vmem>>, vector<8x8064xf32>,
    return
  }
  func.func @transform_0(%arg0: i32) -> (i32, i32) {
    %c0_i32 = arith.constant 0 : i32
    %c0_i32_0 = arith.constant 0 : i32
    %c0_i32_1 = arith.constant 0 : i32
    return %c0_i32, %c0_i32_0 : i32, i32
  }
  func.func @transform_1(%arg0: i32) -> (i32, i32) {
    %c0_i32 = arith.constant 0 : i32
    %c0_i32_0 = arith.constant 0 : i32
    %c0_i32_1 = arith.constant 0 : i32
    return %c0_i32, %c0_i32_0 : i32, i32
  }
  func.func @transform_2(%arg0: i32) -> (i32, i32) {
    %c0_i32 = arith.constant 0 : i32
    %c0_i32_0 = arith.constant 0 : i32
    return %c0_i32, %arg0 : i32, i32
  }
  func.func @transform_3(%arg0: i32) -> (i32, i32) {
    %c0_i32 = arith.constant 0 : i32
    %c0_i32_0 = arith.constant 0 : i32
    return %c0_i32, %arg0 : i32, i32
  }
}

module attributes {stable_mosaic.version = 11 : i64} {
  func.func @_conv_mm_kernel(%arg0: i32, %arg1: memref<8x200xf32, #tpu.memory_space<vmem>>, %arg2: memref<8x1xf32, #tpu.memory_space<vmem>>, %arg3: memref<200x1920xf32, #tpu.memory_space<vmem>>, %arg4: memref<8x1920xf32, #tpu.memory_space<vmem>>) attributes {dimension_semantics = [#tpu.dimension_semantics<parallel>], iteration_bounds = array<i64: 2>, scalar_prefetch = 0 : i64, scratch_operands = 0 : i64, tpu.core_type = #tpu.core_type<tc>, window_params = [{pipeline_mode = #tpu.pipeline_mode<synchronous>, transform_indices = @transform_0, window_bounds = array<i64: 8, 200>}, {pipeline_mode = #tpu.pipeline_mode<synchronous>, transform_indices = @transform_1, window_bounds = array<i64: 8, 1>}, {transform_indices = @transform_2, window_bounds = array<i64: 200, 1920>}, {transform_indices = @transform_3, window_bounds = array<i64: 8, 1920>}]} {
    %c0 = arith.constant 0 : index
    %c0_0 = arith.constant 0 : index
    %0 = vector.load %arg1[%c0, %c0_0] : memref<8x200xf32, #tpu.memory_space<vmem>>, vector<8x200xf32>
    %c0_1 = arith.constant 0 : index
    %c0_2 = arith.constant 0 : index
    %1 = vector.load %arg3[%c0_1, %c0_2] : memref<200x1920xf32, #tpu.memory_space<vmem>>, vector<200x1920xf32>
    %cst = arith.constant dense<0.000000e+00> : vector<8x1920xf32>
    %2 = tpu.matmul %0, %1, %cst {dimension_numbers = #tpu.dot_dimension_numbers<[1], [0], [0], [1], [0, 0, 1, 1], [], []>} : vector<8x200xf32>, vector<200x1920xf32>, vector<8x1920xf32> -> vector<8x1920xf32>
    %c0_3 = arith.constant 0 : index
    %c0_4 = arith.constant 0 : index
    %3 = vector.load %arg2[%c0_3, %c0_4] : memref<8x1xf32, #tpu.memory_space<vmem>>, vector<8x1xf32>
    %4 = vector.broadcast %3 : vector<8x1xf32> to vector<8x1920xf32>
    %5 = arith.addf %2, %4 : vector<8x1920xf32>
    %cst_5 = arith.constant 0.000000e+00 : f32
    %6 = vector.broadcast %cst_5 : f32 to vector<8x1920xf32>
    %7 = arith.maximumf %5, %6 : vector<8x1920xf32>
    %c0_6 = arith.constant 0 : index
    %c0_7 = arith.constant 0 : index
    %8 = vector.load %arg4[%c0_6, %c0_7] : memref<8x1920xf32, #tpu.memory_space<vmem>>, vector<8x1920xf32>
    tpu.vector_store %arg4[%c0_6, %c0_7], %7 {strides = array<i32>} : memref<8x1920xf32, #tpu.memory_space<vmem>>, vector<8x1920xf32>,
    return
  }
  func.func @transform_0(%arg0: i32) -> (i32, i32) {
    %c0_i32 = arith.constant 0 : i32
    %c0_i32_0 = arith.constant 0 : i32
    %c0_i32_1 = arith.constant 0 : i32
    return %c0_i32, %c0_i32_0 : i32, i32
  }
  func.func @transform_1(%arg0: i32) -> (i32, i32) {
    %c0_i32 = arith.constant 0 : i32
    %c0_i32_0 = arith.constant 0 : i32
    %c0_i32_1 = arith.constant 0 : i32
    return %c0_i32, %c0_i32_0 : i32, i32
  }
  func.func @transform_2(%arg0: i32) -> (i32, i32) {
    %c0_i32 = arith.constant 0 : i32
    %c0_i32_0 = arith.constant 0 : i32
    return %c0_i32, %arg0 : i32, i32
  }
  func.func @transform_3(%arg0: i32) -> (i32, i32) {
    %c0_i32 = arith.constant 0 : i32
    %c0_i32_0 = arith.constant 0 : i32
    return %c0_i32, %arg0 : i32, i32
  }
}

module attributes {stable_mosaic.version = 11 : i64} {
  func.func @_conv_mm_kernel(%arg0: i32, %arg1: memref<8x200xf32, #tpu.memory_space<vmem>>, %arg2: memref<8x1xf32, #tpu.memory_space<vmem>>, %arg3: memref<200x782xf32, #tpu.memory_space<vmem>>, %arg4: memref<8x782xf32, #tpu.memory_space<vmem>>) attributes {dimension_semantics = [#tpu.dimension_semantics<parallel>], iteration_bounds = array<i64: 1>, scalar_prefetch = 0 : i64, scratch_operands = 0 : i64, tpu.core_type = #tpu.core_type<tc>, window_params = [{pipeline_mode = #tpu.pipeline_mode<synchronous>, transform_indices = @transform_0, window_bounds = array<i64: 8, 200>}, {pipeline_mode = #tpu.pipeline_mode<synchronous>, transform_indices = @transform_1, window_bounds = array<i64: 8, 1>}, {transform_indices = @transform_2, window_bounds = array<i64: 200, 782>}, {transform_indices = @transform_3, window_bounds = array<i64: 8, 782>}]} {
    %c0 = arith.constant 0 : index
    %c0_0 = arith.constant 0 : index
    %0 = vector.load %arg1[%c0, %c0_0] : memref<8x200xf32, #tpu.memory_space<vmem>>, vector<8x200xf32>
    %c0_1 = arith.constant 0 : index
    %c0_2 = arith.constant 0 : index
    %1 = vector.load %arg3[%c0_1, %c0_2] : memref<200x782xf32, #tpu.memory_space<vmem>>, vector<200x782xf32>
    %cst = arith.constant dense<0.000000e+00> : vector<8x782xf32>
    %2 = tpu.matmul %0, %1, %cst {dimension_numbers = #tpu.dot_dimension_numbers<[1], [0], [0], [1], [0, 0, 1, 1], [], []>} : vector<8x200xf32>, vector<200x782xf32>, vector<8x782xf32> -> vector<8x782xf32>
    %c0_3 = arith.constant 0 : index
    %c0_4 = arith.constant 0 : index
    %3 = vector.load %arg2[%c0_3, %c0_4] : memref<8x1xf32, #tpu.memory_space<vmem>>, vector<8x1xf32>
    %4 = vector.broadcast %3 : vector<8x1xf32> to vector<8x782xf32>
    %5 = arith.addf %2, %4 : vector<8x782xf32>
    %cst_5 = arith.constant 0.000000e+00 : f32
    %6 = vector.broadcast %cst_5 : f32 to vector<8x782xf32>
    %7 = arith.maximumf %5, %6 : vector<8x782xf32>
    %c0_6 = arith.constant 0 : index
    %c0_7 = arith.constant 0 : index
    %8 = vector.load %arg4[%c0_6, %c0_7] : memref<8x782xf32, #tpu.memory_space<vmem>>, vector<8x782xf32>
    tpu.vector_store %arg4[%c0_6, %c0_7], %7 {strides = array<i32>} : memref<8x782xf32, #tpu.memory_space<vmem>>, vector<8x782xf32>,
    return
  }
  func.func @transform_0(%arg0: i32) -> (i32, i32) {
    %c0_i32 = arith.constant 0 : i32
    %c0_i32_0 = arith.constant 0 : i32
    %c0_i32_1 = arith.constant 0 : i32
    return %c0_i32, %c0_i32_0 : i32, i32
  }
  func.func @transform_1(%arg0: i32) -> (i32, i32) {
    %c0_i32 = arith.constant 0 : i32
    %c0_i32_0 = arith.constant 0 : i32
    %c0_i32_1 = arith.constant 0 : i32
    return %c0_i32, %c0_i32_0 : i32, i32
  }
  func.func @transform_2(%arg0: i32) -> (i32, i32) {
    %c0_i32 = arith.constant 0 : i32
    %c0_i32_0 = arith.constant 0 : i32
    return %c0_i32, %arg0 : i32, i32
  }
  func.func @transform_3(%arg0: i32) -> (i32, i32) {
    %c0_i32 = arith.constant 0 : i32
    %c0_i32_0 = arith.constant 0 : i32
    return %c0_i32, %arg0 : i32, i32
  }
}

module attributes {stable_mosaic.version = 11 : i64} {
  func.func @_fc_stack_kernel(%arg0: i32, %arg1: memref<2x3128xf32, #tpu.memory_space<vmem>>, %arg2: memref<3128x256xf32, #tpu.memory_space<vmem>>, %arg3: memref<1x256xf32, #tpu.memory_space<vmem>>, %arg4: memref<256x256xf32, #tpu.memory_space<vmem>>, %arg5: memref<1x256xf32, #tpu.memory_space<vmem>>, %arg6: memref<256x7xf32, #tpu.memory_space<vmem>>, %arg7: memref<1x7xf32, #tpu.memory_space<vmem>>, %arg8: memref<2x7xf32, #tpu.memory_space<vmem>>) attributes {dimension_semantics = [#tpu.dimension_semantics<arbitrary>], iteration_bounds = array<i64: 1>, scalar_prefetch = 0 : i64, scratch_operands = 0 : i64, tpu.core_type = #tpu.core_type<tc>, window_params = [{pipeline_mode = #tpu.pipeline_mode<synchronous>, transform_indices = @transform_0, window_bounds = array<i64: 2, 3128>}, {pipeline_mode = #tpu.pipeline_mode<synchronous>, transform_indices = @transform_1, window_bounds = array<i64: 3128, 256>}, {pipeline_mode = #tpu.pipeline_mode<synchronous>, transform_indices = @transform_2, window_bounds = array<i64: 1, 256>}, {pipeline_mode = #tpu.pipeline_mode<synchronous>, transform_indices = @transform_3, window_bounds = array<i64: 256, 256>}, {pipeline_mode = #tpu.pipeline_mode<synchronous>, transform_indices = @transform_4, window_bounds = array<i64: 1, 256>}, {pipeline_mode = #tpu.pipeline_mode<synchronous>, transform_indices = @transform_5, window_bounds = array<i64: 256, 7>}, {pipeline_mode = #tpu.pipeline_mode<synchronous>, transform_indices = @transform_6, window_bounds = array<i64: 1, 7>}, {pipeline_mode = #tpu.pipeline_mode<synchronous>, transform_indices = @transform_7, window_bounds = array<i64: 2, 7>}]} {
    %c0 = arith.constant 0 : index
    %c0_0 = arith.constant 0 : index
    %0 = vector.load %arg1[%c0, %c0_0] : memref<2x3128xf32, #tpu.memory_space<vmem>>, vector<2x3128xf32>
    %c0_1 = arith.constant 0 : index
    %c0_2 = arith.constant 0 : index
    %1 = vector.load %arg2[%c0_1, %c0_2] : memref<3128x256xf32, #tpu.memory_space<vmem>>, vector<3128x256xf32>
    %cst = arith.constant dense<0.000000e+00> : vector<2x256xf32>
    %2 = tpu.matmul %0, %1, %cst {dimension_numbers = #tpu.dot_dimension_numbers<[1], [0], [0], [1], [0, 0, 1, 1], [], []>} : vector<2x3128xf32>, vector<3128x256xf32>, vector<2x256xf32> -> vector<2x256xf32>
    %c0_3 = arith.constant 0 : index
    %c0_4 = arith.constant 0 : index
    %3 = vector.load %arg3[%c0_3, %c0_4] : memref<1x256xf32, #tpu.memory_space<vmem>>, vector<1x256xf32>
    %4 = vector.broadcast %3 : vector<1x256xf32> to vector<2x256xf32>
    %5 = arith.addf %2, %4 : vector<2x256xf32>
    %cst_5 = arith.constant 0.000000e+00 : f32
    %6 = vector.broadcast %cst_5 : f32 to vector<2x256xf32>
    %7 = arith.maximumf %5, %6 : vector<2x256xf32>
    %c0_6 = arith.constant 0 : index
    %c0_7 = arith.constant 0 : index
    %8 = vector.load %arg4[%c0_6, %c0_7] : memref<256x256xf32, #tpu.memory_space<vmem>>, vector<256x256xf32>
    %cst_8 = arith.constant dense<0.000000e+00> : vector<2x256xf32>
    %9 = tpu.matmul %7, %8, %cst_8 {dimension_numbers = #tpu.dot_dimension_numbers<[1], [0], [0], [1], [0, 0, 1, 1], [], []>} : vector<2x256xf32>, vector<256x256xf32>, vector<2x256xf32> -> vector<2x256xf32>
    %c0_9 = arith.constant 0 : index
    %c0_10 = arith.constant 0 : index
    %10 = vector.load %arg5[%c0_9, %c0_10] : memref<1x256xf32, #tpu.memory_space<vmem>>, vector<1x256xf32>
    %11 = vector.broadcast %10 : vector<1x256xf32> to vector<2x256xf32>
    %12 = arith.addf %9, %11 : vector<2x256xf32>
    %cst_11 = arith.constant 0.000000e+00 : f32
    %13 = vector.broadcast %cst_11 : f32 to vector<2x256xf32>
    %14 = arith.maximumf %12, %13 : vector<2x256xf32>
    %c0_12 = arith.constant 0 : index
    %c0_13 = arith.constant 0 : index
    %15 = vector.load %arg6[%c0_12, %c0_13] : memref<256x7xf32, #tpu.memory_space<vmem>>, vector<256x7xf32>
    %cst_14 = arith.constant dense<0.000000e+00> : vector<2x7xf32>
    %16 = tpu.matmul %14, %15, %cst_14 {dimension_numbers = #tpu.dot_dimension_numbers<[1], [0], [0], [1], [0, 0, 1, 1], [], []>} : vector<2x256xf32>, vector<256x7xf32>, vector<2x7xf32> -> vector<2x7xf32>
    %c0_15 = arith.constant 0 : index
    %c0_16 = arith.constant 0 : index
    %17 = vector.load %arg7[%c0_15, %c0_16] : memref<1x7xf32, #tpu.memory_space<vmem>>, vector<1x7xf32>
    %18 = vector.broadcast %17 : vector<1x7xf32> to vector<2x7xf32>
    %19 = arith.addf %16, %18 : vector<2x7xf32>
    %20 = vector.extract_strided_slice %19 {offsets = [0, 0], sizes = [2, 6], strides = [1, 1]} : vector<2x7xf32> to vector<2x6xf32>
    %cst_17 = arith.constant dense<0xFF800000> : vector<2xf32>
    %21 = vector.multi_reduction <maximumf>, %20, %cst_17 [1] : vector<2x6xf32> to vector<2xf32>
    %22 = vector.shape_cast %21 : vector<2xf32> to vector<2x1xf32>
    %23 = vector.broadcast %22 : vector<2x1xf32> to vector<2x6xf32>
    %24 = arith.subf %20, %23 : vector<2x6xf32>
    %25 = math.exp %24 : vector<2x6xf32>
    %cst_18 = arith.constant dense<0.000000e+00> : vector<2xf32>
    %26 = vector.multi_reduction <add>, %25, %cst_18 [1] : vector<2x6xf32> to vector<2xf32>
    %27 = vector.shape_cast %26 : vector<2xf32> to vector<2x1xf32>
    %28 = vector.broadcast %27 : vector<2x1xf32> to vector<2x6xf32>
    %29 = arith.divf %25, %28 : vector<2x6xf32>
    %c0_19 = arith.constant 0 : index
    %c0_20 = arith.constant 0 : index
    %30 = vector.load %arg8[%c0_19, %c0_20] : memref<2x7xf32, #tpu.memory_space<vmem>>, vector<2x6xf32>
    tpu.vector_store %arg8[%c0_19, %c0_20], %29 {strides = array<i32>} : memref<2x7xf32, #tpu.memory_space<vmem>>, vector<2x6xf32>,
    %31 = vector.extract_strided_slice %19 {offsets = [0, 6], sizes = [2, 1], strides = [1, 1]} : vector<2x7xf32> to vector<2x1xf32>
    %c0_21 = arith.constant 0 : index
    %c6 = arith.constant 6 : index
    %32 = vector.load %arg8[%c0_21, %c6] : memref<2x7xf32, #tpu.memory_space<vmem>>, vector<2x1xf32>
    tpu.vector_store %arg8[%c0_21, %c6], %31 {strides = array<i32>} : memref<2x7xf32, #tpu.memory_space<vmem>>, vector<2x1xf32>,
    return
  }
  func.func @transform_0(%arg0: i32) -> (i32, i32) {
    %c0_i32 = arith.constant 0 : i32
    %c0_i32_0 = arith.constant 0 : i32
    %c0_i32_1 = arith.constant 0 : i32
    return %c0_i32, %c0_i32_0 : i32, i32
  }
  func.func @transform_1(%arg0: i32) -> (i32, i32) {
    %c0_i32 = arith.constant 0 : i32
    %c0_i32_0 = arith.constant 0 : i32
    %c0_i32_1 = arith.constant 0 : i32
    return %c0_i32, %c0_i32_0 : i32, i32
  }
  func.func @transform_2(%arg0: i32) -> (i32, i32) {
    %c0_i32 = arith.constant 0 : i32
    %c0_i32_0 = arith.constant 0 : i32
    %c0_i32_1 = arith.constant 0 : i32
    return %c0_i32, %c0_i32_0 : i32, i32
  }
  func.func @transform_3(%arg0: i32) -> (i32, i32) {
    %c0_i32 = arith.constant 0 : i32
    %c0_i32_0 = arith.constant 0 : i32
    %c0_i32_1 = arith.constant 0 : i32
    return %c0_i32, %c0_i32_0 : i32, i32
  }
  func.func @transform_4(%arg0: i32) -> (i32, i32) {
    %c0_i32 = arith.constant 0 : i32
    %c0_i32_0 = arith.constant 0 : i32
    %c0_i32_1 = arith.constant 0 : i32
    return %c0_i32, %c0_i32_0 : i32, i32
  }
  func.func @transform_5(%arg0: i32) -> (i32, i32) {
    %c0_i32 = arith.constant 0 : i32
    %c0_i32_0 = arith.constant 0 : i32
    %c0_i32_1 = arith.constant 0 : i32
    return %c0_i32, %c0_i32_0 : i32, i32
  }
  func.func @transform_6(%arg0: i32) -> (i32, i32) {
    %c0_i32 = arith.constant 0 : i32
    %c0_i32_0 = arith.constant 0 : i32
    %c0_i32_1 = arith.constant 0 : i32
    return %c0_i32, %c0_i32_0 : i32, i32
  }
  func.func @transform_7(%arg0: i32) -> (i32, i32) {
    %c0_i32 = arith.constant 0 : i32
    %c0_i32_0 = arith.constant 0 : i32
    %c0_i32_1 = arith.constant 0 : i32
    return %c0_i32, %c0_i32_0 : i32, i32
  }
}

</mosaic_0001>

<llo_original>
// kernel: two_heads_forward.4
$region0: #{two_heads_forward.4}
  #allocation0 [shape = 'u32[]', space=smem, size = 0x4, offset = 0x4, fixed_abs, tag = 'smem constant byte address 0x4 - core index']
  #allocation1 [shape = 'u32[144,128]{1,0:T(1,128)}', space=vmem, size = 0x12000, scoped, tag = 'internal scratch']
  %s0 = inlined_call_operand.vmem [shape: f32[8,25], index: 0, kind: input, shape index: {}]
  %s1 = inlined_call_operand.vmem [shape: f32[8,1], index: 1, kind: input, shape index: {}]
  %s2 = inlined_call_operand.vmem [shape: f32[25,16068], index: 2, kind: input, shape index: {}]
  %s3 = inlined_call_operand.vmem [shape: f32[8,16068], index: 3, kind: output, shape index: {}]
  %s4 = sld [smem:[#allocation0]]
  $region68: #{two_heads_forward.4} parent=0
    _
  %s6 = ssub.s32 1, %s4
  %s7 = scalar_select 0, %s6, %s4
  $region1: #{two_heads_forward.4} parent=0
    #allocation2 [shape = 'u8[2064384]{0}', space=vmem, size = 0x1f8000, scoped, tag = 'input window, operand 2']
    loop: start=0, step=1, limit=4
    $region2: #{two_heads_forward.4} parent=1 // loop_pre_header
      _
    $region3: #{two_heads_forward.4} parent=1 // loop_header
      %s9 = sphi 0, %s13
      %p10 = scmp.ge.s32.totalorder %s9, 4
      %s17 = sphi 0, %s17
      %s19 = sphi 0, %s17
      %s20 = sphi 0, %s19
      %s34 = sphi 0, %s20
      %s38 = sphi 0, %s38
      %s40 = sphi 0, %s38
      %s41 = sphi 0, %s40
      %s55 = sphi 0, %s41
      %s61 = sphi 0, %s63
      %s64 = sphi 0, %s61
      %s65 = sphi 0, %s64
      %s81 = sphi 0, %s65
      %s87 = sphi 0, %s89
      %s90 = sphi 0, %s87
      %s91 = sphi 0, %s90
      %s107 = sphi 0, %s91
    $region4: #{two_heads_forward.4} parent=1 // loop_header_branch
      %12 = sbr.rel (%p10) target = $region8
    $region5: #{two_heads_forward.4} parent=1 // loop_body
      %s14 = ssub.s32 %s9, 1
      %s15 = ssub.s32 %s9, 2
      %s16 = sadd.s32 %s9, 1
      %s18 = sadd.s32 %s17, 1
      %p21 = scmp.eq.s32.totalorder %s9, 1
      %p22 = scmp.ne.s32.totalorder %s17, %s19
      %p23 = scmp.eq.s32.totalorder %s9, 0
      %p24 = por %p22, %p23
      %p25 = scmp.ne.s32.totalorder %s17, %s19
      %p26 = scmp.eq.s32.totalorder %s14, 1
      %p27 = por %p25, %p26
      %p28 = scmp.ne.s32.totalorder %s19, %s20
      %p29 = scmp.eq.s32.totalorder %s14, 0
      %p30 = por %p28, %p29
      %p31 = scmp.ne.s32.totalorder %s19, %s20
      %p32 = scmp.eq.s32.totalorder %s15, 1
      %p33 = por %p31, %p32
      %p35 = scmp.ne.s32.totalorder %s20, %s34
      %p36 = scmp.eq.s32.totalorder %s15, 0
      %p37 = por %p35, %p36
      %s39 = sadd.s32 %s38, 1
      %p42 = scmp.eq.s32.totalorder %s9, 1
      %p43 = scmp.ne.s32.totalorder %s38, %s40
      %p44 = scmp.eq.s32.totalorder %s9, 0
      %p45 = por %p43, %p44
      %p46 = scmp.ne.s32.totalorder %s38, %s40
      %p47 = scmp.eq.s32.totalorder %s14, 1
      %p48 = por %p46, %p47
      %p49 = scmp.ne.s32.totalorder %s40, %s41
      %p50 = scmp.eq.s32.totalorder %s14, 0
      %p51 = por %p49, %p50
      %p52 = scmp.ne.s32.totalorder %s40, %s41
      %p53 = scmp.eq.s32.totalorder %s15, 1
      %p54 = por %p52, %p53
      %p56 = scmp.ne.s32.totalorder %s41, %s55
      %p57 = scmp.eq.s32.totalorder %s15, 0
      %p58 = por %p56, %p57
      %s59 = ssub.s32 %s9, %s16
      %p60 = scmp.eq.s32.totalorder %s59, 0
      %s62 = sadd.s32 %s61, 1
      %s63 = scalar_select %p60, %s61, %s62
      %p66 = pneg %p60
      %p67 = scmp.eq.s32.totalorder %s9, 1
      %p68 = por %p66, %p67
      %p69 = scmp.ne.s32.totalorder %s61, %s64
      %p70 = scmp.eq.s32.totalorder %s9, 0
      %p71 = por %p69, %p70
      %p72 = scmp.ne.s32.totalorder %s61, %s64
      %p73 = scmp.eq.s32.totalorder %s14, 1
      %p74 = por %p72, %p73
      %p75 = scmp.ne.s32.totalorder %s64, %s65
      %p76 = scmp.eq.s32.totalorder %s14, 0
      %p77 = por %p75, %p76
      %p78 = scmp.ne.s32.totalorder %s64, %s65
      %p79 = scmp.eq.s32.totalorder %s15, 1
      %p80 = por %p78, %p79
      %p82 = scmp.ne.s32.totalorder %s65, %s81
      %p83 = scmp.eq.s32.totalorder %s15, 0
      %p84 = por %p82, %p83
      %s85 = ssub.s32 %s9, %s16
      %p86 = scmp.eq.s32.totalorder %s85, 0
      %s88 = sadd.s32 %s87, 1
      %s89 = scalar_select %p86, %s87, %s88
      %p92 = pneg %p86
      %p93 = scmp.eq.s32.totalorder %s9, 1
      %p94 = por %p92, %p93
      %p95 = scmp.ne.s32.totalorder %s87, %s90
      %p96 = scmp.eq.s32.totalorder %s9, 0
      %p97 = por %p95, %p96
      %p98 = scmp.ne.s32.totalorder %s87, %s90
      %p99 = scmp.eq.s32.totalorder %s14, 1
      %p100 = por %p98, %p99
      %p101 = scmp.ne.s32.totalorder %s90, %s91
      %p102 = scmp.eq.s32.totalorder %s14, 0
      %p103 = por %p101, %p102
      %p104 = scmp.ne.s32.totalorder %s90, %s91
      %p105 = scmp.eq.s32.totalorder %s15, 1
      %p106 = por %p104, %p105
      %p108 = scmp.ne.s32.totalorder %s91, %s107
      %p109 = scmp.eq.s32.totalorder %s15, 0
      %p110 = por %p108, %p109
      %p111 = scmp.le.s32.totalorder 1, %s9
      %p112 = scmp.lt.s32.totalorder %s9, 3
      %p113 = pnand %p111, %p112
      %p114 = pneg %p113
      // Predicated region
      $region9: #{two_heads_forward.4} parent=5 // pred_check
        _
      $region10: #{two_heads_forward.4} parent=5 // pred_check_branch
        %116 = sbr.rel (%p113) target = $region12
      $region11: #{two_heads_forward.4} parent=5 // pred_region
        %s117 = ssub.s32 %s9, 1
        // Predicated region
        $region13: #{two_heads_forward.4} parent=11 // pred_check
          %p118 = pneg %p30
        $region14: #{two_heads_forward.4} parent=11 // pred_check_branch
          %120 = sbr.rel (%p118) target = $region16
        $region15: #{two_heads_forward.4} parent=11 // pred_region
          _
        $region16: #{two_heads_forward.4} parent=11 // pred_fallthru
          _
        // Predicated region
        $region17: #{two_heads_forward.4} parent=11 // pred_check
          %p121 = pneg %p51
        $region18: #{two_heads_forward.4} parent=11 // pred_check_branch
          %123 = sbr.rel (%p121) target = $region20
        $region19: #{two_heads_forward.4} parent=11 // pred_region
          _
        $region20: #{two_heads_forward.4} parent=11 // pred_fallthru
          _
      $region12: #{two_heads_forward.4} parent=5 // pred_fallthru
        _
      %p124 = scmp.lt.s32.totalorder %s9, 2
      // Predicated region
      $region21: #{two_heads_forward.4} parent=5 // pred_check
        %p125 = pneg %p124
      $region22: #{two_heads_forward.4} parent=5 // pred_check_branch
        %127 = sbr.rel (%p125) target = $region24
      $region23: #{two_heads_forward.4} parent=5 // pred_region
        // Predicated region
        $region25: #{two_heads_forward.4} parent=23 // pred_check
          %p128 = pneg %p71
        $region26: #{two_heads_forward.4} parent=23 // pred_check_branch
          %130 = sbr.rel (%p128) target = $region28
        $region27: #{two_heads_forward.4} parent=23 // pred_region
          %s131 = sand.u32 %s61, 1
          %s132 = sand.u32 %s61, 1
          %s133 = smul.addr %s132, 2016
          %s134 = scalar_lea.vmem [#allocation2], %s133
          %s135 = smul.u32 63, %s9
          %s136 = smul.addr %s135, 8
          %s137 = scalar_lea.vmem %s2, %s136
          // Predicated region
          $region29: #{two_heads_forward.4} parent=27 // pred_check
            _
          $region30: #{two_heads_forward.4} parent=27 // pred_check_branch
            %139 = sbr.rel (0) target = $region32
          $region31: #{two_heads_forward.4} parent=27 // pred_region
            // Predicated region
            $region33: #{two_heads_forward.4} parent=31 // pred_check
              _
            $region34: #{two_heads_forward.4} parent=31 // pred_check_branch
              %141 = sbr.rel (0) target = $region36
            $region35: #{two_heads_forward.4} parent=31 // pred_region
              loop: start=0, step=1, limit=1
              $region37: #{two_heads_forward.4} parent=35 // loop_pre_header
                _
              $region38: #{two_heads_forward.4} parent=35 // loop_header
                %s143 = sphi 0, %s147
                %p144 = scmp.ge.s32.totalorder %s143, 1
                %s148 = sphi %s137, %s137
                %s149 = sphi %s134, %s134
              $region39: #{two_heads_forward.4} parent=35 // loop_header_branch
                %146 = sbr.rel (%p144) target = $region43
              $region40: #{two_heads_forward.4} parent=35 // loop_body
                %v150 = vld [vmem:[%s148] sm:$0xff]
                %151 = vst [vmem:[%s149] sm:$0xff] %v150
                %v152 = vld [vmem:[%s148 + $0x8] sm:$0xff]
                %153 = vst [vmem:[%s149 + $0x8] sm:$0xff] %v152
                %v154 = vld [vmem:[%s148 + $0x10] sm:$0xff]
                %155 = vst [vmem:[%s149 + $0x10] sm:$0xff] %v154
                %v156 = vld [vmem:[%s148 + $0x18] sm:$0xff]
                %157 = vst [vmem:[%s149 + $0x18] sm:$0xff] %v156
                %v158 = vld [vmem:[%s148 + $0x20] sm:$0xff]
                %159 = vst [vmem:[%s149 + $0x20] sm:$0xff] %v158
                %v160 = vld [vmem:[%s148 + $0x28] sm:$0xff]
                %161 = vst [vmem:[%s149 + $0x28] sm:$0xff] %v160
                %v162 = vld [vmem:[%s148 + $0x30] sm:$0xff]
                %163 = vst [vmem:[%s149 + $0x30] sm:$0xff] %v162
                %v164 = vld [vmem:[%s148 + $0x38] sm:$0xff]
                %165 = vst [vmem:[%s149 + $0x38] sm:$0xff] %v164
                %v166 = vld [vmem:[%s148 + $0x40] sm:$0xff]
                %167 = vst [vmem:[%s149 + $0x40] sm:$0xff] %v166
                %v168 = vld [vmem:[%s148 + $0x48] sm:$0xff]
                %169 = vst [vmem:[%s149 + $0x48] sm:$0xff] %v168
                %v170 = vld [vmem:[%s148 + $0x50] sm:$0xff]
                %171 = vst [vmem:[%s149 + $0x50] sm:$0xff] %v170
                %v172 = vld [vmem:[%s148 + $0x58] sm:$0xff]
                %173 = vst [vmem:[%s149 + $0x58] sm:$0xff] %v172
                %v174 = vld [vmem:[%s148 + $0x60] sm:$0xff]
                %175 = vst [vmem:[%s149 + $0x60] sm:$0xff] %v174
                %v176 = vld [vmem:[%s148 + $0x68] sm:$0xff]
                %177 = vst [vmem:[%s149 + $0x68] sm:$0xff] %v176
                %v178 = vld [vmem:[%s148 + $0x70] sm:$0xff]
                %179 = vst [vmem:[%s149 + $0x70] sm:$0xff] %v178
                %v180 = vld [vmem:[%s148 + $0x78] sm:$0xff]
                %181 = vst [vmem:[%s149 + $0x78] sm:$0xff] %v180
                %v182 = vld [vmem:[%s148 + $0x80] sm:$0xff]
                %183 = vst [vmem:[%s149 + $0x80] sm:$0xff] %v182
                %v184 = vld [vmem:[%s148 + $0x88] sm:$0xff]
                %185 = vst [vmem:[%s149 + $0x88] sm:$0xff] %v184
                %v186 = vld [vmem:[%s148 + $0x90] sm:$0xff]
                %187 = vst [vmem:[%s149 + $0x90] sm:$0xff] %v186
                %v188 = vld [vmem:[%s148 + $0x98] sm:$0xff]
                %189 = vst [vmem:[%s149 + $0x98] sm:$0xff] %v188
                %v190 = vld [vmem:[%s148 + $0xa0] sm:$0xff]
                %191 = vst [vmem:[%s149 + $0xa0] sm:$0xff] %v190
                %v192 = vld [vmem:[%s148 + $0xa8] sm:$0xff]
                %193 = vst [vmem:[%s149 + $0xa8] sm:$0xff] %v192
                %v194 = vld [vmem:[%s148 + $0xb0] sm:$0xff]
                %195 = vst [vmem:[%s149 + $0xb0] sm:$0xff] %v194
                %v196 = vld [vmem:[%s148 + $0xb8] sm:$0xff]
                %197 = vst [vmem:[%s149 + $0xb8] sm:$0xff] %v196
                %v198 = vld [vmem:[%s148 + $0xc0] sm:$0xff]
                %199 = vst [vmem:[%s149 + $0xc0] sm:$0xff] %v198
                %v200 = vld [vmem:[%s148 + $0xc8] sm:$0xff]
                %201 = vst [vmem:[%s149 + $0xc8] sm:$0xff] %v200
                %v202 = vld [vmem:[%s148 + $0xd0] sm:$0xff]
                %203 = vst [vmem:[%s149 + $0xd0] sm:$0xff] %v202
                %v204 = vld [vmem:[%s148 + $0xd8] sm:$0xff]
                %205 = vst [vmem:[%s149 + $0xd8] sm:$0xff] %v204
                %v206 = vld [vmem:[%s148 + $0xe0] sm:$0xff]
                %207 = vst [vmem:[%s149 + $0xe0] sm:$0xff] %v206
                %v208 = vld [vmem:[%s148 + $0xe8] sm:$0xff]
                %209 = vst [vmem:[%s149 + $0xe8] sm:$0xff] %v208
                %v210 = vld [vmem:[%s148 + $0xf0] sm:$0xff]
                %211 = vst [vmem:[%s149 + $0xf0] sm:$0xff] %v210
                %v212 = vld [vmem:[%s148 + $0xf8] sm:$0xff]
                %213 = vst [vmem:[%s149 + $0xf8] sm:$0xff] %v212
                %v214 = vld [vmem:[%s148 + $0x100] sm:$0xff]
                %215 = vst [vmem:[%s149 + $0x100] sm:$0xff] %v214
                %v216 = vld [vmem:[%s148 + $0x108] sm:$0xff]
                %217 = vst [vmem:[%s149 + $0x108] sm:$0xff] %v216
                %v218 = vld [vmem:[%s148 + $0x110] sm:$0xff]
                %219 = vst [vmem:[%s149 + $0x110] sm:$0xff] %v218
                %v220 = vld [vmem:[%s148 + $0x118] sm:$0xff]
                %221 = vst [vmem:[%s149 + $0x118] sm:$0xff] %v220
                %v222 = vld [vmem:[%s148 + $0x120] sm:$0xff]
                %223 = vst [vmem:[%s149 + $0x120] sm:$0xff] %v222
                %v224 = vld [vmem:[%s148 + $0x128] sm:$0xff]
                %225 = vst [vmem:[%s149 + $0x128] sm:$0xff] %v224
                %v226 = vld [vmem:[%s148 + $0x130] sm:$0xff]
                %227 = vst [vmem:[%s149 + $0x130] sm:$0xff] %v226
                %v228 = vld [vmem:[%s148 + $0x138] sm:$0xff]
                %229 = vst [vmem:[%s149 + $0x138] sm:$0xff] %v228
                %v230 = vld [vmem:[%s148 + $0x140] sm:$0xff]
                %231 = vst [vmem:[%s149 + $0x140] sm:$0xff] %v230
                %v232 = vld [vmem:[%s148 + $0x148] sm:$0xff]
                %233 = vst [vmem:[%s149 + $0x148] sm:$0xff] %v232
                %v234 = vld [vmem:[%s148 + $0x150] sm:$0xff]
                %235 = vst [vmem:[%s149 + $0x150] sm:$0xff] %v234
                %v236 = vld [vmem:[%s148 + $0x158] sm:$0xff]
                %237 = vst [vmem:[%s149 + $0x158] sm:$0xff] %v236
                %v238 = vld [vmem:[%s148 + $0x160] sm:$0xff]
                %239 = vst [vmem:[%s149 + $0x160] sm:$0xff] %v238
                %v240 = vld [vmem:[%s148 + $0x168] sm:$0xff]
                %241 = vst [vmem:[%s149 + $0x168] sm:$0xff] %v240
                %v242 = vld [vmem:[%s148 + $0x170] sm:$0xff]
                %243 = vst [vmem:[%s149 + $0x170] sm:$0xff] %v242
                %v244 = vld [vmem:[%s148 + $0x178] sm:$0xff]
                %245 = vst [vmem:[%s149 + $0x178] sm:$0xff] %v244
                %v246 = vld [vmem:[%s148 + $0x180] sm:$0xff]
                %247 = vst [vmem:[%s149 + $0x180] sm:$0xff] %v246
                %v248 = vld [vmem:[%s148 + $0x188] sm:$0xff]
                %249 = vst [vmem:[%s149 + $0x188] sm:$0xff] %v248
                %v250 = vld [vmem:[%s148 + $0x190] sm:$0xff]
                %251 = vst [vmem:[%s149 + $0x190] sm:$0xff] %v250
                %v252 = vld [vmem:[%s148 + $0x198] sm:$0xff]
                %253 = vst [vmem:[%s149 + $0x198] sm:$0xff] %v252
                %v254 = vld [vmem:[%s148 + $0x1a0] sm:$0xff]
                %255 = vst [vmem:[%s149 + $0x1a0] sm:$0xff] %v254
                %v256 = vld [vmem:[%s148 + $0x1a8] sm:$0xff]
                %257 = vst [vmem:[%s149 + $0x1a8] sm:$0xff] %v256
                %v258 = vld [vmem:[%s148 + $0x1b0] sm:$0xff]
                %259 = vst [vmem:[%s149 + $0x1b0] sm:$0xff] %v258
                %v260 = vld [vmem:[%s148 + $0x1b8] sm:$0xff]
                %261 = vst [vmem:[%s149 + $0x1b8] sm:$0xff] %v260
                %v262 = vld [vmem:[%s148 + $0x1c0] sm:$0xff]
                %263 = vst [vmem:[%s149 + $0x1c0] sm:$0xff] %v262
                %v264 = vld [vmem:[%s148 + $0x1c8] sm:$0xff]
                %265 = vst [vmem:[%s149 + $0x1c8] sm:$0xff] %v264
                %v266 = vld [vmem:[%s148 + $0x1d0] sm:$0xff]
                %267 = vst [vmem:[%s149 + $0x1d0] sm:$0xff] %v266
                %v268 = vld [vmem:[%s148 + $0x1d8] sm:$0xff]
                %269 = vst [vmem:[%s149 + $0x1d8] sm:$0xff] %v268
                %v270 = vld [vmem:[%s148 + $0x1e0] sm:$0xff]
                %271 = vst [vmem:[%s149 + $0x1e0] sm:$0xff] %v270
                %v272 = vld [vmem:[%s148 + $0x1e8] sm:$0xff]
                %273 = vst [vmem:[%s149 + $0x1e8] sm:$0xff] %v272
                %v274 = vld [vmem:[%s148 + $0x1f0] sm:$0xff]
                %275 = vst [vmem:[%s149 + $0x1f0] sm:$0xff] %v274
                %v276 = vld [vmem:[%s148 + $0x3f0] sm:$0xff]
                %277 = vst [vmem:[%s149 + $0x1f8] sm:$0xff] %v276
                %v278 = vld [vmem:[%s148 + $0x3f8] sm:$0xff]
                %279 = vst [vmem:[%s149 + $0x200] sm:$0xff] %v278
                %v280 = vld [vmem:[%s148 + $0x400] sm:$0xff]
                %281 = vst [vmem:[%s149 + $0x208] sm:$0xff] %v280
                %v282 = vld [vmem:[%s148 + $0x408] sm:$0xff]
                %283 = vst [vmem:[%s149 + $0x210] sm:$0xff] %v282
                %v284 = vld [vmem:[%s148 + $0x410] sm:$0xff]
                %285 = vst [vmem:[%s149 + $0x218] sm:$0xff] %v284
                %v286 = vld [vmem:[%s148 + $0x418] sm:$0xff]
                %287 = vst [vmem:[%s149 + $0x220] sm:$0xff] %v286
                %v288 = vld [vmem:[%s148 + $0x420] sm:$0xff]
                %289 = vst [vmem:[%s149 + $0x228] sm:$0xff] %v288
                %v290 = vld [vmem:[%s148 + $0x428] sm:$0xff]
                %291 = vst [vmem:[%s149 + $0x230] sm:$0xff] %v290
                %v292 = vld [vmem:[%s148 + $0x430] sm:$0xff]
                %293 = vst [vmem:[%s149 + $0x238] sm:$0xff] %v292
                %v294 = vld [vmem:[%s148 + $0x438] sm:$0xff]
                %295 = vst [vmem:[%s149 + $0x240] sm:$0xff] %v294
                %v296 = vld [vmem:[%s148 + $0x440] sm:$0xff]
                %297 = vst [vmem:[%s149 + $0x248] sm:$0xff] %v296
                %v298 = vld [vmem:[%s148 + $0x448] sm:$0xff]
                %299 = vst [vmem:[%s149 + $0x250] sm:$0xff] %v298
                %v300 = vld [vmem:[%s148 + $0x450] sm:$0xff]
                %301 = vst [vmem:[%s149 + $0x258] sm:$0xff] %v300
                %v302 = vld [vmem:[%s148 + $0x458] sm:$0xff]
                %303 = vst [vmem:[%s149 + $0x260] sm:$0xff] %v302
                %v304 = vld [vmem:[%s148 + $0x460] sm:$0xff]
                %305 = vst [vmem:[%s149 + $0x268] sm:$0xff] %v304
                %v306 = vld [vmem:[%s148 + $0x468] sm:$0xff]
                %307 = vst [vmem:[%s149 + $0x270] sm:$0xff] %v306
                %v308 = vld [vmem:[%s148 + $0x470] sm:$0xff]
                %309 = vst [vmem:[%s149 + $0x278] sm:$0xff] %v308
                %v310 = vld [vmem:[%s148 + $0x478] sm:$0xff]
                %311 = vst [vmem:[%s149 + $0x280] sm:$0xff] %v310
                %v312 = vld [vmem:[%s148 + $0x480] sm:$0xff]
                %313 = vst [vmem:[%s149 + $0x288] sm:$0xff] %v312
                %v314 = vld [vmem:[%s148 + $0x488] sm:$0xff]
                %315 = vst [vmem:[%s149 + $0x290] sm:$0xff] %v314
                %v316 = vld [vmem:[%s148 + $0x490] sm:$0xff]
                %317 = vst [vmem:[%s149 + $0x298] sm:$0xff] %v316
                %v318 = vld [vmem:[%s148 + $0x498] sm:$0xff]
                %319 = vst [vmem:[%s149 + $0x2a0] sm:$0xff] %v318
                %v320 = vld [vmem:[%s148 + $0x4a0] sm:$0xff]
                %321 = vst [vmem:[%s149 + $0x2a8] sm:$0xff] %v320
                %v322 = vld [vmem:[%s148 + $0x4a8] sm:$0xff]
                %323 = vst [vmem:[%s149 + $0x2b0] sm:$0xff] %v322
                %v324 = vld [vmem:[%s148 + $0x4b0] sm:$0xff]
                %325 = vst [vmem:[%s149 + $0x2b8] sm:$0xff] %v324
                %v326 = vld [vmem:[%s148 + $0x4b8] sm:$0xff]
                %327 = vst [vmem:[%s149 + $0x2c0] sm:$0xff] %v326
                %v328 = vld [vmem:[%s148 + $0x4c0] sm:$0xff]
                %329 = vst [vmem:[%s149 + $0x2c8] sm:$0xff] %v328
                %v330 = vld [vmem:[%s148 + $0x4c8] sm:$0xff]
                %331 = vst [vmem:[%s149 + $0x2d0] sm:$0xff] %v330
                %v332 = vld [vmem:[%s148 + $0x4d0] sm:$0xff]
                %333 = vst [vmem:[%s149 + $0x2d8] sm:$0xff] %v332
                %v334 = vld [vmem:[%s148 + $0x4d8] sm:$0xff]
                %335 = vst [vmem:[%s149 + $0x2e0] sm:$0xff] %v334
                %v336 = vld [vmem:[%s148 + $0x4e0] sm:$0xff]
                %337 = vst [vmem:[%s149 + $0x2e8] sm:$0xff] %v336
                %v338 = vld [vmem:[%s148 + $0x4e8] sm:$0xff]
                %339 = vst [vmem:[%s149 + $0x2f0] sm:$0xff] %v338
                %v340 = vld [vmem:[%s148 + $0x4f0] sm:$0xff]
                %341 = vst [vmem:[%s149 + $0x2f8] sm:$0xff] %v340
                %v342 = vld [vmem:[%s148 + $0x4f8] sm:$0xff]
                %343 = vst [vmem:[%s149 + $0x300] sm:$0xff] %v342
                %v344 = vld [vmem:[%s148 + $0x500] sm:$0xff]
                %345 = vst [vmem:[%s149 + $0x308] sm:$0xff] %v344
                %v346 = vld [vmem:[%s148 + $0x508] sm:$0xff]
                %347 = vst [vmem:[%s149 + $0x310] sm:$0xff] %v346
                %v348 = vld [vmem:[%s148 + $0x510] sm:$0xff]
                %349 = vst [vmem:[%s149 + $0x318] sm:$0xff] %v348
                %v350 = vld [vmem:[%s148 + $0x518] sm:$0xff]
                %351 = vst [vmem:[%s149 + $0x320] sm:$0xff] %v350
                %v352 = vld [vmem:[%s148 + $0x520] sm:$0xff]
                %353 = vst [vmem:[%s149 + $0x328] sm:$0xff] %v352
                %v354 = vld [vmem:[%s148 + $0x528] sm:$0xff]
                %355 = vst [vmem:[%s149 + $0x330] sm:$0xff] %v354
                %v356 = vld [vmem:[%s148 + $0x530] sm:$0xff]
                %357 = vst [vmem:[%s149 + $0x338] sm:$0xff] %v356
                %v358 = vld [vmem:[%s148 + $0x538] sm:$0xff]
                %359 = vst [vmem:[%s149 + $0x340] sm:$0xff] %v358
                %v360 = vld [vmem:[%s148 + $0x540] sm:$0xff]
                %361 = vst [vmem:[%s149 + $0x348] sm:$0xff] %v360
                %v362 = vld [vmem:[%s148 + $0x548] sm:$0xff]
                %363 = vst [vmem:[%s149 + $0x350] sm:$0xff] %v362
                %v364 = vld [vmem:[%s148 + $0x550] sm:$0xff]
                %365 = vst [vmem:[%s149 + $0x358] sm:$0xff] %v364
                %v366 = vld [vmem:[%s148 + $0x558] sm:$0xff]
                %367 = vst [vmem:[%s149 + $0x360] sm:$0xff] %v366
                %v368 = vld [vmem:[%s148 + $0x560] sm:$0xff]
                %369 = vst [vmem:[%s149 + $0x368] sm:$0xff] %v368
                %v370 = vld [vmem:[%s148 + $0x568] sm:$0xff]
                %371 = vst [vmem:[%s149 + $0x370] sm:$0xff] %v370
                %v372 = vld [vmem:[%s148 + $0x570] sm:$0xff]
                %373 = vst [vmem:[%s149 + $0x378] sm:$0xff] %v372
                %v374 = vld [vmem:[%s148 + $0x578] sm:$0xff]
                %375 = vst [vmem:[%s149 + $0x380] sm:$0xff] %v374
                %v376 = vld [vmem:[%s148 + $0x580] sm:$0xff]
                %377 = vst [vmem:[%s149 + $0x388] sm:$0xff] %v376
                %v378 = vld [vmem:[%s148 + $0x588] sm:$0xff]
                %379 = vst [vmem:[%s149 + $0x390] sm:$0xff] %v378
                %v380 = vld [vmem:[%s148 + $0x590] sm:$0xff]
                %381 = vst [vmem:[%s149 + $0x398] sm:$0xff] %v380
                %v382 = vld [vmem:[%s148 + $0x598] sm:$0xff]
                %383 = vst [vmem:[%s149 + $0x3a0] sm:$0xff] %v382
                %v384 = vld [vmem:[%s148 + $0x5a0] sm:$0xff]
                %385 = vst [vmem:[%s149 + $0x3a8] sm:$0xff] %v384
                %v386 = vld [vmem:[%s148 + $0x5a8] sm:$0xff]
                %387 = vst [vmem:[%s149 + $0x3b0] sm:$0xff] %v386
                %v388 = vld [vmem:[%s148 + $0x5b0] sm:$0xff]
                %389 = vst [vmem:[%s149 + $0x3b8] sm:$0xff] %v388
                %v390 = vld [vmem:[%s148 + $0x5b8] sm:$0xff]
                %391 = vst [vmem:[%s149 + $0x3c0] sm:$0xff] %v390
                %v392 = vld [vmem:[%s148 + $0x5c0] sm:$0xff]
                %393 = vst [vmem:[%s149 + $0x3c8] sm:$0xff] %v392
                %v394 = vld [vmem:[%s148 + $0x5c8] sm:$0xff]
                %395 = vst [vmem:[%s149 + $0x3d0] sm:$0xff] %v394
                %v396 = vld [vmem:[%s148 + $0x5d0] sm:$0xff]
                %397 = vst [vmem:[%s149 + $0x3d8] sm:$0xff] %v396
                %v398 = vld [vmem:[%s148 + $0x5d8] sm:$0xff]
                %399 = vst [vmem:[%s149 + $0x3e0] sm:$0xff] %v398
                %v400 = vld [vmem:[%s148 + $0x5e0] sm:$0xff]
                %401 = vst [vmem:[%s149 + $0x3e8] sm:$0xff] %v400
                %v402 = vld [vmem:[%s148 + $0x7e0] sm:$0xff]
                %403 = vst [vmem:[%s149 + $0x3f0] sm:$0xff] %v402
                %v404 = vld [vmem:[%s148 + $0x7e8] sm:$0xff]
                %405 = vst [vmem:[%s149 + $0x3f8] sm:$0xff] %v404
                %v406 = vld [vmem:[%s148 + $0x7f0] sm:$0xff]
                %407 = vst [vmem:[%s149 + $0x400] sm:$0xff] %v406
                %v408 = vld [vmem:[%s148 + $0x7f8] sm:$0xff]
                %409 = vst [vmem:[%s149 + $0x408] sm:$0xff] %v408
                %v410 = vld [vmem:[%s148 + $0x800] sm:$0xff]
                %411 = vst [vmem:[%s149 + $0x410] sm:$0xff] %v410
                %v412 = vld [vmem:[%s148 + $0x808] sm:$0xff]
                %413 = vst [vmem:[%s149 + $0x418] sm:$0xff] %v412
                %v414 = vld [vmem:[%s148 + $0x810] sm:$0xff]
                %415 = vst [vmem:[%s149 + $0x420] sm:$0xff] %v414
                %v416 = vld [vmem:[%s148 + $0x818] sm:$0xff]
                %417 = vst [vmem:[%s149 + $0x428] sm:$0xff] %v416
                %v418 = vld [vmem:[%s148 + $0x820] sm:$0xff]
                %419 = vst [vmem:[%s149 + $0x430] sm:$0xff] %v418
                %v420 = vld [vmem:[%s148 + $0x828] sm:$0xff]
                %421 = vst [vmem:[%s149 + $0x438] sm:$0xff] %v420
                %v422 = vld [vmem:[%s148 + $0x830] sm:$0xff]
                %423 = vst [vmem:[%s149 + $0x440] sm:$0xff] %v422
                %v424 = vld [vmem:[%s148 + $0x838] sm:$0xff]
                %425 = vst [vmem:[%s149 + $0x448] sm:$0xff] %v424
                %v426 = vld [vmem:[%s148 + $0x840] sm:$0xff]
                %427 = vst [vmem:[%s149 + $0x450] sm:$0xff] %v426
                %v428 = vld [vmem:[%s148 + $0x848] sm:$0xff]
                %429 = vst [vmem:[%s149 + $0x458] sm:$0xff] %v428
                %v430 = vld [vmem:[%s148 + $0x850] sm:$0xff]
                %431 = vst [vmem:[%s149 + $0x460] sm:$0xff] %v430
                %v432 = vld [vmem:[%s148 + $0x858] sm:$0xff]
                %433 = vst [vmem:[%s149 + $0x468] sm:$0xff] %v432
                %v434 = vld [vmem:[%s148 + $0x860] sm:$0xff]
                %435 = vst [vmem:[%s149 + $0x470] sm:$0xff] %v434
                %v436 = vld [vmem:[%s148 + $0x868] sm:$0xff]
                %437 = vst [vmem:[%s149 + $0x478] sm:$0xff] %v436
                %v438 = vld [vmem:[%s148 + $0x870] sm:$0xff]
                %439 = vst [vmem:[%s149 + $0x480] sm:$0xff] %v438
                %v440 = vld [vmem:[%s148 + $0x878] sm:$0xff]
                %441 = vst [vmem:[%s149 + $0x488] sm:$0xff] %v440
                %v442 = vld [vmem:[%s148 + $0x880] sm:$0xff]
                %443 = vst [vmem:[%s149 + $0x490] sm:$0xff] %v442
                %v444 = vld [vmem:[%s148 + $0x888] sm:$0xff]
                %445 = vst [vmem:[%s149 + $0x498] sm:$0xff] %v444
                %v446 = vld [vmem:[%s148 + $0x890] sm:$0xff]
                %447 = vst [vmem:[%s149 + $0x4a0] sm:$0xff] %v446
                %v448 = vld [vmem:[%s148 + $0x898] sm:$0xff]
                %449 = vst [vmem:[%s149 + $0x4a8] sm:$0xff] %v448
                %v450 = vld [vmem:[%s148 + $0x8a0] sm:$0xff]
                %451 = vst [vmem:[%s149 + $0x4b0] sm:$0xff] %v450
                %v452 = vld [vmem:[%s148 + $0x8a8] sm:$0xff]
                %453 = vst [vmem:[%s149 + $0x4b8] sm:$0xff] %v452
                %v454 = vld [vmem:[%s148 + $0x8b0] sm:$0xff]
                %455 = vst [vmem:[%s149 + $0x4c0] sm:$0xff] %v454
                %v456 = vld [vmem:[%s148 + $0x8b8] sm:$0xff]
                %457 = vst [vmem:[%s149 + $0x4c8] sm:$0xff] %v456
                %v458 = vld [vmem:[%s148 + $0x8c0] sm:$0xff]
                %459 = vst [vmem:[%s149 + $0x4d0] sm:$0xff] %v458
                %v460 = vld [vmem:[%s148 + $0x8c8] sm:$0xff]
                %461 = vst [vmem:[%s149 + $0x4d8] sm:$0xff] %v460
                %v462 = vld [vmem:[%s148 + $0x8d0] sm:$0xff]
                %463 = vst [vmem:[%s149 + $0x4e0] sm:$0xff] %v462
                %v464 = vld [vmem:[%s148 + $0x8d8] sm:$0xff]
                %465 = vst [vmem:[%s149 + $0x4e8] sm:$0xff] %v464
                %v466 = vld [vmem:[%s148 + $0x8e0] sm:$0xff]
                %467 = vst [vmem:[%s149 + $0x4f0] sm:$0xff] %v466
                %v468 = vld [vmem:[%s148 + $0x8e8] sm:$0xff]
                %469 = vst [vmem:[%s149 + $0x4f8] sm:$0xff] %v468
                %v470 = vld [vmem:[%s148 + $0x8f0] sm:$0xff]
                %471 = vst [vmem:[%s149 + $0x500] sm:$0xff] %v470
                %v472 = vld [vmem:[%s148 + $0x8f8] sm:$0xff]
                %473 = vst [vmem:[%s149 + $0x508] sm:$0xff] %v472
                %v474 = vld [vmem:[%s148 + $0x900] sm:$0xff]
                %475 = vst [vmem:[%s149 + $0x510] sm:$0xff] %v474
                %v476 = vld [vmem:[%s148 + $0x908] sm:$0xff]
                %477 = vst [vmem:[%s149 + $0x518] sm:$0xff] %v476
                %v478 = vld [vmem:[%s148 + $0x910] sm:$0xff]
                %479 = vst [vmem:[%s149 + $0x520] sm:$0xff] %v478
                %v480 = vld [vmem:[%s148 + $0x918] sm:$0xff]
                %481 = vst [vmem:[%s149 + $0x528] sm:$0xff] %v480
                %v482 = vld [vmem:[%s148 + $0x920] sm:$0xff]
                %483 = vst [vmem:[%s149 + $0x530] sm:$0xff] %v482
                %v484 = vld [vmem:[%s148 + $0x928] sm:$0xff]
                %485 = vst [vmem:[%s149 + $0x538] sm:$0xff] %v484
                %v486 = vld [vmem:[%s148 + $0x930] sm:$0xff]
                %487 = vst [vmem:[%s149 + $0x540] sm:$0xff] %v486
                %v488 = vld [vmem:[%s148 + $0x938] sm:$0xff]
                %489 = vst [vmem:[%s149 + $0x548] sm:$0xff] %v488
                %v490 = vld [vmem:[%s148 + $0x940] sm:$0xff]
                %491 = vst [vmem:[%s149 + $0x550] sm:$0xff] %v490
                %v492 = vld [vmem:[%s148 + $0x948] sm:$0xff]
                %493 = vst [vmem:[%s149 + $0x558] sm:$0xff] %v492
                %v494 = vld [vmem:[%s148 + $0x950] sm:$0xff]
                %495 = vst [vmem:[%s149 + $0x560] sm:$0xff] %v494
                %v496 = vld [vmem:[%s148 + $0x958] sm:$0xff]
                %497 = vst [vmem:[%s149 + $0x568] sm:$0xff] %v496
                %v498 = vld [vmem:[%s148 + $0x960] sm:$0xff]
                %499 = vst [vmem:[%s149 + $0x570] sm:$0xff] %v498
                %v500 = vld [vmem:[%s148 + $0x968] sm:$0xff]
                %501 = vst [vmem:[%s149 + $0x578] sm:$0xff] %v500
                %v502 = vld [vmem:[%s148 + $0x970] sm:$0xff]
                %503 = vst [vmem:[%s149 + $0x580] sm:$0xff] %v502
                %v504 = vld [vmem:[%s148 + $0x978] sm:$0xff]
                %505 = vst [vmem:[%s149 + $0x588] sm:$0xff] %v504
                %v506 = vld [vmem:[%s148 + $0x980] sm:$0xff]
                %507 = vst [vmem:[%s149 + $0x590] sm:$0xff] %v506
                %v508 = vld [vmem:[%s148 + $0x988] sm:$0xff]
                %509 = vst [vmem:[%s149 + $0x598] sm:$0xff] %v508
                %v510 = vld [vmem:[%s148 + $0x990] sm:$0xff]
                %511 = vst [vmem:[%s149 + $0x5a0] sm:$0xff] %v510
                %v512 = vld [vmem:[%s148 + $0x998] sm:$0xff]
                %513 = vst [vmem:[%s149 + $0x5a8] sm:$0xff] %v512
                %v514 = vld [vmem:[%s148 + $0x9a0] sm:$0xff]
                %515 = vst [vmem:[%s149 + $0x5b0] sm:$0xff] %v514
                %v516 = vld [vmem:[%s148 + $0x9a8] sm:$0xff]
                %517 = vst [vmem:[%s149 + $0x5b8] sm:$0xff] %v516
                %v518 = vld [vmem:[%s148 + $0x9b0] sm:$0xff]
                %519 = vst [vmem:[%s149 + $0x5c0] sm:$0xff] %v518
                %v520 = vld [vmem:[%s148 + $0x9b8] sm:$0xff]
                %521 = vst [vmem:[%s149 + $0x5c8] sm:$0xff] %v520
                %v522 = vld [vmem:[%s148 + $0x9c0] sm:$0xff]
                %523 = vst [vmem:[%s149 + $0x5d0] sm:$0xff] %v522
                %v524 = vld [vmem:[%s148 + $0x9c8] sm:$0xff]
                %525 = vst [vmem:[%s149 + $0x5d8] sm:$0xff] %v524
                %v526 = vld [vmem:[%s148 + $0x9d0] sm:$0xff]
                %527 = vst [vmem:[%s149 + $0x5e0] sm:$0xff] %v526
                %v528 = vld [vmem:[%s148 + $0xbd0] sm:$0xff]
                %529 = vst [vmem:[%s149 + $0x5e8] sm:$0xff] %v528
                %v530 = vld [vmem:[%s148 + $0xbd8] sm:$0xff]
                %531 = vst [vmem:[%s149 + $0x5f0] sm:$0xff] %v530
                %v532 = vld [vmem:[%s148 + $0xbe0] sm:$0xff]
                %533 = vst [vmem:[%s149 + $0x5f8] sm:$0xff] %v532
                %v534 = vld [vmem:[%s148 + $0xbe8] sm:$0xff]
                %535 = vst [vmem:[%s149 + $0x600] sm:$0xff] %v534
                %v536 = vld [vmem:[%s148 + $0xbf0] sm:$0xff]
                %537 = vst [vmem:[%s149 + $0x608] sm:$0xff] %v536
                %v538 = vld [vmem:[%s148 + $0xbf8] sm:$0xff]
                %539 = vst [vmem:[%s149 + $0x610] sm:$0xff] %v538
                %v540 = vld [vmem:[%s148 + $0xc00] sm:$0xff]
                %541 = vst [vmem:[%s149 + $0x618] sm:$0xff] %v540
                %v542 = vld [vmem:[%s148 + $0xc08] sm:$0xff]
                %543 = vst [vmem:[%s149 + $0x620] sm:$0xff] %v542
                %v544 = vld [vmem:[%s148 + $0xc10] sm:$0xff]
                %545 = vst [vmem:[%s149 + $0x628] sm:$0xff] %v544
                %v546 = vld [vmem:[%s148 + $0xc18] sm:$0xff]
                %547 = vst [vmem:[%s149 + $0x630] sm:$0xff] %v546
                %v548 = vld [vmem:[%s148 + $0xc20] sm:$0xff]
                %549 = vst [vmem:[%s149 + $0x638] sm:$0xff] %v548
                %v550 = vld [vmem:[%s148 + $0xc28] sm:$0xff]
                %551 = vst [vmem:[%s149 + $0x640] sm:$0xff] %v550
                %v552 = vld [vmem:[%s148 + $0xc30] sm:$0xff]
                %553 = vst [vmem:[%s149 + $0x648] sm:$0xff] %v552
                %v554 = vld [vmem:[%s148 + $0xc38] sm:$0xff]
                %555 = vst [vmem:[%s149 + $0x650] sm:$0xff] %v554
                %v556 = vld [vmem:[%s148 + $0xc40] sm:$0xff]
                %557 = vst [vmem:[%s149 + $0x658] sm:$0xff] %v556
                %v558 = vld [vmem:[%s148 + $0xc48] sm:$0xff]
                %559 = vst [vmem:[%s149 + $0x660] sm:$0xff] %v558
                %v560 = vld [vmem:[%s148 + $0xc50] sm:$0xff]
                %561 = vst [vmem:[%s149 + $0x668] sm:$0xff] %v560
                %v562 = vld [vmem:[%s148 + $0xc58] sm:$0xff]
                %563 = vst [vmem:[%s149 + $0x670] sm:$0xff] %v562
                %v564 = vld [vmem:[%s148 + $0xc60] sm:$0xff]
                %565 = vst [vmem:[%s149 + $0x678] sm:$0xff] %v564
                %v566 = vld [vmem:[%s148 + $0xc68] sm:$0xff]
                %567 = vst [vmem:[%s149 + $0x680] sm:$0xff] %v566
                %v568 = vld [vmem:[%s148 + $0xc70] sm:$0xff]
                %569 = vst [vmem:[%s149 + $0x688] sm:$0xff] %v568
                %v570 = vld [vmem:[%s148 + $0xc78] sm:$0xff]
                %571 = vst [vmem:[%s149 + $0x690] sm:$0xff] %v570
                %v572 = vld [vmem:[%s148 + $0xc80] sm:$0xff]
                %573 = vst [vmem:[%s149 + $0x698] sm:$0xff] %v572
                %v574 = vld [vmem:[%s148 + $0xc88] sm:$0xff]
                %575 = vst [vmem:[%s149 + $0x6a0] sm:$0xff] %v574
                %v576 = vld [vmem:[%s148 + $0xc90] sm:$0xff]
                %577 = vst [vmem:[%s149 + $0x6a8] sm:$0xff] %v576
                %v578 = vld [vmem:[%s148 + $0xc98] sm:$0xff]
                %579 = vst [vmem:[%s149 + $0x6b0] sm:$0xff] %v578
                %v580 = vld [vmem:[%s148 + $0xca0] sm:$0xff]
                %581 = vst [vmem:[%s149 + $0x6b8] sm:$0xff] %v580
                %v582 = vld [vmem:[%s148 + $0xca8] sm:$0xff]
                %583 = vst [vmem:[%s149 + $0x6c0] sm:$0xff] %v582
                %v584 = vld [vmem:[%s148 + $0xcb0] sm:$0xff]
                %585 = vst [vmem:[%s149 + $0x6c8] sm:$0xff] %v584
                %v586 = vld [vmem:[%s148 + $0xcb8] sm:$0xff]
                %587 = vst [vmem:[%s149 + $0x6d0] sm:$0xff] %v586
                %v588 = vld [vmem:[%s148 + $0xcc0] sm:$0xff]
                %589 = vst [vmem:[%s149 + $0x6d8] sm:$0xff] %v588
                %v590 = vld [vmem:[%s148 + $0xcc8] sm:$0xff]
                %591 = vst [vmem:[%s149 + $0x6e0] sm:$0xff] %v590
                %v592 = vld [vmem:[%s148 + $0xcd0] sm:$0xff]
                %593 = vst [vmem:[%s149 + $0x6e8] sm:$0xff] %v592
                %v594 = vld [vmem:[%s148 + $0xcd8] sm:$0xff]
                %595 = vst [vmem:[%s149 + $0x6f0] sm:$0xff] %v594
                %v596 = vld [vmem:[%s148 + $0xce0] sm:$0xff]
                %597 = vst [vmem:[%s149 + $0x6f8] sm:$0xff] %v596
                %v598 = vld [vmem:[%s148 + $0xce8] sm:$0xff]
                %599 = vst [vmem:[%s149 + $0x700] sm:$0xff] %v598
                %v600 = vld [vmem:[%s148 + $0xcf0] sm:$0xff]
                %601 = vst [vmem:[%s149 + $0x708] sm:$0xff] %v600
                %v602 = vld [vmem:[%s148 + $0xcf8] sm:$0xff]
                %603 = vst [vmem:[%s149 + $0x710] sm:$0xff] %v602
                %v604 = vld [vmem:[%s148 + $0xd00] sm:$0xff]
                %605 = vst [vmem:[%s149 + $0x718] sm:$0xff] %v604
                %v606 = vld [vmem:[%s148 + $0xd08] sm:$0xff]
                %607 = vst [vmem:[%s149 + $0x720] sm:$0xff] %v606
                %v608 = vld [vmem:[%s148 + $0xd10] sm:$0xff]
                %609 = vst [vmem:[%s149 + $0x728] sm:$0xff] %v608
                %v610 = vld [vmem:[%s148 + $0xd18] sm:$0xff]
                %611 = vst [vmem:[%s149 + $0x730] sm:$0xff] %v610
                %v612 = vld [vmem:[%s148 + $0xd20] sm:$0xff]
                %613 = vst [vmem:[%s149 + $0x738] sm:$0xff] %v612
                %v614 = vld [vmem:[%s148 + $0xd28] sm:$0xff]
                %615 = vst [vmem:[%s149 + $0x740] sm:$0xff] %v614
                %v616 = vld [vmem:[%s148 + $0xd30] sm:$0xff]
                %617 = vst [vmem:[%s149 + $0x748] sm:$0xff] %v616
                %v618 = vld [vmem:[%s148 + $0xd38] sm:$0xff]
                %619 = vst [vmem:[%s149 + $0x750] sm:$0xff] %v618
                %v620 = vld [vmem:[%s148 + $0xd40] sm:$0xff]
                %621 = vst [vmem:[%s149 + $0x758] sm:$0xff] %v620
                %v622 = vld [vmem:[%s148 + $0xd48] sm:$0xff]
                %623 = vst [vmem:[%s149 + $0x760] sm:$0xff] %v622
                %v624 = vld [vmem:[%s148 + $0xd50] sm:$0xff]
                %625 = vst [vmem:[%s149 + $0x768] sm:$0xff] %v624
                %v626 = vld [vmem:[%s148 + $0xd58] sm:$0xff]
                %627 = vst [vmem:[%s149 + $0x770] sm:$0xff] %v626
                %v628 = vld [vmem:[%s148 + $0xd60] sm:$0xff]
                %629 = vst [vmem:[%s149 + $0x778] sm:$0xff] %v628
                %v630 = vld [vmem:[%s148 + $0xd68] sm:$0xff]
                %631 = vst [vmem:[%s149 + $0x780] sm:$0xff] %v630
                %v632 = vld [vmem:[%s148 + $0xd70] sm:$0xff]
                %633 = vst [vmem:[%s149 + $0x788] sm:$0xff] %v632
                %v634 = vld [vmem:[%s148 + $0xd78] sm:$0xff]
                %635 = vst [vmem:[%s149 + $0x790] sm:$0xff] %v634
                %v636 = vld [vmem:[%s148 + $0xd80] sm:$0xff]
                %637 = vst [vmem:[%s149 + $0x798] sm:$0xff] %v636
                %v638 = vld [vmem:[%s148 + $0xd88] sm:$0xff]
                %639 = vst [vmem:[%s149 + $0x7a0] sm:$0xff] %v638
                %v640 = vld [vmem:[%s148 + $0xd90] sm:$0xff]
                %641 = vst [vmem:[%s149 + $0x7a8] sm:$0xff] %v640
                %v642 = vld [vmem:[%s148 + $0xd98] sm:$0xff]
                %643 = vst [vmem:[%s149 + $0x7b0] sm:$0xff] %v642
                %v644 = vld [vmem:[%s148 + $0xda0] sm:$0xff]
                %645 = vst [vmem:[%s149 + $0x7b8] sm:$0xff] %v644
                %v646 = vld [vmem:[%s148 + $0xda8] sm:$0xff]
                %647 = vst [vmem:[%s149 + $0x7c0] sm:$0xff] %v646
                %v648 = vld [vmem:[%s148 + $0xdb0] sm:$0xff]
                %649 = vst [vmem:[%s149 + $0x7c8] sm:$0xff] %v648
                %v650 = vld [vmem:[%s148 + $0xdb8] sm:$0xff]
                %651 = vst [vmem:[%s149 + $0x7d0] sm:$0xff] %v650
                %v652 = vld [vmem:[%s148 + $0xdc0] sm:$0xff]
                %653 = vst [vmem:[%s149 + $0x7d8] sm:$0xff] %v652
              $region41: #{two_heads_forward.4} parent=35 // loop_footer
                %s147 = sadd.s32 1, %s143
              $region42: #{two_heads_forward.4} parent=35 // loop_footer_branch
                %142 = sbr.rel target = $region38
              $region43: #{two_heads_forward.4} parent=35 // loop_exit
                _
            $region36: #{two_heads_forward.4} parent=31 // pred_fallthru
              _
            // Predicated region
            $region44: #{two_heads_forward.4} parent=31 // pred_check
              _
            $region45: #{two_heads_forward.4} parent=31 // pred_check_branch
              %655 = sbr.rel target = $region47
            $region46: #{two_heads_forward.4} parent=31 // pred_region
              _
            $region47: #{two_heads_forward.4} parent=31 // pred_fallthru
              _
          $region32: #{two_heads_forward.4} parent=27 // pred_fallthru
            _
          %656 = vnop
        $region28: #{two_heads_forward.4} parent=23 // pred_fallthru
          _
      $region24: #{two_heads_forward.4} parent=5 // pred_fallthru
        _
      %p657 = scmp.le.s32.totalorder 1, %s9
      %p658 = scmp.lt.s32.totalorder %s9, 3
      %p659 = pnand %p657, %p658
      %p660 = pneg %p659
      // Predicated region
      $region48: #{two_heads_forward.4} parent=5 // pred_check
        _
      $region49: #{two_heads_forward.4} parent=5 // pred_check_branch
        %662 = sbr.rel (%p659) target = $region51
      $region50: #{two_heads_forward.4} parent=5 // pred_region
        %s663 = ssub.s32 %s9, 1
        %s664 = sand.u32 %s64, 1
        %s665 = sand.u32 %s64, 1
        %s666 = smul.addr %s665, 2016
        %s667 = scalar_lea.vmem [#allocation2], %s666
        // Predicated region
        $region52: #{two_heads_forward.4} parent=50 // pred_check
          %p668 = pneg %p77
        $region53: #{two_heads_forward.4} parent=50 // pred_check_branch
          %670 = sbr.rel (%p668) target = $region55
        $region54: #{two_heads_forward.4} parent=50 // pred_region
          _
        $region55: #{two_heads_forward.4} parent=50 // pred_fallthru
          _
        %p671 = pneg %p30
        %p672 = pneg %p27
        %p673 = pneg %p51
        %p674 = pneg %p48
        %s675 = sand.u32 %s64, 1
        %s676 = sand.u32 %s64, 1
        %s677 = smul.addr %s676, 2016
        %s678 = scalar_lea.vmem [#allocation2], %s677
        %p679 = pneg %p77
        %p680 = pneg %p74
        %p681 = pneg %p103
        %p682 = pneg %p100
        %s683 = smul.u32 63, %s14
        %p684 = scmp.lt.s32.totalorder %s683, 125
        %s685 = scalar_select %p684, %s683, 125
        %s686 = smul.addr %s685, 8
        %s687 = scalar_lea.vmem %s3, %s686
        %s688 = smul.u32 63, %s14
        %s689 = smul.u32 63, %s14
        %p690 = scmp.lt.s32.totalorder %s689, 125
        %s691 = scalar_select %p690, %s689, 125
        %s692 = smul.addr %s691, 8
        %s693 = scalar_lea.vmem %s3, %s692
        %s694 = smul.u32 63, %s14
        %v695 = vld [vmem:[%s0] sm:$0xff]
        %v696 = vld [vmem:[%s667] sm:$0xff]
        %v697 = vld [vmem:[%s667 + $0x8] sm:$0xff]
        %v698 = vld [vmem:[%s667 + $0x10] sm:$0xff]
        %v699 = vld [vmem:[%s667 + $0x18] sm:$0xff]
        %v700 = vld [vmem:[%s667 + $0x20] sm:$0xff]
        %v701 = vld [vmem:[%s667 + $0x28] sm:$0xff]
        %v702 = vld [vmem:[%s667 + $0x30] sm:$0xff]
        %v703 = vld [vmem:[%s667 + $0x38] sm:$0xff]
        %v704 = vld [vmem:[%s667 + $0x40] sm:$0xff]
        %v705 = vld [vmem:[%s667 + $0x48] sm:$0xff]
        %v706 = vld [vmem:[%s667 + $0x50] sm:$0xff]
        %v707 = vld [vmem:[%s667 + $0x58] sm:$0xff]
        %v708 = vld [vmem:[%s667 + $0x60] sm:$0xff]
        %v709 = vld [vmem:[%s667 + $0x68] sm:$0xff]
        %v710 = vld [vmem:[%s667 + $0x70] sm:$0xff]
        %v711 = vld [vmem:[%s667 + $0x78] sm:$0xff]
        %v712 = vld [vmem:[%s667 + $0x80] sm:$0xff]
        %v713 = vld [vmem:[%s667 + $0x88] sm:$0xff]
        %v714 = vld [vmem:[%s667 + $0x90] sm:$0xff]
        %v715 = vld [vmem:[%s667 + $0x98] sm:$0xff]
        %v716 = vld [vmem:[%s667 + $0xa0] sm:$0xff]
        %v717 = vld [vmem:[%s667 + $0xa8] sm:$0xff]
        %v718 = vld [vmem:[%s667 + $0xb0] sm:$0xff]
        %v719 = vld [vmem:[%s667 + $0xb8] sm:$0xff]
        %v720 = vld [vmem:[%s667 + $0xc0] sm:$0xff]
        %v721 = vld [vmem:[%s667 + $0xc8] sm:$0xff]
        %v722 = vld [vmem:[%s667 + $0xd0] sm:$0xff]
        %v723 = vld [vmem:[%s667 + $0xd8] sm:$0xff]
        %v724 = vld [vmem:[%s667 + $0xe0] sm:$0xff]
        %v725 = vld [vmem:[%s667 + $0xe8] sm:$0xff]
        %v726 = vld [vmem:[%s667 + $0xf0] sm:$0xff]
        %v727 = vld [vmem:[%s667 + $0xf8] sm:$0xff]
        %v728 = vld [vmem:[%s667 + $0x100] sm:$0xff]
        %v729 = vld [vmem:[%s667 + $0x108] sm:$0xff]
        %v730 = vld [vmem:[%s667 + $0x110] sm:$0xff]
        %v731 = vld [vmem:[%s667 + $0x118] sm:$0xff]
        %v732 = vld [vmem:[%s667 + $0x120] sm:$0xff]
        %v733 = vld [vmem:[%s667 + $0x128] sm:$0xff]
        %v734 = vld [vmem:[%s667 + $0x130] sm:$0xff]
        %v735 = vld [vmem:[%s667 + $0x138] sm:$0xff]
        %v736 = vld [vmem:[%s667 + $0x140] sm:$0xff]
        %v737 = vld [vmem:[%s667 + $0x148] sm:$0xff]
        %v738 = vld [vmem:[%s667 + $0x150] sm:$0xff]
        %v739 = vld [vmem:[%s667 + $0x158] sm:$0xff]
        %v740 = vld [vmem:[%s667 + $0x160] sm:$0xff]
        %v741 = vld [vmem:[%s667 + $0x168] sm:$0xff]
        %v742 = vld [vmem:[%s667 + $0x170] sm:$0xff]
        %v743 = vld [vmem:[%s667 + $0x178] sm:$0xff]
        %v744 = vld [vmem:[%s667 + $0x180] sm:$0xff]
        %v745 = vld [vmem:[%s667 + $0x188] sm:$0xff]
        %v746 = vld [vmem:[%s667 + $0x190] sm:$0xff]
        %v747 = vld [vmem:[%s667 + $0x198] sm:$0xff]
        %v748 = vld [vmem:[%s667 + $0x1a0] sm:$0xff]
        %v749 = vld [vmem:[%s667 + $0x1a8] sm:$0xff]
        %v750 = vld [vmem:[%s667 + $0x1b0] sm:$0xff]
        %v751 = vld [vmem:[%s667 + $0x1b8] sm:$0xff]
        %v752 = vld [vmem:[%s667 + $0x1c0] sm:$0xff]
        %v753 = vld [vmem:[%s667 + $0x1c8] sm:$0xff]
        %v754 = vld [vmem:[%s667 + $0x1d0] sm:$0xff]
        %v755 = vld [vmem:[%s667 + $0x1d8] sm:$0xff]
        %v756 = vld [vmem:[%s667 + $0x1e0] sm:$0xff]
        %v757 = vld [vmem:[%s667 + $0x1e8] sm:$0xff]
        %v758 = vld [vmem:[%s667 + $0x1f0] sm:$0xff]
        %v759 = vld [vmem:[%s667 + $0x1f8] sm:$0xff]
        %v760 = vld [vmem:[%s667 + $0x200] sm:$0xff]
        %v761 = vld [vmem:[%s667 + $0x208] sm:$0xff]
        %v762 = vld [vmem:[%s667 + $0x210] sm:$0xff]
        %v763 = vld [vmem:[%s667 + $0x218] sm:$0xff]
        %v764 = vld [vmem:[%s667 + $0x220] sm:$0xff]
        %v765 = vld [vmem:[%s667 + $0x228] sm:$0xff]
        %v766 = vld [vmem:[%s667 + $0x230] sm:$0xff]
        %v767 = vld [vmem:[%s667 + $0x238] sm:$0xff]
        %v768 = vld [vmem:[%s667 + $0x240] sm:$0xff]
        %v769 = vld [vmem:[%s667 + $0x248] sm:$0xff]
        %v770 = vld [vmem:[%s667 + $0x250] sm:$0xff]
        %v771 = vld [vmem:[%s667 + $0x258] sm:$0xff]
        %v772 = vld [vmem:[%s667 + $0x260] sm:$0xff]
        %v773 = vld [vmem:[%s667 + $0x268] sm:$0xff]
        %v774 = vld [vmem:[%s667 + $0x270] sm:$0xff]
        %v775 = vld [vmem:[%s667 + $0x278] sm:$0xff]
        %v776 = vld [vmem:[%s667 + $0x280] sm:$0xff]
        %v777 = vld [vmem:[%s667 + $0x288] sm:$0xff]
        %v778 = vld [vmem:[%s667 + $0x290] sm:$0xff]
        %v779 = vld [vmem:[%s667 + $0x298] sm:$0xff]
        %v780 = vld [vmem:[%s667 + $0x2a0] sm:$0xff]
        %v781 = vld [vmem:[%s667 + $0x2a8] sm:$0xff]
        %v782 = vld [vmem:[%s667 + $0x2b0] sm:$0xff]
        %v783 = vld [vmem:[%s667 + $0x2b8] sm:$0xff]
        %v784 = vld [vmem:[%s667 + $0x2c0] sm:$0xff]
        %v785 = vld [vmem:[%s667 + $0x2c8] sm:$0xff]
        %v786 = vld [vmem:[%s667 + $0x2d0] sm:$0xff]
        %v787 = vld [vmem:[%s667 + $0x2d8] sm:$0xff]
        %v788 = vld [vmem:[%s667 + $0x2e0] sm:$0xff]
        %v789 = vld [vmem:[%s667 + $0x2e8] sm:$0xff]
        %v790 = vld [vmem:[%s667 + $0x2f0] sm:$0xff]
        %v791 = vld [vmem:[%s667 + $0x2f8] sm:$0xff]
        %v792 = vld [vmem:[%s667 + $0x300] sm:$0xff]
        %v793 = vld [vmem:[%s667 + $0x308] sm:$0xff]
        %v794 = vld [vmem:[%s667 + $0x310] sm:$0xff]
        %v795 = vld [vmem:[%s667 + $0x318] sm:$0xff]
        %v796 = vld [vmem:[%s667 + $0x320] sm:$0xff]
        %v797 = vld [vmem:[%s667 + $0x328] sm:$0xff]
        %v798 = vld [vmem:[%s667 + $0x330] sm:$0xff]
        %v799 = vld [vmem:[%s667 + $0x338] sm:$0xff]
        %v800 = vld [vmem:[%s667 + $0x340] sm:$0xff]
        %v801 = vld [vmem:[%s667 + $0x348] sm:$0xff]
        %v802 = vld [vmem:[%s667 + $0x350] sm:$0xff]
        %v803 = vld [vmem:[%s667 + $0x358] sm:$0xff]
        %v804 = vld [vmem:[%s667 + $0x360] sm:$0xff]
        %v805 = vld [vmem:[%s667 + $0x368] sm:$0xff]
        %v806 = vld [vmem:[%s667 + $0x370] sm:$0xff]
        %v807 = vld [vmem:[%s667 + $0x378] sm:$0xff]
        %v808 = vld [vmem:[%s667 + $0x380] sm:$0xff]
        %v809 = vld [vmem:[%s667 + $0x388] sm:$0xff]
        %v810 = vld [vmem:[%s667 + $0x390] sm:$0xff]
        %v811 = vld [vmem:[%s667 + $0x398] sm:$0xff]
        %v812 = vld [vmem:[%s667 + $0x3a0] sm:$0xff]
        %v813 = vld [vmem:[%s667 + $0x3a8] sm:$0xff]
        %v814 = vld [vmem:[%s667 + $0x3b0] sm:$0xff]
        %v815 = vld [vmem:[%s667 + $0x3b8] sm:$0xff]
        %v816 = vld [vmem:[%s667 + $0x3c0] sm:$0xff]
        %v817 = vld [vmem:[%s667 + $0x3c8] sm:$0xff]
        %v818 = vld [vmem:[%s667 + $0x3d0] sm:$0xff]
        %v819 = vld [vmem:[%s667 + $0x3d8] sm:$0xff]
        %v820 = vld [vmem:[%s667 + $0x3e0] sm:$0xff]
        %v821 = vld [vmem:[%s667 + $0x3e8] sm:$0xff]
        %v822 = vld [vmem:[%s667 + $0x3f0] sm:$0xff]
        %v823 = vld [vmem:[%s667 + $0x3f8] sm:$0xff]
        %v824 = vld [vmem:[%s667 + $0x400] sm:$0xff]
        %v825 = vld [vmem:[%s667 + $0x408] sm:$0xff]
        %v826 = vld [vmem:[%s667 + $0x410] sm:$0xff]
        %v827 = vld [vmem:[%s667 + $0x418] sm:$0xff]
        %v828 = vld [vmem:[%s667 + $0x420] sm:$0xff]
        %v829 = vld [vmem:[%s667 + $0x428] sm:$0xff]
        %v830 = vld [vmem:[%s667 + $0x430] sm:$0xff]
        %v831 = vld [vmem:[%s667 + $0x438] sm:$0xff]
        %v832 = vld [vmem:[%s667 + $0x440] sm:$0xff]
        %v833 = vld [vmem:[%s667 + $0x448] sm:$0xff]
        %v834 = vld [vmem:[%s667 + $0x450] sm:$0xff]
        %v835 = vld [vmem:[%s667 + $0x458] sm:$0xff]
        %v836 = vld [vmem:[%s667 + $0x460] sm:$0xff]
        %v837 = vld [vmem:[%s667 + $0x468] sm:$0xff]
        %v838 = vld [vmem:[%s667 + $0x470] sm:$0xff]
        %v839 = vld [vmem:[%s667 + $0x478] sm:$0xff]
        %v840 = vld [vmem:[%s667 + $0x480] sm:$0xff]
        %v841 = vld [vmem:[%s667 + $0x488] sm:$0xff]
        %v842 = vld [vmem:[%s667 + $0x490] sm:$0xff]
        %v843 = vld [vmem:[%s667 + $0x498] sm:$0xff]
        %v844 = vld [vmem:[%s667 + $0x4a0] sm:$0xff]
        %v845 = vld [vmem:[%s667 + $0x4a8] sm:$0xff]
        %v846 = vld [vmem:[%s667 + $0x4b0] sm:$0xff]
        %v847 = vld [vmem:[%s667 + $0x4b8] sm:$0xff]
        %v848 = vld [vmem:[%s667 + $0x4c0] sm:$0xff]
        %v849 = vld [vmem:[%s667 + $0x4c8] sm:$0xff]
        %v850 = vld [vmem:[%s667 + $0x4d0] sm:$0xff]
        %v851 = vld [vmem:[%s667 + $0x4d8] sm:$0xff]
        %v852 = vld [vmem:[%s667 + $0x4e0] sm:$0xff]
        %v853 = vld [vmem:[%s667 + $0x4e8] sm:$0xff]
        %v854 = vld [vmem:[%s667 + $0x4f0] sm:$0xff]
        %v855 = vld [vmem:[%s667 + $0x4f8] sm:$0xff]
        %v856 = vld [vmem:[%s667 + $0x500] sm:$0xff]
        %v857 = vld [vmem:[%s667 + $0x508] sm:$0xff]
        %v858 = vld [vmem:[%s667 + $0x510] sm:$0xff]
        %v859 = vld [vmem:[%s667 + $0x518] sm:$0xff]
        %v860 = vld [vmem:[%s667 + $0x520] sm:$0xff]
        %v861 = vld [vmem:[%s667 + $0x528] sm:$0xff]
        %v862 = vld [vmem:[%s667 + $0x530] sm:$0xff]
        %v863 = vld [vmem:[%s667 + $0x538] sm:$0xff]
        %v864 = vld [vmem:[%s667 + $0x540] sm:$0xff]
        %v865 = vld [vmem:[%s667 + $0x548] sm:$0xff]
        %v866 = vld [vmem:[%s667 + $0x550] sm:$0xff]
        %v867 = vld [vmem:[%s667 + $0x558] sm:$0xff]
        %v868 = vld [vmem:[%s667 + $0x560] sm:$0xff]
        %v869 = vld [vmem:[%s667 + $0x568] sm:$0xff]
        %v870 = vld [vmem:[%s667 + $0x570] sm:$0xff]
        %v871 = vld [vmem:[%s667 + $0x578] sm:$0xff]
        %v872 = vld [vmem:[%s667 + $0x580] sm:$0xff]
        %v873 = vld [vmem:[%s667 + $0x588] sm:$0xff]
        %v874 = vld [vmem:[%s667 + $0x590] sm:$0xff]
        %v875 = vld [vmem:[%s667 + $0x598] sm:$0xff]
        %v876 = vld [vmem:[%s667 + $0x5a0] sm:$0xff]
        %v877 = vld [vmem:[%s667 + $0x5a8] sm:$0xff]
        %v878 = vld [vmem:[%s667 + $0x5b0] sm:$0xff]
        %v879 = vld [vmem:[%s667 + $0x5b8] sm:$0xff]
        %v880 = vld [vmem:[%s667 + $0x5c0] sm:$0xff]
        %v881 = vld [vmem:[%s667 + $0x5c8] sm:$0xff]
        %v882 = vld [vmem:[%s667 + $0x5d0] sm:$0xff]
        %v883 = vld [vmem:[%s667 + $0x5d8] sm:$0xff]
        %v884 = vld [vmem:[%s667 + $0x5e0] sm:$0xff]
        %v885 = vld [vmem:[%s667 + $0x5e8] sm:$0x1]
        %v886 = vld [vmem:[%s667 + $0x5f0] sm:$0x1]
        %v887 = vld [vmem:[%s667 + $0x5f8] sm:$0x1]
        %v888 = vld [vmem:[%s667 + $0x600] sm:$0x1]
        %v889 = vld [vmem:[%s667 + $0x608] sm:$0x1]
        %v890 = vld [vmem:[%s667 + $0x610] sm:$0x1]
        %v891 = vld [vmem:[%s667 + $0x618] sm:$0x1]
        %v892 = vld [vmem:[%s667 + $0x620] sm:$0x1]
        %v893 = vld [vmem:[%s667 + $0x628] sm:$0x1]
        %v894 = vld [vmem:[%s667 + $0x630] sm:$0x1]
        %v895 = vld [vmem:[%s667 + $0x638] sm:$0x1]
        %v896 = vld [vmem:[%s667 + $0x640] sm:$0x1]
        %v897 = vld [vmem:[%s667 + $0x648] sm:$0x1]
        %v898 = vld [vmem:[%s667 + $0x650] sm:$0x1]
        %v899 = vld [vmem:[%s667 + $0x658] sm:$0x1]
        %v900 = vld [vmem:[%s667 + $0x660] sm:$0x1]
        %v901 = vld [vmem:[%s667 + $0x668] sm:$0x1]
        %v902 = vld [vmem:[%s667 + $0x670] sm:$0x1]
        %v903 = vld [vmem:[%s667 + $0x678] sm:$0x1]
        %v904 = vld [vmem:[%s667 + $0x680] sm:$0x1]
        %v905 = vld [vmem:[%s667 + $0x688] sm:$0x1]
        %v906 = vld [vmem:[%s667 + $0x690] sm:$0x1]
        %v907 = vld [vmem:[%s667 + $0x698] sm:$0x1]
        %v908 = vld [vmem:[%s667 + $0x6a0] sm:$0x1]
        %v909 = vld [vmem:[%s667 + $0x6a8] sm:$0x1]
        %v910 = vld [vmem:[%s667 + $0x6b0] sm:$0x1]
        %v911 = vld [vmem:[%s667 + $0x6b8] sm:$0x1]
        %v912 = vld [vmem:[%s667 + $0x6c0] sm:$0x1]
        %v913 = vld [vmem:[%s667 + $0x6c8] sm:$0x1]
        %v914 = vld [vmem:[%s667 + $0x6d0] sm:$0x1]
        %v915 = vld [vmem:[%s667 + $0x6d8] sm:$0x1]
        %v916 = vld [vmem:[%s667 + $0x6e0] sm:$0x1]
        %v917 = vld [vmem:[%s667 + $0x6e8] sm:$0x1]
        %v918 = vld [vmem:[%s667 + $0x6f0] sm:$0x1]
        %v919 = vld [vmem:[%s667 + $0x6f8] sm:$0x1]
        %v920 = vld [vmem:[%s667 + $0x700] sm:$0x1]
        %v921 = vld [vmem:[%s667 + $0x708] sm:$0x1]
        %v922 = vld [vmem:[%s667 + $0x710] sm:$0x1]
        %v923 = vld [vmem:[%s667 + $0x718] sm:$0x1]
        %v924 = vld [vmem:[%s667 + $0x720] sm:$0x1]
        %v925 = vld [vmem:[%s667 + $0x728] sm:$0x1]
        %v926 = vld [vmem:[%s667 + $0x730] sm:$0x1]
        %v927 = vld [vmem:[%s667 + $0x738] sm:$0x1]
        %v928 = vld [vmem:[%s667 + $0x740] sm:$0x1]
        %v929 = vld [vmem:[%s667 + $0x748] sm:$0x1]
        %v930 = vld [vmem:[%s667 + $0x750] sm:$0x1]
        %v931 = vld [vmem:[%s667 + $0x758] sm:$0x1]
        %v932 = vld [vmem:[%s667 + $0x760] sm:$0x1]
        %v933 = vld [vmem:[%s667 + $0x768] sm:$0x1]
        %v934 = vld [vmem:[%s667 + $0x770] sm:$0x1]
        %v935 = vld [vmem:[%s667 + $0x778] sm:$0x1]
        %v936 = vld [vmem:[%s667 + $0x780] sm:$0x1]
        %v937 = vld [vmem:[%s667 + $0x788] sm:$0x1]
        %v938 = vld [vmem:[%s667 + $0x790] sm:$0x1]
        %v939 = vld [vmem:[%s667 + $0x798] sm:$0x1]
        %v940 = vld [vmem:[%s667 + $0x7a0] sm:$0x1]
        %v941 = vld [vmem:[%s667 + $0x7a8] sm:$0x1]
        %v942 = vld [vmem:[%s667 + $0x7b0] sm:$0x1]
        %v943 = vld [vmem:[%s667 + $0x7b8] sm:$0x1]
        %v944 = vld [vmem:[%s667 + $0x7c0] sm:$0x1]
        %v945 = vld [vmem:[%s667 + $0x7c8] sm:$0x1]
        %v946 = vld [vmem:[%s667 + $0x7d0] sm:$0x1]
        %v947 = vld [vmem:[%s667 + $0x7d8] sm:$0x1]
        %v948 = vld [vmem:[%s1] sm:$0xff]
        %950 = vset.pattern.permute.xlu0 0
        %951 = vperm.xlu0 %950, %v948
        %v952 = vpop.permute.xlu0 %951
        %vm954 = vcmask 203776
        %v956 = vsel %vm954, %v695, 0
        %vm958 = vcmask 1040384
        %v960 = vsel %vm958, %v885, 0
        %v963 = vsel %vm958, %v886, 0
        %v966 = vsel %vm958, %v887, 0
        %v969 = vsel %vm958, %v888, 0
        %v972 = vsel %vm958, %v889, 0
        %v975 = vsel %vm958, %v890, 0
        %v978 = vsel %vm958, %v891, 0
        %v981 = vsel %vm958, %v892, 0
        %v984 = vsel %vm958, %v893, 0
        %v987 = vsel %vm958, %v894, 0
        %v990 = vsel %vm958, %v895, 0
        %v993 = vsel %vm958, %v896, 0
        %v996 = vsel %vm958, %v897, 0
        %v999 = vsel %vm958, %v898, 0
        %v1002 = vsel %vm958, %v899, 0
        %v1005 = vsel %vm958, %v900, 0
        %v1008 = vsel %vm958, %v901, 0
        %v1011 = vsel %vm958, %v902, 0
        %v1014 = vsel %vm958, %v903, 0
        %v1017 = vsel %vm958, %v904, 0
        %v1020 = vsel %vm958, %v905, 0
        %v1023 = vsel %vm958, %v906, 0
        %v1026 = vsel %vm958, %v907, 0
        %v1029 = vsel %vm958, %v908, 0
        %v1032 = vsel %vm958, %v909, 0
        %v1035 = vsel %vm958, %v910, 0
        %v1038 = vsel %vm958, %v911, 0
        %v1041 = vsel %vm958, %v912, 0
        %v1044 = vsel %vm958, %v913, 0
        %v1047 = vsel %vm958, %v914, 0
        %v1050 = vsel %vm958, %v915, 0
        %v1053 = vsel %vm958, %v916, 0
        %v1056 = vsel %vm958, %v917, 0
        %v1059 = vsel %vm958, %v918, 0
        %v1062 = vsel %vm958, %v919, 0
        %v1065 = vsel %vm958, %v920, 0
        %v1068 = vsel %vm958, %v921, 0
        %v1071 = vsel %vm958, %v922, 0
        %v1074 = vsel %vm958, %v923, 0
        %v1077 = vsel %vm958, %v924, 0
        %v1080 = vsel %vm958, %v925, 0
        %v1083 = vsel %vm958, %v926, 0
        %v1086 = vsel %vm958, %v927, 0
        %v1089 = vsel %vm958, %v928, 0
        %v1092 = vsel %vm958, %v929, 0
        %v1095 = vsel %vm958, %v930, 0
        %v1098 = vsel %vm958, %v931, 0
        %v1101 = vsel %vm958, %v932, 0
        %v1104 = vsel %vm958, %v933, 0
        %v1107 = vsel %vm958, %v934, 0
        %v1110 = vsel %vm958, %v935, 0
        %v1113 = vsel %vm958, %v936, 0
        %v1116 = vsel %vm958, %v937, 0
        %v1119 = vsel %vm958, %v938, 0
        %v1122 = vsel %vm958, %v939, 0
        %v1125 = vsel %vm958, %v940, 0
        %v1128 = vsel %vm958, %v941, 0
        %v1131 = vsel %vm958, %v942, 0
        %v1134 = vsel %vm958, %v943, 0
        %v1137 = vsel %vm958, %v944, 0
        %v1140 = vsel %vm958, %v945, 0
        %v1143 = vsel %vm958, %v946, 0
        %v1146 = vsel %vm958, %v947, 0
        %1148 = vmatprep.subr.mxu0 0.0
        %1149 = vmatpush1.msra.mxu0 0.0
        %1150 = vmatprep.subr.mxu0 0.0
        %1151 = vmatpush1.msra.mxu0 0.0
        %1152 = vmatprep.subr.mxu0 0.0
        %1153 = vmatpush1.msra.mxu0 0.0
        %1154 = vmatprep.subr.mxu0 0.0
        %1155 = vmatpush1.msra.mxu0 0.0
        %1156 = vmatprep.subr.mxu0 0.0
        %1157 = vmatpush1.msra.mxu0 0.0
        %1158 = vmatprep.subr.mxu0 0.0
        %1159 = vmatpush1.msra.mxu0 0.0
        %1160 = vmatprep.subr.mxu0 0.0
        %1161 = vmatpush1.msra.mxu0 0.0
        %1162 = vmatprep.subr.mxu0 0.0
        %1163 = vmatpush1.msra.mxu0 0.0
        %1164 = vmatprep.subr.mxu0 0.0
        %1165 = vmatpush1.msra.mxu0 0.0
        %1166 = vmatprep.subr.mxu0 0.0
        %1167 = vmatpush1.msra.mxu0 0.0
        %1168 = vmatprep.subr.mxu0 0.0
        %1169 = vmatpush1.msra.mxu0 0.0
        %1170 = vmatprep.subr.mxu0 0.0
        %1171 = vmatpush1.msra.mxu0 0.0
        %1172 = vmatprep.subr.mxu0 %v963
        %1173 = vmatpush1.msra.mxu0 %v960
        %1174 = vmatprep.subr.mxu0 %v823
        %1175 = vmatpush1.msra.mxu0 %v822
        %1176 = vmatprep.subr.mxu0 %v760
        %1177 = vmatpush1.msra.mxu0 %v759
        %1178 = vmatprep.subr.mxu0 %v697
        %1179 = vmatpush1.msra.mxu0 %v696
        %1180 = vmatprep.subr.mxu0 0.0
        %1181 = vmatpush2.msra.mxu0 0.0
        %1182 = vmatprep.subr.mxu0 0.0
        %1183 = vmatpush2.msra.mxu0 0.0
        %1184 = vmatprep.subr.mxu0 0.0
        %1185 = vmatpush2.msra.mxu0 0.0
        %1186 = vmatprep.subr.mxu0 0.0
        %1187 = vmatpush2.msra.mxu0 0.0
        %1188 = vmatprep.subr.mxu0 0.0
        %1189 = vmatpush2.msra.mxu0 0.0
        %1190 = vmatprep.subr.mxu0 0.0
        %1191 = vmatpush2.msra.mxu0 0.0
        %1192 = vmatprep.subr.mxu0 0.0
        %1193 = vmatpush2.msra.mxu0 0.0
        %1194 = vmatprep.subr.mxu0 0.0
        %1195 = vmatpush2.msra.mxu0 0.0
        %1196 = vmatprep.subr.mxu0 0.0
        %1197 = vmatpush2.msra.mxu0 0.0
        %1198 = vmatprep.subr.mxu0 0.0
        %1199 = vmatpush2.msra.mxu0 0.0
        %1200 = vmatprep.subr.mxu0 0.0
        %1201 = vmatpush2.msra.mxu0 0.0
        %1202 = vmatprep.subr.mxu0 0.0
        %1203 = vmatpush2.msra.mxu0 0.0
        %1204 = vmatprep.subr.mxu0 0.0
        %1205 = vmatpush2.msra.mxu0 0.0
        %1206 = vmatprep.subr.mxu0 0.0
        %1207 = vmatpush2.msra.mxu0 0.0
        %1208 = vmatprep.subr.mxu0 0.0
        %1209 = vmatpush2.msra.mxu0 0.0
        %1210 = vmatprep.subr.mxu0 0.0
        %1211 = vmatpush2.msra.mxu0 0.0
        %1212 = vmatprep.mubr.f32.mxu0 0.0
        %1213 = vmatmul.mubr.f32.gmra.mxu0 %v956
        %v1214 = vpop.f32.mrf.mxu0
        %v1215 = vadd.f32 %v952, %v1214
        %v1216 = vpop.f32.mrf.mxu0
        %v1217 = vadd.f32 %v952, %v1216
        %1218 = vdwg.mxu0
        %1219 = vmatprep.subr.mxu0 0.0
        %1220 = vmatpush1.msra.mxu0 0.0
        %1221 = vmatprep.subr.mxu0 0.0
        %1222 = vmatpush1.msra.mxu0 0.0
        %1223 = vmatprep.subr.mxu0 0.0
        %1224 = vmatpush1.msra.mxu0 0.0
        %1225 = vmatprep.subr.mxu0 0.0
        %1226 = vmatpush1.msra.mxu0 0.0
        %1227 = vmatprep.subr.mxu0 0.0
        %1228 = vmatpush1.msra.mxu0 0.0
        %1229 = vmatprep.subr.mxu0 0.0
        %1230 = vmatpush1.msra.mxu0 0.0
        %1231 = vmatprep.subr.mxu0 0.0
        %1232 = vmatpush1.msra.mxu0 0.0
        %1233 = vmatprep.subr.mxu0 0.0
        %1234 = vmatpush1.msra.mxu0 0.0
        %1235 = vmatprep.subr.mxu0 0.0
        %1236 = vmatpush1.msra.mxu0 0.0
        %1237 = vmatprep.subr.mxu0 0.0
        %1238 = vmatpush1.msra.mxu0 0.0
        %1239 = vmatprep.subr.mxu0 0.0
        %1240 = vmatpush1.msra.mxu0 0.0
        %1241 = vmatprep.subr.mxu0 0.0
        %1242 = vmatpush1.msra.mxu0 0.0
        %1243 = vmatprep.subr.mxu0 %v969
        %1244 = vmatpush1.msra.mxu0 %v966
        %1245 = vmatprep.subr.mxu0 %v825
        %1246 = vmatpush1.msra.mxu0 %v824
        %1247 = vmatprep.subr.mxu0 %v762
        %1248 = vmatpush1.msra.mxu0 %v761
        %1249 = vmatprep.subr.mxu0 %v699
        %1250 = vmatpush1.msra.mxu0 %v698
        %1251 = vmatprep.subr.mxu0 0.0
        %1252 = vmatpush2.msra.mxu0 0.0
        %1253 = vmatprep.subr.mxu0 0.0
        %1254 = vmatpush2.msra.mxu0 0.0
        %1255 = vmatprep.subr.mxu0 0.0
        %1256 = vmatpush2.msra.mxu0 0.0
        %1257 = vmatprep.subr.mxu0 0.0
        %1258 = vmatpush2.msra.mxu0 0.0
        %1259 = vmatprep.subr.mxu0 0.0
        %1260 = vmatpush2.msra.mxu0 0.0
        %1261 = vmatprep.subr.mxu0 0.0
        %1262 = vmatpush2.msra.mxu0 0.0
        %1263 = vmatprep.subr.mxu0 0.0
        %1264 = vmatpush2.msra.mxu0 0.0
        %1265 = vmatprep.subr.mxu0 0.0
        %1266 = vmatpush2.msra.mxu0 0.0
        %1267 = vmatprep.subr.mxu0 0.0
        %1268 = vmatpush2.msra.mxu0 0.0
        %1269 = vmatprep.subr.mxu0 0.0
        %1270 = vmatpush2.msra.mxu0 0.0
        %1271 = vmatprep.subr.mxu0 0.0
        %1272 = vmatpush2.msra.mxu0 0.0
        %1273 = vmatprep.subr.mxu0 0.0
        %1274 = vmatpush2.msra.mxu0 0.0
        %1275 = vmatprep.subr.mxu0 0.0
        %1276 = vmatpush2.msra.mxu0 0.0
        %1277 = vmatprep.subr.mxu0 0.0
        %1278 = vmatpush2.msra.mxu0 0.0
        %1279 = vmatprep.subr.mxu0 0.0
        %1280 = vmatpush2.msra.mxu0 0.0
        %1281 = vmatprep.subr.mxu0 0.0
        %1282 = vmatpush2.msra.mxu0 0.0
        %1283 = vmatprep.mubr.f32.mxu0 0.0
        %1284 = vmatmul.mubr.f32.gmra.mxu0 %v956
        %v1285 = vpop.f32.mrf.mxu0
        %v1286 = vadd.f32 %v952, %v1285
        %v1287 = vpop.f32.mrf.mxu0
        %v1288 = vadd.f32 %v952, %v1287
        %1289 = vdwg.mxu0
        %1290 = vmatprep.subr.mxu0 0.0
        %1291 = vmatpush1.msra.mxu0 0.0
        %1292 = vmatprep.subr.mxu0 0.0
        %1293 = vmatpush1.msra.mxu0 0.0
        %1294 = vmatprep.subr.mxu0 0.0
        %1295 = vmatpush1.msra.mxu0 0.0
        %1296 = vmatprep.subr.mxu0 0.0
        %1297 = vmatpush1.msra.mxu0 0.0
        %1298 = vmatprep.subr.mxu0 0.0
        %1299 = vmatpush1.msra.mxu0 0.0
        %1300 = vmatprep.subr.mxu0 0.0
        %1301 = vmatpush1.msra.mxu0 0.0
        %1302 = vmatprep.subr.mxu0 0.0
        %1303 = vmatpush1.msra.mxu0 0.0
        %1304 = vmatprep.subr.mxu0 0.0
        %1305 = vmatpush1.msra.mxu0 0.0
        %1306 = vmatprep.subr.mxu0 0.0
        %1307 = vmatpush1.msra.mxu0 0.0
        %1308 = vmatprep.subr.mxu0 0.0
        %1309 = vmatpush1.msra.mxu0 0.0
        %1310 = vmatprep.subr.mxu0 0.0
        %1311 = vmatpush1.msra.mxu0 0.0
        %1312 = vmatprep.subr.mxu0 0.0
        %1313 = vmatpush1.msra.mxu0 0.0
        %1314 = vmatprep.subr.mxu0 %v975
        %1315 = vmatpush1.msra.mxu0 %v972
        %1316 = vmatprep.subr.mxu0 %v827
        %1317 = vmatpush1.msra.mxu0 %v826
        %1318 = vmatprep.subr.mxu0 %v764
        %1319 = vmatpush1.msra.mxu0 %v763
        %1320 = vmatprep.subr.mxu0 %v701
        %1321 = vmatpush1.msra.mxu0 %v700
        %1322 = vmatprep.subr.mxu0 0.0
        %1323 = vmatpush2.msra.mxu0 0.0
        %1324 = vmatprep.subr.mxu0 0.0
        %1325 = vmatpush2.msra.mxu0 0.0
        %1326 = vmatprep.subr.mxu0 0.0
        %1327 = vmatpush2.msra.mxu0 0.0
        %1328 = vmatprep.subr.mxu0 0.0
        %1329 = vmatpush2.msra.mxu0 0.0
        %1330 = vmatprep.subr.mxu0 0.0
        %1331 = vmatpush2.msra.mxu0 0.0
        %1332 = vmatprep.subr.mxu0 0.0
        %1333 = vmatpush2.msra.mxu0 0.0
        %1334 = vmatprep.subr.mxu0 0.0
        %1335 = vmatpush2.msra.mxu0 0.0
        %1336 = vmatprep.subr.mxu0 0.0
        %1337 = vmatpush2.msra.mxu0 0.0
        %1338 = vmatprep.subr.mxu0 0.0
        %1339 = vmatpush2.msra.mxu0 0.0
        %1340 = vmatprep.subr.mxu0 0.0
        %1341 = vmatpush2.msra.mxu0 0.0
        %1342 = vmatprep.subr.mxu0 0.0
        %1343 = vmatpush2.msra.mxu0 0.0
        %1344 = vmatprep.subr.mxu0 0.0
        %1345 = vmatpush2.msra.mxu0 0.0
        %1346 = vmatprep.subr.mxu0 0.0
        %1347 = vmatpush2.msra.mxu0 0.0
        %1348 = vmatprep.subr.mxu0 0.0
        %1349 = vmatpush2.msra.mxu0 0.0
        %1350 = vmatprep.subr.mxu0 0.0
        %1351 = vmatpush2.msra.mxu0 0.0
        %1352 = vmatprep.subr.mxu0 0.0
        %1353 = vmatpush2.msra.mxu0 0.0
        %1354 = vmatprep.mubr.f32.mxu0 0.0
        %1355 = vmatmul.mubr.f32.gmra.mxu0 %v956
        %v1356 = vpop.f32.mrf.mxu0
        %v1357 = vadd.f32 %v952, %v1356
        %v1358 = vpop.f32.mrf.mxu0
        %v1359 = vadd.f32 %v952, %v1358
        %1360 = vdwg.mxu0
        %1361 = vmatprep.subr.mxu0 0.0
        %1362 = vmatpush1.msra.mxu0 0.0
        %1363 = vmatprep.subr.mxu0 0.0
        %1364 = vmatpush1.msra.mxu0 0.0
        %1365 = vmatprep.subr.mxu0 0.0
        %1366 = vmatpush1.msra.mxu0 0.0
        %1367 = vmatprep.subr.mxu0 0.0
        %1368 = vmatpush1.msra.mxu0 0.0
        %1369 = vmatprep.subr.mxu0 0.0
        %1370 = vmatpush1.msra.mxu0 0.0
        %1371 = vmatprep.subr.mxu0 0.0
        %1372 = vmatpush1.msra.mxu0 0.0
        %1373 = vmatprep.subr.mxu0 0.0
        %1374 = vmatpush1.msra.mxu0 0.0
        %1375 = vmatprep.subr.mxu0 0.0
        %1376 = vmatpush1.msra.mxu0 0.0
        %1377 = vmatprep.subr.mxu0 0.0
        %1378 = vmatpush1.msra.mxu0 0.0
        %1379 = vmatprep.subr.mxu0 0.0
        %1380 = vmatpush1.msra.mxu0 0.0
        %1381 = vmatprep.subr.mxu0 0.0
        %1382 = vmatpush1.msra.mxu0 0.0
        %1383 = vmatprep.subr.mxu0 0.0
        %1384 = vmatpush1.msra.mxu0 0.0
        %1385 = vmatprep.subr.mxu0 %v981
        %1386 = vmatpush1.msra.mxu0 %v978
        %1387 = vmatprep.subr.mxu0 %v829
        %1388 = vmatpush1.msra.mxu0 %v828
        %1389 = vmatprep.subr.mxu0 %v766
        %1390 = vmatpush1.msra.mxu0 %v765
        %1391 = vmatprep.subr.mxu0 %v703
        %1392 = vmatpush1.msra.mxu0 %v702
        %1393 = vmatprep.subr.mxu0 0.0
        %1394 = vmatpush2.msra.mxu0 0.0
        %1395 = vmatprep.subr.mxu0 0.0
        %1396 = vmatpush2.msra.mxu0 0.0
        %1397 = vmatprep.subr.mxu0 0.0
        %1398 = vmatpush2.msra.mxu0 0.0
        %1399 = vmatprep.subr.mxu0 0.0
        %1400 = vmatpush2.msra.mxu0 0.0
        %1401 = vmatprep.subr.mxu0 0.0
        %1402 = vmatpush2.msra.mxu0 0.0
        %1403 = vmatprep.subr.mxu0 0.0
        %1404 = vmatpush2.msra.mxu0 0.0
        %1405 = vmatprep.subr.mxu0 0.0
        %1406 = vmatpush2.msra.mxu0 0.0
        %1407 = vmatprep.subr.mxu0 0.0
        %1408 = vmatpush2.msra.mxu0 0.0
        %1409 = vmatprep.subr.mxu0 0.0
        %1410 = vmatpush2.msra.mxu0 0.0
        %1411 = vmatprep.subr.mxu0 0.0
        %1412 = vmatpush2.msra.mxu0 0.0
        %1413 = vmatprep.subr.mxu0 0.0
        %1414 = vmatpush2.msra.mxu0 0.0
        %1415 = vmatprep.subr.mxu0 0.0
        %1416 = vmatpush2.msra.mxu0 0.0
        %1417 = vmatprep.subr.mxu0 0.0
        %1418 = vmatpush2.msra.mxu0 0.0
        %1419 = vmatprep.subr.mxu0 0.0
        %1420 = vmatpush2.msra.mxu0 0.0
        %1421 = vmatprep.subr.mxu0 0.0
        %1422 = vmatpush2.msra.mxu0 0.0
        %1423 = vmatprep.subr.mxu0 0.0
        %1424 = vmatpush2.msra.mxu0 0.0
        %1425 = vmatprep.mubr.f32.mxu0 0.0
        %1426 = vmatmul.mubr.f32.gmra.mxu0 %v956
        %v1427 = vpop.f32.mrf.mxu0
        %v1428 = vadd.f32 %v952, %v1427
        %v1429 = vpop.f32.mrf.mxu0
        %v1430 = vadd.f32 %v952, %v1429
        %1431 = vdwg.mxu0
        %1432 = vmatprep.subr.mxu0 0.0
        %1433 = vmatpush1.msra.mxu0 0.0
        %1434 = vmatprep.subr.mxu0 0.0
        %1435 = vmatpush1.msra.mxu0 0.0
        %1436 = vmatprep.subr.mxu0 0.0
        %1437 = vmatpush1.msra.mxu0 0.0
        %1438 = vmatprep.subr.mxu0 0.0
        %1439 = vmatpush1.msra.mxu0 0.0
        %1440 = vmatprep.subr.mxu0 0.0
        %1441 = vmatpush1.msra.mxu0 0.0
        %1442 = vmatprep.subr.mxu0 0.0
        %1443 = vmatpush1.msra.mxu0 0.0
        %1444 = vmatprep.subr.mxu0 0.0
        %1445 = vmatpush1.msra.mxu0 0.0
        %1446 = vmatprep.subr.mxu0 0.0
        %1447 = vmatpush1.msra.mxu0 0.0
        %1448 = vmatprep.subr.mxu0 0.0
        %1449 = vmatpush1.msra.mxu0 0.0
        %1450 = vmatprep.subr.mxu0 0.0
        %1451 = vmatpush1.msra.mxu0 0.0
        %1452 = vmatprep.subr.mxu0 0.0
        %1453 = vmatpush1.msra.mxu0 0.0
        %1454 = vmatprep.subr.mxu0 0.0
        %1455 = vmatpush1.msra.mxu0 0.0
        %1456 = vmatprep.subr.mxu0 %v987
        %1457 = vmatpush1.msra.mxu0 %v984
        %1458 = vmatprep.subr.mxu0 %v831
        %1459 = vmatpush1.msra.mxu0 %v830
        %1460 = vmatprep.subr.mxu0 %v768
        %1461 = vmatpush1.msra.mxu0 %v767
        %1462 = vmatprep.subr.mxu0 %v705
        %1463 = vmatpush1.msra.mxu0 %v704
        %1464 = vmatprep.subr.mxu0 0.0
        %1465 = vmatpush2.msra.mxu0 0.0
        %1466 = vmatprep.subr.mxu0 0.0
        %1467 = vmatpush2.msra.mxu0 0.0
        %1468 = vmatprep.subr.mxu0 0.0
        %1469 = vmatpush2.msra.mxu0 0.0
        %1470 = vmatprep.subr.mxu0 0.0
        %1471 = vmatpush2.msra.mxu0 0.0
        %1472 = vmatprep.subr.mxu0 0.0
        %1473 = vmatpush2.msra.mxu0 0.0
        %1474 = vmatprep.subr.mxu0 0.0
        %1475 = vmatpush2.msra.mxu0 0.0
        %1476 = vmatprep.subr.mxu0 0.0
        %1477 = vmatpush2.msra.mxu0 0.0
        %1478 = vmatprep.subr.mxu0 0.0
        %1479 = vmatpush2.msra.mxu0 0.0
        %1480 = vmatprep.subr.mxu0 0.0
        %1481 = vmatpush2.msra.mxu0 0.0
        %1482 = vmatprep.subr.mxu0 0.0
        %1483 = vmatpush2.msra.mxu0 0.0
        %1484 = vmatprep.subr.mxu0 0.0
        %1485 = vmatpush2.msra.mxu0 0.0
        %1486 = vmatprep.subr.mxu0 0.0
        %1487 = vmatpush2.msra.mxu0 0.0
        %1488 = vmatprep.subr.mxu0 0.0
        %1489 = vmatpush2.msra.mxu0 0.0
        %1490 = vmatprep.subr.mxu0 0.0
        %1491 = vmatpush2.msra.mxu0 0.0
        %1492 = vmatprep.subr.mxu0 0.0
        %1493 = vmatpush2.msra.mxu0 0.0
        %1494 = vmatprep.subr.mxu0 0.0
        %1495 = vmatpush2.msra.mxu0 0.0
        %1496 = vmatprep.mubr.f32.mxu0 0.0
        %1497 = vmatmul.mubr.f32.gmra.mxu0 %v956
        %v1498 = vpop.f32.mrf.mxu0
        %v1499 = vadd.f32 %v952, %v1498
        %v1500 = vpop.f32.mrf.mxu0
        %v1501 = vadd.f32 %v952, %v1500
        %1502 = vdwg.mxu0
        %1503 = vmatprep.subr.mxu0 0.0
        %1504 = vmatpush1.msra.mxu0 0.0
        %1505 = vmatprep.subr.mxu0 0.0
        %1506 = vmatpush1.msra.mxu0 0.0
        %1507 = vmatprep.subr.mxu0 0.0
        %1508 = vmatpush1.msra.mxu0 0.0
        %1509 = vmatprep.subr.mxu0 0.0
        %1510 = vmatpush1.msra.mxu0 0.0
        %1511 = vmatprep.subr.mxu0 0.0
        %1512 = vmatpush1.msra.mxu0 0.0
        %1513 = vmatprep.subr.mxu0 0.0
        %1514 = vmatpush1.msra.mxu0 0.0
        %1515 = vmatprep.subr.mxu0 0.0
        %1516 = vmatpush1.msra.mxu0 0.0
        %1517 = vmatprep.subr.mxu0 0.0
        %1518 = vmatpush1.msra.mxu0 0.0
        %1519 = vmatprep.subr.mxu0 0.0
        %1520 = vmatpush1.msra.mxu0 0.0
        %1521 = vmatprep.subr.mxu0 0.0
        %1522 = vmatpush1.msra.mxu0 0.0
        %1523 = vmatprep.subr.mxu0 0.0
        %1524 = vmatpush1.msra.mxu0 0.0
        %1525 = vmatprep.subr.mxu0 0.0
        %1526 = vmatpush1.msra.mxu0 0.0
        %1527 = vmatprep.subr.mxu0 %v993
        %1528 = vmatpush1.msra.mxu0 %v990
        %1529 = vmatprep.subr.mxu0 %v833
        %1530 = vmatpush1.msra.mxu0 %v832
        %1531 = vmatprep.subr.mxu0 %v770
        %1532 = vmatpush1.msra.mxu0 %v769
        %1533 = vmatprep.subr.mxu0 %v707
        %1534 = vmatpush1.msra.mxu0 %v706
        %1535 = vmatprep.subr.mxu0 0.0
        %1536 = vmatpush2.msra.mxu0 0.0
        %1537 = vmatprep.subr.mxu0 0.0
        %1538 = vmatpush2.msra.mxu0 0.0
        %1539 = vmatprep.subr.mxu0 0.0
        %1540 = vmatpush2.msra.mxu0 0.0
        %1541 = vmatprep.subr.mxu0 0.0
        %1542 = vmatpush2.msra.mxu0 0.0
        %1543 = vmatprep.subr.mxu0 0.0
        %1544 = vmatpush2.msra.mxu0 0.0
        %1545 = vmatprep.subr.mxu0 0.0
        %1546 = vmatpush2.msra.mxu0 0.0
        %1547 = vmatprep.subr.mxu0 0.0
        %1548 = vmatpush2.msra.mxu0 0.0
        %1549 = vmatprep.subr.mxu0 0.0
        %1550 = vmatpush2.msra.mxu0 0.0
        %1551 = vmatprep.subr.mxu0 0.0
        %1552 = vmatpush2.msra.mxu0 0.0
        %1553 = vmatprep.subr.mxu0 0.0
        %1554 = vmatpush2.msra.mxu0 0.0
        %1555 = vmatprep.subr.mxu0 0.0
        %1556 = vmatpush2.msra.mxu0 0.0
        %1557 = vmatprep.subr.mxu0 0.0
        %1558 = vmatpush2.msra.mxu0 0.0
        %1559 = vmatprep.subr.mxu0 0.0
        %1560 = vmatpush2.msra.mxu0 0.0
        %1561 = vmatprep.subr.mxu0 0.0
        %1562 = vmatpush2.msra.mxu0 0.0
        %1563 = vmatprep.subr.mxu0 0.0
        %1564 = vmatpush2.msra.mxu0 0.0
        %1565 = vmatprep.subr.mxu0 0.0
        %1566 = vmatpush2.msra.mxu0 0.0
        %1567 = vmatprep.mubr.f32.mxu0 0.0
        %1568 = vmatmul.mubr.f32.gmra.mxu0 %v956
        %v1569 = vpop.f32.mrf.mxu0
        %v1570 = vadd.f32 %v952, %v1569
        %v1571 = vpop.f32.mrf.mxu0
        %v1572 = vadd.f32 %v952, %v1571
        %1573 = vdwg.mxu0
        %1574 = vmatprep.subr.mxu0 0.0
        %1575 = vmatpush1.msra.mxu0 0.0
        %1576 = vmatprep.subr.mxu0 0.0
        %1577 = vmatpush1.msra.mxu0 0.0
        %1578 = vmatprep.subr.mxu0 0.0
        %1579 = vmatpush1.msra.mxu0 0.0
        %1580 = vmatprep.subr.mxu0 0.0
        %1581 = vmatpush1.msra.mxu0 0.0
        %1582 = vmatprep.subr.mxu0 0.0
        %1583 = vmatpush1.msra.mxu0 0.0
        %1584 = vmatprep.subr.mxu0 0.0
        %1585 = vmatpush1.msra.mxu0 0.0
        %1586 = vmatprep.subr.mxu0 0.0
        %1587 = vmatpush1.msra.mxu0 0.0
        %1588 = vmatprep.subr.mxu0 0.0
        %1589 = vmatpush1.msra.mxu0 0.0
        %1590 = vmatprep.subr.mxu0 0.0
        %1591 = vmatpush1.msra.mxu0 0.0
        %1592 = vmatprep.subr.mxu0 0.0
        %1593 = vmatpush1.msra.mxu0 0.0
        %1594 = vmatprep.subr.mxu0 0.0
        %1595 = vmatpush1.msra.mxu0 0.0
        %1596 = vmatprep.subr.mxu0 0.0
        %1597 = vmatpush1.msra.mxu0 0.0
        %1598 = vmatprep.subr.mxu0 %v999
        %1599 = vmatpush1.msra.mxu0 %v996
        %1600 = vmatprep.subr.mxu0 %v835
        %1601 = vmatpush1.msra.mxu0 %v834
        %1602 = vmatprep.subr.mxu0 %v772
        %1603 = vmatpush1.msra.mxu0 %v771
        %1604 = vmatprep.subr.mxu0 %v709
        %1605 = vmatpush1.msra.mxu0 %v708
        %1606 = vmatprep.subr.mxu0 0.0
        %1607 = vmatpush2.msra.mxu0 0.0
        %1608 = vmatprep.subr.mxu0 0.0
        %1609 = vmatpush2.msra.mxu0 0.0
        %1610 = vmatprep.subr.mxu0 0.0
        %1611 = vmatpush2.msra.mxu0 0.0
        %1612 = vmatprep.subr.mxu0 0.0
        %1613 = vmatpush2.msra.mxu0 0.0
        %1614 = vmatprep.subr.mxu0 0.0
        %1615 = vmatpush2.msra.mxu0 0.0
        %1616 = vmatprep.subr.mxu0 0.0
        %1617 = vmatpush2.msra.mxu0 0.0
        %1618 = vmatprep.subr.mxu0 0.0
        %1619 = vmatpush2.msra.mxu0 0.0
        %1620 = vmatprep.subr.mxu0 0.0
        %1621 = vmatpush2.msra.mxu0 0.0
        %1622 = vmatprep.subr.mxu0 0.0
        %1623 = vmatpush2.msra.mxu0 0.0
        %1624 = vmatprep.subr.mxu0 0.0
        %1625 = vmatpush2.msra.mxu0 0.0
        %1626 = vmatprep.subr.mxu0 0.0
        %1627 = vmatpush2.msra.mxu0 0.0
        %1628 = vmatprep.subr.mxu0 0.0
        %1629 = vmatpush2.msra.mxu0 0.0
        %1630 = vmatprep.subr.mxu0 0.0
        %1631 = vmatpush2.msra.mxu0 0.0
        %1632 = vmatprep.subr.mxu0 0.0
        %1633 = vmatpush2.msra.mxu0 0.0
        %1634 = vmatprep.subr.mxu0 0.0
        %1635 = vmatpush2.msra.mxu0 0.0
        %1636 = vmatprep.subr.mxu0 0.0
        %1637 = vmatpush2.msra.mxu0 0.0
        %1638 = vmatprep.mubr.f32.mxu0 0.0
        %1639 = vmatmul.mubr.f32.gmra.mxu0 %v956
        %v1640 = vpop.f32.mrf.mxu0
        %v1641 = vadd.f32 %v952, %v1640
        %v1642 = vpop.f32.mrf.mxu0
        %v1643 = vadd.f32 %v952, %v1642
        %1644 = vdwg.mxu0
        %1645 = vmatprep.subr.mxu0 0.0
        %1646 = vmatpush1.msra.mxu0 0.0
        %1647 = vmatprep.subr.mxu0 0.0
        %1648 = vmatpush1.msra.mxu0 0.0
        %1649 = vmatprep.subr.mxu0 0.0
        %1650 = vmatpush1.msra.mxu0 0.0
        %1651 = vmatprep.subr.mxu0 0.0
        %1652 = vmatpush1.msra.mxu0 0.0
        %1653 = vmatprep.subr.mxu0 0.0
        %1654 = vmatpush1.msra.mxu0 0.0
        %1655 = vmatprep.subr.mxu0 0.0
        %1656 = vmatpush1.msra.mxu0 0.0
        %1657 = vmatprep.subr.mxu0 0.0
        %1658 = vmatpush1.msra.mxu0 0.0
        %1659 = vmatprep.subr.mxu0 0.0
        %1660 = vmatpush1.msra.mxu0 0.0
        %1661 = vmatprep.subr.mxu0 0.0
        %1662 = vmatpush1.msra.mxu0 0.0
        %1663 = vmatprep.subr.mxu0 0.0
        %1664 = vmatpush1.msra.mxu0 0.0
        %1665 = vmatprep.subr.mxu0 0.0
        %1666 = vmatpush1.msra.mxu0 0.0
        %1667 = vmatprep.subr.mxu0 0.0
        %1668 = vmatpush1.msra.mxu0 0.0
        %1669 = vmatprep.subr.mxu0 %v1005
        %1670 = vmatpush1.msra.mxu0 %v1002
        %1671 = vmatprep.subr.mxu0 %v837
        %1672 = vmatpush1.msra.mxu0 %v836
        %1673 = vmatprep.subr.mxu0 %v774
        %1674 = vmatpush1.msra.mxu0 %v773
        %1675 = vmatprep.subr.mxu0 %v711
        %1676 = vmatpush1.msra.mxu0 %v710
        %1677 = vmatprep.subr.mxu0 0.0
        %1678 = vmatpush2.msra.mxu0 0.0
        %1679 = vmatprep.subr.mxu0 0.0
        %1680 = vmatpush2.msra.mxu0 0.0
        %1681 = vmatprep.subr.mxu0 0.0
        %1682 = vmatpush2.msra.mxu0 0.0
        %1683 = vmatprep.subr.mxu0 0.0
        %1684 = vmatpush2.msra.mxu0 0.0
        %1685 = vmatprep.subr.mxu0 0.0
        %1686 = vmatpush2.msra.mxu0 0.0
        %1687 = vmatprep.subr.mxu0 0.0
        %1688 = vmatpush2.msra.mxu0 0.0
        %1689 = vmatprep.subr.mxu0 0.0
        %1690 = vmatpush2.msra.mxu0 0.0
        %1691 = vmatprep.subr.mxu0 0.0
        %1692 = vmatpush2.msra.mxu0 0.0
        %1693 = vmatprep.subr.mxu0 0.0
        %1694 = vmatpush2.msra.mxu0 0.0
        %1695 = vmatprep.subr.mxu0 0.0
        %1696 = vmatpush2.msra.mxu0 0.0
        %1697 = vmatprep.subr.mxu0 0.0
        %1698 = vmatpush2.msra.mxu0 0.0
        %1699 = vmatprep.subr.mxu0 0.0
        %1700 = vmatpush2.msra.mxu0 0.0
        %1701 = vmatprep.subr.mxu0 0.0
        %1702 = vmatpush2.msra.mxu0 0.0
        %1703 = vmatprep.subr.mxu0 0.0
        %1704 = vmatpush2.msra.mxu0 0.0
        %1705 = vmatprep.subr.mxu0 0.0
        %1706 = vmatpush2.msra.mxu0 0.0
        %1707 = vmatprep.subr.mxu0 0.0
        %1708 = vmatpush2.msra.mxu0 0.0
        %1709 = vmatprep.mubr.f32.mxu0 0.0
        %1710 = vmatmul.mubr.f32.gmra.mxu0 %v956
        %v1711 = vpop.f32.mrf.mxu0
        %v1712 = vadd.f32 %v952, %v1711
        %v1713 = vpop.f32.mrf.mxu0
        %v1714 = vadd.f32 %v952, %v1713
        %1715 = vdwg.mxu0
        %1716 = vmatprep.subr.mxu0 0.0
        %1717 = vmatpush1.msra.mxu0 0.0
        %1718 = vmatprep.subr.mxu0 0.0
        %1719 = vmatpush1.msra.mxu0 0.0
        %1720 = vmatprep.subr.mxu0 0.0
        %1721 = vmatpush1.msra.mxu0 0.0
        %1722 = vmatprep.subr.mxu0 0.0
        %1723 = vmatpush1.msra.mxu0 0.0
        %1724 = vmatprep.subr.mxu0 0.0
        %1725 = vmatpush1.msra.mxu0 0.0
        %1726 = vmatprep.subr.mxu0 0.0
        %1727 = vmatpush1.msra.mxu0 0.0
        %1728 = vmatprep.subr.mxu0 0.0
        %1729 = vmatpush1.msra.mxu0 0.0
        %1730 = vmatprep.subr.mxu0 0.0
        %1731 = vmatpush1.msra.mxu0 0.0
        %1732 = vmatprep.subr.mxu0 0.0
        %1733 = vmatpush1.msra.mxu0 0.0
        %1734 = vmatprep.subr.mxu0 0.0
        %1735 = vmatpush1.msra.mxu0 0.0
        %1736 = vmatprep.subr.mxu0 0.0
        %1737 = vmatpush1.msra.mxu0 0.0
        %1738 = vmatprep.subr.mxu0 0.0
        %1739 = vmatpush1.msra.mxu0 0.0
        %1740 = vmatprep.subr.mxu0 %v1011
        %1741 = vmatpush1.msra.mxu0 %v1008
        %1742 = vmatprep.subr.mxu0 %v839
        %1743 = vmatpush1.msra.mxu0 %v838
        %1744 = vmatprep.subr.mxu0 %v776
        %1745 = vmatpush1.msra.mxu0 %v775
        %1746 = vmatprep.subr.mxu0 %v713
        %1747 = vmatpush1.msra.mxu0 %v712
        %1748 = vmatprep.subr.mxu0 0.0
        %1749 = vmatpush2.msra.mxu0 0.0
        %1750 = vmatprep.subr.mxu0 0.0
        %1751 = vmatpush2.msra.mxu0 0.0
        %1752 = vmatprep.subr.mxu0 0.0
        %1753 = vmatpush2.msra.mxu0 0.0
        %1754 = vmatprep.subr.mxu0 0.0
        %1755 = vmatpush2.msra.mxu0 0.0
        %1756 = vmatprep.subr.mxu0 0.0
        %1757 = vmatpush2.msra.mxu0 0.0
        %1758 = vmatprep.subr.mxu0 0.0
        %1759 = vmatpush2.msra.mxu0 0.0
        %1760 = vmatprep.subr.mxu0 0.0
        %1761 = vmatpush2.msra.mxu0 0.0
        %1762 = vmatprep.subr.mxu0 0.0
        %1763 = vmatpush2.msra.mxu0 0.0
        %1764 = vmatprep.subr.mxu0 0.0
        %1765 = vmatpush2.msra.mxu0 0.0
        %1766 = vmatprep.subr.mxu0 0.0
        %1767 = vmatpush2.msra.mxu0 0.0
        %1768 = vmatprep.subr.mxu0 0.0
        %1769 = vmatpush2.msra.mxu0 0.0
        %1770 = vmatprep.subr.mxu0 0.0
        %1771 = vmatpush2.msra.mxu0 0.0
        %1772 = vmatprep.subr.mxu0 0.0
        %1773 = vmatpush2.msra.mxu0 0.0
        %1774 = vmatprep.subr.mxu0 0.0
        %1775 = vmatpush2.msra.mxu0 0.0
        %1776 = vmatprep.subr.mxu0 0.0
        %1777 = vmatpush2.msra.mxu0 0.0
        %1778 = vmatprep.subr.mxu0 0.0
        %1779 = vmatpush2.msra.mxu0 0.0
        %1780 = vmatprep.mubr.f32.mxu0 0.0
        %1781 = vmatmul.mubr.f32.gmra.mxu0 %v956
        %v1782 = vpop.f32.mrf.mxu0
        %v1783 = vadd.f32 %v952, %v1782
        %v1784 = vpop.f32.mrf.mxu0
        %v1785 = vadd.f32 %v952, %v1784
        %1786 = vdwg.mxu0
        %1787 = vmatprep.subr.mxu0 0.0
        %1788 = vmatpush1.msra.mxu0 0.0
        %1789 = vmatprep.subr.mxu0 0.0
        %1790 = vmatpush1.msra.mxu0 0.0
        %1791 = vmatprep.subr.mxu0 0.0
        %1792 = vmatpush1.msra.mxu0 0.0
        %1793 = vmatprep.subr.mxu0 0.0
        %1794 = vmatpush1.msra.mxu0 0.0
        %1795 = vmatprep.subr.mxu0 0.0
        %1796 = vmatpush1.msra.mxu0 0.0
        %1797 = vmatprep.subr.mxu0 0.0
        %1798 = vmatpush1.msra.mxu0 0.0
        %1799 = vmatprep.subr.mxu0 0.0
        %1800 = vmatpush1.msra.mxu0 0.0
        %1801 = vmatprep.subr.mxu0 0.0
        %1802 = vmatpush1.msra.mxu0 0.0
        %1803 = vmatprep.subr.mxu0 0.0
        %1804 = vmatpush1.msra.mxu0 0.0
        %1805 = vmatprep.subr.mxu0 0.0
        %1806 = vmatpush1.msra.mxu0 0.0
        %1807 = vmatprep.subr.mxu0 0.0
        %1808 = vmatpush1.msra.mxu0 0.0
        %1809 = vmatprep.subr.mxu0 0.0
        %1810 = vmatpush1.msra.mxu0 0.0
        %1811 = vmatprep.subr.mxu0 %v1017
        %1812 = vmatpush1.msra.mxu0 %v1014
        %1813 = vmatprep.subr.mxu0 %v841
        %1814 = vmatpush1.msra.mxu0 %v840
        %1815 = vmatprep.subr.mxu0 %v778
        %1816 = vmatpush1.msra.mxu0 %v777
        %1817 = vmatprep.subr.mxu0 %v715
        %1818 = vmatpush1.msra.mxu0 %v714
        %1819 = vmatprep.subr.mxu0 0.0
        %1820 = vmatpush2.msra.mxu0 0.0
        %1821 = vmatprep.subr.mxu0 0.0
        %1822 = vmatpush2.msra.mxu0 0.0
        %1823 = vmatprep.subr.mxu0 0.0
        %1824 = vmatpush2.msra.mxu0 0.0
        %1825 = vmatprep.subr.mxu0 0.0
        %1826 = vmatpush2.msra.mxu0 0.0
        %1827 = vmatprep.subr.mxu0 0.0
        %1828 = vmatpush2.msra.mxu0 0.0
        %1829 = vmatprep.subr.mxu0 0.0
        %1830 = vmatpush2.msra.mxu0 0.0
        %1831 = vmatprep.subr.mxu0 0.0
        %1832 = vmatpush2.msra.mxu0 0.0
        %1833 = vmatprep.subr.mxu0 0.0
        %1834 = vmatpush2.msra.mxu0 0.0
        %1835 = vmatprep.subr.mxu0 0.0
        %1836 = vmatpush2.msra.mxu0 0.0
        %1837 = vmatprep.subr.mxu0 0.0
        %1838 = vmatpush2.msra.mxu0 0.0
        %1839 = vmatprep.subr.mxu0 0.0
        %1840 = vmatpush2.msra.mxu0 0.0
        %1841 = vmatprep.subr.mxu0 0.0
        %1842 = vmatpush2.msra.mxu0 0.0
        %1843 = vmatprep.subr.mxu0 0.0
        %1844 = vmatpush2.msra.mxu0 0.0
        %1845 = vmatprep.subr.mxu0 0.0
        %1846 = vmatpush2.msra.mxu0 0.0
        %1847 = vmatprep.subr.mxu0 0.0
        %1848 = vmatpush2.msra.mxu0 0.0
        %1849 = vmatprep.subr.mxu0 0.0
        %1850 = vmatpush2.msra.mxu0 0.0
        %1851 = vmatprep.mubr.f32.mxu0 0.0
        %1852 = vmatmul.mubr.f32.gmra.mxu0 %v956
        %v1853 = vpop.f32.mrf.mxu0
        %v1854 = vadd.f32 %v952, %v1853
        %v1855 = vpop.f32.mrf.mxu0
        %v1856 = vadd.f32 %v952, %v1855
        %1857 = vdwg.mxu0
        %1858 = vmatprep.subr.mxu0 0.0
        %1859 = vmatpush1.msra.mxu0 0.0
        %1860 = vmatprep.subr.mxu0 0.0
        %1861 = vmatpush1.msra.mxu0 0.0
        %1862 = vmatprep.subr.mxu0 0.0
        %1863 = vmatpush1.msra.mxu0 0.0
        %1864 = vmatprep.subr.mxu0 0.0
        %1865 = vmatpush1.msra.mxu0 0.0
        %1866 = vmatprep.subr.mxu0 0.0
        %1867 = vmatpush1.msra.mxu0 0.0
        %1868 = vmatprep.subr.mxu0 0.0
        %1869 = vmatpush1.msra.mxu0 0.0
        %1870 = vmatprep.subr.mxu0 0.0
        %1871 = vmatpush1.msra.mxu0 0.0
        %1872 = vmatprep.subr.mxu0 0.0
        %1873 = vmatpush1.msra.mxu0 0.0
        %1874 = vmatprep.subr.mxu0 0.0
        %1875 = vmatpush1.msra.mxu0 0.0
        %1876 = vmatprep.subr.mxu0 0.0
        %1877 = vmatpush1.msra.mxu0 0.0
        %1878 = vmatprep.subr.mxu0 0.0
        %1879 = vmatpush1.msra.mxu0 0.0
        %1880 = vmatprep.subr.mxu0 0.0
        %1881 = vmatpush1.msra.mxu0 0.0
        %1882 = vmatprep.subr.mxu0 %v1023
        %1883 = vmatpush1.msra.mxu0 %v1020
        %1884 = vmatprep.subr.mxu0 %v843
        %1885 = vmatpush1.msra.mxu0 %v842
        %1886 = vmatprep.subr.mxu0 %v780
        %1887 = vmatpush1.msra.mxu0 %v779
        %1888 = vmatprep.subr.mxu0 %v717
        %1889 = vmatpush1.msra.mxu0 %v716
        %1890 = vmatprep.subr.mxu0 0.0
        %1891 = vmatpush2.msra.mxu0 0.0
        %1892 = vmatprep.subr.mxu0 0.0
        %1893 = vmatpush2.msra.mxu0 0.0
        %1894 = vmatprep.subr.mxu0 0.0
        %1895 = vmatpush2.msra.mxu0 0.0
        %1896 = vmatprep.subr.mxu0 0.0
        %1897 = vmatpush2.msra.mxu0 0.0
        %1898 = vmatprep.subr.mxu0 0.0
        %1899 = vmatpush2.msra.mxu0 0.0
        %1900 = vmatprep.subr.mxu0 0.0
        %1901 = vmatpush2.msra.mxu0 0.0
        %1902 = vmatprep.subr.mxu0 0.0
        %1903 = vmatpush2.msra.mxu0 0.0
        %1904 = vmatprep.subr.mxu0 0.0
        %1905 = vmatpush2.msra.mxu0 0.0
        %1906 = vmatprep.subr.mxu0 0.0
        %1907 = vmatpush2.msra.mxu0 0.0
        %1908 = vmatprep.subr.mxu0 0.0
        %1909 = vmatpush2.msra.mxu0 0.0
        %1910 = vmatprep.subr.mxu0 0.0
        %1911 = vmatpush2.msra.mxu0 0.0
        %1912 = vmatprep.subr.mxu0 0.0
        %1913 = vmatpush2.msra.mxu0 0.0
        %1914 = vmatprep.subr.mxu0 0.0
        %1915 = vmatpush2.msra.mxu0 0.0
        %1916 = vmatprep.subr.mxu0 0.0
        %1917 = vmatpush2.msra.mxu0 0.0
        %1918 = vmatprep.subr.mxu0 0.0
        %1919 = vmatpush2.msra.mxu0 0.0
        %1920 = vmatprep.subr.mxu0 0.0
        %1921 = vmatpush2.msra.mxu0 0.0
        %1922 = vmatprep.mubr.f32.mxu0 0.0
        %1923 = vmatmul.mubr.f32.gmra.mxu0 %v956
        %v1924 = vpop.f32.mrf.mxu0
        %v1925 = vadd.f32 %v952, %v1924
        %v1926 = vpop.f32.mrf.mxu0
        %v1927 = vadd.f32 %v952, %v1926
        %1928 = vdwg.mxu0
        %1929 = vmatprep.subr.mxu0 0.0
        %1930 = vmatpush1.msra.mxu0 0.0
        %1931 = vmatprep.subr.mxu0 0.0
        %1932 = vmatpush1.msra.mxu0 0.0
        %1933 = vmatprep.subr.mxu0 0.0
        %1934 = vmatpush1.msra.mxu0 0.0
        %1935 = vmatprep.subr.mxu0 0.0
        %1936 = vmatpush1.msra.mxu0 0.0
        %1937 = vmatprep.subr.mxu0 0.0
        %1938 = vmatpush1.msra.mxu0 0.0
        %1939 = vmatprep.subr.mxu0 0.0
        %1940 = vmatpush1.msra.mxu0 0.0
        %1941 = vmatprep.subr.mxu0 0.0
        %1942 = vmatpush1.msra.mxu0 0.0
        %1943 = vmatprep.subr.mxu0 0.0
        %1944 = vmatpush1.msra.mxu0 0.0
        %1945 = vmatprep.subr.mxu0 0.0
        %1946 = vmatpush1.msra.mxu0 0.0
        %1947 = vmatprep.subr.mxu0 0.0
        %1948 = vmatpush1.msra.mxu0 0.0
        %1949 = vmatprep.subr.mxu0 0.0
        %1950 = vmatpush1.msra.mxu0 0.0
        %1951 = vmatprep.subr.mxu0 0.0
        %1952 = vmatpush1.msra.mxu0 0.0
        %1953 = vmatprep.subr.mxu0 %v1029
        %1954 = vmatpush1.msra.mxu0 %v1026
        %1955 = vmatprep.subr.mxu0 %v845
        %1956 = vmatpush1.msra.mxu0 %v844
        %1957 = vmatprep.subr.mxu0 %v782
        %1958 = vmatpush1.msra.mxu0 %v781
        %1959 = vmatprep.subr.mxu0 %v719
        %1960 = vmatpush1.msra.mxu0 %v718
        %1961 = vmatprep.subr.mxu0 0.0
        %1962 = vmatpush2.msra.mxu0 0.0
        %1963 = vmatprep.subr.mxu0 0.0
        %1964 = vmatpush2.msra.mxu0 0.0
        %1965 = vmatprep.subr.mxu0 0.0
        %1966 = vmatpush2.msra.mxu0 0.0
        %1967 = vmatprep.subr.mxu0 0.0
        %1968 = vmatpush2.msra.mxu0 0.0
        %1969 = vmatprep.subr.mxu0 0.0
        %1970 = vmatpush2.msra.mxu0 0.0
        %1971 = vmatprep.subr.mxu0 0.0
        %1972 = vmatpush2.msra.mxu0 0.0
        %1973 = vmatprep.subr.mxu0 0.0
        %1974 = vmatpush2.msra.mxu0 0.0
        %1975 = vmatprep.subr.mxu0 0.0
        %1976 = vmatpush2.msra.mxu0 0.0
        %1977 = vmatprep.subr.mxu0 0.0
        %1978 = vmatpush2.msra.mxu0 0.0
        %1979 = vmatprep.subr.mxu0 0.0
        %1980 = vmatpush2.msra.mxu0 0.0
        %1981 = vmatprep.subr.mxu0 0.0
        %1982 = vmatpush2.msra.mxu0 0.0
        %1983 = vmatprep.subr.mxu0 0.0
        %1984 = vmatpush2.msra.mxu0 0.0
        %1985 = vmatprep.subr.mxu0 0.0
        %1986 = vmatpush2.msra.mxu0 0.0
        %1987 = vmatprep.subr.mxu0 0.0
        %1988 = vmatpush2.msra.mxu0 0.0
        %1989 = vmatprep.subr.mxu0 0.0
        %1990 = vmatpush2.msra.mxu0 0.0
        %1991 = vmatprep.subr.mxu0 0.0
        %1992 = vmatpush2.msra.mxu0 0.0
        %1993 = vmatprep.mubr.f32.mxu0 0.0
        %1994 = vmatmul.mubr.f32.gmra.mxu0 %v956
        %v1995 = vpop.f32.mrf.mxu0
        %v1996 = vadd.f32 %v952, %v1995
        %v1997 = vpop.f32.mrf.mxu0
        %v1998 = vadd.f32 %v952, %v1997
        %1999 = vdwg.mxu0
        %2000 = vmatprep.subr.mxu0 0.0
        %2001 = vmatpush1.msra.mxu0 0.0
        %2002 = vmatprep.subr.mxu0 0.0
        %2003 = vmatpush1.msra.mxu0 0.0
        %2004 = vmatprep.subr.mxu0 0.0
        %2005 = vmatpush1.msra.mxu0 0.0
        %2006 = vmatprep.subr.mxu0 0.0
        %2007 = vmatpush1.msra.mxu0 0.0
        %2008 = vmatprep.subr.mxu0 0.0
        %2009 = vmatpush1.msra.mxu0 0.0
        %2010 = vmatprep.subr.mxu0 0.0
        %2011 = vmatpush1.msra.mxu0 0.0
        %2012 = vmatprep.subr.mxu0 0.0
        %2013 = vmatpush1.msra.mxu0 0.0
        %2014 = vmatprep.subr.mxu0 0.0
        %2015 = vmatpush1.msra.mxu0 0.0
        %2016 = vmatprep.subr.mxu0 0.0
        %2017 = vmatpush1.msra.mxu0 0.0
        %2018 = vmatprep.subr.mxu0 0.0
        %2019 = vmatpush1.msra.mxu0 0.0
        %2020 = vmatprep.subr.mxu0 0.0
        %2021 = vmatpush1.msra.mxu0 0.0
        %2022 = vmatprep.subr.mxu0 0.0
        %2023 = vmatpush1.msra.mxu0 0.0
        %2024 = vmatprep.subr.mxu0 %v1035
        %2025 = vmatpush1.msra.mxu0 %v1032
        %2026 = vmatprep.subr.mxu0 %v847
        %2027 = vmatpush1.msra.mxu0 %v846
        %2028 = vmatprep.subr.mxu0 %v784
        %2029 = vmatpush1.msra.mxu0 %v783
        %2030 = vmatprep.subr.mxu0 %v721
        %2031 = vmatpush1.msra.mxu0 %v720
        %2032 = vmatprep.subr.mxu0 0.0
        %2033 = vmatpush2.msra.mxu0 0.0
        %2034 = vmatprep.subr.mxu0 0.0
        %2035 = vmatpush2.msra.mxu0 0.0
        %2036 = vmatprep.subr.mxu0 0.0
        %2037 = vmatpush2.msra.mxu0 0.0
        %2038 = vmatprep.subr.mxu0 0.0
        %2039 = vmatpush2.msra.mxu0 0.0
        %2040 = vmatprep.subr.mxu0 0.0
        %2041 = vmatpush2.msra.mxu0 0.0
        %2042 = vmatprep.subr.mxu0 0.0
        %2043 = vmatpush2.msra.mxu0 0.0
        %2044 = vmatprep.subr.mxu0 0.0
        %2045 = vmatpush2.msra.mxu0 0.0
        %2046 = vmatprep.subr.mxu0 0.0
        %2047 = vmatpush2.msra.mxu0 0.0
        %2048 = vmatprep.subr.mxu0 0.0
        %2049 = vmatpush2.msra.mxu0 0.0
        %2050 = vmatprep.subr.mxu0 0.0
        %2051 = vmatpush2.msra.mxu0 0.0
        %2052 = vmatprep.subr.mxu0 0.0
        %2053 = vmatpush2.msra.mxu0 0.0
        %2054 = vmatprep.subr.mxu0 0.0
        %2055 = vmatpush2.msra.mxu0 0.0
        %2056 = vmatprep.subr.mxu0 0.0
        %2057 = vmatpush2.msra.mxu0 0.0
        %2058 = vmatprep.subr.mxu0 0.0
        %2059 = vmatpush2.msra.mxu0 0.0
        %2060 = vmatprep.subr.mxu0 0.0
        %2061 = vmatpush2.msra.mxu0 0.0
        %2062 = vmatprep.subr.mxu0 0.0
        %2063 = vmatpush2.msra.mxu0 0.0
        %2064 = vmatprep.mubr.f32.mxu0 0.0
        %2065 = vmatmul.mubr.f32.gmra.mxu0 %v956
        %v2066 = vpop.f32.mrf.mxu0
        %v2067 = vadd.f32 %v952, %v2066
        %v2068 = vpop.f32.mrf.mxu0
        %v2069 = vadd.f32 %v952, %v2068
        %2070 = vdwg.mxu0
        %2071 = vmatprep.subr.mxu0 0.0
        %2072 = vmatpush1.msra.mxu0 0.0
        %2073 = vmatprep.subr.mxu0 0.0
        %2074 = vmatpush1.msra.mxu0 0.0
        %2075 = vmatprep.subr.mxu0 0.0
        %2076 = vmatpush1.msra.mxu0 0.0
        %2077 = vmatprep.subr.mxu0 0.0
        %2078 = vmatpush1.msra.mxu0 0.0
        %2079 = vmatprep.subr.mxu0 0.0
        %2080 = vmatpush1.msra.mxu0 0.0
        %2081 = vmatprep.subr.mxu0 0.0
        %2082 = vmatpush1.msra.mxu0 0.0
        %2083 = vmatprep.subr.mxu0 0.0
        %2084 = vmatpush1.msra.mxu0 0.0
        %2085 = vmatprep.subr.mxu0 0.0
        %2086 = vmatpush1.msra.mxu0 0.0
        %2087 = vmatprep.subr.mxu0 0.0
        %2088 = vmatpush1.msra.mxu0 0.0
        %2089 = vmatprep.subr.mxu0 0.0
        %2090 = vmatpush1.msra.mxu0 0.0
        %2091 = vmatprep.subr.mxu0 0.0
        %2092 = vmatpush1.msra.mxu0 0.0
        %2093 = vmatprep.subr.mxu0 0.0
        %2094 = vmatpush1.msra.mxu0 0.0
        %2095 = vmatprep.subr.mxu0 %v1041
        %2096 = vmatpush1.msra.mxu0 %v1038
        %2097 = vmatprep.subr.mxu0 %v849
        %2098 = vmatpush1.msra.mxu0 %v848
        %2099 = vmatprep.subr.mxu0 %v786
        %2100 = vmatpush1.msra.mxu0 %v785
        %2101 = vmatprep.subr.mxu0 %v723
        %2102 = vmatpush1.msra.mxu0 %v722
        %2103 = vmatprep.subr.mxu0 0.0
        %2104 = vmatpush2.msra.mxu0 0.0
        %2105 = vmatprep.subr.mxu0 0.0
        %2106 = vmatpush2.msra.mxu0 0.0
        %2107 = vmatprep.subr.mxu0 0.0
        %2108 = vmatpush2.msra.mxu0 0.0
        %2109 = vmatprep.subr.mxu0 0.0
        %2110 = vmatpush2.msra.mxu0 0.0
        %2111 = vmatprep.subr.mxu0 0.0
        %2112 = vmatpush2.msra.mxu0 0.0
        %2113 = vmatprep.subr.mxu0 0.0
        %2114 = vmatpush2.msra.mxu0 0.0
        %2115 = vmatprep.subr.mxu0 0.0
        %2116 = vmatpush2.msra.mxu0 0.0
        %2117 = vmatprep.subr.mxu0 0.0
        %2118 = vmatpush2.msra.mxu0 0.0
        %2119 = vmatprep.subr.mxu0 0.0
        %2120 = vmatpush2.msra.mxu0 0.0
        %2121 = vmatprep.subr.mxu0 0.0
        %2122 = vmatpush2.msra.mxu0 0.0
        %2123 = vmatprep.subr.mxu0 0.0
        %2124 = vmatpush2.msra.mxu0 0.0
        %2125 = vmatprep.subr.mxu0 0.0
        %2126 = vmatpush2.msra.mxu0 0.0
        %2127 = vmatprep.subr.mxu0 0.0
        %2128 = vmatpush2.msra.mxu0 0.0
        %2129 = vmatprep.subr.mxu0 0.0
        %2130 = vmatpush2.msra.mxu0 0.0
        %2131 = vmatprep.subr.mxu0 0.0
        %2132 = vmatpush2.msra.mxu0 0.0
        %2133 = vmatprep.subr.mxu0 0.0
        %2134 = vmatpush2.msra.mxu0 0.0
        %2135 = vmatprep.mubr.f32.mxu0 0.0
        %2136 = vmatmul.mubr.f32.gmra.mxu0 %v956
        %v2137 = vpop.f32.mrf.mxu0
        %v2138 = vadd.f32 %v952, %v2137
        %v2139 = vpop.f32.mrf.mxu0
        %v2140 = vadd.f32 %v952, %v2139
        %2141 = vdwg.mxu0
        %2142 = vmatprep.subr.mxu0 0.0
        %2143 = vmatpush1.msra.mxu0 0.0
        %2144 = vmatprep.subr.mxu0 0.0
        %2145 = vmatpush1.msra.mxu0 0.0
        %2146 = vmatprep.subr.mxu0 0.0
        %2147 = vmatpush1.msra.mxu0 0.0
        %2148 = vmatprep.subr.mxu0 0.0
        %2149 = vmatpush1.msra.mxu0 0.0
        %2150 = vmatprep.subr.mxu0 0.0
        %2151 = vmatpush1.msra.mxu0 0.0
        %2152 = vmatprep.subr.mxu0 0.0
        %2153 = vmatpush1.msra.mxu0 0.0
        %2154 = vmatprep.subr.mxu0 0.0
        %2155 = vmatpush1.msra.mxu0 0.0
        %2156 = vmatprep.subr.mxu0 0.0
        %2157 = vmatpush1.msra.mxu0 0.0
        %2158 = vmatprep.subr.mxu0 0.0
        %2159 = vmatpush1.msra.mxu0 0.0
        %2160 = vmatprep.subr.mxu0 0.0
        %2161 = vmatpush1.msra.mxu0 0.0
        %2162 = vmatprep.subr.mxu0 0.0
        %2163 = vmatpush1.msra.mxu0 0.0
        %2164 = vmatprep.subr.mxu0 0.0
        %2165 = vmatpush1.msra.mxu0 0.0
        %2166 = vmatprep.subr.mxu0 %v1047
        %2167 = vmatpush1.msra.mxu0 %v1044
        %2168 = vmatprep.subr.mxu0 %v851
        %2169 = vmatpush1.msra.mxu0 %v850
        %2170 = vmatprep.subr.mxu0 %v788
        %2171 = vmatpush1.msra.mxu0 %v787
        %2172 = vmatprep.subr.mxu0 %v725
        %2173 = vmatpush1.msra.mxu0 %v724
        %2174 = vmatprep.subr.mxu0 0.0
        %2175 = vmatpush2.msra.mxu0 0.0
        %2176 = vmatprep.subr.mxu0 0.0
        %2177 = vmatpush2.msra.mxu0 0.0
        %2178 = vmatprep.subr.mxu0 0.0
        %2179 = vmatpush2.msra.mxu0 0.0
        %2180 = vmatprep.subr.mxu0 0.0
        %2181 = vmatpush2.msra.mxu0 0.0
        %2182 = vmatprep.subr.mxu0 0.0
        %2183 = vmatpush2.msra.mxu0 0.0
        %2184 = vmatprep.subr.mxu0 0.0
        %2185 = vmatpush2.msra.mxu0 0.0
        %2186 = vmatprep.subr.mxu0 0.0
        %2187 = vmatpush2.msra.mxu0 0.0
        %2188 = vmatprep.subr.mxu0 0.0
        %2189 = vmatpush2.msra.mxu0 0.0
        %2190 = vmatprep.subr.mxu0 0.0
        %2191 = vmatpush2.msra.mxu0 0.0
        %2192 = vmatprep.subr.mxu0 0.0
        %2193 = vmatpush2.msra.mxu0 0.0
        %2194 = vmatprep.subr.mxu0 0.0
        %2195 = vmatpush2.msra.mxu0 0.0
        %2196 = vmatprep.subr.mxu0 0.0
        %2197 = vmatpush2.msra.mxu0 0.0
        %2198 = vmatprep.subr.mxu0 0.0
        %2199 = vmatpush2.msra.mxu0 0.0
        %2200 = vmatprep.subr.mxu0 0.0
        %2201 = vmatpush2.msra.mxu0 0.0
        %2202 = vmatprep.subr.mxu0 0.0
        %2203 = vmatpush2.msra.mxu0 0.0
        %2204 = vmatprep.subr.mxu0 0.0
        %2205 = vmatpush2.msra.mxu0 0.0
        %2206 = vmatprep.mubr.f32.mxu0 0.0
        %2207 = vmatmul.mubr.f32.gmra.mxu0 %v956
        %v2208 = vpop.f32.mrf.mxu0
        %v2209 = vadd.f32 %v952, %v2208
        %v2210 = vpop.f32.mrf.mxu0
        %v2211 = vadd.f32 %v952, %v2210
        %2212 = vdwg.mxu0
        %2213 = vmatprep.subr.mxu0 0.0
        %2214 = vmatpush1.msra.mxu0 0.0
        %2215 = vmatprep.subr.mxu0 0.0
        %2216 = vmatpush1.msra.mxu0 0.0
        %2217 = vmatprep.subr.mxu0 0.0
        %2218 = vmatpush1.msra.mxu0 0.0
        %2219 = vmatprep.subr.mxu0 0.0
        %2220 = vmatpush1.msra.mxu0 0.0
        %2221 = vmatprep.subr.mxu0 0.0
        %2222 = vmatpush1.msra.mxu0 0.0
        %2223 = vmatprep.subr.mxu0 0.0
        %2224 = vmatpush1.msra.mxu0 0.0
        %2225 = vmatprep.subr.mxu0 0.0
        %2226 = vmatpush1.msra.mxu0 0.0
        %2227 = vmatprep.subr.mxu0 0.0
        %2228 = vmatpush1.msra.mxu0 0.0
        %2229 = vmatprep.subr.mxu0 0.0
        %2230 = vmatpush1.msra.mxu0 0.0
        %2231 = vmatprep.subr.mxu0 0.0
        %2232 = vmatpush1.msra.mxu0 0.0
        %2233 = vmatprep.subr.mxu0 0.0
        %2234 = vmatpush1.msra.mxu0 0.0
        %2235 = vmatprep.subr.mxu0 0.0
        %2236 = vmatpush1.msra.mxu0 0.0
        %2237 = vmatprep.subr.mxu0 %v1053
        %2238 = vmatpush1.msra.mxu0 %v1050
        %2239 = vmatprep.subr.mxu0 %v853
        %2240 = vmatpush1.msra.mxu0 %v852
        %2241 = vmatprep.subr.mxu0 %v790
        %2242 = vmatpush1.msra.mxu0 %v789
        %2243 = vmatprep.subr.mxu0 %v727
        %2244 = vmatpush1.msra.mxu0 %v726
        %2245 = vmatprep.subr.mxu0 0.0
        %2246 = vmatpush2.msra.mxu0 0.0
        %2247 = vmatprep.subr.mxu0 0.0
        %2248 = vmatpush2.msra.mxu0 0.0
        %2249 = vmatprep.subr.mxu0 0.0
        %2250 = vmatpush2.msra.mxu0 0.0
        %2251 = vmatprep.subr.mxu0 0.0
        %2252 = vmatpush2.msra.mxu0 0.0
        %2253 = vmatprep.subr.mxu0 0.0
        %2254 = vmatpush2.msra.mxu0 0.0
        %2255 = vmatprep.subr.mxu0 0.0
        %2256 = vmatpush2.msra.mxu0 0.0
        %2257 = vmatprep.subr.mxu0 0.0
        %2258 = vmatpush2.msra.mxu0 0.0
        %2259 = vmatprep.subr.mxu0 0.0
        %2260 = vmatpush2.msra.mxu0 0.0
        %2261 = vmatprep.subr.mxu0 0.0
        %2262 = vmatpush2.msra.mxu0 0.0
        %2263 = vmatprep.subr.mxu0 0.0
        %2264 = vmatpush2.msra.mxu0 0.0
        %2265 = vmatprep.subr.mxu0 0.0
        %2266 = vmatpush2.msra.mxu0 0.0
        %2267 = vmatprep.subr.mxu0 0.0
        %2268 = vmatpush2.msra.mxu0 0.0
        %2269 = vmatprep.subr.mxu0 0.0
        %2270 = vmatpush2.msra.mxu0 0.0
        %2271 = vmatprep.subr.mxu0 0.0
        %2272 = vmatpush2.msra.mxu0 0.0
        %2273 = vmatprep.subr.mxu0 0.0
        %2274 = vmatpush2.msra.mxu0 0.0
        %2275 = vmatprep.subr.mxu0 0.0
        %2276 = vmatpush2.msra.mxu0 0.0
        %2277 = vmatprep.mubr.f32.mxu0 0.0
        %2278 = vmatmul.mubr.f32.gmra.mxu0 %v956
        %v2279 = vpop.f32.mrf.mxu0
        %v2280 = vadd.f32 %v952, %v2279
        %v2281 = vpop.f32.mrf.mxu0
        %v2282 = vadd.f32 %v952, %v2281
        %2283 = vdwg.mxu0
        %2284 = vmatprep.subr.mxu0 0.0
        %2285 = vmatpush1.msra.mxu0 0.0
        %2286 = vmatprep.subr.mxu0 0.0
        %2287 = vmatpush1.msra.mxu0 0.0
        %2288 = vmatprep.subr.mxu0 0.0
        %2289 = vmatpush1.msra.mxu0 0.0
        %2290 = vmatprep.subr.mxu0 0.0
        %2291 = vmatpush1.msra.mxu0 0.0
        %2292 = vmatprep.subr.mxu0 0.0
        %2293 = vmatpush1.msra.mxu0 0.0
        %2294 = vmatprep.subr.mxu0 0.0
        %2295 = vmatpush1.msra.mxu0 0.0
        %2296 = vmatprep.subr.mxu0 0.0
        %2297 = vmatpush1.msra.mxu0 0.0
        %2298 = vmatprep.subr.mxu0 0.0
        %2299 = vmatpush1.msra.mxu0 0.0
        %2300 = vmatprep.subr.mxu0 0.0
        %2301 = vmatpush1.msra.mxu0 0.0
        %2302 = vmatprep.subr.mxu0 0.0
        %2303 = vmatpush1.msra.mxu0 0.0
        %2304 = vmatprep.subr.mxu0 0.0
        %2305 = vmatpush1.msra.mxu0 0.0
        %2306 = vmatprep.subr.mxu0 0.0
        %2307 = vmatpush1.msra.mxu0 0.0
        %2308 = vmatprep.subr.mxu0 %v1059
        %2309 = vmatpush1.msra.mxu0 %v1056
        %2310 = vmatprep.subr.mxu0 %v855
        %2311 = vmatpush1.msra.mxu0 %v854
        %2312 = vmatprep.subr.mxu0 %v792
        %2313 = vmatpush1.msra.mxu0 %v791
        %2314 = vmatprep.subr.mxu0 %v729
        %2315 = vmatpush1.msra.mxu0 %v728
        %2316 = vmatprep.subr.mxu0 0.0
        %2317 = vmatpush2.msra.mxu0 0.0
        %2318 = vmatprep.subr.mxu0 0.0
        %2319 = vmatpush2.msra.mxu0 0.0
        %2320 = vmatprep.subr.mxu0 0.0
        %2321 = vmatpush2.msra.mxu0 0.0
        %2322 = vmatprep.subr.mxu0 0.0
        %2323 = vmatpush2.msra.mxu0 0.0
        %2324 = vmatprep.subr.mxu0 0.0
        %2325 = vmatpush2.msra.mxu0 0.0
        %2326 = vmatprep.subr.mxu0 0.0
        %2327 = vmatpush2.msra.mxu0 0.0
        %2328 = vmatprep.subr.mxu0 0.0
        %2329 = vmatpush2.msra.mxu0 0.0
        %2330 = vmatprep.subr.mxu0 0.0
        %2331 = vmatpush2.msra.mxu0 0.0
        %2332 = vmatprep.subr.mxu0 0.0
        %2333 = vmatpush2.msra.mxu0 0.0
        %2334 = vmatprep.subr.mxu0 0.0
        %2335 = vmatpush2.msra.mxu0 0.0
        %2336 = vmatprep.subr.mxu0 0.0
        %2337 = vmatpush2.msra.mxu0 0.0
        %2338 = vmatprep.subr.mxu0 0.0
        %2339 = vmatpush2.msra.mxu0 0.0
        %2340 = vmatprep.subr.mxu0 0.0
        %2341 = vmatpush2.msra.mxu0 0.0
        %2342 = vmatprep.subr.mxu0 0.0
        %2343 = vmatpush2.msra.mxu0 0.0
        %2344 = vmatprep.subr.mxu0 0.0
        %2345 = vmatpush2.msra.mxu0 0.0
        %2346 = vmatprep.subr.mxu0 0.0
        %2347 = vmatpush2.msra.mxu0 0.0
        %2348 = vmatprep.mubr.f32.mxu0 0.0
        %2349 = vmatmul.mubr.f32.gmra.mxu0 %v956
        %v2350 = vpop.f32.mrf.mxu0
        %v2351 = vadd.f32 %v952, %v2350
        %v2352 = vpop.f32.mrf.mxu0
        %v2353 = vadd.f32 %v952, %v2352
        %2354 = vdwg.mxu0
        %2355 = vmatprep.subr.mxu0 0.0
        %2356 = vmatpush1.msra.mxu0 0.0
        %2357 = vmatprep.subr.mxu0 0.0
        %2358 = vmatpush1.msra.mxu0 0.0
        %2359 = vmatprep.subr.mxu0 0.0
        %2360 = vmatpush1.msra.mxu0 0.0
        %2361 = vmatprep.subr.mxu0 0.0
        %2362 = vmatpush1.msra.mxu0 0.0
        %2363 = vmatprep.subr.mxu0 0.0
        %2364 = vmatpush1.msra.mxu0 0.0
        %2365 = vmatprep.subr.mxu0 0.0
        %2366 = vmatpush1.msra.mxu0 0.0
        %2367 = vmatprep.subr.mxu0 0.0
        %2368 = vmatpush1.msra.mxu0 0.0
        %2369 = vmatprep.subr.mxu0 0.0
        %2370 = vmatpush1.msra.mxu0 0.0
        %2371 = vmatprep.subr.mxu0 0.0
        %2372 = vmatpush1.msra.mxu0 0.0
        %2373 = vmatprep.subr.mxu0 0.0
        %2374 = vmatpush1.msra.mxu0 0.0
        %2375 = vmatprep.subr.mxu0 0.0
        %2376 = vmatpush1.msra.mxu0 0.0
        %2377 = vmatprep.subr.mxu0 0.0
        %2378 = vmatpush1.msra.mxu0 0.0
        %2379 = vmatprep.subr.mxu0 %v1065
        %2380 = vmatpush1.msra.mxu0 %v1062
        %2381 = vmatprep.subr.mxu0 %v857
        %2382 = vmatpush1.msra.mxu0 %v856
        %2383 = vmatprep.subr.mxu0 %v794
        %2384 = vmatpush1.msra.mxu0 %v793
        %2385 = vmatprep.subr.mxu0 %v731
        %2386 = vmatpush1.msra.mxu0 %v730
        %2387 = vmatprep.subr.mxu0 0.0
        %2388 = vmatpush2.msra.mxu0 0.0
        %2389 = vmatprep.subr.mxu0 0.0
        %2390 = vmatpush2.msra.mxu0 0.0
        %2391 = vmatprep.subr.mxu0 0.0
        %2392 = vmatpush2.msra.mxu0 0.0
        %2393 = vmatprep.subr.mxu0 0.0
        %2394 = vmatpush2.msra.mxu0 0.0
        %2395 = vmatprep.subr.mxu0 0.0
        %2396 = vmatpush2.msra.mxu0 0.0
        %2397 = vmatprep.subr.mxu0 0.0
        %2398 = vmatpush2.msra.mxu0 0.0
        %2399 = vmatprep.subr.mxu0 0.0
        %2400 = vmatpush2.msra.mxu0 0.0
        %2401 = vmatprep.subr.mxu0 0.0
        %2402 = vmatpush2.msra.mxu0 0.0
        %2403 = vmatprep.subr.mxu0 0.0
        %2404 = vmatpush2.msra.mxu0 0.0
        %2405 = vmatprep.subr.mxu0 0.0
        %2406 = vmatpush2.msra.mxu0 0.0
        %2407 = vmatprep.subr.mxu0 0.0
        %2408 = vmatpush2.msra.mxu0 0.0
        %2409 = vmatprep.subr.mxu0 0.0
        %2410 = vmatpush2.msra.mxu0 0.0
        %2411 = vmatprep.subr.mxu0 0.0
        %2412 = vmatpush2.msra.mxu0 0.0
        %2413 = vmatprep.subr.mxu0 0.0
        %2414 = vmatpush2.msra.mxu0 0.0
        %2415 = vmatprep.subr.mxu0 0.0
        %2416 = vmatpush2.msra.mxu0 0.0
        %2417 = vmatprep.subr.mxu0 0.0
        %2418 = vmatpush2.msra.mxu0 0.0
        %2419 = vmatprep.mubr.f32.mxu0 0.0
        %2420 = vmatmul.mubr.f32.gmra.mxu0 %v956
        %v2421 = vpop.f32.mrf.mxu0
        %v2422 = vadd.f32 %v952, %v2421
        %v2423 = vpop.f32.mrf.mxu0
        %v2424 = vadd.f32 %v952, %v2423
        %2425 = vdwg.mxu0
        %2426 = vmatprep.subr.mxu0 0.0
        %2427 = vmatpush1.msra.mxu0 0.0
        %2428 = vmatprep.subr.mxu0 0.0
        %2429 = vmatpush1.msra.mxu0 0.0
        %2430 = vmatprep.subr.mxu0 0.0
        %2431 = vmatpush1.msra.mxu0 0.0
        %2432 = vmatprep.subr.mxu0 0.0
        %2433 = vmatpush1.msra.mxu0 0.0
        %2434 = vmatprep.subr.mxu0 0.0
        %2435 = vmatpush1.msra.mxu0 0.0
        %2436 = vmatprep.subr.mxu0 0.0
        %2437 = vmatpush1.msra.mxu0 0.0
        %2438 = vmatprep.subr.mxu0 0.0
        %2439 = vmatpush1.msra.mxu0 0.0
        %2440 = vmatprep.subr.mxu0 0.0
        %2441 = vmatpush1.msra.mxu0 0.0
        %2442 = vmatprep.subr.mxu0 0.0
        %2443 = vmatpush1.msra.mxu0 0.0
        %2444 = vmatprep.subr.mxu0 0.0
        %2445 = vmatpush1.msra.mxu0 0.0
        %2446 = vmatprep.subr.mxu0 0.0
        %2447 = vmatpush1.msra.mxu0 0.0
        %2448 = vmatprep.subr.mxu0 0.0
        %2449 = vmatpush1.msra.mxu0 0.0
        %2450 = vmatprep.subr.mxu0 %v1071
        %2451 = vmatpush1.msra.mxu0 %v1068
        %2452 = vmatprep.subr.mxu0 %v859
        %2453 = vmatpush1.msra.mxu0 %v858
        %2454 = vmatprep.subr.mxu0 %v796
        %2455 = vmatpush1.msra.mxu0 %v795
        %2456 = vmatprep.subr.mxu0 %v733
        %2457 = vmatpush1.msra.mxu0 %v732
        %2458 = vmatprep.subr.mxu0 0.0
        %2459 = vmatpush2.msra.mxu0 0.0
        %2460 = vmatprep.subr.mxu0 0.0
        %2461 = vmatpush2.msra.mxu0 0.0
        %2462 = vmatprep.subr.mxu0 0.0
        %2463 = vmatpush2.msra.mxu0 0.0
        %2464 = vmatprep.subr.mxu0 0.0
        %2465 = vmatpush2.msra.mxu0 0.0
        %2466 = vmatprep.subr.mxu0 0.0
        %2467 = vmatpush2.msra.mxu0 0.0
        %2468 = vmatprep.subr.mxu0 0.0
        %2469 = vmatpush2.msra.mxu0 0.0
        %2470 = vmatprep.subr.mxu0 0.0
        %2471 = vmatpush2.msra.mxu0 0.0
        %2472 = vmatprep.subr.mxu0 0.0
        %2473 = vmatpush2.msra.mxu0 0.0
        %2474 = vmatprep.subr.mxu0 0.0
        %2475 = vmatpush2.msra.mxu0 0.0
        %2476 = vmatprep.subr.mxu0 0.0
        %2477 = vmatpush2.msra.mxu0 0.0
        %2478 = vmatprep.subr.mxu0 0.0
        %2479 = vmatpush2.msra.mxu0 0.0
        %2480 = vmatprep.subr.mxu0 0.0
        %2481 = vmatpush2.msra.mxu0 0.0
        %2482 = vmatprep.subr.mxu0 0.0
        %2483 = vmatpush2.msra.mxu0 0.0
        %2484 = vmatprep.subr.mxu0 0.0
        %2485 = vmatpush2.msra.mxu0 0.0
        %2486 = vmatprep.subr.mxu0 0.0
        %2487 = vmatpush2.msra.mxu0 0.0
        %2488 = vmatprep.subr.mxu0 0.0
        %2489 = vmatpush2.msra.mxu0 0.0
        %2490 = vmatprep.mubr.f32.mxu0 0.0
        %2491 = vmatmul.mubr.f32.gmra.mxu0 %v956
        %v2492 = vpop.f32.mrf.mxu0
        %v2493 = vadd.f32 %v952, %v2492
        %v2494 = vpop.f32.mrf.mxu0
        %v2495 = vadd.f32 %v952, %v2494
        %2496 = vdwg.mxu0
        %2497 = vmatprep.subr.mxu0 0.0
        %2498 = vmatpush1.msra.mxu0 0.0
        %2499 = vmatprep.subr.mxu0 0.0
        %2500 = vmatpush1.msra.mxu0 0.0
        %2501 = vmatprep.subr.mxu0 0.0
        %2502 = vmatpush1.msra.mxu0 0.0
        %2503 = vmatprep.subr.mxu0 0.0
        %2504 = vmatpush1.msra.mxu0 0.0
        %2505 = vmatprep.subr.mxu0 0.0
        %2506 = vmatpush1.msra.mxu0 0.0
        %2507 = vmatprep.subr.mxu0 0.0
        %2508 = vmatpush1.msra.mxu0 0.0
        %2509 = vmatprep.subr.mxu0 0.0
        %2510 = vmatpush1.msra.mxu0 0.0
        %2511 = vmatprep.subr.mxu0 0.0
        %2512 = vmatpush1.msra.mxu0 0.0
        %2513 = vmatprep.subr.mxu0 0.0
        %2514 = vmatpush1.msra.mxu0 0.0
        %2515 = vmatprep.subr.mxu0 0.0
        %2516 = vmatpush1.msra.mxu0 0.0
        %2517 = vmatprep.subr.mxu0 0.0
        %2518 = vmatpush1.msra.mxu0 0.0
        %2519 = vmatprep.subr.mxu0 0.0
        %2520 = vmatpush1.msra.mxu0 0.0
        %2521 = vmatprep.subr.mxu0 %v1077
        %2522 = vmatpush1.msra.mxu0 %v1074
        %2523 = vmatprep.subr.mxu0 %v861
        %2524 = vmatpush1.msra.mxu0 %v860
        %2525 = vmatprep.subr.mxu0 %v798
        %2526 = vmatpush1.msra.mxu0 %v797
        %2527 = vmatprep.subr.mxu0 %v735
        %2528 = vmatpush1.msra.mxu0 %v734
        %2529 = vmatprep.subr.mxu0 0.0
        %2530 = vmatpush2.msra.mxu0 0.0
        %2531 = vmatprep.subr.mxu0 0.0
        %2532 = vmatpush2.msra.mxu0 0.0
        %2533 = vmatprep.subr.mxu0 0.0
        %2534 = vmatpush2.msra.mxu0 0.0
        %2535 = vmatprep.subr.mxu0 0.0
        %2536 = vmatpush2.msra.mxu0 0.0
        %2537 = vmatprep.subr.mxu0 0.0
        %2538 = vmatpush2.msra.mxu0 0.0
        %2539 = vmatprep.subr.mxu0 0.0
        %2540 = vmatpush2.msra.mxu0 0.0
        %2541 = vmatprep.subr.mxu0 0.0
        %2542 = vmatpush2.msra.mxu0 0.0
        %2543 = vmatprep.subr.mxu0 0.0
        %2544 = vmatpush2.msra.mxu0 0.0
        %2545 = vmatprep.subr.mxu0 0.0
        %2546 = vmatpush2.msra.mxu0 0.0
        %2547 = vmatprep.subr.mxu0 0.0
        %2548 = vmatpush2.msra.mxu0 0.0
        %2549 = vmatprep.subr.mxu0 0.0
        %2550 = vmatpush2.msra.mxu0 0.0
        %2551 = vmatprep.subr.mxu0 0.0
        %2552 = vmatpush2.msra.mxu0 0.0
        %2553 = vmatprep.subr.mxu0 0.0
        %2554 = vmatpush2.msra.mxu0 0.0
        %2555 = vmatprep.subr.mxu0 0.0
        %2556 = vmatpush2.msra.mxu0 0.0
        %2557 = vmatprep.subr.mxu0 0.0
        %2558 = vmatpush2.msra.mxu0 0.0
        %2559 = vmatprep.subr.mxu0 0.0
        %2560 = vmatpush2.msra.mxu0 0.0
        %2561 = vmatprep.mubr.f32.mxu0 0.0
        %2562 = vmatmul.mubr.f32.gmra.mxu0 %v956
        %v2563 = vpop.f32.mrf.mxu0
        %v2564 = vadd.f32 %v952, %v2563
        %v2565 = vpop.f32.mrf.mxu0
        %v2566 = vadd.f32 %v952, %v2565
        %2567 = vdwg.mxu0
        %2568 = vmatprep.subr.mxu0 0.0
        %2569 = vmatpush1.msra.mxu0 0.0
        %2570 = vmatprep.subr.mxu0 0.0
        %2571 = vmatpush1.msra.mxu0 0.0
        %2572 = vmatprep.subr.mxu0 0.0
        %2573 = vmatpush1.msra.mxu0 0.0
        %2574 = vmatprep.subr.mxu0 0.0
        %2575 = vmatpush1.msra.mxu0 0.0
        %2576 = vmatprep.subr.mxu0 0.0
        %2577 = vmatpush1.msra.mxu0 0.0
        %2578 = vmatprep.subr.mxu0 0.0
        %2579 = vmatpush1.msra.mxu0 0.0
        %2580 = vmatprep.subr.mxu0 0.0
        %2581 = vmatpush1.msra.mxu0 0.0
        %2582 = vmatprep.subr.mxu0 0.0
        %2583 = vmatpush1.msra.mxu0 0.0
        %2584 = vmatprep.subr.mxu0 0.0
        %2585 = vmatpush1.msra.mxu0 0.0
        %2586 = vmatprep.subr.mxu0 0.0
        %2587 = vmatpush1.msra.mxu0 0.0
        %2588 = vmatprep.subr.mxu0 0.0
        %2589 = vmatpush1.msra.mxu0 0.0
        %2590 = vmatprep.subr.mxu0 0.0
        %2591 = vmatpush1.msra.mxu0 0.0
        %2592 = vmatprep.subr.mxu0 %v1083
        %2593 = vmatpush1.msra.mxu0 %v1080
        %2594 = vmatprep.subr.mxu0 %v863
        %2595 = vmatpush1.msra.mxu0 %v862
        %2596 = vmatprep.subr.mxu0 %v800
        %2597 = vmatpush1.msra.mxu0 %v799
        %2598 = vmatprep.subr.mxu0 %v737
        %2599 = vmatpush1.msra.mxu0 %v736
        %2600 = vmatprep.subr.mxu0 0.0
        %2601 = vmatpush2.msra.mxu0 0.0
        %2602 = vmatprep.subr.mxu0 0.0
        %2603 = vmatpush2.msra.mxu0 0.0
        %2604 = vmatprep.subr.mxu0 0.0
        %2605 = vmatpush2.msra.mxu0 0.0
        %2606 = vmatprep.subr.mxu0 0.0
        %2607 = vmatpush2.msra.mxu0 0.0
        %2608 = vmatprep.subr.mxu0 0.0
        %2609 = vmatpush2.msra.mxu0 0.0
        %2610 = vmatprep.subr.mxu0 0.0
        %2611 = vmatpush2.msra.mxu0 0.0
        %2612 = vmatprep.subr.mxu0 0.0
        %2613 = vmatpush2.msra.mxu0 0.0
        %2614 = vmatprep.subr.mxu0 0.0
        %2615 = vmatpush2.msra.mxu0 0.0
        %2616 = vmatprep.subr.mxu0 0.0
        %2617 = vmatpush2.msra.mxu0 0.0
        %2618 = vmatprep.subr.mxu0 0.0
        %2619 = vmatpush2.msra.mxu0 0.0
        %2620 = vmatprep.subr.mxu0 0.0
        %2621 = vmatpush2.msra.mxu0 0.0
        %2622 = vmatprep.subr.mxu0 0.0
        %2623 = vmatpush2.msra.mxu0 0.0
        %2624 = vmatprep.subr.mxu0 0.0
        %2625 = vmatpush2.msra.mxu0 0.0
        %2626 = vmatprep.subr.mxu0 0.0
        %2627 = vmatpush2.msra.mxu0 0.0
        %2628 = vmatprep.subr.mxu0 0.0
        %2629 = vmatpush2.msra.mxu0 0.0
        %2630 = vmatprep.subr.mxu0 0.0
        %2631 = vmatpush2.msra.mxu0 0.0
        %2632 = vmatprep.mubr.f32.mxu0 0.0
        %2633 = vmatmul.mubr.f32.gmra.mxu0 %v956
        %v2634 = vpop.f32.mrf.mxu0
        %v2635 = vadd.f32 %v952, %v2634
        %v2636 = vpop.f32.mrf.mxu0
        %v2637 = vadd.f32 %v952, %v2636
        %2638 = vdwg.mxu0
        %2639 = vmatprep.subr.mxu0 0.0
        %2640 = vmatpush1.msra.mxu0 0.0
        %2641 = vmatprep.subr.mxu0 0.0
        %2642 = vmatpush1.msra.mxu0 0.0
        %2643 = vmatprep.subr.mxu0 0.0
        %2644 = vmatpush1.msra.mxu0 0.0
        %2645 = vmatprep.subr.mxu0 0.0
        %2646 = vmatpush1.msra.mxu0 0.0
        %2647 = vmatprep.subr.mxu0 0.0
        %2648 = vmatpush1.msra.mxu0 0.0
        %2649 = vmatprep.subr.mxu0 0.0
        %2650 = vmatpush1.msra.mxu0 0.0
        %2651 = vmatprep.subr.mxu0 0.0
        %2652 = vmatpush1.msra.mxu0 0.0
        %2653 = vmatprep.subr.mxu0 0.0
        %2654 = vmatpush1.msra.mxu0 0.0
        %2655 = vmatprep.subr.mxu0 0.0
        %2656 = vmatpush1.msra.mxu0 0.0
        %2657 = vmatprep.subr.mxu0 0.0
        %2658 = vmatpush1.msra.mxu0 0.0
        %2659 = vmatprep.subr.mxu0 0.0
        %2660 = vmatpush1.msra.mxu0 0.0
        %2661 = vmatprep.subr.mxu0 0.0
        %2662 = vmatpush1.msra.mxu0 0.0
        %2663 = vmatprep.subr.mxu0 %v1089
        %2664 = vmatpush1.msra.mxu0 %v1086
        %2665 = vmatprep.subr.mxu0 %v865
        %2666 = vmatpush1.msra.mxu0 %v864
        %2667 = vmatprep.subr.mxu0 %v802
        %2668 = vmatpush1.msra.mxu0 %v801
        %2669 = vmatprep.subr.mxu0 %v739
        %2670 = vmatpush1.msra.mxu0 %v738
        %2671 = vmatprep.subr.mxu0 0.0
        %2672 = vmatpush2.msra.mxu0 0.0
        %2673 = vmatprep.subr.mxu0 0.0
        %2674 = vmatpush2.msra.mxu0 0.0
        %2675 = vmatprep.subr.mxu0 0.0
        %2676 = vmatpush2.msra.mxu0 0.0
        %2677 = vmatprep.subr.mxu0 0.0
        %2678 = vmatpush2.msra.mxu0 0.0
        %2679 = vmatprep.subr.mxu0 0.0
        %2680 = vmatpush2.msra.mxu0 0.0
        %2681 = vmatprep.subr.mxu0 0.0
        %2682 = vmatpush2.msra.mxu0 0.0
        %2683 = vmatprep.subr.mxu0 0.0
        %2684 = vmatpush2.msra.mxu0 0.0
        %2685 = vmatprep.subr.mxu0 0.0
        %2686 = vmatpush2.msra.mxu0 0.0
        %2687 = vmatprep.subr.mxu0 0.0
        %2688 = vmatpush2.msra.mxu0 0.0
        %2689 = vmatprep.subr.mxu0 0.0
        %2690 = vmatpush2.msra.mxu0 0.0
        %2691 = vmatprep.subr.mxu0 0.0
        %2692 = vmatpush2.msra.mxu0 0.0
        %2693 = vmatprep.subr.mxu0 0.0
        %2694 = vmatpush2.msra.mxu0 0.0
        %2695 = vmatprep.subr.mxu0 0.0
        %2696 = vmatpush2.msra.mxu0 0.0
        %2697 = vmatprep.subr.mxu0 0.0
        %2698 = vmatpush2.msra.mxu0 0.0
        %2699 = vmatprep.subr.mxu0 0.0
        %2700 = vmatpush2.msra.mxu0 0.0
        %2701 = vmatprep.subr.mxu0 0.0
        %2702 = vmatpush2.msra.mxu0 0.0
        %2703 = vmatprep.mubr.f32.mxu0 0.0
        %2704 = vmatmul.mubr.f32.gmra.mxu0 %v956
        %v2705 = vpop.f32.mrf.mxu0
        %v2706 = vadd.f32 %v952, %v2705
        %v2707 = vpop.f32.mrf.mxu0
        %v2708 = vadd.f32 %v952, %v2707
        %2709 = vdwg.mxu0
        %2710 = vmatprep.subr.mxu0 0.0
        %2711 = vmatpush1.msra.mxu0 0.0
        %2712 = vmatprep.subr.mxu0 0.0
        %2713 = vmatpush1.msra.mxu0 0.0
        %2714 = vmatprep.subr.mxu0 0.0
        %2715 = vmatpush1.msra.mxu0 0.0
        %2716 = vmatprep.subr.mxu0 0.0
        %2717 = vmatpush1.msra.mxu0 0.0
        %2718 = vmatprep.subr.mxu0 0.0
        %2719 = vmatpush1.msra.mxu0 0.0
        %2720 = vmatprep.subr.mxu0 0.0
        %2721 = vmatpush1.msra.mxu0 0.0
        %2722 = vmatprep.subr.mxu0 0.0
        %2723 = vmatpush1.msra.mxu0 0.0
        %2724 = vmatprep.subr.mxu0 0.0
        %2725 = vmatpush1.msra.mxu0 0.0
        %2726 = vmatprep.subr.mxu0 0.0
        %2727 = vmatpush1.msra.mxu0 0.0
        %2728 = vmatprep.subr.mxu0 0.0
        %2729 = vmatpush1.msra.mxu0 0.0
        %2730 = vmatprep.subr.mxu0 0.0
        %2731 = vmatpush1.msra.mxu0 0.0
        %2732 = vmatprep.subr.mxu0 0.0
        %2733 = vmatpush1.msra.mxu0 0.0
        %2734 = vmatprep.subr.mxu0 %v1095
        %2735 = vmatpush1.msra.mxu0 %v1092
        %2736 = vmatprep.subr.mxu0 %v867
        %2737 = vmatpush1.msra.mxu0 %v866
        %2738 = vmatprep.subr.mxu0 %v804
        %2739 = vmatpush1.msra.mxu0 %v803
        %2740 = vmatprep.subr.mxu0 %v741
        %2741 = vmatpush1.msra.mxu0 %v740
        %2742 = vmatprep.subr.mxu0 0.0
        %2743 = vmatpush2.msra.mxu0 0.0
        %2744 = vmatprep.subr.mxu0 0.0
        %2745 = vmatpush2.msra.mxu0 0.0
        %2746 = vmatprep.subr.mxu0 0.0
        %2747 = vmatpush2.msra.mxu0 0.0
        %2748 = vmatprep.subr.mxu0 0.0
        %2749 = vmatpush2.msra.mxu0 0.0
        %2750 = vmatprep.subr.mxu0 0.0
        %2751 = vmatpush2.msra.mxu0 0.0
        %2752 = vmatprep.subr.mxu0 0.0
        %2753 = vmatpush2.msra.mxu0 0.0
        %2754 = vmatprep.subr.mxu0 0.0
        %2755 = vmatpush2.msra.mxu0 0.0
        %2756 = vmatprep.subr.mxu0 0.0
        %2757 = vmatpush2.msra.mxu0 0.0
        %2758 = vmatprep.subr.mxu0 0.0
        %2759 = vmatpush2.msra.mxu0 0.0
        %2760 = vmatprep.subr.mxu0 0.0
        %2761 = vmatpush2.msra.mxu0 0.0
        %2762 = vmatprep.subr.mxu0 0.0
        %2763 = vmatpush2.msra.mxu0 0.0
        %2764 = vmatprep.subr.mxu0 0.0
        %2765 = vmatpush2.msra.mxu0 0.0
        %2766 = vmatprep.subr.mxu0 0.0
        %2767 = vmatpush2.msra.mxu0 0.0
        %2768 = vmatprep.subr.mxu0 0.0
        %2769 = vmatpush2.msra.mxu0 0.0
        %2770 = vmatprep.subr.mxu0 0.0
        %2771 = vmatpush2.msra.mxu0 0.0
        %2772 = vmatprep.subr.mxu0 0.0
        %2773 = vmatpush2.msra.mxu0 0.0
        %2774 = vmatprep.mubr.f32.mxu0 0.0
        %2775 = vmatmul.mubr.f32.gmra.mxu0 %v956
        %v2776 = vpop.f32.mrf.mxu0
        %v2777 = vadd.f32 %v952, %v2776
        %v2778 = vpop.f32.mrf.mxu0
        %v2779 = vadd.f32 %v952, %v2778
        %2780 = vdwg.mxu0
        %2781 = vmatprep.subr.mxu0 0.0
        %2782 = vmatpush1.msra.mxu0 0.0
        %2783 = vmatprep.subr.mxu0 0.0
        %2784 = vmatpush1.msra.mxu0 0.0
        %2785 = vmatprep.subr.mxu0 0.0
        %2786 = vmatpush1.msra.mxu0 0.0
        %2787 = vmatprep.subr.mxu0 0.0
        %2788 = vmatpush1.msra.mxu0 0.0
        %2789 = vmatprep.subr.mxu0 0.0
        %2790 = vmatpush1.msra.mxu0 0.0
        %2791 = vmatprep.subr.mxu0 0.0
        %2792 = vmatpush1.msra.mxu0 0.0
        %2793 = vmatprep.subr.mxu0 0.0
        %2794 = vmatpush1.msra.mxu0 0.0
        %2795 = vmatprep.subr.mxu0 0.0
        %2796 = vmatpush1.msra.mxu0 0.0
        %2797 = vmatprep.subr.mxu0 0.0
        %2798 = vmatpush1.msra.mxu0 0.0
        %2799 = vmatprep.subr.mxu0 0.0
        %2800 = vmatpush1.msra.mxu0 0.0
        %2801 = vmatprep.subr.mxu0 0.0
        %2802 = vmatpush1.msra.mxu0 0.0
        %2803 = vmatprep.subr.mxu0 0.0
        %2804 = vmatpush1.msra.mxu0 0.0
        %2805 = vmatprep.subr.mxu0 %v1101
        %2806 = vmatpush1.msra.mxu0 %v1098
        %2807 = vmatprep.subr.mxu0 %v869
        %2808 = vmatpush1.msra.mxu0 %v868
        %2809 = vmatprep.subr.mxu0 %v806
        %2810 = vmatpush1.msra.mxu0 %v805
        %2811 = vmatprep.subr.mxu0 %v743
        %2812 = vmatpush1.msra.mxu0 %v742
        %2813 = vmatprep.subr.mxu0 0.0
        %2814 = vmatpush2.msra.mxu0 0.0
        %2815 = vmatprep.subr.mxu0 0.0
        %2816 = vmatpush2.msra.mxu0 0.0
        %2817 = vmatprep.subr.mxu0 0.0
        %2818 = vmatpush2.msra.mxu0 0.0
        %2819 = vmatprep.subr.mxu0 0.0
        %2820 = vmatpush2.msra.mxu0 0.0
        %2821 = vmatprep.subr.mxu0 0.0
        %2822 = vmatpush2.msra.mxu0 0.0
        %2823 = vmatprep.subr.mxu0 0.0
        %2824 = vmatpush2.msra.mxu0 0.0
        %2825 = vmatprep.subr.mxu0 0.0
        %2826 = vmatpush2.msra.mxu0 0.0
        %2827 = vmatprep.subr.mxu0 0.0
        %2828 = vmatpush2.msra.mxu0 0.0
        %2829 = vmatprep.subr.mxu0 0.0
        %2830 = vmatpush2.msra.mxu0 0.0
        %2831 = vmatprep.subr.mxu0 0.0
        %2832 = vmatpush2.msra.mxu0 0.0
        %2833 = vmatprep.subr.mxu0 0.0
        %2834 = vmatpush2.msra.mxu0 0.0
        %2835 = vmatprep.subr.mxu0 0.0
        %2836 = vmatpush2.msra.mxu0 0.0
        %2837 = vmatprep.subr.mxu0 0.0
        %2838 = vmatpush2.msra.mxu0 0.0
        %2839 = vmatprep.subr.mxu0 0.0
        %2840 = vmatpush2.msra.mxu0 0.0
        %2841 = vmatprep.subr.mxu0 0.0
        %2842 = vmatpush2.msra.mxu0 0.0
        %2843 = vmatprep.subr.mxu0 0.0
        %2844 = vmatpush2.msra.mxu0 0.0
        %2845 = vmatprep.mubr.f32.mxu0 0.0
        %2846 = vmatmul.mubr.f32.gmra.mxu0 %v956
        %v2847 = vpop.f32.mrf.mxu0
        %v2848 = vadd.f32 %v952, %v2847
        %v2849 = vpop.f32.mrf.mxu0
        %v2850 = vadd.f32 %v952, %v2849
        %2851 = vdwg.mxu0
        %2852 = vmatprep.subr.mxu0 0.0
        %2853 = vmatpush1.msra.mxu0 0.0
        %2854 = vmatprep.subr.mxu0 0.0
        %2855 = vmatpush1.msra.mxu0 0.0
        %2856 = vmatprep.subr.mxu0 0.0
        %2857 = vmatpush1.msra.mxu0 0.0
        %2858 = vmatprep.subr.mxu0 0.0
        %2859 = vmatpush1.msra.mxu0 0.0
        %2860 = vmatprep.subr.mxu0 0.0
        %2861 = vmatpush1.msra.mxu0 0.0
        %2862 = vmatprep.subr.mxu0 0.0
        %2863 = vmatpush1.msra.mxu0 0.0
        %2864 = vmatprep.subr.mxu0 0.0
        %2865 = vmatpush1.msra.mxu0 0.0
        %2866 = vmatprep.subr.mxu0 0.0
        %2867 = vmatpush1.msra.mxu0 0.0
        %2868 = vmatprep.subr.mxu0 0.0
        %2869 = vmatpush1.msra.mxu0 0.0
        %2870 = vmatprep.subr.mxu0 0.0
        %2871 = vmatpush1.msra.mxu0 0.0
        %2872 = vmatprep.subr.mxu0 0.0
        %2873 = vmatpush1.msra.mxu0 0.0
        %2874 = vmatprep.subr.mxu0 0.0
        %2875 = vmatpush1.msra.mxu0 0.0
        %2876 = vmatprep.subr.mxu0 %v1107
        %2877 = vmatpush1.msra.mxu0 %v1104
        %2878 = vmatprep.subr.mxu0 %v871
        %2879 = vmatpush1.msra.mxu0 %v870
        %2880 = vmatprep.subr.mxu0 %v808
        %2881 = vmatpush1.msra.mxu0 %v807
        %2882 = vmatprep.subr.mxu0 %v745
        %2883 = vmatpush1.msra.mxu0 %v744
        %2884 = vmatprep.subr.mxu0 0.0
        %2885 = vmatpush2.msra.mxu0 0.0
        %2886 = vmatprep.subr.mxu0 0.0
        %2887 = vmatpush2.msra.mxu0 0.0
        %2888 = vmatprep.subr.mxu0 0.0
        %2889 = vmatpush2.msra.mxu0 0.0
        %2890 = vmatprep.subr.mxu0 0.0
        %2891 = vmatpush2.msra.mxu0 0.0
        %2892 = vmatprep.subr.mxu0 0.0
        %2893 = vmatpush2.msra.mxu0 0.0
        %2894 = vmatprep.subr.mxu0 0.0
        %2895 = vmatpush2.msra.mxu0 0.0
        %2896 = vmatprep.subr.mxu0 0.0
        %2897 = vmatpush2.msra.mxu0 0.0
        %2898 = vmatprep.subr.mxu0 0.0
        %2899 = vmatpush2.msra.mxu0 0.0
        %2900 = vmatprep.subr.mxu0 0.0
        %2901 = vmatpush2.msra.mxu0 0.0
        %2902 = vmatprep.subr.mxu0 0.0
        %2903 = vmatpush2.msra.mxu0 0.0
        %2904 = vmatprep.subr.mxu0 0.0
        %2905 = vmatpush2.msra.mxu0 0.0
        %2906 = vmatprep.subr.mxu0 0.0
        %2907 = vmatpush2.msra.mxu0 0.0
        %2908 = vmatprep.subr.mxu0 0.0
        %2909 = vmatpush2.msra.mxu0 0.0
        %2910 = vmatprep.subr.mxu0 0.0
        %2911 = vmatpush2.msra.mxu0 0.0
        %2912 = vmatprep.subr.mxu0 0.0
        %2913 = vmatpush2.msra.mxu0 0.0
        %2914 = vmatprep.subr.mxu0 0.0
        %2915 = vmatpush2.msra.mxu0 0.0
        %2916 = vmatprep.mubr.f32.mxu0 0.0
        %2917 = vmatmul.mubr.f32.gmra.mxu0 %v956
        %v2918 = vpop.f32.mrf.mxu0
        %v2919 = vadd.f32 %v952, %v2918
        %v2920 = vpop.f32.mrf.mxu0
        %v2921 = vadd.f32 %v952, %v2920
        %2922 = vdwg.mxu0
        %2923 = vmatprep.subr.mxu0 0.0
        %2924 = vmatpush1.msra.mxu0 0.0
        %2925 = vmatprep.subr.mxu0 0.0
        %2926 = vmatpush1.msra.mxu0 0.0
        %2927 = vmatprep.subr.mxu0 0.0
        %2928 = vmatpush1.msra.mxu0 0.0
        %2929 = vmatprep.subr.mxu0 0.0
        %2930 = vmatpush1.msra.mxu0 0.0
        %2931 = vmatprep.subr.mxu0 0.0
        %2932 = vmatpush1.msra.mxu0 0.0
        %2933 = vmatprep.subr.mxu0 0.0
        %2934 = vmatpush1.msra.mxu0 0.0
        %2935 = vmatprep.subr.mxu0 0.0
        %2936 = vmatpush1.msra.mxu0 0.0
        %2937 = vmatprep.subr.mxu0 0.0
        %2938 = vmatpush1.msra.mxu0 0.0
        %2939 = vmatprep.subr.mxu0 0.0
        %2940 = vmatpush1.msra.mxu0 0.0
        %2941 = vmatprep.subr.mxu0 0.0
        %2942 = vmatpush1.msra.mxu0 0.0
        %2943 = vmatprep.subr.mxu0 0.0
        %2944 = vmatpush1.msra.mxu0 0.0
        %2945 = vmatprep.subr.mxu0 0.0
        %2946 = vmatpush1.msra.mxu0 0.0
        %2947 = vmatprep.subr.mxu0 %v1113
        %2948 = vmatpush1.msra.mxu0 %v1110
        %2949 = vmatprep.subr.mxu0 %v873
        %2950 = vmatpush1.msra.mxu0 %v872
        %2951 = vmatprep.subr.mxu0 %v810
        %2952 = vmatpush1.msra.mxu0 %v809
        %2953 = vmatprep.subr.mxu0 %v747
        %2954 = vmatpush1.msra.mxu0 %v746
        %2955 = vmatprep.subr.mxu0 0.0
        %2956 = vmatpush2.msra.mxu0 0.0
        %2957 = vmatprep.subr.mxu0 0.0
        %2958 = vmatpush2.msra.mxu0 0.0
        %2959 = vmatprep.subr.mxu0 0.0
        %2960 = vmatpush2.msra.mxu0 0.0
        %2961 = vmatprep.subr.mxu0 0.0
        %2962 = vmatpush2.msra.mxu0 0.0
        %2963 = vmatprep.subr.mxu0 0.0
        %2964 = vmatpush2.msra.mxu0 0.0
        %2965 = vmatprep.subr.mxu0 0.0
        %2966 = vmatpush2.msra.mxu0 0.0
        %2967 = vmatprep.subr.mxu0 0.0
        %2968 = vmatpush2.msra.mxu0 0.0
        %2969 = vmatprep.subr.mxu0 0.0
        %2970 = vmatpush2.msra.mxu0 0.0
        %2971 = vmatprep.subr.mxu0 0.0
        %2972 = vmatpush2.msra.mxu0 0.0
        %2973 = vmatprep.subr.mxu0 0.0
        %2974 = vmatpush2.msra.mxu0 0.0
        %2975 = vmatprep.subr.mxu0 0.0
        %2976 = vmatpush2.msra.mxu0 0.0
        %2977 = vmatprep.subr.mxu0 0.0
        %2978 = vmatpush2.msra.mxu0 0.0
        %2979 = vmatprep.subr.mxu0 0.0
        %2980 = vmatpush2.msra.mxu0 0.0
        %2981 = vmatprep.subr.mxu0 0.0
        %2982 = vmatpush2.msra.mxu0 0.0
        %2983 = vmatprep.subr.mxu0 0.0
        %2984 = vmatpush2.msra.mxu0 0.0
        %2985 = vmatprep.subr.mxu0 0.0
        %2986 = vmatpush2.msra.mxu0 0.0
        %2987 = vmatprep.mubr.f32.mxu0 0.0
        %2988 = vmatmul.mubr.f32.gmra.mxu0 %v956
        %v2989 = vpop.f32.mrf.mxu0
        %v2990 = vadd.f32 %v952, %v2989
        %v2991 = vpop.f32.mrf.mxu0
        %v2992 = vadd.f32 %v952, %v2991
        %2993 = vdwg.mxu0
        %2994 = vmatprep.subr.mxu0 0.0
        %2995 = vmatpush1.msra.mxu0 0.0
        %2996 = vmatprep.subr.mxu0 0.0
        %2997 = vmatpush1.msra.mxu0 0.0
        %2998 = vmatprep.subr.mxu0 0.0
        %2999 = vmatpush1.msra.mxu0 0.0
        %3000 = vmatprep.subr.mxu0 0.0
        %3001 = vmatpush1.msra.mxu0 0.0
        %3002 = vmatprep.subr.mxu0 0.0
        %3003 = vmatpush1.msra.mxu0 0.0
        %3004 = vmatprep.subr.mxu0 0.0
        %3005 = vmatpush1.msra.mxu0 0.0
        %3006 = vmatprep.subr.mxu0 0.0
        %3007 = vmatpush1.msra.mxu0 0.0
        %3008 = vmatprep.subr.mxu0 0.0
        %3009 = vmatpush1.msra.mxu0 0.0
        %3010 = vmatprep.subr.mxu0 0.0
        %3011 = vmatpush1.msra.mxu0 0.0
        %3012 = vmatprep.subr.mxu0 0.0
        %3013 = vmatpush1.msra.mxu0 0.0
        %3014 = vmatprep.subr.mxu0 0.0
        %3015 = vmatpush1.msra.mxu0 0.0
        %3016 = vmatprep.subr.mxu0 0.0
        %3017 = vmatpush1.msra.mxu0 0.0
        %3018 = vmatprep.subr.mxu0 %v1119
        %3019 = vmatpush1.msra.mxu0 %v1116
        %3020 = vmatprep.subr.mxu0 %v875
        %3021 = vmatpush1.msra.mxu0 %v874
        %3022 = vmatprep.subr.mxu0 %v812
        %3023 = vmatpush1.msra.mxu0 %v811
        %3024 = vmatprep.subr.mxu0 %v749
        %3025 = vmatpush1.msra.mxu0 %v748
        %3026 = vmatprep.subr.mxu0 0.0
        %3027 = vmatpush2.msra.mxu0 0.0
        %3028 = vmatprep.subr.mxu0 0.0
        %3029 = vmatpush2.msra.mxu0 0.0
        %3030 = vmatprep.subr.mxu0 0.0
        %3031 = vmatpush2.msra.mxu0 0.0
        %3032 = vmatprep.subr.mxu0 0.0
        %3033 = vmatpush2.msra.mxu0 0.0
        %3034 = vmatprep.subr.mxu0 0.0
        %3035 = vmatpush2.msra.mxu0 0.0
        %3036 = vmatprep.subr.mxu0 0.0
        %3037 = vmatpush2.msra.mxu0 0.0
        %3038 = vmatprep.subr.mxu0 0.0
        %3039 = vmatpush2.msra.mxu0 0.0
        %3040 = vmatprep.subr.mxu0 0.0
        %3041 = vmatpush2.msra.mxu0 0.0
        %3042 = vmatprep.subr.mxu0 0.0
        %3043 = vmatpush2.msra.mxu0 0.0
        %3044 = vmatprep.subr.mxu0 0.0
        %3045 = vmatpush2.msra.mxu0 0.0
        %3046 = vmatprep.subr.mxu0 0.0
        %3047 = vmatpush2.msra.mxu0 0.0
        %3048 = vmatprep.subr.mxu0 0.0
        %3049 = vmatpush2.msra.mxu0 0.0
        %3050 = vmatprep.subr.mxu0 0.0
        %3051 = vmatpush2.msra.mxu0 0.0
        %3052 = vmatprep.subr.mxu0 0.0
        %3053 = vmatpush2.msra.mxu0 0.0
        %3054 = vmatprep.subr.mxu0 0.0
        %3055 = vmatpush2.msra.mxu0 0.0
        %3056 = vmatprep.subr.mxu0 0.0
        %3057 = vmatpush2.msra.mxu0 0.0
        %3058 = vmatprep.mubr.f32.mxu0 0.0
        %3059 = vmatmul.mubr.f32.gmra.mxu0 %v956
        %v3060 = vpop.f32.mrf.mxu0
        %v3061 = vadd.f32 %v952, %v3060
        %v3062 = vpop.f32.mrf.mxu0
        %v3063 = vadd.f32 %v952, %v3062
        %3064 = vdwg.mxu0
        %3065 = vmatprep.subr.mxu0 0.0
        %3066 = vmatpush1.msra.mxu0 0.0
        %3067 = vmatprep.subr.mxu0 0.0
        %3068 = vmatpush1.msra.mxu0 0.0
        %3069 = vmatprep.subr.mxu0 0.0
        %3070 = vmatpush1.msra.mxu0 0.0
        %3071 = vmatprep.subr.mxu0 0.0
        %3072 = vmatpush1.msra.mxu0 0.0
        %3073 = vmatprep.subr.mxu0 0.0
        %3074 = vmatpush1.msra.mxu0 0.0
        %3075 = vmatprep.subr.mxu0 0.0
        %3076 = vmatpush1.msra.mxu0 0.0
        %3077 = vmatprep.subr.mxu0 0.0
        %3078 = vmatpush1.msra.mxu0 0.0
        %3079 = vmatprep.subr.mxu0 0.0
        %3080 = vmatpush1.msra.mxu0 0.0
        %3081 = vmatprep.subr.mxu0 0.0
        %3082 = vmatpush1.msra.mxu0 0.0
        %3083 = vmatprep.subr.mxu0 0.0
        %3084 = vmatpush1.msra.mxu0 0.0
        %3085 = vmatprep.subr.mxu0 0.0
        %3086 = vmatpush1.msra.mxu0 0.0
        %3087 = vmatprep.subr.mxu0 0.0
        %3088 = vmatpush1.msra.mxu0 0.0
        %3089 = vmatprep.subr.mxu0 %v1125
        %3090 = vmatpush1.msra.mxu0 %v1122
        %3091 = vmatprep.subr.mxu0 %v877
        %3092 = vmatpush1.msra.mxu0 %v876
        %3093 = vmatprep.subr.mxu0 %v814
        %3094 = vmatpush1.msra.mxu0 %v813
        %3095 = vmatprep.subr.mxu0 %v751
        %3096 = vmatpush1.msra.mxu0 %v750
        %3097 = vmatprep.subr.mxu0 0.0
        %3098 = vmatpush2.msra.mxu0 0.0
        %3099 = vmatprep.subr.mxu0 0.0
        %3100 = vmatpush2.msra.mxu0 0.0
        %3101 = vmatprep.subr.mxu0 0.0
        %3102 = vmatpush2.msra.mxu0 0.0
        %3103 = vmatprep.subr.mxu0 0.0
        %3104 = vmatpush2.msra.mxu0 0.0
        %3105 = vmatprep.subr.mxu0 0.0
        %3106 = vmatpush2.msra.mxu0 0.0
        %3107 = vmatprep.subr.mxu0 0.0
        %3108 = vmatpush2.msra.mxu0 0.0
        %3109 = vmatprep.subr.mxu0 0.0
        %3110 = vmatpush2.msra.mxu0 0.0
        %3111 = vmatprep.subr.mxu0 0.0
        %3112 = vmatpush2.msra.mxu0 0.0
        %3113 = vmatprep.subr.mxu0 0.0
        %3114 = vmatpush2.msra.mxu0 0.0
        %3115 = vmatprep.subr.mxu0 0.0
        %3116 = vmatpush2.msra.mxu0 0.0
        %3117 = vmatprep.subr.mxu0 0.0
        %3118 = vmatpush2.msra.mxu0 0.0
        %3119 = vmatprep.subr.mxu0 0.0
        %3120 = vmatpush2.msra.mxu0 0.0
        %3121 = vmatprep.subr.mxu0 0.0
        %3122 = vmatpush2.msra.mxu0 0.0
        %3123 = vmatprep.subr.mxu0 0.0
        %3124 = vmatpush2.msra.mxu0 0.0
        %3125 = vmatprep.subr.mxu0 0.0
        %3126 = vmatpush2.msra.mxu0 0.0
        %3127 = vmatprep.subr.mxu0 0.0
        %3128 = vmatpush2.msra.mxu0 0.0
        %3129 = vmatprep.mubr.f32.mxu0 0.0
        %3130 = vmatmul.mubr.f32.gmra.mxu0 %v956
        %v3131 = vpop.f32.mrf.mxu0
        %v3132 = vadd.f32 %v952, %v3131
        %v3133 = vpop.f32.mrf.mxu0
        %v3134 = vadd.f32 %v952, %v3133
        %3135 = vdwg.mxu0
        %3136 = vmatprep.subr.mxu0 0.0
        %3137 = vmatpush1.msra.mxu0 0.0
        %3138 = vmatprep.subr.mxu0 0.0
        %3139 = vmatpush1.msra.mxu0 0.0
        %3140 = vmatprep.subr.mxu0 0.0
        %3141 = vmatpush1.msra.mxu0 0.0
        %3142 = vmatprep.subr.mxu0 0.0
        %3143 = vmatpush1.msra.mxu0 0.0
        %3144 = vmatprep.subr.mxu0 0.0
        %3145 = vmatpush1.msra.mxu0 0.0
        %3146 = vmatprep.subr.mxu0 0.0
        %3147 = vmatpush1.msra.mxu0 0.0
        %3148 = vmatprep.subr.mxu0 0.0
        %3149 = vmatpush1.msra.mxu0 0.0
        %3150 = vmatprep.subr.mxu0 0.0
        %3151 = vmatpush1.msra.mxu0 0.0
        %3152 = vmatprep.subr.mxu0 0.0
        %3153 = vmatpush1.msra.mxu0 0.0
        %3154 = vmatprep.subr.mxu0 0.0
        %3155 = vmatpush1.msra.mxu0 0.0
        %3156 = vmatprep.subr.mxu0 0.0
        %3157 = vmatpush1.msra.mxu0 0.0
        %3158 = vmatprep.subr.mxu0 0.0
        %3159 = vmatpush1.msra.mxu0 0.0
        %3160 = vmatprep.subr.mxu0 %v1131
        %3161 = vmatpush1.msra.mxu0 %v1128
        %3162 = vmatprep.subr.mxu0 %v879
        %3163 = vmatpush1.msra.mxu0 %v878
        %3164 = vmatprep.subr.mxu0 %v816
        %3165 = vmatpush1.msra.mxu0 %v815
        %3166 = vmatprep.subr.mxu0 %v753
        %3167 = vmatpush1.msra.mxu0 %v752
        %3168 = vmatprep.subr.mxu0 0.0
        %3169 = vmatpush2.msra.mxu0 0.0
        %3170 = vmatprep.subr.mxu0 0.0
        %3171 = vmatpush2.msra.mxu0 0.0
        %3172 = vmatprep.subr.mxu0 0.0
        %3173 = vmatpush2.msra.mxu0 0.0
        %3174 = vmatprep.subr.mxu0 0.0
        %3175 = vmatpush2.msra.mxu0 0.0
        %3176 = vmatprep.subr.mxu0 0.0
        %3177 = vmatpush2.msra.mxu0 0.0
        %3178 = vmatprep.subr.mxu0 0.0
        %3179 = vmatpush2.msra.mxu0 0.0
        %3180 = vmatprep.subr.mxu0 0.0
        %3181 = vmatpush2.msra.mxu0 0.0
        %3182 = vmatprep.subr.mxu0 0.0
        %3183 = vmatpush2.msra.mxu0 0.0
        %3184 = vmatprep.subr.mxu0 0.0
        %3185 = vmatpush2.msra.mxu0 0.0
        %3186 = vmatprep.subr.mxu0 0.0
        %3187 = vmatpush2.msra.mxu0 0.0
        %3188 = vmatprep.subr.mxu0 0.0
        %3189 = vmatpush2.msra.mxu0 0.0
        %3190 = vmatprep.subr.mxu0 0.0
        %3191 = vmatpush2.msra.mxu0 0.0
        %3192 = vmatprep.subr.mxu0 0.0
        %3193 = vmatpush2.msra.mxu0 0.0
        %3194 = vmatprep.subr.mxu0 0.0
        %3195 = vmatpush2.msra.mxu0 0.0
        %3196 = vmatprep.subr.mxu0 0.0
        %3197 = vmatpush2.msra.mxu0 0.0
        %3198 = vmatprep.subr.mxu0 0.0
        %3199 = vmatpush2.msra.mxu0 0.0
        %3200 = vmatprep.mubr.f32.mxu0 0.0
        %3201 = vmatmul.mubr.f32.gmra.mxu0 %v956
        %v3202 = vpop.f32.mrf.mxu0
        %v3203 = vadd.f32 %v952, %v3202
        %v3204 = vpop.f32.mrf.mxu0
        %v3205 = vadd.f32 %v952, %v3204
        %3206 = vdwg.mxu0
        %3207 = vmatprep.subr.mxu0 0.0
        %3208 = vmatpush1.msra.mxu0 0.0
        %3209 = vmatprep.subr.mxu0 0.0
        %3210 = vmatpush1.msra.mxu0 0.0
        %3211 = vmatprep.subr.mxu0 0.0
        %3212 = vmatpush1.msra.mxu0 0.0
        %3213 = vmatprep.subr.mxu0 0.0
        %3214 = vmatpush1.msra.mxu0 0.0
        %3215 = vmatprep.subr.mxu0 0.0
        %3216 = vmatpush1.msra.mxu0 0.0
        %3217 = vmatprep.subr.mxu0 0.0
        %3218 = vmatpush1.msra.mxu0 0.0
        %3219 = vmatprep.subr.mxu0 0.0
        %3220 = vmatpush1.msra.mxu0 0.0
        %3221 = vmatprep.subr.mxu0 0.0
        %3222 = vmatpush1.msra.mxu0 0.0
        %3223 = vmatprep.subr.mxu0 0.0
        %3224 = vmatpush1.msra.mxu0 0.0
        %3225 = vmatprep.subr.mxu0 0.0
        %3226 = vmatpush1.msra.mxu0 0.0
        %3227 = vmatprep.subr.mxu0 0.0
        %3228 = vmatpush1.msra.mxu0 0.0
        %3229 = vmatprep.subr.mxu0 0.0
        %3230 = vmatpush1.msra.mxu0 0.0
        %3231 = vmatprep.subr.mxu0 %v1137
        %3232 = vmatpush1.msra.mxu0 %v1134
        %3233 = vmatprep.subr.mxu0 %v881
        %3234 = vmatpush1.msra.mxu0 %v880
        %3235 = vmatprep.subr.mxu0 %v818
        %3236 = vmatpush1.msra.mxu0 %v817
        %3237 = vmatprep.subr.mxu0 %v755
        %3238 = vmatpush1.msra.mxu0 %v754
        %3239 = vmatprep.subr.mxu0 0.0
        %3240 = vmatpush2.msra.mxu0 0.0
        %3241 = vmatprep.subr.mxu0 0.0
        %3242 = vmatpush2.msra.mxu0 0.0
        %3243 = vmatprep.subr.mxu0 0.0
        %3244 = vmatpush2.msra.mxu0 0.0
        %3245 = vmatprep.subr.mxu0 0.0
        %3246 = vmatpush2.msra.mxu0 0.0
        %3247 = vmatprep.subr.mxu0 0.0
        %3248 = vmatpush2.msra.mxu0 0.0
        %3249 = vmatprep.subr.mxu0 0.0
        %3250 = vmatpush2.msra.mxu0 0.0
        %3251 = vmatprep.subr.mxu0 0.0
        %3252 = vmatpush2.msra.mxu0 0.0
        %3253 = vmatprep.subr.mxu0 0.0
        %3254 = vmatpush2.msra.mxu0 0.0
        %3255 = vmatprep.subr.mxu0 0.0
        %3256 = vmatpush2.msra.mxu0 0.0
        %3257 = vmatprep.subr.mxu0 0.0
        %3258 = vmatpush2.msra.mxu0 0.0
        %3259 = vmatprep.subr.mxu0 0.0
        %3260 = vmatpush2.msra.mxu0 0.0
        %3261 = vmatprep.subr.mxu0 0.0
        %3262 = vmatpush2.msra.mxu0 0.0
        %3263 = vmatprep.subr.mxu0 0.0
        %3264 = vmatpush2.msra.mxu0 0.0
        %3265 = vmatprep.subr.mxu0 0.0
        %3266 = vmatpush2.msra.mxu0 0.0
        %3267 = vmatprep.subr.mxu0 0.0
        %3268 = vmatpush2.msra.mxu0 0.0
        %3269 = vmatprep.subr.mxu0 0.0
        %3270 = vmatpush2.msra.mxu0 0.0
        %3271 = vmatprep.mubr.f32.mxu0 0.0
        %3272 = vmatmul.mubr.f32.gmra.mxu0 %v956
        %v3273 = vpop.f32.mrf.mxu0
        %v3274 = vadd.f32 %v952, %v3273
        %v3275 = vpop.f32.mrf.mxu0
        %v3276 = vadd.f32 %v952, %v3275
        %3277 = vdwg.mxu0
        %3278 = vmatprep.subr.mxu0 0.0
        %3279 = vmatpush1.msra.mxu0 0.0
        %3280 = vmatprep.subr.mxu0 0.0
        %3281 = vmatpush1.msra.mxu0 0.0
        %3282 = vmatprep.subr.mxu0 0.0
        %3283 = vmatpush1.msra.mxu0 0.0
        %3284 = vmatprep.subr.mxu0 0.0
        %3285 = vmatpush1.msra.mxu0 0.0
        %3286 = vmatprep.subr.mxu0 0.0
        %3287 = vmatpush1.msra.mxu0 0.0
        %3288 = vmatprep.subr.mxu0 0.0
        %3289 = vmatpush1.msra.mxu0 0.0
        %3290 = vmatprep.subr.mxu0 0.0
        %3291 = vmatpush1.msra.mxu0 0.0
        %3292 = vmatprep.subr.mxu0 0.0
        %3293 = vmatpush1.msra.mxu0 0.0
        %3294 = vmatprep.subr.mxu0 0.0
        %3295 = vmatpush1.msra.mxu0 0.0
        %3296 = vmatprep.subr.mxu0 0.0
        %3297 = vmatpush1.msra.mxu0 0.0
        %3298 = vmatprep.subr.mxu0 0.0
        %3299 = vmatpush1.msra.mxu0 0.0
        %3300 = vmatprep.subr.mxu0 0.0
        %3301 = vmatpush1.msra.mxu0 0.0
        %3302 = vmatprep.subr.mxu0 %v1143
        %3303 = vmatpush1.msra.mxu0 %v1140
        %3304 = vmatprep.subr.mxu0 %v883
        %3305 = vmatpush1.msra.mxu0 %v882
        %3306 = vmatprep.subr.mxu0 %v820
        %3307 = vmatpush1.msra.mxu0 %v819
        %3308 = vmatprep.subr.mxu0 %v757
        %3309 = vmatpush1.msra.mxu0 %v756
        %3310 = vmatprep.subr.mxu0 0.0
        %3311 = vmatpush2.msra.mxu0 0.0
        %3312 = vmatprep.subr.mxu0 0.0
        %3313 = vmatpush2.msra.mxu0 0.0
        %3314 = vmatprep.subr.mxu0 0.0
        %3315 = vmatpush2.msra.mxu0 0.0
        %3316 = vmatprep.subr.mxu0 0.0
        %3317 = vmatpush2.msra.mxu0 0.0
        %3318 = vmatprep.subr.mxu0 0.0
        %3319 = vmatpush2.msra.mxu0 0.0
        %3320 = vmatprep.subr.mxu0 0.0
        %3321 = vmatpush2.msra.mxu0 0.0
        %3322 = vmatprep.subr.mxu0 0.0
        %3323 = vmatpush2.msra.mxu0 0.0
        %3324 = vmatprep.subr.mxu0 0.0
        %3325 = vmatpush2.msra.mxu0 0.0
        %3326 = vmatprep.subr.mxu0 0.0
        %3327 = vmatpush2.msra.mxu0 0.0
        %3328 = vmatprep.subr.mxu0 0.0
        %3329 = vmatpush2.msra.mxu0 0.0
        %3330 = vmatprep.subr.mxu0 0.0
        %3331 = vmatpush2.msra.mxu0 0.0
        %3332 = vmatprep.subr.mxu0 0.0
        %3333 = vmatpush2.msra.mxu0 0.0
        %3334 = vmatprep.subr.mxu0 0.0
        %3335 = vmatpush2.msra.mxu0 0.0
        %3336 = vmatprep.subr.mxu0 0.0
        %3337 = vmatpush2.msra.mxu0 0.0
        %3338 = vmatprep.subr.mxu0 0.0
        %3339 = vmatpush2.msra.mxu0 0.0
        %3340 = vmatprep.subr.mxu0 0.0
        %3341 = vmatpush2.msra.mxu0 0.0
        %3342 = vmatprep.mubr.f32.mxu0 0.0
        %3343 = vmatmul.mubr.f32.gmra.mxu0 %v956
        %v3344 = vpop.f32.mrf.mxu0
        %v3345 = vadd.f32 %v952, %v3344
        %v3346 = vpop.f32.mrf.mxu0
        %v3347 = vadd.f32 %v952, %v3346
        %3348 = vdwg.mxu0
        %3349 = vmatprep.subr.mxu0 0.0
        %3350 = vmatpush1.msra.mxu0 0.0
        %3351 = vmatprep.subr.mxu0 0.0
        %3352 = vmatpush1.msra.mxu0 0.0
        %3353 = vmatprep.subr.mxu0 0.0
        %3354 = vmatpush1.msra.mxu0 0.0
        %3355 = vmatprep.subr.mxu0 0.0
        %3356 = vmatpush1.msra.mxu0 0.0
        %3357 = vmatprep.subr.mxu0 0.0
        %3358 = vmatpush1.msra.mxu0 0.0
        %3359 = vmatprep.subr.mxu0 0.0
        %3360 = vmatpush1.msra.mxu0 0.0
        %3361 = vmatprep.subr.mxu0 0.0
        %3362 = vmatpush1.msra.mxu0 0.0
        %3363 = vmatprep.subr.mxu0 0.0
        %3364 = vmatpush1.msra.mxu0 0.0
        %3365 = vmatprep.subr.mxu0 0.0
        %3366 = vmatpush1.msra.mxu0 0.0
        %3367 = vmatprep.subr.mxu0 0.0
        %3368 = vmatpush1.msra.mxu0 0.0
        %3369 = vmatprep.subr.mxu0 0.0
        %3370 = vmatpush1.msra.mxu0 0.0
        %3371 = vmatprep.subr.mxu0 0.0
        %3372 = vmatpush1.msra.mxu0 0.0
        %3373 = vmatprep.subr.mxu0 0.0
        %3374 = vmatpush1.msra.mxu0 %v1146
        %3375 = vmatprep.subr.mxu0 0.0
        %3376 = vmatpush1.msra.mxu0 %v884
        %3377 = vmatprep.subr.mxu0 0.0
        %3378 = vmatpush1.msra.mxu0 %v821
        %3379 = vmatprep.subr.mxu0 0.0
        %3380 = vmatpush1.msra.mxu0 %v758
        %3381 = vmatprep.subr.mxu0 0.0
        %3382 = vmatpush2.msra.mxu0 0.0
        %3383 = vmatprep.subr.mxu0 0.0
        %3384 = vmatpush2.msra.mxu0 0.0
        %3385 = vmatprep.subr.mxu0 0.0
        %3386 = vmatpush2.msra.mxu0 0.0
        %3387 = vmatprep.subr.mxu0 0.0
        %3388 = vmatpush2.msra.mxu0 0.0
        %3389 = vmatprep.subr.mxu0 0.0
        %3390 = vmatpush2.msra.mxu0 0.0
        %3391 = vmatprep.subr.mxu0 0.0
        %3392 = vmatpush2.msra.mxu0 0.0
        %3393 = vmatprep.subr.mxu0 0.0
        %3394 = vmatpush2.msra.mxu0 0.0
        %3395 = vmatprep.subr.mxu0 0.0
        %3396 = vmatpush2.msra.mxu0 0.0
        %3397 = vmatprep.subr.mxu0 0.0
        %3398 = vmatpush2.msra.mxu0 0.0
        %3399 = vmatprep.subr.mxu0 0.0
        %3400 = vmatpush2.msra.mxu0 0.0
        %3401 = vmatprep.subr.mxu0 0.0
        %3402 = vmatpush2.msra.mxu0 0.0
        %3403 = vmatprep.subr.mxu0 0.0
        %3404 = vmatpush2.msra.mxu0 0.0
        %3405 = vmatprep.subr.mxu0 0.0
        %3406 = vmatpush2.msra.mxu0 0.0
        %3407 = vmatprep.subr.mxu0 0.0
        %3408 = vmatpush2.msra.mxu0 0.0
        %3409 = vmatprep.subr.mxu0 0.0
        %3410 = vmatpush2.msra.mxu0 0.0
        %3411 = vmatprep.subr.mxu0 0.0
        %3412 = vmatpush2.msra.mxu0 0.0
        %3413 = vmatprep.mubr.f32.mxu0 0.0
        %3414 = vmatmul.mubr.f32.gmra.mxu0 %v956
        %v3415 = vpop.f32.mrf.mxu0
        %v3416 = vadd.f32 %v952, %v3415
        %v3417 = vpop.f32.mrf.mxu0
        %3418 = vdwg.mxu0
        %v3419 = vmax.f32 %v1215, 0.0
        %v3420 = vmax.f32 %v1217, 0.0
        %v3421 = vmax.f32 %v1286, 0.0
        %v3422 = vmax.f32 %v1288, 0.0
        %v3423 = vmax.f32 %v1357, 0.0
        %v3424 = vmax.f32 %v1359, 0.0
        %v3425 = vmax.f32 %v1428, 0.0
        %v3426 = vmax.f32 %v1430, 0.0
        %v3427 = vmax.f32 %v1499, 0.0
        %v3428 = vmax.f32 %v1501, 0.0
        %v3429 = vmax.f32 %v1570, 0.0
        %v3430 = vmax.f32 %v1572, 0.0
        %v3431 = vmax.f32 %v1641, 0.0
        %v3432 = vmax.f32 %v1643, 0.0
        %v3433 = vmax.f32 %v1712, 0.0
        %v3434 = vmax.f32 %v1714, 0.0
        %v3435 = vmax.f32 %v1783, 0.0
        %v3436 = vmax.f32 %v1785, 0.0
        %v3437 = vmax.f32 %v1854, 0.0
        %v3438 = vmax.f32 %v1856, 0.0
        %v3439 = vmax.f32 %v1925, 0.0
        %v3440 = vmax.f32 %v1927, 0.0
        %v3441 = vmax.f32 %v1996, 0.0
        %v3442 = vmax.f32 %v1998, 0.0
        %v3443 = vmax.f32 %v2067, 0.0
        %v3444 = vmax.f32 %v2069, 0.0
        %v3445 = vmax.f32 %v2138, 0.0
        %v3446 = vmax.f32 %v2140, 0.0
        %v3447 = vmax.f32 %v2209, 0.0
        %v3448 = vmax.f32 %v2211, 0.0
        %v3449 = vmax.f32 %v2280, 0.0
        %v3450 = vmax.f32 %v2282, 0.0
        %v3451 = vmax.f32 %v2351, 0.0
        %v3452 = vmax.f32 %v2353, 0.0
        %v3453 = vmax.f32 %v2422, 0.0
        %v3454 = vmax.f32 %v2424, 0.0
        %v3455 = vmax.f32 %v2493, 0.0
        %v3456 = vmax.f32 %v2495, 0.0
        %v3457 = vmax.f32 %v2564, 0.0
        %v3458 = vmax.f32 %v2566, 0.0
        %v3459 = vmax.f32 %v2635, 0.0
        %v3460 = vmax.f32 %v2637, 0.0
        %v3461 = vmax.f32 %v2706, 0.0
        %v3462 = vmax.f32 %v2708, 0.0
        %v3463 = vmax.f32 %v2777, 0.0
        %v3464 = vmax.f32 %v2779, 0.0
        %v3465 = vmax.f32 %v2848, 0.0
        %v3466 = vmax.f32 %v2850, 0.0
        %v3467 = vmax.f32 %v2919, 0.0
        %v3468 = vmax.f32 %v2921, 0.0
        %v3469 = vmax.f32 %v2990, 0.0
        %v3470 = vmax.f32 %v2992, 0.0
        %v3471 = vmax.f32 %v3061, 0.0
        %v3472 = vmax.f32 %v3063, 0.0
        %v3473 = vmax.f32 %v3132, 0.0
        %v3474 = vmax.f32 %v3134, 0.0
        %v3475 = vmax.f32 %v3203, 0.0
        %v3476 = vmax.f32 %v3205, 0.0
        %v3477 = vmax.f32 %v3274, 0.0
        %v3478 = vmax.f32 %v3276, 0.0
        %v3479 = vmax.f32 %v3345, 0.0
        %v3480 = vmax.f32 %v3347, 0.0
        %v3481 = vmax.f32 %v3416, 0.0
        %3482 = vst [vmem:[%s693] sm:$0xff] %v3419
        %3483 = vst [vmem:[%s693 + $0x8] sm:$0xff] %v3420
        %3484 = vst [vmem:[%s693 + $0x10] sm:$0xff] %v3421
        %3485 = vst [vmem:[%s693 + $0x18] sm:$0xff] %v3422
        %3486 = vst [vmem:[%s693 + $0x20] sm:$0xff] %v3423
        %3487 = vst [vmem:[%s693 + $0x28] sm:$0xff] %v3424
        %3488 = vst [vmem:[%s693 + $0x30] sm:$0xff] %v3425
        %3489 = vst [vmem:[%s693 + $0x38] sm:$0xff] %v3426
        %3490 = vst [vmem:[%s693 + $0x40] sm:$0xff] %v3427
        %3491 = vst [vmem:[%s693 + $0x48] sm:$0xff] %v3428
        %3492 = vst [vmem:[%s693 + $0x50] sm:$0xff] %v3429
        %3493 = vst [vmem:[%s693 + $0x58] sm:$0xff] %v3430
        %3494 = vst [vmem:[%s693 + $0x60] sm:$0xff] %v3431
        %3495 = vst [vmem:[%s693 + $0x68] sm:$0xff] %v3432
        %3496 = vst [vmem:[%s693 + $0x70] sm:$0xff] %v3433
        %3497 = vst [vmem:[%s693 + $0x78] sm:$0xff] %v3434
        %3498 = vst [vmem:[%s693 + $0x80] sm:$0xff] %v3435
        %3499 = vst [vmem:[%s693 + $0x88] sm:$0xff] %v3436
        %3500 = vst [vmem:[%s693 + $0x90] sm:$0xff] %v3437
        %3501 = vst [vmem:[%s693 + $0x98] sm:$0xff] %v3438
        %3502 = vst [vmem:[%s693 + $0xa0] sm:$0xff] %v3439
        %3503 = vst [vmem:[%s693 + $0xa8] sm:$0xff] %v3440
        %3504 = vst [vmem:[%s693 + $0xb0] sm:$0xff] %v3441
        %3505 = vst [vmem:[%s693 + $0xb8] sm:$0xff] %v3442
        %3506 = vst [vmem:[%s693 + $0xc0] sm:$0xff] %v3443
        %3507 = vst [vmem:[%s693 + $0xc8] sm:$0xff] %v3444
        %3508 = vst [vmem:[%s693 + $0xd0] sm:$0xff] %v3445
        %3509 = vst [vmem:[%s693 + $0xd8] sm:$0xff] %v3446
        %3510 = vst [vmem:[%s693 + $0xe0] sm:$0xff] %v3447
        %3511 = vst [vmem:[%s693 + $0xe8] sm:$0xff] %v3448
        %3512 = vst [vmem:[%s693 + $0xf0] sm:$0xff] %v3449
        %3513 = vst [vmem:[%s693 + $0xf8] sm:$0xff] %v3450
        %3514 = vst [vmem:[%s693 + $0x100] sm:$0xff] %v3451
        %3515 = vst [vmem:[%s693 + $0x108] sm:$0xff] %v3452
        %3516 = vst [vmem:[%s693 + $0x110] sm:$0xff] %v3453
        %3517 = vst [vmem:[%s693 + $0x118] sm:$0xff] %v3454
        %3518 = vst [vmem:[%s693 + $0x120] sm:$0xff] %v3455
        %3519 = vst [vmem:[%s693 + $0x128] sm:$0xff] %v3456
        %3520 = vst [vmem:[%s693 + $0x130] sm:$0xff] %v3457
        %3521 = vst [vmem:[%s693 + $0x138] sm:$0xff] %v3458
        %3522 = vst [vmem:[%s693 + $0x140] sm:$0xff] %v3459
        %3523 = vst [vmem:[%s693 + $0x148] sm:$0xff] %v3460
        %3524 = vst [vmem:[%s693 + $0x150] sm:$0xff] %v3461
        %3525 = vst [vmem:[%s693 + $0x158] sm:$0xff] %v3462
        %3526 = vst [vmem:[%s693 + $0x160] sm:$0xff] %v3463
        %3527 = vst [vmem:[%s693 + $0x168] sm:$0xff] %v3464
        %3528 = vst [vmem:[%s693 + $0x170] sm:$0xff] %v3465
        %3529 = vst [vmem:[%s693 + $0x178] sm:$0xff] %v3466
        %3530 = vst [vmem:[%s693 + $0x180] sm:$0xff] %v3467
        %3531 = vst [vmem:[%s693 + $0x188] sm:$0xff] %v3468
        %3532 = vst [vmem:[%s693 + $0x190] sm:$0xff] %v3469
        %3533 = vst [vmem:[%s693 + $0x198] sm:$0xff] %v3470
        %3534 = vst [vmem:[%s693 + $0x1a0] sm:$0xff] %v3471
        %3535 = vst [vmem:[%s693 + $0x1a8] sm:$0xff] %v3472
        %3536 = vst [vmem:[%s693 + $0x1b0] sm:$0xff] %v3473
        %3537 = vst [vmem:[%s693 + $0x1b8] sm:$0xff] %v3474
        %3538 = vst [vmem:[%s693 + $0x1c0] sm:$0xff] %v3475
        %3539 = vst [vmem:[%s693 + $0x1c8] sm:$0xff] %v3476
        %3540 = vst [vmem:[%s693 + $0x1d0] sm:$0xff] %v3477
        %3541 = vst [vmem:[%s693 + $0x1d8] sm:$0xff] %v3478
        %3542 = vst [vmem:[%s693 + $0x1e0] sm:$0xff] %v3479
        %3543 = vst [vmem:[%s693 + $0x1e8] sm:$0xff] %v3480
        %3544 = vst [vmem:[%s693 + $0x1f0] sm:$0xff] %v3481
        %s3545 = smul.u32 63, %s14
        %p3546 = scmp.lt.s32.totalorder %s3545, 125
        %s3547 = scalar_select %p3546, %s3545, 125
        %s3548 = smul.addr %s3547, 8
        %s3549 = scalar_lea.vmem %s3, %s3548
        // Predicated region
        $region56: #{two_heads_forward.4} parent=50 // pred_check
          %p3550 = pneg %p100
        $region57: #{two_heads_forward.4} parent=50 // pred_check_branch
          %3552 = sbr.rel (%p3550) target = $region59
        $region58: #{two_heads_forward.4} parent=50 // pred_region
          %s3553 = smul.u32 63, %s14
        $region59: #{two_heads_forward.4} parent=50 // pred_fallthru
          _
      $region51: #{two_heads_forward.4} parent=5 // pred_fallthru
        _
      %p3554 = scmp.le.s32.totalorder 2, %s9
      // Predicated region
      $region60: #{two_heads_forward.4} parent=5 // pred_check
        %p3555 = pneg %p3554
      $region61: #{two_heads_forward.4} parent=5 // pred_check_branch
        %3557 = sbr.rel (%p3555) target = $region63
      $region62: #{two_heads_forward.4} parent=5 // pred_region
        %s3558 = ssub.s32 %s9, 2
        // Predicated region
        $region64: #{two_heads_forward.4} parent=62 // pred_check
          %p3559 = pneg %p106
        $region65: #{two_heads_forward.4} parent=62 // pred_check_branch
          %3561 = sbr.rel (%p3559) target = $region67
        $region66: #{two_heads_forward.4} parent=62 // pred_region
          %s3562 = smul.u32 63, %s15
          %p3563 = scmp.lt.s32.totalorder %s3562, 125
          %s3564 = scalar_select %p3563, %s3562, 125
          %s3565 = smul.addr %s3564, 8
          %s3566 = scalar_lea.vmem %s3, %s3565
        $region67: #{two_heads_forward.4} parent=62 // pred_fallthru
          _
      $region63: #{two_heads_forward.4} parent=5 // pred_fallthru
        _
    $region6: #{two_heads_forward.4} parent=1 // loop_footer
      %s13 = sadd.s32 1, %s9
    $region7: #{two_heads_forward.4} parent=1 // loop_footer_branch
      %8 = sbr.rel target = $region3
    $region8: #{two_heads_forward.4} parent=1 // loop_exit
      _

// kernel: two_heads_forward.5
$region0: #{two_heads_forward.5}
  #allocation0 [shape = 'u32[]', space=smem, size = 0x4, offset = 0x4, fixed_abs, tag = 'smem constant byte address 0x4 - core index']
  #allocation1 [shape = 'u32[144,128]{1,0:T(1,128)}', space=vmem, size = 0x12000, scoped, tag = 'internal scratch']
  %s0 = inlined_call_operand.vmem [shape: f32[8,200], index: 0, kind: input, shape index: {}]
  %s1 = inlined_call_operand.vmem [shape: f32[8,1], index: 1, kind: input, shape index: {}]
  %s2 = inlined_call_operand.vmem [shape: f32[200,3700], index: 2, kind: input, shape index: {}]
  %s3 = inlined_call_operand.vmem [shape: f32[8,3700], index: 3, kind: output, shape index: {}]
  %s4 = sld [smem:[#allocation0]]
  $region173: #{two_heads_forward.5} parent=0
    _
  %s6 = ssub.s32 1, %s4
  %s7 = scalar_select 0, %s6, %s4
  $region1: #{two_heads_forward.5} parent=0
    #allocation2 [shape = 'u8[3072000]{0}', space=vmem, size = 0x2ee000, scoped, tag = 'input window, operand 2']
    #allocation3 [shape = 'u8[122880]{0}', space=vmem, size = 0x1e000, scoped, tag = 'output window, operand 0']
    loop: start=0, step=1, limit=4
    $region2: #{two_heads_forward.5} parent=1 // loop_pre_header
      _
    $region3: #{two_heads_forward.5} parent=1 // loop_header
      %s9 = sphi 0, %s13
      %p10 = scmp.ge.s32.totalorder %s9, 4
      %s17 = sphi 0, %s17
      %s19 = sphi 0, %s17
      %s20 = sphi 0, %s19
      %s34 = sphi 0, %s20
      %s38 = sphi 0, %s38
      %s40 = sphi 0, %s38
      %s41 = sphi 0, %s40
      %s55 = sphi 0, %s41
      %s61 = sphi 0, %s63
      %s64 = sphi 0, %s61
      %s65 = sphi 0, %s64
      %s81 = sphi 0, %s65
      %s87 = sphi 0, %s89
      %s90 = sphi 0, %s87
      %s91 = sphi 0, %s90
      %s107 = sphi 0, %s91
    $region4: #{two_heads_forward.5} parent=1 // loop_header_branch
      %12 = sbr.rel (%p10) target = $region8
    $region5: #{two_heads_forward.5} parent=1 // loop_body
      %s14 = ssub.s32 %s9, 1
      %s15 = ssub.s32 %s9, 2
      %s16 = sadd.s32 %s9, 1
      %s18 = sadd.s32 %s17, 1
      %p21 = scmp.eq.s32.totalorder %s9, 1
      %p22 = scmp.ne.s32.totalorder %s17, %s19
      %p23 = scmp.eq.s32.totalorder %s9, 0
      %p24 = por %p22, %p23
      %p25 = scmp.ne.s32.totalorder %s17, %s19
      %p26 = scmp.eq.s32.totalorder %s14, 1
      %p27 = por %p25, %p26
      %p28 = scmp.ne.s32.totalorder %s19, %s20
      %p29 = scmp.eq.s32.totalorder %s14, 0
      %p30 = por %p28, %p29
      %p31 = scmp.ne.s32.totalorder %s19, %s20
      %p32 = scmp.eq.s32.totalorder %s15, 1
      %p33 = por %p31, %p32
      %p35 = scmp.ne.s32.totalorder %s20, %s34
      %p36 = scmp.eq.s32.totalorder %s15, 0
      %p37 = por %p35, %p36
      %s39 = sadd.s32 %s38, 1
      %p42 = scmp.eq.s32.totalorder %s9, 1
      %p43 = scmp.ne.s32.totalorder %s38, %s40
      %p44 = scmp.eq.s32.totalorder %s9, 0
      %p45 = por %p43, %p44
      %p46 = scmp.ne.s32.totalorder %s38, %s40
      %p47 = scmp.eq.s32.totalorder %s14, 1
      %p48 = por %p46, %p47
      %p49 = scmp.ne.s32.totalorder %s40, %s41
      %p50 = scmp.eq.s32.totalorder %s14, 0
      %p51 = por %p49, %p50
      %p52 = scmp.ne.s32.totalorder %s40, %s41
      %p53 = scmp.eq.s32.totalorder %s15, 1
      %p54 = por %p52, %p53
      %p56 = scmp.ne.s32.totalorder %s41, %s55
      %p57 = scmp.eq.s32.totalorder %s15, 0
      %p58 = por %p56, %p57
      %s59 = ssub.s32 %s9, %s16
      %p60 = scmp.eq.s32.totalorder %s59, 0
      %s62 = sadd.s32 %s61, 1
      %s63 = scalar_select %p60, %s61, %s62
      %p66 = pneg %p60
      %p67 = scmp.eq.s32.totalorder %s9, 1
      %p68 = por %p66, %p67
      %p69 = scmp.ne.s32.totalorder %s61, %s64
      %p70 = scmp.eq.s32.totalorder %s9, 0
      %p71 = por %p69, %p70
      %p72 = scmp.ne.s32.totalorder %s61, %s64
      %p73 = scmp.eq.s32.totalorder %s14, 1
      %p74 = por %p72, %p73
      %p75 = scmp.ne.s32.totalorder %s64, %s65
      %p76 = scmp.eq.s32.totalorder %s14, 0
      %p77 = por %p75, %p76
      %p78 = scmp.ne.s32.totalorder %s64, %s65
      %p79 = scmp.eq.s32.totalorder %s15, 1
      %p80 = por %p78, %p79
      %p82 = scmp.ne.s32.totalorder %s65, %s81
      %p83 = scmp.eq.s32.totalorder %s15, 0
      %p84 = por %p82, %p83
      %s85 = ssub.s32 %s9, %s16
      %p86 = scmp.eq.s32.totalorder %s85, 0
      %s88 = sadd.s32 %s87, 1
      %s89 = scalar_select %p86, %s87, %s88
      %p92 = pneg %p86
      %p93 = scmp.eq.s32.totalorder %s9, 1
      %p94 = por %p92, %p93
      %p95 = scmp.ne.s32.totalorder %s87, %s90
      %p96 = scmp.eq.s32.totalorder %s9, 0
      %p97 = por %p95, %p96
      %p98 = scmp.ne.s32.totalorder %s87, %s90
      %p99 = scmp.eq.s32.totalorder %s14, 1
      %p100 = por %p98, %p99
      %p101 = scmp.ne.s32.totalorder %s90, %s91
      %p102 = scmp.eq.s32.totalorder %s14, 0
      %p103 = por %p101, %p102
      %p104 = scmp.ne.s32.totalorder %s90, %s91
      %p105 = scmp.eq.s32.totalorder %s15, 1
      %p106 = por %p104, %p105
      %p108 = scmp.ne.s32.totalorder %s91, %s107
      %p109 = scmp.eq.s32.totalorder %s15, 0
      %p110 = por %p108, %p109
      %p111 = scmp.le.s32.totalorder 1, %s9
      %p112 = scmp.lt.s32.totalorder %s9, 3
      %p113 = pnand %p111, %p112
      %p114 = pneg %p113
      // Predicated region
      $region9: #{two_heads_forward.5} parent=5 // pred_check
        _
      $region10: #{two_heads_forward.5} parent=5 // pred_check_branch
        %116 = sbr.rel (%p113) target = $region12
      $region11: #{two_heads_forward.5} parent=5 // pred_region
        %s117 = ssub.s32 %s9, 1
        // Predicated region
        $region13: #{two_heads_forward.5} parent=11 // pred_check
          %p118 = pneg %p30
        $region14: #{two_heads_forward.5} parent=11 // pred_check_branch
          %120 = sbr.rel (%p118) target = $region16
        $region15: #{two_heads_forward.5} parent=11 // pred_region
          _
        $region16: #{two_heads_forward.5} parent=11 // pred_fallthru
          _
        // Predicated region
        $region17: #{two_heads_forward.5} parent=11 // pred_check
          %p121 = pneg %p51
        $region18: #{two_heads_forward.5} parent=11 // pred_check_branch
          %123 = sbr.rel (%p121) target = $region20
        $region19: #{two_heads_forward.5} parent=11 // pred_region
          _
        $region20: #{two_heads_forward.5} parent=11 // pred_fallthru
          _
      $region12: #{two_heads_forward.5} parent=5 // pred_fallthru
        _
      %p124 = scmp.lt.s32.totalorder %s9, 2
      // Predicated region
      $region21: #{two_heads_forward.5} parent=5 // pred_check
        %p125 = pneg %p124
      $region22: #{two_heads_forward.5} parent=5 // pred_check_branch
        %127 = sbr.rel (%p125) target = $region24
      $region23: #{two_heads_forward.5} parent=5 // pred_region
        // Predicated region
        $region25: #{two_heads_forward.5} parent=23 // pred_check
          %p128 = pneg %p71
        $region26: #{two_heads_forward.5} parent=23 // pred_check_branch
          %130 = sbr.rel (%p128) target = $region28
        $region27: #{two_heads_forward.5} parent=23 // pred_region
          %s131 = sand.u32 %s61, 1
          %s132 = sand.u32 %s61, 1
          %s133 = smul.addr %s132, 3000
          %s134 = scalar_lea.vmem [#allocation2], %s133
          %s135 = smul.u32 15, %s9
          %s136 = ssub.s32 29, %s135
          %p137 = scmp.lt.s32.totalorder %s136, 15
          %s138 = scalar_select %p137, %s136, 15
          %s139 = smul.u32 3200, %s138
          %p140 = scmp.ne.s32.totalorder 0, %s139
          %s141 = smul.addr %s135, 8
          %s142 = scalar_lea.vmem %s2, %s141
          %s143 = smul.u32 %s138, 8
          // Predicated region
          $region29: #{two_heads_forward.5} parent=27 // pred_check
            %p144 = pneg %p140
          $region30: #{two_heads_forward.5} parent=27 // pred_check_branch
            %146 = sbr.rel (%p144) target = $region32
          $region31: #{two_heads_forward.5} parent=27 // pred_region
            %p147 = scmp.lt.u32.totalorder %s143, 8
            %p148 = pneg %p147
            // Predicated region
            $region33: #{two_heads_forward.5} parent=31 // pred_check
              _
            $region34: #{two_heads_forward.5} parent=31 // pred_check_branch
              %150 = sbr.rel (%p147) target = $region36
            $region35: #{two_heads_forward.5} parent=31 // pred_region
              %s214 = sand.u32 %s143, 7
              %p215 = scmp.eq.s32.totalorder %s214, 0
              // Predicated region
              $region48: #{two_heads_forward.5} parent=35 // pred_check
                %p216 = pneg %p215
              $region49: #{two_heads_forward.5} parent=35 // pred_check_branch
                %218 = sbr.rel (%p216) target = $region51
              $region50: #{two_heads_forward.5} parent=35 // pred_region
                %s219 = sshrl.u32 %s143, 3
                %s220 = sdiv.u32.pop %s219, 3
                %s221 = srem.u32.pop %s219, 3
                // While loop
                $region52: #{two_heads_forward.5} parent=50 // loop_pre_header
                  _
                $region53: #{two_heads_forward.5} parent=50 // loop_header
                  %s225 = sphi 0, %s227
                  %p226 = scmp.ge.s32.totalorder %s225, %s220
                  %s230 = sphi 0, %s385
                  %s231 = sphi %s142, %s388
                  %s232 = sphi %s134, %s389
                $region54: #{two_heads_forward.5} parent=50 // loop_header_branch
                  %229 = sbr.rel (%p226) target = $region58
                $region55: #{two_heads_forward.5} parent=50 // loop_body
                  %v233 = vld [vmem:[%s231] sm:$0xff]
                  %234 = vst [vmem:[%s232] sm:$0xff] %v233
                  %v235 = vld [vmem:[%s231 + $0x8] sm:$0xff]
                  %236 = vst [vmem:[%s232 + $0x8] sm:$0xff] %v235
                  %v237 = vld [vmem:[%s231 + $0x10] sm:$0xff]
                  %238 = vst [vmem:[%s232 + $0x10] sm:$0xff] %v237
                  %v239 = vld [vmem:[%s231 + $0xe8] sm:$0xff]
                  %240 = vst [vmem:[%s232 + $0x78] sm:$0xff] %v239
                  %v241 = vld [vmem:[%s231 + $0xf0] sm:$0xff]
                  %242 = vst [vmem:[%s232 + $0x80] sm:$0xff] %v241
                  %v243 = vld [vmem:[%s231 + $0xf8] sm:$0xff]
                  %244 = vst [vmem:[%s232 + $0x88] sm:$0xff] %v243
                  %v245 = vld [vmem:[%s231 + $0x1d0] sm:$0xff]
                  %246 = vst [vmem:[%s232 + $0xf0] sm:$0xff] %v245
                  %v247 = vld [vmem:[%s231 + $0x1d8] sm:$0xff]
                  %248 = vst [vmem:[%s232 + $0xf8] sm:$0xff] %v247
                  %v249 = vld [vmem:[%s231 + $0x1e0] sm:$0xff]
                  %250 = vst [vmem:[%s232 + $0x100] sm:$0xff] %v249
                  %v251 = vld [vmem:[%s231 + $0x2b8] sm:$0xff]
                  %252 = vst [vmem:[%s232 + $0x168] sm:$0xff] %v251
                  %v253 = vld [vmem:[%s231 + $0x2c0] sm:$0xff]
                  %254 = vst [vmem:[%s232 + $0x170] sm:$0xff] %v253
                  %v255 = vld [vmem:[%s231 + $0x2c8] sm:$0xff]
                  %256 = vst [vmem:[%s232 + $0x178] sm:$0xff] %v255
                  %v257 = vld [vmem:[%s231 + $0x3a0] sm:$0xff]
                  %258 = vst [vmem:[%s232 + $0x1e0] sm:$0xff] %v257
                  %v259 = vld [vmem:[%s231 + $0x3a8] sm:$0xff]
                  %260 = vst [vmem:[%s232 + $0x1e8] sm:$0xff] %v259
                  %v261 = vld [vmem:[%s231 + $0x3b0] sm:$0xff]
                  %262 = vst [vmem:[%s232 + $0x1f0] sm:$0xff] %v261
                  %v263 = vld [vmem:[%s231 + $0x488] sm:$0xff]
                  %264 = vst [vmem:[%s232 + $0x258] sm:$0xff] %v263
                  %v265 = vld [vmem:[%s231 + $0x490] sm:$0xff]
                  %266 = vst [vmem:[%s232 + $0x260] sm:$0xff] %v265
                  %v267 = vld [vmem:[%s231 + $0x498] sm:$0xff]
                  %268 = vst [vmem:[%s232 + $0x268] sm:$0xff] %v267
                  %v269 = vld [vmem:[%s231 + $0x570] sm:$0xff]
                  %270 = vst [vmem:[%s232 + $0x2d0] sm:$0xff] %v269
                  %v271 = vld [vmem:[%s231 + $0x578] sm:$0xff]
                  %272 = vst [vmem:[%s232 + $0x2d8] sm:$0xff] %v271
                  %v273 = vld [vmem:[%s231 + $0x580] sm:$0xff]
                  %274 = vst [vmem:[%s232 + $0x2e0] sm:$0xff] %v273
                  %v275 = vld [vmem:[%s231 + $0x658] sm:$0xff]
                  %276 = vst [vmem:[%s232 + $0x348] sm:$0xff] %v275
                  %v277 = vld [vmem:[%s231 + $0x660] sm:$0xff]
                  %278 = vst [vmem:[%s232 + $0x350] sm:$0xff] %v277
                  %v279 = vld [vmem:[%s231 + $0x668] sm:$0xff]
                  %280 = vst [vmem:[%s232 + $0x358] sm:$0xff] %v279
                  %v281 = vld [vmem:[%s231 + $0x740] sm:$0xff]
                  %282 = vst [vmem:[%s232 + $0x3c0] sm:$0xff] %v281
                  %v283 = vld [vmem:[%s231 + $0x748] sm:$0xff]
                  %284 = vst [vmem:[%s232 + $0x3c8] sm:$0xff] %v283
                  %v285 = vld [vmem:[%s231 + $0x750] sm:$0xff]
                  %286 = vst [vmem:[%s232 + $0x3d0] sm:$0xff] %v285
                  %v287 = vld [vmem:[%s231 + $0x828] sm:$0xff]
                  %288 = vst [vmem:[%s232 + $0x438] sm:$0xff] %v287
                  %v289 = vld [vmem:[%s231 + $0x830] sm:$0xff]
                  %290 = vst [vmem:[%s232 + $0x440] sm:$0xff] %v289
                  %v291 = vld [vmem:[%s231 + $0x838] sm:$0xff]
                  %292 = vst [vmem:[%s232 + $0x448] sm:$0xff] %v291
                  %v293 = vld [vmem:[%s231 + $0x910] sm:$0xff]
                  %294 = vst [vmem:[%s232 + $0x4b0] sm:$0xff] %v293
                  %v295 = vld [vmem:[%s231 + $0x918] sm:$0xff]
                  %296 = vst [vmem:[%s232 + $0x4b8] sm:$0xff] %v295
                  %v297 = vld [vmem:[%s231 + $0x920] sm:$0xff]
                  %298 = vst [vmem:[%s232 + $0x4c0] sm:$0xff] %v297
                  %v299 = vld [vmem:[%s231 + $0x9f8] sm:$0xff]
                  %300 = vst [vmem:[%s232 + $0x528] sm:$0xff] %v299
                  %v301 = vld [vmem:[%s231 + $0xa00] sm:$0xff]
                  %302 = vst [vmem:[%s232 + $0x530] sm:$0xff] %v301
                  %v303 = vld [vmem:[%s231 + $0xa08] sm:$0xff]
                  %304 = vst [vmem:[%s232 + $0x538] sm:$0xff] %v303
                  %v305 = vld [vmem:[%s231 + $0xae0] sm:$0xff]
                  %306 = vst [vmem:[%s232 + $0x5a0] sm:$0xff] %v305
                  %v307 = vld [vmem:[%s231 + $0xae8] sm:$0xff]
                  %308 = vst [vmem:[%s232 + $0x5a8] sm:$0xff] %v307
                  %v309 = vld [vmem:[%s231 + $0xaf0] sm:$0xff]
                  %310 = vst [vmem:[%s232 + $0x5b0] sm:$0xff] %v309
                  %v311 = vld [vmem:[%s231 + $0xbc8] sm:$0xff]
                  %312 = vst [vmem:[%s232 + $0x618] sm:$0xff] %v311
                  %v313 = vld [vmem:[%s231 + $0xbd0] sm:$0xff]
                  %314 = vst [vmem:[%s232 + $0x620] sm:$0xff] %v313
                  %v315 = vld [vmem:[%s231 + $0xbd8] sm:$0xff]
                  %316 = vst [vmem:[%s232 + $0x628] sm:$0xff] %v315
                  %v317 = vld [vmem:[%s231 + $0xcb0] sm:$0xff]
                  %318 = vst [vmem:[%s232 + $0x690] sm:$0xff] %v317
                  %v319 = vld [vmem:[%s231 + $0xcb8] sm:$0xff]
                  %320 = vst [vmem:[%s232 + $0x698] sm:$0xff] %v319
                  %v321 = vld [vmem:[%s231 + $0xcc0] sm:$0xff]
                  %322 = vst [vmem:[%s232 + $0x6a0] sm:$0xff] %v321
                  %v323 = vld [vmem:[%s231 + $0xd98] sm:$0xff]
                  %324 = vst [vmem:[%s232 + $0x708] sm:$0xff] %v323
                  %v325 = vld [vmem:[%s231 + $0xda0] sm:$0xff]
                  %326 = vst [vmem:[%s232 + $0x710] sm:$0xff] %v325
                  %v327 = vld [vmem:[%s231 + $0xda8] sm:$0xff]
                  %328 = vst [vmem:[%s232 + $0x718] sm:$0xff] %v327
                  %v329 = vld [vmem:[%s231 + $0xe80] sm:$0xff]
                  %330 = vst [vmem:[%s232 + $0x780] sm:$0xff] %v329
                  %v331 = vld [vmem:[%s231 + $0xe88] sm:$0xff]
                  %332 = vst [vmem:[%s232 + $0x788] sm:$0xff] %v331
                  %v333 = vld [vmem:[%s231 + $0xe90] sm:$0xff]
                  %334 = vst [vmem:[%s232 + $0x790] sm:$0xff] %v333
                  %v335 = vld [vmem:[%s231 + $0xf68] sm:$0xff]
                  %336 = vst [vmem:[%s232 + $0x7f8] sm:$0xff] %v335
                  %v337 = vld [vmem:[%s231 + $0xf70] sm:$0xff]
                  %338 = vst [vmem:[%s232 + $0x800] sm:$0xff] %v337
                  %v339 = vld [vmem:[%s231 + $0xf78] sm:$0xff]
                  %340 = vst [vmem:[%s232 + $0x808] sm:$0xff] %v339
                  %v341 = vld [vmem:[%s231 + $0x1050] sm:$0xff]
                  %342 = vst [vmem:[%s232 + $0x870] sm:$0xff] %v341
                  %v343 = vld [vmem:[%s231 + $0x1058] sm:$0xff]
                  %344 = vst [vmem:[%s232 + $0x878] sm:$0xff] %v343
                  %v345 = vld [vmem:[%s231 + $0x1060] sm:$0xff]
                  %346 = vst [vmem:[%s232 + $0x880] sm:$0xff] %v345
                  %v347 = vld [vmem:[%s231 + $0x1138] sm:$0xff]
                  %348 = vst [vmem:[%s232 + $0x8e8] sm:$0xff] %v347
                  %v349 = vld [vmem:[%s231 + $0x1140] sm:$0xff]
                  %350 = vst [vmem:[%s232 + $0x8f0] sm:$0xff] %v349
                  %v351 = vld [vmem:[%s231 + $0x1148] sm:$0xff]
                  %352 = vst [vmem:[%s232 + $0x8f8] sm:$0xff] %v351
                  %v353 = vld [vmem:[%s231 + $0x1220] sm:$0xff]
                  %354 = vst [vmem:[%s232 + $0x960] sm:$0xff] %v353
                  %v355 = vld [vmem:[%s231 + $0x1228] sm:$0xff]
                  %356 = vst [vmem:[%s232 + $0x968] sm:$0xff] %v355
                  %v357 = vld [vmem:[%s231 + $0x1230] sm:$0xff]
                  %358 = vst [vmem:[%s232 + $0x970] sm:$0xff] %v357
                  %v359 = vld [vmem:[%s231 + $0x1308] sm:$0xff]
                  %360 = vst [vmem:[%s232 + $0x9d8] sm:$0xff] %v359
                  %v361 = vld [vmem:[%s231 + $0x1310] sm:$0xff]
                  %362 = vst [vmem:[%s232 + $0x9e0] sm:$0xff] %v361
                  %v363 = vld [vmem:[%s231 + $0x1318] sm:$0xff]
                  %364 = vst [vmem:[%s232 + $0x9e8] sm:$0xff] %v363
                  %v365 = vld [vmem:[%s231 + $0x13f0] sm:$0xff]
                  %366 = vst [vmem:[%s232 + $0xa50] sm:$0xff] %v365
                  %v367 = vld [vmem:[%s231 + $0x13f8] sm:$0xff]
                  %368 = vst [vmem:[%s232 + $0xa58] sm:$0xff] %v367
                  %v369 = vld [vmem:[%s231 + $0x1400] sm:$0xff]
                  %370 = vst [vmem:[%s232 + $0xa60] sm:$0xff] %v369
                  %v371 = vld [vmem:[%s231 + $0x14d8] sm:$0xff]
                  %372 = vst [vmem:[%s232 + $0xac8] sm:$0xff] %v371
                  %v373 = vld [vmem:[%s231 + $0x14e0] sm:$0xff]
                  %374 = vst [vmem:[%s232 + $0xad0] sm:$0xff] %v373
                  %v375 = vld [vmem:[%s231 + $0x14e8] sm:$0xff]
                  %376 = vst [vmem:[%s232 + $0xad8] sm:$0xff] %v375
                  %v377 = vld [vmem:[%s231 + $0x15c0] sm:$0xff]
                  %378 = vst [vmem:[%s232 + $0xb40] sm:$0xff] %v377
                  %v379 = vld [vmem:[%s231 + $0x15c8] sm:$0xff]
                  %380 = vst [vmem:[%s232 + $0xb48] sm:$0xff] %v379
                  %v381 = vld [vmem:[%s231 + $0x15d0] sm:$0xff]
                  %382 = vst [vmem:[%s232 + $0xb50] sm:$0xff] %v381
                  %s383 = sadd.s32 1, %s230
                  %p384 = scmp.ge.s32.totalorder %s383, %s220
                  %s385 = scalar_select %p384, 0, %s383
                  %s386 = smul.u32 %s385, 24
                  %s387 = smul.u32 %s385, 24
                  %s388 = scalar_lea.vmem %s142, %s386
                  %s389 = scalar_lea.vmem %s134, %s387 [#allocation2]
                $region56: #{two_heads_forward.5} parent=50 // loop_footer
                  %s227 = sadd.s32 %s225, 1
                $region57: #{two_heads_forward.5} parent=50 // loop_footer_branch
                  %224 = sbr.rel target = $region53
                $region58: #{two_heads_forward.5} parent=50 // loop_exit
                  _
                %s390 = sdiv.u32.pop %s219, 3
                %s391 = srem.u32.pop %s219, 3
                %s392 = smul.u32 %s390, 3
                %s393 = smul.u32 128, %s392
                %s394 = sshra.s32 %s393, 4
                %s395 = scalar_lea.vmem %s142, %s394
                %s396 = smul.u32 128, %s392
                %s397 = sshra.s32 %s396, 4
                %s398 = scalar_lea.vmem %s134, %s397 [#allocation2]
                // While loop
                $region59: #{two_heads_forward.5} parent=50 // loop_pre_header
                  _
                $region60: #{two_heads_forward.5} parent=50 // loop_header
                  %s402 = sphi 0, %s404
                  %p403 = scmp.ge.s32.totalorder %s402, %s391
                  %s407 = sphi 0, %s462
                  %s408 = sphi %s395, %s465
                  %s409 = sphi %s398, %s466
                $region61: #{two_heads_forward.5} parent=50 // loop_header_branch
                  %406 = sbr.rel (%p403) target = $region65
                $region62: #{two_heads_forward.5} parent=50 // loop_body
                  %v410 = vld [vmem:[%s408] sm:$0xff]
                  %411 = vst [vmem:[%s409] sm:$0xff] %v410
                  %v412 = vld [vmem:[%s408 + $0xe8] sm:$0xff]
                  %413 = vst [vmem:[%s409 + $0x78] sm:$0xff] %v412
                  %v414 = vld [vmem:[%s408 + $0x1d0] sm:$0xff]
                  %415 = vst [vmem:[%s409 + $0xf0] sm:$0xff] %v414
                  %v416 = vld [vmem:[%s408 + $0x2b8] sm:$0xff]
                  %417 = vst [vmem:[%s409 + $0x168] sm:$0xff] %v416
                  %v418 = vld [vmem:[%s408 + $0x3a0] sm:$0xff]
                  %419 = vst [vmem:[%s409 + $0x1e0] sm:$0xff] %v418
                  %v420 = vld [vmem:[%s408 + $0x488] sm:$0xff]
                  %421 = vst [vmem:[%s409 + $0x258] sm:$0xff] %v420
                  %v422 = vld [vmem:[%s408 + $0x570] sm:$0xff]
                  %423 = vst [vmem:[%s409 + $0x2d0] sm:$0xff] %v422
                  %v424 = vld [vmem:[%s408 + $0x658] sm:$0xff]
                  %425 = vst [vmem:[%s409 + $0x348] sm:$0xff] %v424
                  %v426 = vld [vmem:[%s408 + $0x740] sm:$0xff]
                  %427 = vst [vmem:[%s409 + $0x3c0] sm:$0xff] %v426
                  %v428 = vld [vmem:[%s408 + $0x828] sm:$0xff]
                  %429 = vst [vmem:[%s409 + $0x438] sm:$0xff] %v428
                  %v430 = vld [vmem:[%s408 + $0x910] sm:$0xff]
                  %431 = vst [vmem:[%s409 + $0x4b0] sm:$0xff] %v430
                  %v432 = vld [vmem:[%s408 + $0x9f8] sm:$0xff]
                  %433 = vst [vmem:[%s409 + $0x528] sm:$0xff] %v432
                  %v434 = vld [vmem:[%s408 + $0xae0] sm:$0xff]
                  %435 = vst [vmem:[%s409 + $0x5a0] sm:$0xff] %v434
                  %v436 = vld [vmem:[%s408 + $0xbc8] sm:$0xff]
                  %437 = vst [vmem:[%s409 + $0x618] sm:$0xff] %v436
                  %v438 = vld [vmem:[%s408 + $0xcb0] sm:$0xff]
                  %439 = vst [vmem:[%s409 + $0x690] sm:$0xff] %v438
                  %v440 = vld [vmem:[%s408 + $0xd98] sm:$0xff]
                  %441 = vst [vmem:[%s409 + $0x708] sm:$0xff] %v440
                  %v442 = vld [vmem:[%s408 + $0xe80] sm:$0xff]
                  %443 = vst [vmem:[%s409 + $0x780] sm:$0xff] %v442
                  %v444 = vld [vmem:[%s408 + $0xf68] sm:$0xff]
                  %445 = vst [vmem:[%s409 + $0x7f8] sm:$0xff] %v444
                  %v446 = vld [vmem:[%s408 + $0x1050] sm:$0xff]
                  %447 = vst [vmem:[%s409 + $0x870] sm:$0xff] %v446
                  %v448 = vld [vmem:[%s408 + $0x1138] sm:$0xff]
                  %449 = vst [vmem:[%s409 + $0x8e8] sm:$0xff] %v448
                  %v450 = vld [vmem:[%s408 + $0x1220] sm:$0xff]
                  %451 = vst [vmem:[%s409 + $0x960] sm:$0xff] %v450
                  %v452 = vld [vmem:[%s408 + $0x1308] sm:$0xff]
                  %453 = vst [vmem:[%s409 + $0x9d8] sm:$0xff] %v452
                  %v454 = vld [vmem:[%s408 + $0x13f0] sm:$0xff]
                  %455 = vst [vmem:[%s409 + $0xa50] sm:$0xff] %v454
                  %v456 = vld [vmem:[%s408 + $0x14d8] sm:$0xff]
                  %457 = vst [vmem:[%s409 + $0xac8] sm:$0xff] %v456
                  %v458 = vld [vmem:[%s408 + $0x15c0] sm:$0xff]
                  %459 = vst [vmem:[%s409 + $0xb40] sm:$0xff] %v458
                  %s460 = sadd.s32 1, %s407
                  %p461 = scmp.ge.s32.totalorder %s460, %s391
                  %s462 = scalar_select %p461, 0, %s460
                  %s463 = smul.u32 %s462, 8
                  %s464 = smul.u32 %s462, 8
                  %s465 = scalar_lea.vmem %s395, %s463
                  %s466 = scalar_lea.vmem %s398, %s464 [#allocation2]
                $region63: #{two_heads_forward.5} parent=50 // loop_footer
                  %s404 = sadd.s32 %s402, 1
                $region64: #{two_heads_forward.5} parent=50 // loop_footer_branch
                  %401 = sbr.rel target = $region60
                $region65: #{two_heads_forward.5} parent=50 // loop_exit
                  _
              $region51: #{two_heads_forward.5} parent=35 // pred_fallthru
                _
              %p467 = pneg %p215
              // Predicated region
              $region66: #{two_heads_forward.5} parent=35 // pred_check
                _
              $region67: #{two_heads_forward.5} parent=35 // pred_check_branch
                %469 = sbr.rel (%p215) target = $region69
              $region68: #{two_heads_forward.5} parent=35 // pred_region
                %s470 = sand.u32 %s143, 7
                %s471 = ssub.s32 %s143, %s470
                %s472 = scalar_lea.vmem %s142, %s471
                %s473 = ssub.s32 %s143, %s470
                %s474 = scalar_lea.vmem %s134, %s473 [#allocation2]
                %s475 = sshrl.u32 %s143, 3
                %s476 = sdiv.u32.pop %s475, 3
                %s477 = srem.u32.pop %s475, 3
                // While loop
                $region70: #{two_heads_forward.5} parent=68 // loop_pre_header
                  _
                $region71: #{two_heads_forward.5} parent=68 // loop_header
                  %s481 = sphi 0, %s483
                  %p482 = scmp.ge.s32.totalorder %s481, %s476
                  %s486 = sphi 0, %s641
                  %s487 = sphi %s142, %s644
                  %s488 = sphi %s134, %s645
                $region72: #{two_heads_forward.5} parent=68 // loop_header_branch
                  %485 = sbr.rel (%p482) target = $region76
                $region73: #{two_heads_forward.5} parent=68 // loop_body
                  %v489 = vld [vmem:[%s487] sm:$0xff]
                  %490 = vst [vmem:[%s488] sm:$0xff] %v489
                  %v491 = vld [vmem:[%s487 + $0x8] sm:$0xff]
                  %492 = vst [vmem:[%s488 + $0x8] sm:$0xff] %v491
                  %v493 = vld [vmem:[%s487 + $0x10] sm:$0xff]
                  %494 = vst [vmem:[%s488 + $0x10] sm:$0xff] %v493
                  %v495 = vld [vmem:[%s487 + $0xe8] sm:$0xff]
                  %496 = vst [vmem:[%s488 + $0x78] sm:$0xff] %v495
                  %v497 = vld [vmem:[%s487 + $0xf0] sm:$0xff]
                  %498 = vst [vmem:[%s488 + $0x80] sm:$0xff] %v497
                  %v499 = vld [vmem:[%s487 + $0xf8] sm:$0xff]
                  %500 = vst [vmem:[%s488 + $0x88] sm:$0xff] %v499
                  %v501 = vld [vmem:[%s487 + $0x1d0] sm:$0xff]
                  %502 = vst [vmem:[%s488 + $0xf0] sm:$0xff] %v501
                  %v503 = vld [vmem:[%s487 + $0x1d8] sm:$0xff]
                  %504 = vst [vmem:[%s488 + $0xf8] sm:$0xff] %v503
                  %v505 = vld [vmem:[%s487 + $0x1e0] sm:$0xff]
                  %506 = vst [vmem:[%s488 + $0x100] sm:$0xff] %v505
                  %v507 = vld [vmem:[%s487 + $0x2b8] sm:$0xff]
                  %508 = vst [vmem:[%s488 + $0x168] sm:$0xff] %v507
                  %v509 = vld [vmem:[%s487 + $0x2c0] sm:$0xff]
                  %510 = vst [vmem:[%s488 + $0x170] sm:$0xff] %v509
                  %v511 = vld [vmem:[%s487 + $0x2c8] sm:$0xff]
                  %512 = vst [vmem:[%s488 + $0x178] sm:$0xff] %v511
                  %v513 = vld [vmem:[%s487 + $0x3a0] sm:$0xff]
                  %514 = vst [vmem:[%s488 + $0x1e0] sm:$0xff] %v513
                  %v515 = vld [vmem:[%s487 + $0x3a8] sm:$0xff]
                  %516 = vst [vmem:[%s488 + $0x1e8] sm:$0xff] %v515
                  %v517 = vld [vmem:[%s487 + $0x3b0] sm:$0xff]
                  %518 = vst [vmem:[%s488 + $0x1f0] sm:$0xff] %v517
                  %v519 = vld [vmem:[%s487 + $0x488] sm:$0xff]
                  %520 = vst [vmem:[%s488 + $0x258] sm:$0xff] %v519
                  %v521 = vld [vmem:[%s487 + $0x490] sm:$0xff]
                  %522 = vst [vmem:[%s488 + $0x260] sm:$0xff] %v521
                  %v523 = vld [vmem:[%s487 + $0x498] sm:$0xff]
                  %524 = vst [vmem:[%s488 + $0x268] sm:$0xff] %v523
                  %v525 = vld [vmem:[%s487 + $0x570] sm:$0xff]
                  %526 = vst [vmem:[%s488 + $0x2d0] sm:$0xff] %v525
                  %v527 = vld [vmem:[%s487 + $0x578] sm:$0xff]
                  %528 = vst [vmem:[%s488 + $0x2d8] sm:$0xff] %v527
                  %v529 = vld [vmem:[%s487 + $0x580] sm:$0xff]
                  %530 = vst [vmem:[%s488 + $0x2e0] sm:$0xff] %v529
                  %v531 = vld [vmem:[%s487 + $0x658] sm:$0xff]
                  %532 = vst [vmem:[%s488 + $0x348] sm:$0xff] %v531
                  %v533 = vld [vmem:[%s487 + $0x660] sm:$0xff]
                  %534 = vst [vmem:[%s488 + $0x350] sm:$0xff] %v533
                  %v535 = vld [vmem:[%s487 + $0x668] sm:$0xff]
                  %536 = vst [vmem:[%s488 + $0x358] sm:$0xff] %v535
                  %v537 = vld [vmem:[%s487 + $0x740] sm:$0xff]
                  %538 = vst [vmem:[%s488 + $0x3c0] sm:$0xff] %v537
                  %v539 = vld [vmem:[%s487 + $0x748] sm:$0xff]
                  %540 = vst [vmem:[%s488 + $0x3c8] sm:$0xff] %v539
                  %v541 = vld [vmem:[%s487 + $0x750] sm:$0xff]
                  %542 = vst [vmem:[%s488 + $0x3d0] sm:$0xff] %v541
                  %v543 = vld [vmem:[%s487 + $0x828] sm:$0xff]
                  %544 = vst [vmem:[%s488 + $0x438] sm:$0xff] %v543
                  %v545 = vld [vmem:[%s487 + $0x830] sm:$0xff]
                  %546 = vst [vmem:[%s488 + $0x440] sm:$0xff] %v545
                  %v547 = vld [vmem:[%s487 + $0x838] sm:$0xff]
                  %548 = vst [vmem:[%s488 + $0x448] sm:$0xff] %v547
                  %v549 = vld [vmem:[%s487 + $0x910] sm:$0xff]
                  %550 = vst [vmem:[%s488 + $0x4b0] sm:$0xff] %v549
                  %v551 = vld [vmem:[%s487 + $0x918] sm:$0xff]
                  %552 = vst [vmem:[%s488 + $0x4b8] sm:$0xff] %v551
                  %v553 = vld [vmem:[%s487 + $0x920] sm:$0xff]
                  %554 = vst [vmem:[%s488 + $0x4c0] sm:$0xff] %v553
                  %v555 = vld [vmem:[%s487 + $0x9f8] sm:$0xff]
                  %556 = vst [vmem:[%s488 + $0x528] sm:$0xff] %v555
                  %v557 = vld [vmem:[%s487 + $0xa00] sm:$0xff]
                  %558 = vst [vmem:[%s488 + $0x530] sm:$0xff] %v557
                  %v559 = vld [vmem:[%s487 + $0xa08] sm:$0xff]
                  %560 = vst [vmem:[%s488 + $0x538] sm:$0xff] %v559
                  %v561 = vld [vmem:[%s487 + $0xae0] sm:$0xff]
                  %562 = vst [vmem:[%s488 + $0x5a0] sm:$0xff] %v561
                  %v563 = vld [vmem:[%s487 + $0xae8] sm:$0xff]
                  %564 = vst [vmem:[%s488 + $0x5a8] sm:$0xff] %v563
                  %v565 = vld [vmem:[%s487 + $0xaf0] sm:$0xff]
                  %566 = vst [vmem:[%s488 + $0x5b0] sm:$0xff] %v565
                  %v567 = vld [vmem:[%s487 + $0xbc8] sm:$0xff]
                  %568 = vst [vmem:[%s488 + $0x618] sm:$0xff] %v567
                  %v569 = vld [vmem:[%s487 + $0xbd0] sm:$0xff]
                  %570 = vst [vmem:[%s488 + $0x620] sm:$0xff] %v569
                  %v571 = vld [vmem:[%s487 + $0xbd8] sm:$0xff]
                  %572 = vst [vmem:[%s488 + $0x628] sm:$0xff] %v571
                  %v573 = vld [vmem:[%s487 + $0xcb0] sm:$0xff]
                  %574 = vst [vmem:[%s488 + $0x690] sm:$0xff] %v573
                  %v575 = vld [vmem:[%s487 + $0xcb8] sm:$0xff]
                  %576 = vst [vmem:[%s488 + $0x698] sm:$0xff] %v575
                  %v577 = vld [vmem:[%s487 + $0xcc0] sm:$0xff]
                  %578 = vst [vmem:[%s488 + $0x6a0] sm:$0xff] %v577
                  %v579 = vld [vmem:[%s487 + $0xd98] sm:$0xff]
                  %580 = vst [vmem:[%s488 + $0x708] sm:$0xff] %v579
                  %v581 = vld [vmem:[%s487 + $0xda0] sm:$0xff]
                  %582 = vst [vmem:[%s488 + $0x710] sm:$0xff] %v581
                  %v583 = vld [vmem:[%s487 + $0xda8] sm:$0xff]
                  %584 = vst [vmem:[%s488 + $0x718] sm:$0xff] %v583
                  %v585 = vld [vmem:[%s487 + $0xe80] sm:$0xff]
                  %586 = vst [vmem:[%s488 + $0x780] sm:$0xff] %v585
                  %v587 = vld [vmem:[%s487 + $0xe88] sm:$0xff]
                  %588 = vst [vmem:[%s488 + $0x788] sm:$0xff] %v587
                  %v589 = vld [vmem:[%s487 + $0xe90] sm:$0xff]
                  %590 = vst [vmem:[%s488 + $0x790] sm:$0xff] %v589
                  %v591 = vld [vmem:[%s487 + $0xf68] sm:$0xff]
                  %592 = vst [vmem:[%s488 + $0x7f8] sm:$0xff] %v591
                  %v593 = vld [vmem:[%s487 + $0xf70] sm:$0xff]
                  %594 = vst [vmem:[%s488 + $0x800] sm:$0xff] %v593
                  %v595 = vld [vmem:[%s487 + $0xf78] sm:$0xff]
                  %596 = vst [vmem:[%s488 + $0x808] sm:$0xff] %v595
                  %v597 = vld [vmem:[%s487 + $0x1050] sm:$0xff]
                  %598 = vst [vmem:[%s488 + $0x870] sm:$0xff] %v597
                  %v599 = vld [vmem:[%s487 + $0x1058] sm:$0xff]
                  %600 = vst [vmem:[%s488 + $0x878] sm:$0xff] %v599
                  %v601 = vld [vmem:[%s487 + $0x1060] sm:$0xff]
                  %602 = vst [vmem:[%s488 + $0x880] sm:$0xff] %v601
                  %v603 = vld [vmem:[%s487 + $0x1138] sm:$0xff]
                  %604 = vst [vmem:[%s488 + $0x8e8] sm:$0xff] %v603
                  %v605 = vld [vmem:[%s487 + $0x1140] sm:$0xff]
                  %606 = vst [vmem:[%s488 + $0x8f0] sm:$0xff] %v605
                  %v607 = vld [vmem:[%s487 + $0x1148] sm:$0xff]
                  %608 = vst [vmem:[%s488 + $0x8f8] sm:$0xff] %v607
                  %v609 = vld [vmem:[%s487 + $0x1220] sm:$0xff]
                  %610 = vst [vmem:[%s488 + $0x960] sm:$0xff] %v609
                  %v611 = vld [vmem:[%s487 + $0x1228] sm:$0xff]
                  %612 = vst [vmem:[%s488 + $0x968] sm:$0xff] %v611
                  %v613 = vld [vmem:[%s487 + $0x1230] sm:$0xff]
                  %614 = vst [vmem:[%s488 + $0x970] sm:$0xff] %v613
                  %v615 = vld [vmem:[%s487 + $0x1308] sm:$0xff]
                  %616 = vst [vmem:[%s488 + $0x9d8] sm:$0xff] %v615
                  %v617 = vld [vmem:[%s487 + $0x1310] sm:$0xff]
                  %618 = vst [vmem:[%s488 + $0x9e0] sm:$0xff] %v617
                  %v619 = vld [vmem:[%s487 + $0x1318] sm:$0xff]
                  %620 = vst [vmem:[%s488 + $0x9e8] sm:$0xff] %v619
                  %v621 = vld [vmem:[%s487 + $0x13f0] sm:$0xff]
                  %622 = vst [vmem:[%s488 + $0xa50] sm:$0xff] %v621
                  %v623 = vld [vmem:[%s487 + $0x13f8] sm:$0xff]
                  %624 = vst [vmem:[%s488 + $0xa58] sm:$0xff] %v623
                  %v625 = vld [vmem:[%s487 + $0x1400] sm:$0xff]
                  %626 = vst [vmem:[%s488 + $0xa60] sm:$0xff] %v625
                  %v627 = vld [vmem:[%s487 + $0x14d8] sm:$0xff]
                  %628 = vst [vmem:[%s488 + $0xac8] sm:$0xff] %v627
                  %v629 = vld [vmem:[%s487 + $0x14e0] sm:$0xff]
                  %630 = vst [vmem:[%s488 + $0xad0] sm:$0xff] %v629
                  %v631 = vld [vmem:[%s487 + $0x14e8] sm:$0xff]
                  %632 = vst [vmem:[%s488 + $0xad8] sm:$0xff] %v631
                  %v633 = vld [vmem:[%s487 + $0x15c0] sm:$0xff]
                  %634 = vst [vmem:[%s488 + $0xb40] sm:$0xff] %v633
                  %v635 = vld [vmem:[%s487 + $0x15c8] sm:$0xff]
                  %636 = vst [vmem:[%s488 + $0xb48] sm:$0xff] %v635
                  %v637 = vld [vmem:[%s487 + $0x15d0] sm:$0xff]
                  %638 = vst [vmem:[%s488 + $0xb50] sm:$0xff] %v637
                  %s639 = sadd.s32 1, %s486
                  %p640 = scmp.ge.s32.totalorder %s639, %s476
                  %s641 = scalar_select %p640, 0, %s639
                  %s642 = smul.u32 %s641, 24
                  %s643 = smul.u32 %s641, 24
                  %s644 = scalar_lea.vmem %s142, %s642
                  %s645 = scalar_lea.vmem %s134, %s643 [#allocation2]
                $region74: #{two_heads_forward.5} parent=68 // loop_footer
                  %s483 = sadd.s32 %s481, 1
                $region75: #{two_heads_forward.5} parent=68 // loop_footer_branch
                  %480 = sbr.rel target = $region71
                $region76: #{two_heads_forward.5} parent=68 // loop_exit
                  _
                %s646 = sdiv.u32.pop %s475, 3
                %s647 = srem.u32.pop %s475, 3
                %s648 = smul.u32 %s646, 3
                %s649 = smul.u32 128, %s648
                %s650 = sshra.s32 %s649, 4
                %s651 = scalar_lea.vmem %s142, %s650
                %s652 = smul.u32 128, %s648
                %s653 = sshra.s32 %s652, 4
                %s654 = scalar_lea.vmem %s134, %s653 [#allocation2]
                // While loop
                $region77: #{two_heads_forward.5} parent=68 // loop_pre_header
                  _
                $region78: #{two_heads_forward.5} parent=68 // loop_header
                  %s658 = sphi 0, %s660
                  %p659 = scmp.ge.s32.totalorder %s658, %s647
                  %s663 = sphi 0, %s718
                  %s664 = sphi %s651, %s721
                  %s665 = sphi %s654, %s722
                $region79: #{two_heads_forward.5} parent=68 // loop_header_branch
                  %662 = sbr.rel (%p659) target = $region83
                $region80: #{two_heads_forward.5} parent=68 // loop_body
                  %v666 = vld [vmem:[%s664] sm:$0xff]
                  %667 = vst [vmem:[%s665] sm:$0xff] %v666
                  %v668 = vld [vmem:[%s664 + $0xe8] sm:$0xff]
                  %669 = vst [vmem:[%s665 + $0x78] sm:$0xff] %v668
                  %v670 = vld [vmem:[%s664 + $0x1d0] sm:$0xff]
                  %671 = vst [vmem:[%s665 + $0xf0] sm:$0xff] %v670
                  %v672 = vld [vmem:[%s664 + $0x2b8] sm:$0xff]
                  %673 = vst [vmem:[%s665 + $0x168] sm:$0xff] %v672
                  %v674 = vld [vmem:[%s664 + $0x3a0] sm:$0xff]
                  %675 = vst [vmem:[%s665 + $0x1e0] sm:$0xff] %v674
                  %v676 = vld [vmem:[%s664 + $0x488] sm:$0xff]
                  %677 = vst [vmem:[%s665 + $0x258] sm:$0xff] %v676
                  %v678 = vld [vmem:[%s664 + $0x570] sm:$0xff]
                  %679 = vst [vmem:[%s665 + $0x2d0] sm:$0xff] %v678
                  %v680 = vld [vmem:[%s664 + $0x658] sm:$0xff]
                  %681 = vst [vmem:[%s665 + $0x348] sm:$0xff] %v680
                  %v682 = vld [vmem:[%s664 + $0x740] sm:$0xff]
                  %683 = vst [vmem:[%s665 + $0x3c0] sm:$0xff] %v682
                  %v684 = vld [vmem:[%s664 + $0x828] sm:$0xff]
                  %685 = vst [vmem:[%s665 + $0x438] sm:$0xff] %v684
                  %v686 = vld [vmem:[%s664 + $0x910] sm:$0xff]
                  %687 = vst [vmem:[%s665 + $0x4b0] sm:$0xff] %v686
                  %v688 = vld [vmem:[%s664 + $0x9f8] sm:$0xff]
                  %689 = vst [vmem:[%s665 + $0x528] sm:$0xff] %v688
                  %v690 = vld [vmem:[%s664 + $0xae0] sm:$0xff]
                  %691 = vst [vmem:[%s665 + $0x5a0] sm:$0xff] %v690
                  %v692 = vld [vmem:[%s664 + $0xbc8] sm:$0xff]
                  %693 = vst [vmem:[%s665 + $0x618] sm:$0xff] %v692
                  %v694 = vld [vmem:[%s664 + $0xcb0] sm:$0xff]
                  %695 = vst [vmem:[%s665 + $0x690] sm:$0xff] %v694
                  %v696 = vld [vmem:[%s664 + $0xd98] sm:$0xff]
                  %697 = vst [vmem:[%s665 + $0x708] sm:$0xff] %v696
                  %v698 = vld [vmem:[%s664 + $0xe80] sm:$0xff]
                  %699 = vst [vmem:[%s665 + $0x780] sm:$0xff] %v698
                  %v700 = vld [vmem:[%s664 + $0xf68] sm:$0xff]
                  %701 = vst [vmem:[%s665 + $0x7f8] sm:$0xff] %v700
                  %v702 = vld [vmem:[%s664 + $0x1050] sm:$0xff]
                  %703 = vst [vmem:[%s665 + $0x870] sm:$0xff] %v702
                  %v704 = vld [vmem:[%s664 + $0x1138] sm:$0xff]
                  %705 = vst [vmem:[%s665 + $0x8e8] sm:$0xff] %v704
                  %v706 = vld [vmem:[%s664 + $0x1220] sm:$0xff]
                  %707 = vst [vmem:[%s665 + $0x960] sm:$0xff] %v706
                  %v708 = vld [vmem:[%s664 + $0x1308] sm:$0xff]
                  %709 = vst [vmem:[%s665 + $0x9d8] sm:$0xff] %v708
                  %v710 = vld [vmem:[%s664 + $0x13f0] sm:$0xff]
                  %711 = vst [vmem:[%s665 + $0xa50] sm:$0xff] %v710
                  %v712 = vld [vmem:[%s664 + $0x14d8] sm:$0xff]
                  %713 = vst [vmem:[%s665 + $0xac8] sm:$0xff] %v712
                  %v714 = vld [vmem:[%s664 + $0x15c0] sm:$0xff]
                  %715 = vst [vmem:[%s665 + $0xb40] sm:$0xff] %v714
                  %s716 = sadd.s32 1, %s663
                  %p717 = scmp.ge.s32.totalorder %s716, %s647
                  %s718 = scalar_select %p717, 0, %s716
                  %s719 = smul.u32 %s718, 8
                  %s720 = smul.u32 %s718, 8
                  %s721 = scalar_lea.vmem %s651, %s719
                  %s722 = scalar_lea.vmem %s654, %s720 [#allocation2]
                $region81: #{two_heads_forward.5} parent=68 // loop_footer
                  %s660 = sadd.s32 %s658, 1
                $region82: #{two_heads_forward.5} parent=68 // loop_footer_branch
                  %657 = sbr.rel target = $region78
                $region83: #{two_heads_forward.5} parent=68 // loop_exit
                  _
                %s723 = sshll.u32 1, %s470
                %s724 = ssub.s32 %s723, 1
                loop: start=0, step=1, limit=1
                $region84: #{two_heads_forward.5} parent=68 // loop_pre_header
                  _
                $region85: #{two_heads_forward.5} parent=68 // loop_header
                  %s726 = sphi 0, %s730
                  %p727 = scmp.ge.s32.totalorder %s726, 1
                  %s731 = sphi %s472, %s472
                  %s732 = sphi %s474, %s474
                $region86: #{two_heads_forward.5} parent=68 // loop_header_branch
                  %729 = sbr.rel (%p727) target = $region90
                $region87: #{two_heads_forward.5} parent=68 // loop_body
                  %v733 = vld [vmem:[%s731] sm:%s724]
                  %734 = vst [vmem:[%s732] sm:%s724] %v733
                  %v735 = vld [vmem:[%s731 + $0xe8] sm:%s724]
                  %736 = vst [vmem:[%s732 + $0x78] sm:%s724] %v735
                  %v737 = vld [vmem:[%s731 + $0x1d0] sm:%s724]
                  %738 = vst [vmem:[%s732 + $0xf0] sm:%s724] %v737
                  %v739 = vld [vmem:[%s731 + $0x2b8] sm:%s724]
                  %740 = vst [vmem:[%s732 + $0x168] sm:%s724] %v739
                  %v741 = vld [vmem:[%s731 + $0x3a0] sm:%s724]
                  %742 = vst [vmem:[%s732 + $0x1e0] sm:%s724] %v741
                  %v743 = vld [vmem:[%s731 + $0x488] sm:%s724]
                  %744 = vst [vmem:[%s732 + $0x258] sm:%s724] %v743
                  %v745 = vld [vmem:[%s731 + $0x570] sm:%s724]
                  %746 = vst [vmem:[%s732 + $0x2d0] sm:%s724] %v745
                  %v747 = vld [vmem:[%s731 + $0x658] sm:%s724]
                  %748 = vst [vmem:[%s732 + $0x348] sm:%s724] %v747
                  %v749 = vld [vmem:[%s731 + $0x740] sm:%s724]
                  %750 = vst [vmem:[%s732 + $0x3c0] sm:%s724] %v749
                  %v751 = vld [vmem:[%s731 + $0x828] sm:%s724]
                  %752 = vst [vmem:[%s732 + $0x438] sm:%s724] %v751
                  %v753 = vld [vmem:[%s731 + $0x910] sm:%s724]
                  %754 = vst [vmem:[%s732 + $0x4b0] sm:%s724] %v753
                  %v755 = vld [vmem:[%s731 + $0x9f8] sm:%s724]
                  %756 = vst [vmem:[%s732 + $0x528] sm:%s724] %v755
                  %v757 = vld [vmem:[%s731 + $0xae0] sm:%s724]
                  %758 = vst [vmem:[%s732 + $0x5a0] sm:%s724] %v757
                  %v759 = vld [vmem:[%s731 + $0xbc8] sm:%s724]
                  %760 = vst [vmem:[%s732 + $0x618] sm:%s724] %v759
                  %v761 = vld [vmem:[%s731 + $0xcb0] sm:%s724]
                  %762 = vst [vmem:[%s732 + $0x690] sm:%s724] %v761
                  %v763 = vld [vmem:[%s731 + $0xd98] sm:%s724]
                  %764 = vst [vmem:[%s732 + $0x708] sm:%s724] %v763
                  %v765 = vld [vmem:[%s731 + $0xe80] sm:%s724]
                  %766 = vst [vmem:[%s732 + $0x780] sm:%s724] %v765
                  %v767 = vld [vmem:[%s731 + $0xf68] sm:%s724]
                  %768 = vst [vmem:[%s732 + $0x7f8] sm:%s724] %v767
                  %v769 = vld [vmem:[%s731 + $0x1050] sm:%s724]
                  %770 = vst [vmem:[%s732 + $0x870] sm:%s724] %v769
                  %v771 = vld [vmem:[%s731 + $0x1138] sm:%s724]
                  %772 = vst [vmem:[%s732 + $0x8e8] sm:%s724] %v771
                  %v773 = vld [vmem:[%s731 + $0x1220] sm:%s724]
                  %774 = vst [vmem:[%s732 + $0x960] sm:%s724] %v773
                  %v775 = vld [vmem:[%s731 + $0x1308] sm:%s724]
                  %776 = vst [vmem:[%s732 + $0x9d8] sm:%s724] %v775
                  %v777 = vld [vmem:[%s731 + $0x13f0] sm:%s724]
                  %778 = vst [vmem:[%s732 + $0xa50] sm:%s724] %v777
                  %v779 = vld [vmem:[%s731 + $0x14d8] sm:%s724]
                  %780 = vst [vmem:[%s732 + $0xac8] sm:%s724] %v779
                  %v781 = vld [vmem:[%s731 + $0x15c0] sm:%s724]
                  %782 = vst [vmem:[%s732 + $0xb40] sm:%s724] %v781
                $region88: #{two_heads_forward.5} parent=68 // loop_footer
                  %s730 = sadd.s32 1, %s726
                $region89: #{two_heads_forward.5} parent=68 // loop_footer_branch
                  %725 = sbr.rel target = $region85
                $region90: #{two_heads_forward.5} parent=68 // loop_exit
                  _
              $region69: #{two_heads_forward.5} parent=35 // pred_fallthru
                _
            $region36: #{two_heads_forward.5} parent=31 // pred_fallthru
              _
            // Predicated region
            $region37: #{two_heads_forward.5} parent=31 // pred_check
              %p151 = pneg %p147
            $region38: #{two_heads_forward.5} parent=31 // pred_check_branch
              %153 = sbr.rel (%p151) target = $region40
            $region39: #{two_heads_forward.5} parent=31 // pred_region
              %s154 = sshll.u32 1, %s143
              %s155 = ssub.s32 %s154, 1
              loop: start=0, step=1, limit=1
              $region41: #{two_heads_forward.5} parent=39 // loop_pre_header
                _
              $region42: #{two_heads_forward.5} parent=39 // loop_header
                %s157 = sphi 0, %s161
                %p158 = scmp.ge.s32.totalorder %s157, 1
                %s162 = sphi %s142, %s142
                %s163 = sphi %s134, %s134
              $region43: #{two_heads_forward.5} parent=39 // loop_header_branch
                %160 = sbr.rel (%p158) target = $region47
              $region44: #{two_heads_forward.5} parent=39 // loop_body
                %v164 = vld [vmem:[%s162] sm:%s155]
                %165 = vst [vmem:[%s163] sm:%s155] %v164
                %v166 = vld [vmem:[%s162 + $0xe8] sm:%s155]
                %167 = vst [vmem:[%s163 + $0x78] sm:%s155] %v166
                %v168 = vld [vmem:[%s162 + $0x1d0] sm:%s155]
                %169 = vst [vmem:[%s163 + $0xf0] sm:%s155] %v168
                %v170 = vld [vmem:[%s162 + $0x2b8] sm:%s155]
                %171 = vst [vmem:[%s163 + $0x168] sm:%s155] %v170
                %v172 = vld [vmem:[%s162 + $0x3a0] sm:%s155]
                %173 = vst [vmem:[%s163 + $0x1e0] sm:%s155] %v172
                %v174 = vld [vmem:[%s162 + $0x488] sm:%s155]
                %175 = vst [vmem:[%s163 + $0x258] sm:%s155] %v174
                %v176 = vld [vmem:[%s162 + $0x570] sm:%s155]
                %177 = vst [vmem:[%s163 + $0x2d0] sm:%s155] %v176
                %v178 = vld [vmem:[%s162 + $0x658] sm:%s155]
                %179 = vst [vmem:[%s163 + $0x348] sm:%s155] %v178
                %v180 = vld [vmem:[%s162 + $0x740] sm:%s155]
                %181 = vst [vmem:[%s163 + $0x3c0] sm:%s155] %v180
                %v182 = vld [vmem:[%s162 + $0x828] sm:%s155]
                %183 = vst [vmem:[%s163 + $0x438] sm:%s155] %v182
                %v184 = vld [vmem:[%s162 + $0x910] sm:%s155]
                %185 = vst [vmem:[%s163 + $0x4b0] sm:%s155] %v184
                %v186 = vld [vmem:[%s162 + $0x9f8] sm:%s155]
                %187 = vst [vmem:[%s163 + $0x528] sm:%s155] %v186
                %v188 = vld [vmem:[%s162 + $0xae0] sm:%s155]
                %189 = vst [vmem:[%s163 + $0x5a0] sm:%s155] %v188
                %v190 = vld [vmem:[%s162 + $0xbc8] sm:%s155]
                %191 = vst [vmem:[%s163 + $0x618] sm:%s155] %v190
                %v192 = vld [vmem:[%s162 + $0xcb0] sm:%s155]
                %193 = vst [vmem:[%s163 + $0x690] sm:%s155] %v192
                %v194 = vld [vmem:[%s162 + $0xd98] sm:%s155]
                %195 = vst [vmem:[%s163 + $0x708] sm:%s155] %v194
                %v196 = vld [vmem:[%s162 + $0xe80] sm:%s155]
                %197 = vst [vmem:[%s163 + $0x780] sm:%s155] %v196
                %v198 = vld [vmem:[%s162 + $0xf68] sm:%s155]
                %199 = vst [vmem:[%s163 + $0x7f8] sm:%s155] %v198
                %v200 = vld [vmem:[%s162 + $0x1050] sm:%s155]
                %201 = vst [vmem:[%s163 + $0x870] sm:%s155] %v200
                %v202 = vld [vmem:[%s162 + $0x1138] sm:%s155]
                %203 = vst [vmem:[%s163 + $0x8e8] sm:%s155] %v202
                %v204 = vld [vmem:[%s162 + $0x1220] sm:%s155]
                %205 = vst [vmem:[%s163 + $0x960] sm:%s155] %v204
                %v206 = vld [vmem:[%s162 + $0x1308] sm:%s155]
                %207 = vst [vmem:[%s163 + $0x9d8] sm:%s155] %v206
                %v208 = vld [vmem:[%s162 + $0x13f0] sm:%s155]
                %209 = vst [vmem:[%s163 + $0xa50] sm:%s155] %v208
                %v210 = vld [vmem:[%s162 + $0x14d8] sm:%s155]
                %211 = vst [vmem:[%s163 + $0xac8] sm:%s155] %v210
                %v212 = vld [vmem:[%s162 + $0x15c0] sm:%s155]
                %213 = vst [vmem:[%s163 + $0xb40] sm:%s155] %v212
              $region45: #{two_heads_forward.5} parent=39 // loop_footer
                %s161 = sadd.s32 1, %s157
              $region46: #{two_heads_forward.5} parent=39 // loop_footer_branch
                %156 = sbr.rel target = $region42
              $region47: #{two_heads_forward.5} parent=39 // loop_exit
                _
            $region40: #{two_heads_forward.5} parent=31 // pred_fallthru
              _
          $region32: #{two_heads_forward.5} parent=27 // pred_fallthru
            _
          %783 = vnop
        $region28: #{two_heads_forward.5} parent=23 // pred_fallthru
          _
      $region24: #{two_heads_forward.5} parent=5 // pred_fallthru
        _
      %p784 = scmp.le.s32.totalorder 1, %s9
      %p785 = scmp.lt.s32.totalorder %s9, 3
      %p786 = pnand %p784, %p785
      %p787 = pneg %p786
      // Predicated region
      $region91: #{two_heads_forward.5} parent=5 // pred_check
        _
      $region92: #{two_heads_forward.5} parent=5 // pred_check_branch
        %789 = sbr.rel (%p786) target = $region94
      $region93: #{two_heads_forward.5} parent=5 // pred_region
        %s790 = ssub.s32 %s9, 1
        %s791 = sand.u32 %s64, 1
        %s792 = sand.u32 %s64, 1
        %s793 = smul.addr %s792, 3000
        %s794 = scalar_lea.vmem [#allocation2], %s793
        // Predicated region
        $region95: #{two_heads_forward.5} parent=93 // pred_check
          %p795 = pneg %p77
        $region96: #{two_heads_forward.5} parent=93 // pred_check_branch
          %797 = sbr.rel (%p795) target = $region98
        $region97: #{two_heads_forward.5} parent=93 // pred_region
          _
        $region98: #{two_heads_forward.5} parent=93 // pred_fallthru
          _
        %p798 = pneg %p30
        %p799 = pneg %p27
        %p800 = pneg %p51
        %p801 = pneg %p48
        %s802 = sand.u32 %s64, 1
        %s803 = sand.u32 %s64, 1
        %s804 = smul.addr %s803, 3000
        %s805 = scalar_lea.vmem [#allocation2], %s804
        %p806 = pneg %p77
        %p807 = pneg %p74
        %p808 = pneg %p103
        %p809 = pneg %p100
        %s810 = sand.u32 %s90, 1
        %s811 = sand.u32 %s90, 1
        %s812 = smul.addr %s811, 120
        %s813 = scalar_lea.vmem [#allocation3], %s812
        %s814 = smul.u32 15, %s14
        %s815 = ssub.s32 29, %s814
        %p816 = scmp.lt.s32.totalorder %s815, 15
        %s817 = scalar_select %p816, %s815, 15
        %s818 = smul.u32 3200, %s817
        %s819 = smul.u32 15, %s14
        %s820 = ssub.s32 29, %s819
        %p821 = scmp.lt.s32.totalorder %s820, 15
        %s822 = scalar_select %p821, %s820, 15
        %s823 = smul.u32 128, %s822
        %v824 = vld [vmem:[%s0] sm:$0xff]
        %v825 = vld [vmem:[%s0 + $0x8] sm:$0xff]
        %v826 = vld [vmem:[%s794] sm:$0xff]
        %v827 = vld [vmem:[%s794 + $0x8] sm:$0xff]
        %v828 = vld [vmem:[%s794 + $0x10] sm:$0xff]
        %v829 = vld [vmem:[%s794 + $0x18] sm:$0xff]
        %v830 = vld [vmem:[%s794 + $0x20] sm:$0xff]
        %v831 = vld [vmem:[%s794 + $0x28] sm:$0xff]
        %v832 = vld [vmem:[%s794 + $0x30] sm:$0xff]
        %v833 = vld [vmem:[%s794 + $0x38] sm:$0xff]
        %v834 = vld [vmem:[%s794 + $0x40] sm:$0xff]
        %v835 = vld [vmem:[%s794 + $0x48] sm:$0xff]
        %v836 = vld [vmem:[%s794 + $0x50] sm:$0xff]
        %v837 = vld [vmem:[%s794 + $0x58] sm:$0xff]
        %v838 = vld [vmem:[%s794 + $0x60] sm:$0xff]
        %v839 = vld [vmem:[%s794 + $0x68] sm:$0xff]
        %v840 = vld [vmem:[%s794 + $0x70] sm:$0xff]
        %v841 = vld [vmem:[%s794 + $0x78] sm:$0xff]
        %v842 = vld [vmem:[%s794 + $0x80] sm:$0xff]
        %v843 = vld [vmem:[%s794 + $0x88] sm:$0xff]
        %v844 = vld [vmem:[%s794 + $0x90] sm:$0xff]
        %v845 = vld [vmem:[%s794 + $0x98] sm:$0xff]
        %v846 = vld [vmem:[%s794 + $0xa0] sm:$0xff]
        %v847 = vld [vmem:[%s794 + $0xa8] sm:$0xff]
        %v848 = vld [vmem:[%s794 + $0xb0] sm:$0xff]
        %v849 = vld [vmem:[%s794 + $0xb8] sm:$0xff]
        %v850 = vld [vmem:[%s794 + $0xc0] sm:$0xff]
        %v851 = vld [vmem:[%s794 + $0xc8] sm:$0xff]
        %v852 = vld [vmem:[%s794 + $0xd0] sm:$0xff]
        %v853 = vld [vmem:[%s794 + $0xd8] sm:$0xff]
        %v854 = vld [vmem:[%s794 + $0xe0] sm:$0xff]
        %v855 = vld [vmem:[%s794 + $0xe8] sm:$0xff]
        %v856 = vld [vmem:[%s794 + $0xf0] sm:$0xff]
        %v857 = vld [vmem:[%s794 + $0xf8] sm:$0xff]
        %v858 = vld [vmem:[%s794 + $0x100] sm:$0xff]
        %v859 = vld [vmem:[%s794 + $0x108] sm:$0xff]
        %v860 = vld [vmem:[%s794 + $0x110] sm:$0xff]
        %v861 = vld [vmem:[%s794 + $0x118] sm:$0xff]
        %v862 = vld [vmem:[%s794 + $0x120] sm:$0xff]
        %v863 = vld [vmem:[%s794 + $0x128] sm:$0xff]
        %v864 = vld [vmem:[%s794 + $0x130] sm:$0xff]
        %v865 = vld [vmem:[%s794 + $0x138] sm:$0xff]
        %v866 = vld [vmem:[%s794 + $0x140] sm:$0xff]
        %v867 = vld [vmem:[%s794 + $0x148] sm:$0xff]
        %v868 = vld [vmem:[%s794 + $0x150] sm:$0xff]
        %v869 = vld [vmem:[%s794 + $0x158] sm:$0xff]
        %v870 = vld [vmem:[%s794 + $0x160] sm:$0xff]
        %v871 = vld [vmem:[%s794 + $0x168] sm:$0xff]
        %v872 = vld [vmem:[%s794 + $0x170] sm:$0xff]
        %v873 = vld [vmem:[%s794 + $0x178] sm:$0xff]
        %v874 = vld [vmem:[%s794 + $0x180] sm:$0xff]
        %v875 = vld [vmem:[%s794 + $0x188] sm:$0xff]
        %v876 = vld [vmem:[%s794 + $0x190] sm:$0xff]
        %v877 = vld [vmem:[%s794 + $0x198] sm:$0xff]
        %v878 = vld [vmem:[%s794 + $0x1a0] sm:$0xff]
        %v879 = vld [vmem:[%s794 + $0x1a8] sm:$0xff]
        %v880 = vld [vmem:[%s794 + $0x1b0] sm:$0xff]
        %v881 = vld [vmem:[%s794 + $0x1b8] sm:$0xff]
        %v882 = vld [vmem:[%s794 + $0x1c0] sm:$0xff]
        %v883 = vld [vmem:[%s794 + $0x1c8] sm:$0xff]
        %v884 = vld [vmem:[%s794 + $0x1d0] sm:$0xff]
        %v885 = vld [vmem:[%s794 + $0x1d8] sm:$0xff]
        %v886 = vld [vmem:[%s794 + $0x1e0] sm:$0xff]
        %v887 = vld [vmem:[%s794 + $0x1e8] sm:$0xff]
        %v888 = vld [vmem:[%s794 + $0x1f0] sm:$0xff]
        %v889 = vld [vmem:[%s794 + $0x1f8] sm:$0xff]
        %v890 = vld [vmem:[%s794 + $0x200] sm:$0xff]
        %v891 = vld [vmem:[%s794 + $0x208] sm:$0xff]
        %v892 = vld [vmem:[%s794 + $0x210] sm:$0xff]
        %v893 = vld [vmem:[%s794 + $0x218] sm:$0xff]
        %v894 = vld [vmem:[%s794 + $0x220] sm:$0xff]
        %v895 = vld [vmem:[%s794 + $0x228] sm:$0xff]
        %v896 = vld [vmem:[%s794 + $0x230] sm:$0xff]
        %v897 = vld [vmem:[%s794 + $0x238] sm:$0xff]
        %v898 = vld [vmem:[%s794 + $0x240] sm:$0xff]
        %v899 = vld [vmem:[%s794 + $0x248] sm:$0xff]
        %v900 = vld [vmem:[%s794 + $0x250] sm:$0xff]
        %v901 = vld [vmem:[%s794 + $0x258] sm:$0xff]
        %v902 = vld [vmem:[%s794 + $0x260] sm:$0xff]
        %v903 = vld [vmem:[%s794 + $0x268] sm:$0xff]
        %v904 = vld [vmem:[%s794 + $0x270] sm:$0xff]
        %v905 = vld [vmem:[%s794 + $0x278] sm:$0xff]
        %v906 = vld [vmem:[%s794 + $0x280] sm:$0xff]
        %v907 = vld [vmem:[%s794 + $0x288] sm:$0xff]
        %v908 = vld [vmem:[%s794 + $0x290] sm:$0xff]
        %v909 = vld [vmem:[%s794 + $0x298] sm:$0xff]
        %v910 = vld [vmem:[%s794 + $0x2a0] sm:$0xff]
        %v911 = vld [vmem:[%s794 + $0x2a8] sm:$0xff]
        %v912 = vld [vmem:[%s794 + $0x2b0] sm:$0xff]
        %v913 = vld [vmem:[%s794 + $0x2b8] sm:$0xff]
        %v914 = vld [vmem:[%s794 + $0x2c0] sm:$0xff]
        %v915 = vld [vmem:[%s794 + $0x2c8] sm:$0xff]
        %v916 = vld [vmem:[%s794 + $0x2d0] sm:$0xff]
        %v917 = vld [vmem:[%s794 + $0x2d8] sm:$0xff]
        %v918 = vld [vmem:[%s794 + $0x2e0] sm:$0xff]
        %v919 = vld [vmem:[%s794 + $0x2e8] sm:$0xff]
        %v920 = vld [vmem:[%s794 + $0x2f0] sm:$0xff]
        %v921 = vld [vmem:[%s794 + $0x2f8] sm:$0xff]
        %v922 = vld [vmem:[%s794 + $0x300] sm:$0xff]
        %v923 = vld [vmem:[%s794 + $0x308] sm:$0xff]
        %v924 = vld [vmem:[%s794 + $0x310] sm:$0xff]
        %v925 = vld [vmem:[%s794 + $0x318] sm:$0xff]
        %v926 = vld [vmem:[%s794 + $0x320] sm:$0xff]
        %v927 = vld [vmem:[%s794 + $0x328] sm:$0xff]
        %v928 = vld [vmem:[%s794 + $0x330] sm:$0xff]
        %v929 = vld [vmem:[%s794 + $0x338] sm:$0xff]
        %v930 = vld [vmem:[%s794 + $0x340] sm:$0xff]
        %v931 = vld [vmem:[%s794 + $0x348] sm:$0xff]
        %v932 = vld [vmem:[%s794 + $0x350] sm:$0xff]
        %v933 = vld [vmem:[%s794 + $0x358] sm:$0xff]
        %v934 = vld [vmem:[%s794 + $0x360] sm:$0xff]
        %v935 = vld [vmem:[%s794 + $0x368] sm:$0xff]
        %v936 = vld [vmem:[%s794 + $0x370] sm:$0xff]
        %v937 = vld [vmem:[%s794 + $0x378] sm:$0xff]
        %v938 = vld [vmem:[%s794 + $0x380] sm:$0xff]
        %v939 = vld [vmem:[%s794 + $0x388] sm:$0xff]
        %v940 = vld [vmem:[%s794 + $0x390] sm:$0xff]
        %v941 = vld [vmem:[%s794 + $0x398] sm:$0xff]
        %v942 = vld [vmem:[%s794 + $0x3a0] sm:$0xff]
        %v943 = vld [vmem:[%s794 + $0x3a8] sm:$0xff]
        %v944 = vld [vmem:[%s794 + $0x3b0] sm:$0xff]
        %v945 = vld [vmem:[%s794 + $0x3b8] sm:$0xff]
        %v946 = vld [vmem:[%s794 + $0x3c0] sm:$0xff]
        %v947 = vld [vmem:[%s794 + $0x3c8] sm:$0xff]
        %v948 = vld [vmem:[%s794 + $0x3d0] sm:$0xff]
        %v949 = vld [vmem:[%s794 + $0x3d8] sm:$0xff]
        %v950 = vld [vmem:[%s794 + $0x3e0] sm:$0xff]
        %v951 = vld [vmem:[%s794 + $0x3e8] sm:$0xff]
        %v952 = vld [vmem:[%s794 + $0x3f0] sm:$0xff]
        %v953 = vld [vmem:[%s794 + $0x3f8] sm:$0xff]
        %v954 = vld [vmem:[%s794 + $0x400] sm:$0xff]
        %v955 = vld [vmem:[%s794 + $0x408] sm:$0xff]
        %v956 = vld [vmem:[%s794 + $0x410] sm:$0xff]
        %v957 = vld [vmem:[%s794 + $0x418] sm:$0xff]
        %v958 = vld [vmem:[%s794 + $0x420] sm:$0xff]
        %v959 = vld [vmem:[%s794 + $0x428] sm:$0xff]
        %v960 = vld [vmem:[%s794 + $0x430] sm:$0xff]
        %v961 = vld [vmem:[%s794 + $0x438] sm:$0xff]
        %v962 = vld [vmem:[%s794 + $0x440] sm:$0xff]
        %v963 = vld [vmem:[%s794 + $0x448] sm:$0xff]
        %v964 = vld [vmem:[%s794 + $0x450] sm:$0xff]
        %v965 = vld [vmem:[%s794 + $0x458] sm:$0xff]
        %v966 = vld [vmem:[%s794 + $0x460] sm:$0xff]
        %v967 = vld [vmem:[%s794 + $0x468] sm:$0xff]
        %v968 = vld [vmem:[%s794 + $0x470] sm:$0xff]
        %v969 = vld [vmem:[%s794 + $0x478] sm:$0xff]
        %v970 = vld [vmem:[%s794 + $0x480] sm:$0xff]
        %v971 = vld [vmem:[%s794 + $0x488] sm:$0xff]
        %v972 = vld [vmem:[%s794 + $0x490] sm:$0xff]
        %v973 = vld [vmem:[%s794 + $0x498] sm:$0xff]
        %v974 = vld [vmem:[%s794 + $0x4a0] sm:$0xff]
        %v975 = vld [vmem:[%s794 + $0x4a8] sm:$0xff]
        %v976 = vld [vmem:[%s794 + $0x4b0] sm:$0xff]
        %v977 = vld [vmem:[%s794 + $0x4b8] sm:$0xff]
        %v978 = vld [vmem:[%s794 + $0x4c0] sm:$0xff]
        %v979 = vld [vmem:[%s794 + $0x4c8] sm:$0xff]
        %v980 = vld [vmem:[%s794 + $0x4d0] sm:$0xff]
        %v981 = vld [vmem:[%s794 + $0x4d8] sm:$0xff]
        %v982 = vld [vmem:[%s794 + $0x4e0] sm:$0xff]
        %v983 = vld [vmem:[%s794 + $0x4e8] sm:$0xff]
        %v984 = vld [vmem:[%s794 + $0x4f0] sm:$0xff]
        %v985 = vld [vmem:[%s794 + $0x4f8] sm:$0xff]
        %v986 = vld [vmem:[%s794 + $0x500] sm:$0xff]
        %v987 = vld [vmem:[%s794 + $0x508] sm:$0xff]
        %v988 = vld [vmem:[%s794 + $0x510] sm:$0xff]
        %v989 = vld [vmem:[%s794 + $0x518] sm:$0xff]
        %v990 = vld [vmem:[%s794 + $0x520] sm:$0xff]
        %v991 = vld [vmem:[%s794 + $0x528] sm:$0xff]
        %v992 = vld [vmem:[%s794 + $0x530] sm:$0xff]
        %v993 = vld [vmem:[%s794 + $0x538] sm:$0xff]
        %v994 = vld [vmem:[%s794 + $0x540] sm:$0xff]
        %v995 = vld [vmem:[%s794 + $0x548] sm:$0xff]
        %v996 = vld [vmem:[%s794 + $0x550] sm:$0xff]
        %v997 = vld [vmem:[%s794 + $0x558] sm:$0xff]
        %v998 = vld [vmem:[%s794 + $0x560] sm:$0xff]
        %v999 = vld [vmem:[%s794 + $0x568] sm:$0xff]
        %v1000 = vld [vmem:[%s794 + $0x570] sm:$0xff]
        %v1001 = vld [vmem:[%s794 + $0x578] sm:$0xff]
        %v1002 = vld [vmem:[%s794 + $0x580] sm:$0xff]
        %v1003 = vld [vmem:[%s794 + $0x588] sm:$0xff]
        %v1004 = vld [vmem:[%s794 + $0x590] sm:$0xff]
        %v1005 = vld [vmem:[%s794 + $0x598] sm:$0xff]
        %v1006 = vld [vmem:[%s794 + $0x5a0] sm:$0xff]
        %v1007 = vld [vmem:[%s794 + $0x5a8] sm:$0xff]
        %v1008 = vld [vmem:[%s794 + $0x5b0] sm:$0xff]
        %v1009 = vld [vmem:[%s794 + $0x5b8] sm:$0xff]
        %v1010 = vld [vmem:[%s794 + $0x5c0] sm:$0xff]
        %v1011 = vld [vmem:[%s794 + $0x5c8] sm:$0xff]
        %v1012 = vld [vmem:[%s794 + $0x5d0] sm:$0xff]
        %v1013 = vld [vmem:[%s794 + $0x5d8] sm:$0xff]
        %v1014 = vld [vmem:[%s794 + $0x5e0] sm:$0xff]
        %v1015 = vld [vmem:[%s794 + $0x5e8] sm:$0xff]
        %v1016 = vld [vmem:[%s794 + $0x5f0] sm:$0xff]
        %v1017 = vld [vmem:[%s794 + $0x5f8] sm:$0xff]
        %v1018 = vld [vmem:[%s794 + $0x600] sm:$0xff]
        %v1019 = vld [vmem:[%s794 + $0x608] sm:$0xff]
        %v1020 = vld [vmem:[%s794 + $0x610] sm:$0xff]
        %v1021 = vld [vmem:[%s794 + $0x618] sm:$0xff]
        %v1022 = vld [vmem:[%s794 + $0x620] sm:$0xff]
        %v1023 = vld [vmem:[%s794 + $0x628] sm:$0xff]
        %v1024 = vld [vmem:[%s794 + $0x630] sm:$0xff]
        %v1025 = vld [vmem:[%s794 + $0x638] sm:$0xff]
        %v1026 = vld [vmem:[%s794 + $0x640] sm:$0xff]
        %v1027 = vld [vmem:[%s794 + $0x648] sm:$0xff]
        %v1028 = vld [vmem:[%s794 + $0x650] sm:$0xff]
        %v1029 = vld [vmem:[%s794 + $0x658] sm:$0xff]
        %v1030 = vld [vmem:[%s794 + $0x660] sm:$0xff]
        %v1031 = vld [vmem:[%s794 + $0x668] sm:$0xff]
        %v1032 = vld [vmem:[%s794 + $0x670] sm:$0xff]
        %v1033 = vld [vmem:[%s794 + $0x678] sm:$0xff]
        %v1034 = vld [vmem:[%s794 + $0x680] sm:$0xff]
        %v1035 = vld [vmem:[%s794 + $0x688] sm:$0xff]
        %v1036 = vld [vmem:[%s794 + $0x690] sm:$0xff]
        %v1037 = vld [vmem:[%s794 + $0x698] sm:$0xff]
        %v1038 = vld [vmem:[%s794 + $0x6a0] sm:$0xff]
        %v1039 = vld [vmem:[%s794 + $0x6a8] sm:$0xff]
        %v1040 = vld [vmem:[%s794 + $0x6b0] sm:$0xff]
        %v1041 = vld [vmem:[%s794 + $0x6b8] sm:$0xff]
        %v1042 = vld [vmem:[%s794 + $0x6c0] sm:$0xff]
        %v1043 = vld [vmem:[%s794 + $0x6c8] sm:$0xff]
        %v1044 = vld [vmem:[%s794 + $0x6d0] sm:$0xff]
        %v1045 = vld [vmem:[%s794 + $0x6d8] sm:$0xff]
        %v1046 = vld [vmem:[%s794 + $0x6e0] sm:$0xff]
        %v1047 = vld [vmem:[%s794 + $0x6e8] sm:$0xff]
        %v1048 = vld [vmem:[%s794 + $0x6f0] sm:$0xff]
        %v1049 = vld [vmem:[%s794 + $0x6f8] sm:$0xff]
        %v1050 = vld [vmem:[%s794 + $0x700] sm:$0xff]
        %v1051 = vld [vmem:[%s794 + $0x708] sm:$0xff]
        %v1052 = vld [vmem:[%s794 + $0x710] sm:$0xff]
        %v1053 = vld [vmem:[%s794 + $0x718] sm:$0xff]
        %v1054 = vld [vmem:[%s794 + $0x720] sm:$0xff]
        %v1055 = vld [vmem:[%s794 + $0x728] sm:$0xff]
        %v1056 = vld [vmem:[%s794 + $0x730] sm:$0xff]
        %v1057 = vld [vmem:[%s794 + $0x738] sm:$0xff]
        %v1058 = vld [vmem:[%s794 + $0x740] sm:$0xff]
        %v1059 = vld [vmem:[%s794 + $0x748] sm:$0xff]
        %v1060 = vld [vmem:[%s794 + $0x750] sm:$0xff]
        %v1061 = vld [vmem:[%s794 + $0x758] sm:$0xff]
        %v1062 = vld [vmem:[%s794 + $0x760] sm:$0xff]
        %v1063 = vld [vmem:[%s794 + $0x768] sm:$0xff]
        %v1064 = vld [vmem:[%s794 + $0x770] sm:$0xff]
        %v1065 = vld [vmem:[%s794 + $0x778] sm:$0xff]
        %v1066 = vld [vmem:[%s794 + $0x780] sm:$0xff]
        %v1067 = vld [vmem:[%s794 + $0x788] sm:$0xff]
        %v1068 = vld [vmem:[%s794 + $0x790] sm:$0xff]
        %v1069 = vld [vmem:[%s794 + $0x798] sm:$0xff]
        %v1070 = vld [vmem:[%s794 + $0x7a0] sm:$0xff]
        %v1071 = vld [vmem:[%s794 + $0x7a8] sm:$0xff]
        %v1072 = vld [vmem:[%s794 + $0x7b0] sm:$0xff]
        %v1073 = vld [vmem:[%s794 + $0x7b8] sm:$0xff]
        %v1074 = vld [vmem:[%s794 + $0x7c0] sm:$0xff]
        %v1075 = vld [vmem:[%s794 + $0x7c8] sm:$0xff]
        %v1076 = vld [vmem:[%s794 + $0x7d0] sm:$0xff]
        %v1077 = vld [vmem:[%s794 + $0x7d8] sm:$0xff]
        %v1078 = vld [vmem:[%s794 + $0x7e0] sm:$0xff]
        %v1079 = vld [vmem:[%s794 + $0x7e8] sm:$0xff]
        %v1080 = vld [vmem:[%s794 + $0x7f0] sm:$0xff]
        %v1081 = vld [vmem:[%s794 + $0x7f8] sm:$0xff]
        %v1082 = vld [vmem:[%s794 + $0x800] sm:$0xff]
        %v1083 = vld [vmem:[%s794 + $0x808] sm:$0xff]
        %v1084 = vld [vmem:[%s794 + $0x810] sm:$0xff]
        %v1085 = vld [vmem:[%s794 + $0x818] sm:$0xff]
        %v1086 = vld [vmem:[%s794 + $0x820] sm:$0xff]
        %v1087 = vld [vmem:[%s794 + $0x828] sm:$0xff]
        %v1088 = vld [vmem:[%s794 + $0x830] sm:$0xff]
        %v1089 = vld [vmem:[%s794 + $0x838] sm:$0xff]
        %v1090 = vld [vmem:[%s794 + $0x840] sm:$0xff]
        %v1091 = vld [vmem:[%s794 + $0x848] sm:$0xff]
        %v1092 = vld [vmem:[%s794 + $0x850] sm:$0xff]
        %v1093 = vld [vmem:[%s794 + $0x858] sm:$0xff]
        %v1094 = vld [vmem:[%s794 + $0x860] sm:$0xff]
        %v1095 = vld [vmem:[%s794 + $0x868] sm:$0xff]
        %v1096 = vld [vmem:[%s794 + $0x870] sm:$0xff]
        %v1097 = vld [vmem:[%s794 + $0x878] sm:$0xff]
        %v1098 = vld [vmem:[%s794 + $0x880] sm:$0xff]
        %v1099 = vld [vmem:[%s794 + $0x888] sm:$0xff]
        %v1100 = vld [vmem:[%s794 + $0x890] sm:$0xff]
        %v1101 = vld [vmem:[%s794 + $0x898] sm:$0xff]
        %v1102 = vld [vmem:[%s794 + $0x8a0] sm:$0xff]
        %v1103 = vld [vmem:[%s794 + $0x8a8] sm:$0xff]
        %v1104 = vld [vmem:[%s794 + $0x8b0] sm:$0xff]
        %v1105 = vld [vmem:[%s794 + $0x8b8] sm:$0xff]
        %v1106 = vld [vmem:[%s794 + $0x8c0] sm:$0xff]
        %v1107 = vld [vmem:[%s794 + $0x8c8] sm:$0xff]
        %v1108 = vld [vmem:[%s794 + $0x8d0] sm:$0xff]
        %v1109 = vld [vmem:[%s794 + $0x8d8] sm:$0xff]
        %v1110 = vld [vmem:[%s794 + $0x8e0] sm:$0xff]
        %v1111 = vld [vmem:[%s794 + $0x8e8] sm:$0xff]
        %v1112 = vld [vmem:[%s794 + $0x8f0] sm:$0xff]
        %v1113 = vld [vmem:[%s794 + $0x8f8] sm:$0xff]
        %v1114 = vld [vmem:[%s794 + $0x900] sm:$0xff]
        %v1115 = vld [vmem:[%s794 + $0x908] sm:$0xff]
        %v1116 = vld [vmem:[%s794 + $0x910] sm:$0xff]
        %v1117 = vld [vmem:[%s794 + $0x918] sm:$0xff]
        %v1118 = vld [vmem:[%s794 + $0x920] sm:$0xff]
        %v1119 = vld [vmem:[%s794 + $0x928] sm:$0xff]
        %v1120 = vld [vmem:[%s794 + $0x930] sm:$0xff]
        %v1121 = vld [vmem:[%s794 + $0x938] sm:$0xff]
        %v1122 = vld [vmem:[%s794 + $0x940] sm:$0xff]
        %v1123 = vld [vmem:[%s794 + $0x948] sm:$0xff]
        %v1124 = vld [vmem:[%s794 + $0x950] sm:$0xff]
        %v1125 = vld [vmem:[%s794 + $0x958] sm:$0xff]
        %v1126 = vld [vmem:[%s794 + $0x960] sm:$0xff]
        %v1127 = vld [vmem:[%s794 + $0x968] sm:$0xff]
        %v1128 = vld [vmem:[%s794 + $0x970] sm:$0xff]
        %v1129 = vld [vmem:[%s794 + $0x978] sm:$0xff]
        %v1130 = vld [vmem:[%s794 + $0x980] sm:$0xff]
        %v1131 = vld [vmem:[%s794 + $0x988] sm:$0xff]
        %v1132 = vld [vmem:[%s794 + $0x990] sm:$0xff]
        %v1133 = vld [vmem:[%s794 + $0x998] sm:$0xff]
        %v1134 = vld [vmem:[%s794 + $0x9a0] sm:$0xff]
        %v1135 = vld [vmem:[%s794 + $0x9a8] sm:$0xff]
        %v1136 = vld [vmem:[%s794 + $0x9b0] sm:$0xff]
        %v1137 = vld [vmem:[%s794 + $0x9b8] sm:$0xff]
        %v1138 = vld [vmem:[%s794 + $0x9c0] sm:$0xff]
        %v1139 = vld [vmem:[%s794 + $0x9c8] sm:$0xff]
        %v1140 = vld [vmem:[%s794 + $0x9d0] sm:$0xff]
        %v1141 = vld [vmem:[%s794 + $0x9d8] sm:$0xff]
        %v1142 = vld [vmem:[%s794 + $0x9e0] sm:$0xff]
        %v1143 = vld [vmem:[%s794 + $0x9e8] sm:$0xff]
        %v1144 = vld [vmem:[%s794 + $0x9f0] sm:$0xff]
        %v1145 = vld [vmem:[%s794 + $0x9f8] sm:$0xff]
        %v1146 = vld [vmem:[%s794 + $0xa00] sm:$0xff]
        %v1147 = vld [vmem:[%s794 + $0xa08] sm:$0xff]
        %v1148 = vld [vmem:[%s794 + $0xa10] sm:$0xff]
        %v1149 = vld [vmem:[%s794 + $0xa18] sm:$0xff]
        %v1150 = vld [vmem:[%s794 + $0xa20] sm:$0xff]
        %v1151 = vld [vmem:[%s794 + $0xa28] sm:$0xff]
        %v1152 = vld [vmem:[%s794 + $0xa30] sm:$0xff]
        %v1153 = vld [vmem:[%s794 + $0xa38] sm:$0xff]
        %v1154 = vld [vmem:[%s794 + $0xa40] sm:$0xff]
        %v1155 = vld [vmem:[%s794 + $0xa48] sm:$0xff]
        %v1156 = vld [vmem:[%s794 + $0xa50] sm:$0xff]
        %v1157 = vld [vmem:[%s794 + $0xa58] sm:$0xff]
        %v1158 = vld [vmem:[%s794 + $0xa60] sm:$0xff]
        %v1159 = vld [vmem:[%s794 + $0xa68] sm:$0xff]
        %v1160 = vld [vmem:[%s794 + $0xa70] sm:$0xff]
        %v1161 = vld [vmem:[%s794 + $0xa78] sm:$0xff]
        %v1162 = vld [vmem:[%s794 + $0xa80] sm:$0xff]
        %v1163 = vld [vmem:[%s794 + $0xa88] sm:$0xff]
        %v1164 = vld [vmem:[%s794 + $0xa90] sm:$0xff]
        %v1165 = vld [vmem:[%s794 + $0xa98] sm:$0xff]
        %v1166 = vld [vmem:[%s794 + $0xaa0] sm:$0xff]
        %v1167 = vld [vmem:[%s794 + $0xaa8] sm:$0xff]
        %v1168 = vld [vmem:[%s794 + $0xab0] sm:$0xff]
        %v1169 = vld [vmem:[%s794 + $0xab8] sm:$0xff]
        %v1170 = vld [vmem:[%s794 + $0xac0] sm:$0xff]
        %v1171 = vld [vmem:[%s794 + $0xac8] sm:$0xff]
        %v1172 = vld [vmem:[%s794 + $0xad0] sm:$0xff]
        %v1173 = vld [vmem:[%s794 + $0xad8] sm:$0xff]
        %v1174 = vld [vmem:[%s794 + $0xae0] sm:$0xff]
        %v1175 = vld [vmem:[%s794 + $0xae8] sm:$0xff]
        %v1176 = vld [vmem:[%s794 + $0xaf0] sm:$0xff]
        %v1177 = vld [vmem:[%s794 + $0xaf8] sm:$0xff]
        %v1178 = vld [vmem:[%s794 + $0xb00] sm:$0xff]
        %v1179 = vld [vmem:[%s794 + $0xb08] sm:$0xff]
        %v1180 = vld [vmem:[%s794 + $0xb10] sm:$0xff]
        %v1181 = vld [vmem:[%s794 + $0xb18] sm:$0xff]
        %v1182 = vld [vmem:[%s794 + $0xb20] sm:$0xff]
        %v1183 = vld [vmem:[%s794 + $0xb28] sm:$0xff]
        %v1184 = vld [vmem:[%s794 + $0xb30] sm:$0xff]
        %v1185 = vld [vmem:[%s794 + $0xb38] sm:$0xff]
        %v1186 = vld [vmem:[%s794 + $0xb40] sm:$0xff]
        %v1187 = vld [vmem:[%s794 + $0xb48] sm:$0xff]
        %v1188 = vld [vmem:[%s794 + $0xb50] sm:$0xff]
        %v1189 = vld [vmem:[%s794 + $0xb58] sm:$0xff]
        %v1190 = vld [vmem:[%s794 + $0xb60] sm:$0xff]
        %v1191 = vld [vmem:[%s794 + $0xb68] sm:$0xff]
        %v1192 = vld [vmem:[%s794 + $0xb70] sm:$0xff]
        %v1193 = vld [vmem:[%s794 + $0xb78] sm:$0xff]
        %v1194 = vld [vmem:[%s794 + $0xb80] sm:$0xff]
        %v1195 = vld [vmem:[%s794 + $0xb88] sm:$0xff]
        %v1196 = vld [vmem:[%s794 + $0xb90] sm:$0xff]
        %v1197 = vld [vmem:[%s794 + $0xb98] sm:$0xff]
        %v1198 = vld [vmem:[%s794 + $0xba0] sm:$0xff]
        %v1199 = vld [vmem:[%s794 + $0xba8] sm:$0xff]
        %v1200 = vld [vmem:[%s794 + $0xbb0] sm:$0xff]
        %v1201 = vld [vmem:[%s1] sm:$0xff]
        %1203 = vset.pattern.permute.xlu0 0
        %1204 = vperm.xlu0 %1203, %v1201
        %v1205 = vpop.permute.xlu0 %1204
        %vm1207 = vcmask 588800
        %v1209 = vsel %vm1207, %v825, 0
        %1211 = vmatprep.subr.mxu0 %v1052
        %1212 = vmatpush1.msra.mxu0 %v1051
        %1213 = vmatprep.subr.mxu0 %v1037
        %1214 = vmatpush1.msra.mxu0 %v1036
        %1215 = vmatprep.subr.mxu0 %v1022
        %1216 = vmatpush1.msra.mxu0 %v1021
        %1217 = vmatprep.subr.mxu0 %v1007
        %1218 = vmatpush1.msra.mxu0 %v1006
        %1219 = vmatprep.subr.mxu0 %v992
        %1220 = vmatpush1.msra.mxu0 %v991
        %1221 = vmatprep.subr.mxu0 %v977
        %1222 = vmatpush1.msra.mxu0 %v976
        %1223 = vmatprep.subr.mxu0 %v962
        %1224 = vmatpush1.msra.mxu0 %v961
        %1225 = vmatprep.subr.mxu0 %v947
        %1226 = vmatpush1.msra.mxu0 %v946
        %1227 = vmatprep.subr.mxu0 %v932
        %1228 = vmatpush1.msra.mxu0 %v931
        %1229 = vmatprep.subr.mxu0 %v917
        %1230 = vmatpush1.msra.mxu0 %v916
        %1231 = vmatprep.subr.mxu0 %v902
        %1232 = vmatpush1.msra.mxu0 %v901
        %1233 = vmatprep.subr.mxu0 %v887
        %1234 = vmatpush1.msra.mxu0 %v886
        %1235 = vmatprep.subr.mxu0 %v872
        %1236 = vmatpush1.msra.mxu0 %v871
        %1237 = vmatprep.subr.mxu0 %v857
        %1238 = vmatpush1.msra.mxu0 %v856
        %1239 = vmatprep.subr.mxu0 %v842
        %1240 = vmatpush1.msra.mxu0 %v841
        %1241 = vmatprep.subr.mxu0 %v827
        %1242 = vmatpush1.msra.mxu0 %v826
        %1243 = vmatprep.subr.mxu0 0.0
        %1244 = vmatpush2.msra.mxu0 0.0
        %1245 = vmatprep.subr.mxu0 0.0
        %1246 = vmatpush2.msra.mxu0 0.0
        %1247 = vmatprep.subr.mxu0 0.0
        %1248 = vmatpush2.msra.mxu0 0.0
        %1249 = vmatprep.subr.mxu0 0.0
        %1250 = vmatpush2.msra.mxu0 0.0
        %1251 = vmatprep.subr.mxu0 0.0
        %1252 = vmatpush2.msra.mxu0 0.0
        %1253 = vmatprep.subr.mxu0 0.0
        %1254 = vmatpush2.msra.mxu0 0.0
        %1255 = vmatprep.subr.mxu0 0.0
        %1256 = vmatpush2.msra.mxu0 0.0
        %1257 = vmatprep.subr.mxu0 %v1187
        %1258 = vmatpush2.msra.mxu0 %v1186
        %1259 = vmatprep.subr.mxu0 %v1172
        %1260 = vmatpush2.msra.mxu0 %v1171
        %1261 = vmatprep.subr.mxu0 %v1157
        %1262 = vmatpush2.msra.mxu0 %v1156
        %1263 = vmatprep.subr.mxu0 %v1142
        %1264 = vmatpush2.msra.mxu0 %v1141
        %1265 = vmatprep.subr.mxu0 %v1127
        %1266 = vmatpush2.msra.mxu0 %v1126
        %1267 = vmatprep.subr.mxu0 %v1112
        %1268 = vmatpush2.msra.mxu0 %v1111
        %1269 = vmatprep.subr.mxu0 %v1097
        %1270 = vmatpush2.msra.mxu0 %v1096
        %1271 = vmatprep.subr.mxu0 %v1082
        %1272 = vmatpush2.msra.mxu0 %v1081
        %1273 = vmatprep.subr.mxu0 %v1067
        %1274 = vmatpush2.msra.mxu0 %v1066
        %1275 = vmatprep.mubr.f32.mxu0 %v1209
        %1276 = vmatmul.mubr.f32.gmra.mxu0 %v824
        %v1277 = vpop.f32.mrf.mxu0
        %v1278 = vadd.f32 %v1205, %v1277
        %v1279 = vpop.f32.mrf.mxu0
        %v1280 = vadd.f32 %v1205, %v1279
        %1281 = vdwg.mxu0
        %1282 = vmatprep.subr.mxu0 %v1054
        %1283 = vmatpush1.msra.mxu0 %v1053
        %1284 = vmatprep.subr.mxu0 %v1039
        %1285 = vmatpush1.msra.mxu0 %v1038
        %1286 = vmatprep.subr.mxu0 %v1024
        %1287 = vmatpush1.msra.mxu0 %v1023
        %1288 = vmatprep.subr.mxu0 %v1009
        %1289 = vmatpush1.msra.mxu0 %v1008
        %1290 = vmatprep.subr.mxu0 %v994
        %1291 = vmatpush1.msra.mxu0 %v993
        %1292 = vmatprep.subr.mxu0 %v979
        %1293 = vmatpush1.msra.mxu0 %v978
        %1294 = vmatprep.subr.mxu0 %v964
        %1295 = vmatpush1.msra.mxu0 %v963
        %1296 = vmatprep.subr.mxu0 %v949
        %1297 = vmatpush1.msra.mxu0 %v948
        %1298 = vmatprep.subr.mxu0 %v934
        %1299 = vmatpush1.msra.mxu0 %v933
        %1300 = vmatprep.subr.mxu0 %v919
        %1301 = vmatpush1.msra.mxu0 %v918
        %1302 = vmatprep.subr.mxu0 %v904
        %1303 = vmatpush1.msra.mxu0 %v903
        %1304 = vmatprep.subr.mxu0 %v889
        %1305 = vmatpush1.msra.mxu0 %v888
        %1306 = vmatprep.subr.mxu0 %v874
        %1307 = vmatpush1.msra.mxu0 %v873
        %1308 = vmatprep.subr.mxu0 %v859
        %1309 = vmatpush1.msra.mxu0 %v858
        %1310 = vmatprep.subr.mxu0 %v844
        %1311 = vmatpush1.msra.mxu0 %v843
        %1312 = vmatprep.subr.mxu0 %v829
        %1313 = vmatpush1.msra.mxu0 %v828
        %1314 = vmatprep.subr.mxu0 0.0
        %1315 = vmatpush2.msra.mxu0 0.0
        %1316 = vmatprep.subr.mxu0 0.0
        %1317 = vmatpush2.msra.mxu0 0.0
        %1318 = vmatprep.subr.mxu0 0.0
        %1319 = vmatpush2.msra.mxu0 0.0
        %1320 = vmatprep.subr.mxu0 0.0
        %1321 = vmatpush2.msra.mxu0 0.0
        %1322 = vmatprep.subr.mxu0 0.0
        %1323 = vmatpush2.msra.mxu0 0.0
        %1324 = vmatprep.subr.mxu0 0.0
        %1325 = vmatpush2.msra.mxu0 0.0
        %1326 = vmatprep.subr.mxu0 0.0
        %1327 = vmatpush2.msra.mxu0 0.0
        %1328 = vmatprep.subr.mxu0 %v1189
        %1329 = vmatpush2.msra.mxu0 %v1188
        %1330 = vmatprep.subr.mxu0 %v1174
        %1331 = vmatpush2.msra.mxu0 %v1173
        %1332 = vmatprep.subr.mxu0 %v1159
        %1333 = vmatpush2.msra.mxu0 %v1158
        %1334 = vmatprep.subr.mxu0 %v1144
        %1335 = vmatpush2.msra.mxu0 %v1143
        %1336 = vmatprep.subr.mxu0 %v1129
        %1337 = vmatpush2.msra.mxu0 %v1128
        %1338 = vmatprep.subr.mxu0 %v1114
        %1339 = vmatpush2.msra.mxu0 %v1113
        %1340 = vmatprep.subr.mxu0 %v1099
        %1341 = vmatpush2.msra.mxu0 %v1098
        %1342 = vmatprep.subr.mxu0 %v1084
        %1343 = vmatpush2.msra.mxu0 %v1083
        %1344 = vmatprep.subr.mxu0 %v1069
        %1345 = vmatpush2.msra.mxu0 %v1068
        %1346 = vmatprep.mubr.f32.mxu0 %v1209
        %1347 = vmatmul.mubr.f32.gmra.mxu0 %v824
        %v1348 = vpop.f32.mrf.mxu0
        %v1349 = vadd.f32 %v1205, %v1348
        %v1350 = vpop.f32.mrf.mxu0
        %v1351 = vadd.f32 %v1205, %v1350
        %1352 = vdwg.mxu0
        %1353 = vmatprep.subr.mxu0 %v1056
        %1354 = vmatpush1.msra.mxu0 %v1055
        %1355 = vmatprep.subr.mxu0 %v1041
        %1356 = vmatpush1.msra.mxu0 %v1040
        %1357 = vmatprep.subr.mxu0 %v1026
        %1358 = vmatpush1.msra.mxu0 %v1025
        %1359 = vmatprep.subr.mxu0 %v1011
        %1360 = vmatpush1.msra.mxu0 %v1010
        %1361 = vmatprep.subr.mxu0 %v996
        %1362 = vmatpush1.msra.mxu0 %v995
        %1363 = vmatprep.subr.mxu0 %v981
        %1364 = vmatpush1.msra.mxu0 %v980
        %1365 = vmatprep.subr.mxu0 %v966
        %1366 = vmatpush1.msra.mxu0 %v965
        %1367 = vmatprep.subr.mxu0 %v951
        %1368 = vmatpush1.msra.mxu0 %v950
        %1369 = vmatprep.subr.mxu0 %v936
        %1370 = vmatpush1.msra.mxu0 %v935
        %1371 = vmatprep.subr.mxu0 %v921
        %1372 = vmatpush1.msra.mxu0 %v920
        %1373 = vmatprep.subr.mxu0 %v906
        %1374 = vmatpush1.msra.mxu0 %v905
        %1375 = vmatprep.subr.mxu0 %v891
        %1376 = vmatpush1.msra.mxu0 %v890
        %1377 = vmatprep.subr.mxu0 %v876
        %1378 = vmatpush1.msra.mxu0 %v875
        %1379 = vmatprep.subr.mxu0 %v861
        %1380 = vmatpush1.msra.mxu0 %v860
        %1381 = vmatprep.subr.mxu0 %v846
        %1382 = vmatpush1.msra.mxu0 %v845
        %1383 = vmatprep.subr.mxu0 %v831
        %1384 = vmatpush1.msra.mxu0 %v830
        %1385 = vmatprep.subr.mxu0 0.0
        %1386 = vmatpush2.msra.mxu0 0.0
        %1387 = vmatprep.subr.mxu0 0.0
        %1388 = vmatpush2.msra.mxu0 0.0
        %1389 = vmatprep.subr.mxu0 0.0
        %1390 = vmatpush2.msra.mxu0 0.0
        %1391 = vmatprep.subr.mxu0 0.0
        %1392 = vmatpush2.msra.mxu0 0.0
        %1393 = vmatprep.subr.mxu0 0.0
        %1394 = vmatpush2.msra.mxu0 0.0
        %1395 = vmatprep.subr.mxu0 0.0
        %1396 = vmatpush2.msra.mxu0 0.0
        %1397 = vmatprep.subr.mxu0 0.0
        %1398 = vmatpush2.msra.mxu0 0.0
        %1399 = vmatprep.subr.mxu0 %v1191
        %1400 = vmatpush2.msra.mxu0 %v1190
        %1401 = vmatprep.subr.mxu0 %v1176
        %1402 = vmatpush2.msra.mxu0 %v1175
        %1403 = vmatprep.subr.mxu0 %v1161
        %1404 = vmatpush2.msra.mxu0 %v1160
        %1405 = vmatprep.subr.mxu0 %v1146
        %1406 = vmatpush2.msra.mxu0 %v1145
        %1407 = vmatprep.subr.mxu0 %v1131
        %1408 = vmatpush2.msra.mxu0 %v1130
        %1409 = vmatprep.subr.mxu0 %v1116
        %1410 = vmatpush2.msra.mxu0 %v1115
        %1411 = vmatprep.subr.mxu0 %v1101
        %1412 = vmatpush2.msra.mxu0 %v1100
        %1413 = vmatprep.subr.mxu0 %v1086
        %1414 = vmatpush2.msra.mxu0 %v1085
        %1415 = vmatprep.subr.mxu0 %v1071
        %1416 = vmatpush2.msra.mxu0 %v1070
        %1417 = vmatprep.mubr.f32.mxu0 %v1209
        %1418 = vmatmul.mubr.f32.gmra.mxu0 %v824
        %v1419 = vpop.f32.mrf.mxu0
        %v1420 = vadd.f32 %v1205, %v1419
        %v1421 = vpop.f32.mrf.mxu0
        %v1422 = vadd.f32 %v1205, %v1421
        %1423 = vdwg.mxu0
        %1424 = vmatprep.subr.mxu0 %v1058
        %1425 = vmatpush1.msra.mxu0 %v1057
        %1426 = vmatprep.subr.mxu0 %v1043
        %1427 = vmatpush1.msra.mxu0 %v1042
        %1428 = vmatprep.subr.mxu0 %v1028
        %1429 = vmatpush1.msra.mxu0 %v1027
        %1430 = vmatprep.subr.mxu0 %v1013
        %1431 = vmatpush1.msra.mxu0 %v1012
        %1432 = vmatprep.subr.mxu0 %v998
        %1433 = vmatpush1.msra.mxu0 %v997
        %1434 = vmatprep.subr.mxu0 %v983
        %1435 = vmatpush1.msra.mxu0 %v982
        %1436 = vmatprep.subr.mxu0 %v968
        %1437 = vmatpush1.msra.mxu0 %v967
        %1438 = vmatprep.subr.mxu0 %v953
        %1439 = vmatpush1.msra.mxu0 %v952
        %1440 = vmatprep.subr.mxu0 %v938
        %1441 = vmatpush1.msra.mxu0 %v937
        %1442 = vmatprep.subr.mxu0 %v923
        %1443 = vmatpush1.msra.mxu0 %v922
        %1444 = vmatprep.subr.mxu0 %v908
        %1445 = vmatpush1.msra.mxu0 %v907
        %1446 = vmatprep.subr.mxu0 %v893
        %1447 = vmatpush1.msra.mxu0 %v892
        %1448 = vmatprep.subr.mxu0 %v878
        %1449 = vmatpush1.msra.mxu0 %v877
        %1450 = vmatprep.subr.mxu0 %v863
        %1451 = vmatpush1.msra.mxu0 %v862
        %1452 = vmatprep.subr.mxu0 %v848
        %1453 = vmatpush1.msra.mxu0 %v847
        %1454 = vmatprep.subr.mxu0 %v833
        %1455 = vmatpush1.msra.mxu0 %v832
        %1456 = vmatprep.subr.mxu0 0.0
        %1457 = vmatpush2.msra.mxu0 0.0
        %1458 = vmatprep.subr.mxu0 0.0
        %1459 = vmatpush2.msra.mxu0 0.0
        %1460 = vmatprep.subr.mxu0 0.0
        %1461 = vmatpush2.msra.mxu0 0.0
        %1462 = vmatprep.subr.mxu0 0.0
        %1463 = vmatpush2.msra.mxu0 0.0
        %1464 = vmatprep.subr.mxu0 0.0
        %1465 = vmatpush2.msra.mxu0 0.0
        %1466 = vmatprep.subr.mxu0 0.0
        %1467 = vmatpush2.msra.mxu0 0.0
        %1468 = vmatprep.subr.mxu0 0.0
        %1469 = vmatpush2.msra.mxu0 0.0
        %1470 = vmatprep.subr.mxu0 %v1193
        %1471 = vmatpush2.msra.mxu0 %v1192
        %1472 = vmatprep.subr.mxu0 %v1178
        %1473 = vmatpush2.msra.mxu0 %v1177
        %1474 = vmatprep.subr.mxu0 %v1163
        %1475 = vmatpush2.msra.mxu0 %v1162
        %1476 = vmatprep.subr.mxu0 %v1148
        %1477 = vmatpush2.msra.mxu0 %v1147
        %1478 = vmatprep.subr.mxu0 %v1133
        %1479 = vmatpush2.msra.mxu0 %v1132
        %1480 = vmatprep.subr.mxu0 %v1118
        %1481 = vmatpush2.msra.mxu0 %v1117
        %1482 = vmatprep.subr.mxu0 %v1103
        %1483 = vmatpush2.msra.mxu0 %v1102
        %1484 = vmatprep.subr.mxu0 %v1088
        %1485 = vmatpush2.msra.mxu0 %v1087
        %1486 = vmatprep.subr.mxu0 %v1073
        %1487 = vmatpush2.msra.mxu0 %v1072
        %1488 = vmatprep.mubr.f32.mxu0 %v1209
        %1489 = vmatmul.mubr.f32.gmra.mxu0 %v824
        %v1490 = vpop.f32.mrf.mxu0
        %v1491 = vadd.f32 %v1205, %v1490
        %v1492 = vpop.f32.mrf.mxu0
        %v1493 = vadd.f32 %v1205, %v1492
        %1494 = vdwg.mxu0
        %1495 = vmatprep.subr.mxu0 %v1060
        %1496 = vmatpush1.msra.mxu0 %v1059
        %1497 = vmatprep.subr.mxu0 %v1045
        %1498 = vmatpush1.msra.mxu0 %v1044
        %1499 = vmatprep.subr.mxu0 %v1030
        %1500 = vmatpush1.msra.mxu0 %v1029
        %1501 = vmatprep.subr.mxu0 %v1015
        %1502 = vmatpush1.msra.mxu0 %v1014
        %1503 = vmatprep.subr.mxu0 %v1000
        %1504 = vmatpush1.msra.mxu0 %v999
        %1505 = vmatprep.subr.mxu0 %v985
        %1506 = vmatpush1.msra.mxu0 %v984
        %1507 = vmatprep.subr.mxu0 %v970
        %1508 = vmatpush1.msra.mxu0 %v969
        %1509 = vmatprep.subr.mxu0 %v955
        %1510 = vmatpush1.msra.mxu0 %v954
        %1511 = vmatprep.subr.mxu0 %v940
        %1512 = vmatpush1.msra.mxu0 %v939
        %1513 = vmatprep.subr.mxu0 %v925
        %1514 = vmatpush1.msra.mxu0 %v924
        %1515 = vmatprep.subr.mxu0 %v910
        %1516 = vmatpush1.msra.mxu0 %v909
        %1517 = vmatprep.subr.mxu0 %v895
        %1518 = vmatpush1.msra.mxu0 %v894
        %1519 = vmatprep.subr.mxu0 %v880
        %1520 = vmatpush1.msra.mxu0 %v879
        %1521 = vmatprep.subr.mxu0 %v865
        %1522 = vmatpush1.msra.mxu0 %v864
        %1523 = vmatprep.subr.mxu0 %v850
        %1524 = vmatpush1.msra.mxu0 %v849
        %1525 = vmatprep.subr.mxu0 %v835
        %1526 = vmatpush1.msra.mxu0 %v834
        %1527 = vmatprep.subr.mxu0 0.0
        %1528 = vmatpush2.msra.mxu0 0.0
        %1529 = vmatprep.subr.mxu0 0.0
        %1530 = vmatpush2.msra.mxu0 0.0
        %1531 = vmatprep.subr.mxu0 0.0
        %1532 = vmatpush2.msra.mxu0 0.0
        %1533 = vmatprep.subr.mxu0 0.0
        %1534 = vmatpush2.msra.mxu0 0.0
        %1535 = vmatprep.subr.mxu0 0.0
        %1536 = vmatpush2.msra.mxu0 0.0
        %1537 = vmatprep.subr.mxu0 0.0
        %1538 = vmatpush2.msra.mxu0 0.0
        %1539 = vmatprep.subr.mxu0 0.0
        %1540 = vmatpush2.msra.mxu0 0.0
        %1541 = vmatprep.subr.mxu0 %v1195
        %1542 = vmatpush2.msra.mxu0 %v1194
        %1543 = vmatprep.subr.mxu0 %v1180
        %1544 = vmatpush2.msra.mxu0 %v1179
        %1545 = vmatprep.subr.mxu0 %v1165
        %1546 = vmatpush2.msra.mxu0 %v1164
        %1547 = vmatprep.subr.mxu0 %v1150
        %1548 = vmatpush2.msra.mxu0 %v1149
        %1549 = vmatprep.subr.mxu0 %v1135
        %1550 = vmatpush2.msra.mxu0 %v1134
        %1551 = vmatprep.subr.mxu0 %v1120
        %1552 = vmatpush2.msra.mxu0 %v1119
        %1553 = vmatprep.subr.mxu0 %v1105
        %1554 = vmatpush2.msra.mxu0 %v1104
        %1555 = vmatprep.subr.mxu0 %v1090
        %1556 = vmatpush2.msra.mxu0 %v1089
        %1557 = vmatprep.subr.mxu0 %v1075
        %1558 = vmatpush2.msra.mxu0 %v1074
        %1559 = vmatprep.mubr.f32.mxu0 %v1209
        %1560 = vmatmul.mubr.f32.gmra.mxu0 %v824
        %v1561 = vpop.f32.mrf.mxu0
        %v1562 = vadd.f32 %v1205, %v1561
        %v1563 = vpop.f32.mrf.mxu0
        %v1564 = vadd.f32 %v1205, %v1563
        %1565 = vdwg.mxu0
        %1566 = vmatprep.subr.mxu0 %v1062
        %1567 = vmatpush1.msra.mxu0 %v1061
        %1568 = vmatprep.subr.mxu0 %v1047
        %1569 = vmatpush1.msra.mxu0 %v1046
        %1570 = vmatprep.subr.mxu0 %v1032
        %1571 = vmatpush1.msra.mxu0 %v1031
        %1572 = vmatprep.subr.mxu0 %v1017
        %1573 = vmatpush1.msra.mxu0 %v1016
        %1574 = vmatprep.subr.mxu0 %v1002
        %1575 = vmatpush1.msra.mxu0 %v1001
        %1576 = vmatprep.subr.mxu0 %v987
        %1577 = vmatpush1.msra.mxu0 %v986
        %1578 = vmatprep.subr.mxu0 %v972
        %1579 = vmatpush1.msra.mxu0 %v971
        %1580 = vmatprep.subr.mxu0 %v957
        %1581 = vmatpush1.msra.mxu0 %v956
        %1582 = vmatprep.subr.mxu0 %v942
        %1583 = vmatpush1.msra.mxu0 %v941
        %1584 = vmatprep.subr.mxu0 %v927
        %1585 = vmatpush1.msra.mxu0 %v926
        %1586 = vmatprep.subr.mxu0 %v912
        %1587 = vmatpush1.msra.mxu0 %v911
        %1588 = vmatprep.subr.mxu0 %v897
        %1589 = vmatpush1.msra.mxu0 %v896
        %1590 = vmatprep.subr.mxu0 %v882
        %1591 = vmatpush1.msra.mxu0 %v881
        %1592 = vmatprep.subr.mxu0 %v867
        %1593 = vmatpush1.msra.mxu0 %v866
        %1594 = vmatprep.subr.mxu0 %v852
        %1595 = vmatpush1.msra.mxu0 %v851
        %1596 = vmatprep.subr.mxu0 %v837
        %1597 = vmatpush1.msra.mxu0 %v836
        %1598 = vmatprep.subr.mxu0 0.0
        %1599 = vmatpush2.msra.mxu0 0.0
        %1600 = vmatprep.subr.mxu0 0.0
        %1601 = vmatpush2.msra.mxu0 0.0
        %1602 = vmatprep.subr.mxu0 0.0
        %1603 = vmatpush2.msra.mxu0 0.0
        %1604 = vmatprep.subr.mxu0 0.0
        %1605 = vmatpush2.msra.mxu0 0.0
        %1606 = vmatprep.subr.mxu0 0.0
        %1607 = vmatpush2.msra.mxu0 0.0
        %1608 = vmatprep.subr.mxu0 0.0
        %1609 = vmatpush2.msra.mxu0 0.0
        %1610 = vmatprep.subr.mxu0 0.0
        %1611 = vmatpush2.msra.mxu0 0.0
        %1612 = vmatprep.subr.mxu0 %v1197
        %1613 = vmatpush2.msra.mxu0 %v1196
        %1614 = vmatprep.subr.mxu0 %v1182
        %1615 = vmatpush2.msra.mxu0 %v1181
        %1616 = vmatprep.subr.mxu0 %v1167
        %1617 = vmatpush2.msra.mxu0 %v1166
        %1618 = vmatprep.subr.mxu0 %v1152
        %1619 = vmatpush2.msra.mxu0 %v1151
        %1620 = vmatprep.subr.mxu0 %v1137
        %1621 = vmatpush2.msra.mxu0 %v1136
        %1622 = vmatprep.subr.mxu0 %v1122
        %1623 = vmatpush2.msra.mxu0 %v1121
        %1624 = vmatprep.subr.mxu0 %v1107
        %1625 = vmatpush2.msra.mxu0 %v1106
        %1626 = vmatprep.subr.mxu0 %v1092
        %1627 = vmatpush2.msra.mxu0 %v1091
        %1628 = vmatprep.subr.mxu0 %v1077
        %1629 = vmatpush2.msra.mxu0 %v1076
        %1630 = vmatprep.mubr.f32.mxu0 %v1209
        %1631 = vmatmul.mubr.f32.gmra.mxu0 %v824
        %v1632 = vpop.f32.mrf.mxu0
        %v1633 = vadd.f32 %v1205, %v1632
        %v1634 = vpop.f32.mrf.mxu0
        %v1635 = vadd.f32 %v1205, %v1634
        %1636 = vdwg.mxu0
        %1637 = vmatprep.subr.mxu0 %v1064
        %1638 = vmatpush1.msra.mxu0 %v1063
        %1639 = vmatprep.subr.mxu0 %v1049
        %1640 = vmatpush1.msra.mxu0 %v1048
        %1641 = vmatprep.subr.mxu0 %v1034
        %1642 = vmatpush1.msra.mxu0 %v1033
        %1643 = vmatprep.subr.mxu0 %v1019
        %1644 = vmatpush1.msra.mxu0 %v1018
        %1645 = vmatprep.subr.mxu0 %v1004
        %1646 = vmatpush1.msra.mxu0 %v1003
        %1647 = vmatprep.subr.mxu0 %v989
        %1648 = vmatpush1.msra.mxu0 %v988
        %1649 = vmatprep.subr.mxu0 %v974
        %1650 = vmatpush1.msra.mxu0 %v973
        %1651 = vmatprep.subr.mxu0 %v959
        %1652 = vmatpush1.msra.mxu0 %v958
        %1653 = vmatprep.subr.mxu0 %v944
        %1654 = vmatpush1.msra.mxu0 %v943
        %1655 = vmatprep.subr.mxu0 %v929
        %1656 = vmatpush1.msra.mxu0 %v928
        %1657 = vmatprep.subr.mxu0 %v914
        %1658 = vmatpush1.msra.mxu0 %v913
        %1659 = vmatprep.subr.mxu0 %v899
        %1660 = vmatpush1.msra.mxu0 %v898
        %1661 = vmatprep.subr.mxu0 %v884
        %1662 = vmatpush1.msra.mxu0 %v883
        %1663 = vmatprep.subr.mxu0 %v869
        %1664 = vmatpush1.msra.mxu0 %v868
        %1665 = vmatprep.subr.mxu0 %v854
        %1666 = vmatpush1.msra.mxu0 %v853
        %1667 = vmatprep.subr.mxu0 %v839
        %1668 = vmatpush1.msra.mxu0 %v838
        %1669 = vmatprep.subr.mxu0 0.0
        %1670 = vmatpush2.msra.mxu0 0.0
        %1671 = vmatprep.subr.mxu0 0.0
        %1672 = vmatpush2.msra.mxu0 0.0
        %1673 = vmatprep.subr.mxu0 0.0
        %1674 = vmatpush2.msra.mxu0 0.0
        %1675 = vmatprep.subr.mxu0 0.0
        %1676 = vmatpush2.msra.mxu0 0.0
        %1677 = vmatprep.subr.mxu0 0.0
        %1678 = vmatpush2.msra.mxu0 0.0
        %1679 = vmatprep.subr.mxu0 0.0
        %1680 = vmatpush2.msra.mxu0 0.0
        %1681 = vmatprep.subr.mxu0 0.0
        %1682 = vmatpush2.msra.mxu0 0.0
        %1683 = vmatprep.subr.mxu0 %v1199
        %1684 = vmatpush2.msra.mxu0 %v1198
        %1685 = vmatprep.subr.mxu0 %v1184
        %1686 = vmatpush2.msra.mxu0 %v1183
        %1687 = vmatprep.subr.mxu0 %v1169
        %1688 = vmatpush2.msra.mxu0 %v1168
        %1689 = vmatprep.subr.mxu0 %v1154
        %1690 = vmatpush2.msra.mxu0 %v1153
        %1691 = vmatprep.subr.mxu0 %v1139
        %1692 = vmatpush2.msra.mxu0 %v1138
        %1693 = vmatprep.subr.mxu0 %v1124
        %1694 = vmatpush2.msra.mxu0 %v1123
        %1695 = vmatprep.subr.mxu0 %v1109
        %1696 = vmatpush2.msra.mxu0 %v1108
        %1697 = vmatprep.subr.mxu0 %v1094
        %1698 = vmatpush2.msra.mxu0 %v1093
        %1699 = vmatprep.subr.mxu0 %v1079
        %1700 = vmatpush2.msra.mxu0 %v1078
        %1701 = vmatprep.mubr.f32.mxu0 %v1209
        %1702 = vmatmul.mubr.f32.gmra.mxu0 %v824
        %v1703 = vpop.f32.mrf.mxu0
        %v1704 = vadd.f32 %v1205, %v1703
        %v1705 = vpop.f32.mrf.mxu0
        %v1706 = vadd.f32 %v1205, %v1705
        %1707 = vdwg.mxu0
        %1708 = vmatprep.subr.mxu0 0.0
        %1709 = vmatpush1.msra.mxu0 %v1065
        %1710 = vmatprep.subr.mxu0 0.0
        %1711 = vmatpush1.msra.mxu0 %v1050
        %1712 = vmatprep.subr.mxu0 0.0
        %1713 = vmatpush1.msra.mxu0 %v1035
        %1714 = vmatprep.subr.mxu0 0.0
        %1715 = vmatpush1.msra.mxu0 %v1020
        %1716 = vmatprep.subr.mxu0 0.0
        %1717 = vmatpush1.msra.mxu0 %v1005
        %1718 = vmatprep.subr.mxu0 0.0
        %1719 = vmatpush1.msra.mxu0 %v990
        %1720 = vmatprep.subr.mxu0 0.0
        %1721 = vmatpush1.msra.mxu0 %v975
        %1722 = vmatprep.subr.mxu0 0.0
        %1723 = vmatpush1.msra.mxu0 %v960
        %1724 = vmatprep.subr.mxu0 0.0
        %1725 = vmatpush1.msra.mxu0 %v945
        %1726 = vmatprep.subr.mxu0 0.0
        %1727 = vmatpush1.msra.mxu0 %v930
        %1728 = vmatprep.subr.mxu0 0.0
        %1729 = vmatpush1.msra.mxu0 %v915
        %1730 = vmatprep.subr.mxu0 0.0
        %1731 = vmatpush1.msra.mxu0 %v900
        %1732 = vmatprep.subr.mxu0 0.0
        %1733 = vmatpush1.msra.mxu0 %v885
        %1734 = vmatprep.subr.mxu0 0.0
        %1735 = vmatpush1.msra.mxu0 %v870
        %1736 = vmatprep.subr.mxu0 0.0
        %1737 = vmatpush1.msra.mxu0 %v855
        %1738 = vmatprep.subr.mxu0 0.0
        %1739 = vmatpush1.msra.mxu0 %v840
        %1740 = vmatprep.subr.mxu0 0.0
        %1741 = vmatpush2.msra.mxu0 0.0
        %1742 = vmatprep.subr.mxu0 0.0
        %1743 = vmatpush2.msra.mxu0 0.0
        %1744 = vmatprep.subr.mxu0 0.0
        %1745 = vmatpush2.msra.mxu0 0.0
        %1746 = vmatprep.subr.mxu0 0.0
        %1747 = vmatpush2.msra.mxu0 0.0
        %1748 = vmatprep.subr.mxu0 0.0
        %1749 = vmatpush2.msra.mxu0 0.0
        %1750 = vmatprep.subr.mxu0 0.0
        %1751 = vmatpush2.msra.mxu0 0.0
        %1752 = vmatprep.subr.mxu0 0.0
        %1753 = vmatpush2.msra.mxu0 0.0
        %1754 = vmatprep.subr.mxu0 0.0
        %1755 = vmatpush2.msra.mxu0 %v1200
        %1756 = vmatprep.subr.mxu0 0.0
        %1757 = vmatpush2.msra.mxu0 %v1185
        %1758 = vmatprep.subr.mxu0 0.0
        %1759 = vmatpush2.msra.mxu0 %v1170
        %1760 = vmatprep.subr.mxu0 0.0
        %1761 = vmatpush2.msra.mxu0 %v1155
        %1762 = vmatprep.subr.mxu0 0.0
        %1763 = vmatpush2.msra.mxu0 %v1140
        %1764 = vmatprep.subr.mxu0 0.0
        %1765 = vmatpush2.msra.mxu0 %v1125
        %1766 = vmatprep.subr.mxu0 0.0
        %1767 = vmatpush2.msra.mxu0 %v1110
        %1768 = vmatprep.subr.mxu0 0.0
        %1769 = vmatpush2.msra.mxu0 %v1095
        %1770 = vmatprep.subr.mxu0 0.0
        %1771 = vmatpush2.msra.mxu0 %v1080
        %1772 = vmatprep.mubr.f32.mxu0 %v1209
        %1773 = vmatmul.mubr.f32.gmra.mxu0 %v824
        %v1774 = vpop.f32.mrf.mxu0
        %v1775 = vadd.f32 %v1205, %v1774
        %v1776 = vpop.f32.mrf.mxu0
        %1777 = vdwg.mxu0
        %v1778 = vmax.f32 %v1278, 0.0
        %v1779 = vmax.f32 %v1280, 0.0
        %v1780 = vmax.f32 %v1349, 0.0
        %v1781 = vmax.f32 %v1351, 0.0
        %v1782 = vmax.f32 %v1420, 0.0
        %v1783 = vmax.f32 %v1422, 0.0
        %v1784 = vmax.f32 %v1491, 0.0
        %v1785 = vmax.f32 %v1493, 0.0
        %v1786 = vmax.f32 %v1562, 0.0
        %v1787 = vmax.f32 %v1564, 0.0
        %v1788 = vmax.f32 %v1633, 0.0
        %v1789 = vmax.f32 %v1635, 0.0
        %v1790 = vmax.f32 %v1704, 0.0
        %v1791 = vmax.f32 %v1706, 0.0
        %v1792 = vmax.f32 %v1775, 0.0
        %1793 = vst [vmem:[%s813] sm:$0xff] %v1778
        %1794 = vst [vmem:[%s813 + $0x8] sm:$0xff] %v1779
        %1795 = vst [vmem:[%s813 + $0x10] sm:$0xff] %v1780
        %1796 = vst [vmem:[%s813 + $0x18] sm:$0xff] %v1781
        %1797 = vst [vmem:[%s813 + $0x20] sm:$0xff] %v1782
        %1798 = vst [vmem:[%s813 + $0x28] sm:$0xff] %v1783
        %1799 = vst [vmem:[%s813 + $0x30] sm:$0xff] %v1784
        %1800 = vst [vmem:[%s813 + $0x38] sm:$0xff] %v1785
        %1801 = vst [vmem:[%s813 + $0x40] sm:$0xff] %v1786
        %1802 = vst [vmem:[%s813 + $0x48] sm:$0xff] %v1787
        %1803 = vst [vmem:[%s813 + $0x50] sm:$0xff] %v1788
        %1804 = vst [vmem:[%s813 + $0x58] sm:$0xff] %v1789
        %1805 = vst [vmem:[%s813 + $0x60] sm:$0xff] %v1790
        %1806 = vst [vmem:[%s813 + $0x68] sm:$0xff] %v1791
        %1807 = vst [vmem:[%s813 + $0x70] sm:$0xff] %v1792
        %s1808 = sand.u32 %s90, 1
        %s1809 = sand.u32 %s90, 1
        %s1810 = smul.addr %s1809, 120
        %s1811 = scalar_lea.vmem [#allocation3], %s1810
        // Predicated region
        $region99: #{two_heads_forward.5} parent=93 // pred_check
          %p1812 = pneg %p100
        $region100: #{two_heads_forward.5} parent=93 // pred_check_branch
          %1814 = sbr.rel (%p1812) target = $region102
        $region101: #{two_heads_forward.5} parent=93 // pred_region
          %s1815 = smul.u32 15, %s14
          %s1816 = ssub.s32 29, %s1815
          %p1817 = scmp.lt.s32.totalorder %s1816, 15
          %s1818 = scalar_select %p1817, %s1816, 15
          %s1819 = smul.u32 128, %s1818
          %p1820 = scmp.ne.s32.totalorder 0, %s1819
          %s1821 = smul.addr %s1815, 8
          %s1822 = scalar_lea.vmem %s3, %s1821
          %s1823 = smul.u32 %s1818, 8
          // Predicated region
          $region103: #{two_heads_forward.5} parent=101 // pred_check
            %p1824 = pneg %p1820
          $region104: #{two_heads_forward.5} parent=101 // pred_check_branch
            %1826 = sbr.rel (%p1824) target = $region106
          $region105: #{two_heads_forward.5} parent=101 // pred_region
            %p1827 = scmp.lt.u32.totalorder %s1823, 8
            %p1828 = pneg %p1827
            // Predicated region
            $region107: #{two_heads_forward.5} parent=105 // pred_check
              _
            $region108: #{two_heads_forward.5} parent=105 // pred_check_branch
              %1830 = sbr.rel (%p1827) target = $region110
            $region109: #{two_heads_forward.5} parent=105 // pred_region
              %s1846 = sand.u32 %s1823, 7
              %p1847 = scmp.eq.s32.totalorder %s1846, 0
              // Predicated region
              $region122: #{two_heads_forward.5} parent=109 // pred_check
                %p1848 = pneg %p1847
              $region123: #{two_heads_forward.5} parent=109 // pred_check_branch
                %1850 = sbr.rel (%p1848) target = $region125
              $region124: #{two_heads_forward.5} parent=109 // pred_region
                %s1851 = sshrl.u32 %s1823, 3
                %s1852 = sshrl.u32 %s1851, 6
                // While loop
                $region126: #{two_heads_forward.5} parent=124 // loop_pre_header
                  _
                $region127: #{two_heads_forward.5} parent=124 // loop_header
                  %s1856 = sphi 0, %s1858
                  %p1857 = scmp.ge.s32.totalorder %s1856, %s1852
                  %s1861 = sphi 0, %s1994
                  %s1862 = sphi %s1811, %s1997
                  %s1863 = sphi %s1822, %s1998
                $region128: #{two_heads_forward.5} parent=124 // loop_header_branch
                  %1860 = sbr.rel (%p1857) target = $region132
                $region129: #{two_heads_forward.5} parent=124 // loop_body
                  %v1864 = vld [vmem:[%s1862] sm:$0xff]
                  %1865 = vst [vmem:[%s1863] sm:$0xff] %v1864
                  %v1866 = vld [vmem:[%s1862 + $0x8] sm:$0xff]
                  %1867 = vst [vmem:[%s1863 + $0x8] sm:$0xff] %v1866
                  %v1868 = vld [vmem:[%s1862 + $0x10] sm:$0xff]
                  %1869 = vst [vmem:[%s1863 + $0x10] sm:$0xff] %v1868
                  %v1870 = vld [vmem:[%s1862 + $0x18] sm:$0xff]
                  %1871 = vst [vmem:[%s1863 + $0x18] sm:$0xff] %v1870
                  %v1872 = vld [vmem:[%s1862 + $0x20] sm:$0xff]
                  %1873 = vst [vmem:[%s1863 + $0x20] sm:$0xff] %v1872
                  %v1874 = vld [vmem:[%s1862 + $0x28] sm:$0xff]
                  %1875 = vst [vmem:[%s1863 + $0x28] sm:$0xff] %v1874
                  %v1876 = vld [vmem:[%s1862 + $0x30] sm:$0xff]
                  %1877 = vst [vmem:[%s1863 + $0x30] sm:$0xff] %v1876
                  %v1878 = vld [vmem:[%s1862 + $0x38] sm:$0xff]
                  %1879 = vst [vmem:[%s1863 + $0x38] sm:$0xff] %v1878
                  %v1880 = vld [vmem:[%s1862 + $0x40] sm:$0xff]
                  %1881 = vst [vmem:[%s1863 + $0x40] sm:$0xff] %v1880
                  %v1882 = vld [vmem:[%s1862 + $0x48] sm:$0xff]
                  %1883 = vst [vmem:[%s1863 + $0x48] sm:$0xff] %v1882
                  %v1884 = vld [vmem:[%s1862 + $0x50] sm:$0xff]
                  %1885 = vst [vmem:[%s1863 + $0x50] sm:$0xff] %v1884
                  %v1886 = vld [vmem:[%s1862 + $0x58] sm:$0xff]
                  %1887 = vst [vmem:[%s1863 + $0x58] sm:$0xff] %v1886
                  %v1888 = vld [vmem:[%s1862 + $0x60] sm:$0xff]
                  %1889 = vst [vmem:[%s1863 + $0x60] sm:$0xff] %v1888
                  %v1890 = vld [vmem:[%s1862 + $0x68] sm:$0xff]
                  %1891 = vst [vmem:[%s1863 + $0x68] sm:$0xff] %v1890
                  %v1892 = vld [vmem:[%s1862 + $0x70] sm:$0xff]
                  %1893 = vst [vmem:[%s1863 + $0x70] sm:$0xff] %v1892
                  %v1894 = vld [vmem:[%s1862 + $0x78] sm:$0xff]
                  %1895 = vst [vmem:[%s1863 + $0x78] sm:$0xff] %v1894
                  %v1896 = vld [vmem:[%s1862 + $0x80] sm:$0xff]
                  %1897 = vst [vmem:[%s1863 + $0x80] sm:$0xff] %v1896
                  %v1898 = vld [vmem:[%s1862 + $0x88] sm:$0xff]
                  %1899 = vst [vmem:[%s1863 + $0x88] sm:$0xff] %v1898
                  %v1900 = vld [vmem:[%s1862 + $0x90] sm:$0xff]
                  %1901 = vst [vmem:[%s1863 + $0x90] sm:$0xff] %v1900
                  %v1902 = vld [vmem:[%s1862 + $0x98] sm:$0xff]
                  %1903 = vst [vmem:[%s1863 + $0x98] sm:$0xff] %v1902
                  %v1904 = vld [vmem:[%s1862 + $0xa0] sm:$0xff]
                  %1905 = vst [vmem:[%s1863 + $0xa0] sm:$0xff] %v1904
                  %v1906 = vld [vmem:[%s1862 + $0xa8] sm:$0xff]
                  %1907 = vst [vmem:[%s1863 + $0xa8] sm:$0xff] %v1906
                  %v1908 = vld [vmem:[%s1862 + $0xb0] sm:$0xff]
                  %1909 = vst [vmem:[%s1863 + $0xb0] sm:$0xff] %v1908
                  %v1910 = vld [vmem:[%s1862 + $0xb8] sm:$0xff]
                  %1911 = vst [vmem:[%s1863 + $0xb8] sm:$0xff] %v1910
                  %v1912 = vld [vmem:[%s1862 + $0xc0] sm:$0xff]
                  %1913 = vst [vmem:[%s1863 + $0xc0] sm:$0xff] %v1912
                  %v1914 = vld [vmem:[%s1862 + $0xc8] sm:$0xff]
                  %1915 = vst [vmem:[%s1863 + $0xc8] sm:$0xff] %v1914
                  %v1916 = vld [vmem:[%s1862 + $0xd0] sm:$0xff]
                  %1917 = vst [vmem:[%s1863 + $0xd0] sm:$0xff] %v1916
                  %v1918 = vld [vmem:[%s1862 + $0xd8] sm:$0xff]
                  %1919 = vst [vmem:[%s1863 + $0xd8] sm:$0xff] %v1918
                  %v1920 = vld [vmem:[%s1862 + $0xe0] sm:$0xff]
                  %1921 = vst [vmem:[%s1863 + $0xe0] sm:$0xff] %v1920
                  %v1922 = vld [vmem:[%s1862 + $0xe8] sm:$0xff]
                  %1923 = vst [vmem:[%s1863 + $0xe8] sm:$0xff] %v1922
                  %v1924 = vld [vmem:[%s1862 + $0xf0] sm:$0xff]
                  %1925 = vst [vmem:[%s1863 + $0xf0] sm:$0xff] %v1924
                  %v1926 = vld [vmem:[%s1862 + $0xf8] sm:$0xff]
                  %1927 = vst [vmem:[%s1863 + $0xf8] sm:$0xff] %v1926
                  %v1928 = vld [vmem:[%s1862 + $0x100] sm:$0xff]
                  %1929 = vst [vmem:[%s1863 + $0x100] sm:$0xff] %v1928
                  %v1930 = vld [vmem:[%s1862 + $0x108] sm:$0xff]
                  %1931 = vst [vmem:[%s1863 + $0x108] sm:$0xff] %v1930
                  %v1932 = vld [vmem:[%s1862 + $0x110] sm:$0xff]
                  %1933 = vst [vmem:[%s1863 + $0x110] sm:$0xff] %v1932
                  %v1934 = vld [vmem:[%s1862 + $0x118] sm:$0xff]
                  %1935 = vst [vmem:[%s1863 + $0x118] sm:$0xff] %v1934
                  %v1936 = vld [vmem:[%s1862 + $0x120] sm:$0xff]
                  %1937 = vst [vmem:[%s1863 + $0x120] sm:$0xff] %v1936
                  %v1938 = vld [vmem:[%s1862 + $0x128] sm:$0xff]
                  %1939 = vst [vmem:[%s1863 + $0x128] sm:$0xff] %v1938
                  %v1940 = vld [vmem:[%s1862 + $0x130] sm:$0xff]
                  %1941 = vst [vmem:[%s1863 + $0x130] sm:$0xff] %v1940
                  %v1942 = vld [vmem:[%s1862 + $0x138] sm:$0xff]
                  %1943 = vst [vmem:[%s1863 + $0x138] sm:$0xff] %v1942
                  %v1944 = vld [vmem:[%s1862 + $0x140] sm:$0xff]
                  %1945 = vst [vmem:[%s1863 + $0x140] sm:$0xff] %v1944
                  %v1946 = vld [vmem:[%s1862 + $0x148] sm:$0xff]
                  %1947 = vst [vmem:[%s1863 + $0x148] sm:$0xff] %v1946
                  %v1948 = vld [vmem:[%s1862 + $0x150] sm:$0xff]
                  %1949 = vst [vmem:[%s1863 + $0x150] sm:$0xff] %v1948
                  %v1950 = vld [vmem:[%s1862 + $0x158] sm:$0xff]
                  %1951 = vst [vmem:[%s1863 + $0x158] sm:$0xff] %v1950
                  %v1952 = vld [vmem:[%s1862 + $0x160] sm:$0xff]
                  %1953 = vst [vmem:[%s1863 + $0x160] sm:$0xff] %v1952
                  %v1954 = vld [vmem:[%s1862 + $0x168] sm:$0xff]
                  %1955 = vst [vmem:[%s1863 + $0x168] sm:$0xff] %v1954
                  %v1956 = vld [vmem:[%s1862 + $0x170] sm:$0xff]
                  %1957 = vst [vmem:[%s1863 + $0x170] sm:$0xff] %v1956
                  %v1958 = vld [vmem:[%s1862 + $0x178] sm:$0xff]
                  %1959 = vst [vmem:[%s1863 + $0x178] sm:$0xff] %v1958
                  %v1960 = vld [vmem:[%s1862 + $0x180] sm:$0xff]
                  %1961 = vst [vmem:[%s1863 + $0x180] sm:$0xff] %v1960
                  %v1962 = vld [vmem:[%s1862 + $0x188] sm:$0xff]
                  %1963 = vst [vmem:[%s1863 + $0x188] sm:$0xff] %v1962
                  %v1964 = vld [vmem:[%s1862 + $0x190] sm:$0xff]
                  %1965 = vst [vmem:[%s1863 + $0x190] sm:$0xff] %v1964
                  %v1966 = vld [vmem:[%s1862 + $0x198] sm:$0xff]
                  %1967 = vst [vmem:[%s1863 + $0x198] sm:$0xff] %v1966
                  %v1968 = vld [vmem:[%s1862 + $0x1a0] sm:$0xff]
                  %1969 = vst [vmem:[%s1863 + $0x1a0] sm:$0xff] %v1968
                  %v1970 = vld [vmem:[%s1862 + $0x1a8] sm:$0xff]
                  %1971 = vst [vmem:[%s1863 + $0x1a8] sm:$0xff] %v1970
                  %v1972 = vld [vmem:[%s1862 + $0x1b0] sm:$0xff]
                  %1973 = vst [vmem:[%s1863 + $0x1b0] sm:$0xff] %v1972
                  %v1974 = vld [vmem:[%s1862 + $0x1b8] sm:$0xff]
                  %1975 = vst [vmem:[%s1863 + $0x1b8] sm:$0xff] %v1974
                  %v1976 = vld [vmem:[%s1862 + $0x1c0] sm:$0xff]
                  %1977 = vst [vmem:[%s1863 + $0x1c0] sm:$0xff] %v1976
                  %v1978 = vld [vmem:[%s1862 + $0x1c8] sm:$0xff]
                  %1979 = vst [vmem:[%s1863 + $0x1c8] sm:$0xff] %v1978
                  %v1980 = vld [vmem:[%s1862 + $0x1d0] sm:$0xff]
                  %1981 = vst [vmem:[%s1863 + $0x1d0] sm:$0xff] %v1980
                  %v1982 = vld [vmem:[%s1862 + $0x1d8] sm:$0xff]
                  %1983 = vst [vmem:[%s1863 + $0x1d8] sm:$0xff] %v1982
                  %v1984 = vld [vmem:[%s1862 + $0x1e0] sm:$0xff]
                  %1985 = vst [vmem:[%s1863 + $0x1e0] sm:$0xff] %v1984
                  %v1986 = vld [vmem:[%s1862 + $0x1e8] sm:$0xff]
                  %1987 = vst [vmem:[%s1863 + $0x1e8] sm:$0xff] %v1986
                  %v1988 = vld [vmem:[%s1862 + $0x1f0] sm:$0xff]
                  %1989 = vst [vmem:[%s1863 + $0x1f0] sm:$0xff] %v1988
                  %v1990 = vld [vmem:[%s1862 + $0x1f8] sm:$0xff]
                  %1991 = vst [vmem:[%s1863 + $0x1f8] sm:$0xff] %v1990
                  %s1992 = sadd.s32 1, %s1861
                  %p1993 = scmp.ge.s32.totalorder %s1992, %s1852
                  %s1994 = scalar_select %p1993, 0, %s1992
                  %s1995 = smul.u32 %s1994, 512
                  %s1996 = smul.u32 %s1994, 512
                  %s1997 = scalar_lea.vmem %s1811, %s1995 [#allocation3]
                  %s1998 = scalar_lea.vmem %s1822, %s1996
                $region130: #{two_heads_forward.5} parent=124 // loop_footer
                  %s1858 = sadd.s32 %s1856, 1
                $region131: #{two_heads_forward.5} parent=124 // loop_footer_branch
                  %1855 = sbr.rel target = $region127
                $region132: #{two_heads_forward.5} parent=124 // loop_exit
                  _
                %s1999 = sshrl.u32 %s1851, 6
                %s2000 = sand.u32 %s1851, 63
                %s2001 = smul.u32 %s1999, 64
                %s2002 = smul.u32 128, %s2001
                %s2003 = sshra.s32 %s2002, 4
                %s2004 = scalar_lea.vmem %s1811, %s2003 [#allocation3]
                %s2005 = smul.u32 128, %s2001
                %s2006 = sshra.s32 %s2005, 4
                %s2007 = scalar_lea.vmem %s1822, %s2006
                // While loop
                $region133: #{two_heads_forward.5} parent=124 // loop_pre_header
                  _
                $region134: #{two_heads_forward.5} parent=124 // loop_header
                  %s2011 = sphi 0, %s2013
                  %p2012 = scmp.ge.s32.totalorder %s2011, %s2000
                  %s2016 = sphi 0, %s2023
                  %s2017 = sphi %s2004, %s2026
                  %s2018 = sphi %s2007, %s2027
                $region135: #{two_heads_forward.5} parent=124 // loop_header_branch
                  %2015 = sbr.rel (%p2012) target = $region139
                $region136: #{two_heads_forward.5} parent=124 // loop_body
                  %v2019 = vld [vmem:[%s2017] sm:$0xff]
                  %2020 = vst [vmem:[%s2018] sm:$0xff] %v2019
                  %s2021 = sadd.s32 1, %s2016
                  %p2022 = scmp.ge.s32.totalorder %s2021, %s2000
                  %s2023 = scalar_select %p2022, 0, %s2021
                  %s2024 = smul.u32 %s2023, 8
                  %s2025 = smul.u32 %s2023, 8
                  %s2026 = scalar_lea.vmem %s2004, %s2024 [#allocation3]
                  %s2027 = scalar_lea.vmem %s2007, %s2025
                $region137: #{two_heads_forward.5} parent=124 // loop_footer
                  %s2013 = sadd.s32 %s2011, 1
                $region138: #{two_heads_forward.5} parent=124 // loop_footer_branch
                  %2010 = sbr.rel target = $region134
                $region139: #{two_heads_forward.5} parent=124 // loop_exit
                  _
              $region125: #{two_heads_forward.5} parent=109 // pred_fallthru
                _
              %p2028 = pneg %p1847
              // Predicated region
              $region140: #{two_heads_forward.5} parent=109 // pred_check
                _
              $region141: #{two_heads_forward.5} parent=109 // pred_check_branch
                %2030 = sbr.rel (%p1847) target = $region143
              $region142: #{two_heads_forward.5} parent=109 // pred_region
                %s2031 = sand.u32 %s1823, 7
                %s2032 = ssub.s32 %s1823, %s2031
                %s2033 = scalar_lea.vmem %s1811, %s2032 [#allocation3]
                %s2034 = ssub.s32 %s1823, %s2031
                %s2035 = scalar_lea.vmem %s1822, %s2034
                %s2036 = sshrl.u32 %s1823, 3
                %s2037 = sshrl.u32 %s2036, 6
                // While loop
                $region144: #{two_heads_forward.5} parent=142 // loop_pre_header
                  _
                $region145: #{two_heads_forward.5} parent=142 // loop_header
                  %s2041 = sphi 0, %s2043
                  %p2042 = scmp.ge.s32.totalorder %s2041, %s2037
                  %s2046 = sphi 0, %s2179
                  %s2047 = sphi %s1811, %s2182
                  %s2048 = sphi %s1822, %s2183
                $region146: #{two_heads_forward.5} parent=142 // loop_header_branch
                  %2045 = sbr.rel (%p2042) target = $region150
                $region147: #{two_heads_forward.5} parent=142 // loop_body
                  %v2049 = vld [vmem:[%s2047] sm:$0xff]
                  %2050 = vst [vmem:[%s2048] sm:$0xff] %v2049
                  %v2051 = vld [vmem:[%s2047 + $0x8] sm:$0xff]
                  %2052 = vst [vmem:[%s2048 + $0x8] sm:$0xff] %v2051
                  %v2053 = vld [vmem:[%s2047 + $0x10] sm:$0xff]
                  %2054 = vst [vmem:[%s2048 + $0x10] sm:$0xff] %v2053
                  %v2055 = vld [vmem:[%s2047 + $0x18] sm:$0xff]
                  %2056 = vst [vmem:[%s2048 + $0x18] sm:$0xff] %v2055
                  %v2057 = vld [vmem:[%s2047 + $0x20] sm:$0xff]
                  %2058 = vst [vmem:[%s2048 + $0x20] sm:$0xff] %v2057
                  %v2059 = vld [vmem:[%s2047 + $0x28] sm:$0xff]
                  %2060 = vst [vmem:[%s2048 + $0x28] sm:$0xff] %v2059
                  %v2061 = vld [vmem:[%s2047 + $0x30] sm:$0xff]
                  %2062 = vst [vmem:[%s2048 + $0x30] sm:$0xff] %v2061
                  %v2063 = vld [vmem:[%s2047 + $0x38] sm:$0xff]
                  %2064 = vst [vmem:[%s2048 + $0x38] sm:$0xff] %v2063
                  %v2065 = vld [vmem:[%s2047 + $0x40] sm:$0xff]
                  %2066 = vst [vmem:[%s2048 + $0x40] sm:$0xff] %v2065
                  %v2067 = vld [vmem:[%s2047 + $0x48] sm:$0xff]
                  %2068 = vst [vmem:[%s2048 + $0x48] sm:$0xff] %v2067
                  %v2069 = vld [vmem:[%s2047 + $0x50] sm:$0xff]
                  %2070 = vst [vmem:[%s2048 + $0x50] sm:$0xff] %v2069
                  %v2071 = vld [vmem:[%s2047 + $0x58] sm:$0xff]
                  %2072 = vst [vmem:[%s2048 + $0x58] sm:$0xff] %v2071
                  %v2073 = vld [vmem:[%s2047 + $0x60] sm:$0xff]
                  %2074 = vst [vmem:[%s2048 + $0x60] sm:$0xff] %v2073
                  %v2075 = vld [vmem:[%s2047 + $0x68] sm:$0xff]
                  %2076 = vst [vmem:[%s2048 + $0x68] sm:$0xff] %v2075
                  %v2077 = vld [vmem:[%s2047 + $0x70] sm:$0xff]
                  %2078 = vst [vmem:[%s2048 + $0x70] sm:$0xff] %v2077
                  %v2079 = vld [vmem:[%s2047 + $0x78] sm:$0xff]
                  %2080 = vst [vmem:[%s2048 + $0x78] sm:$0xff] %v2079
                  %v2081 = vld [vmem:[%s2047 + $0x80] sm:$0xff]
                  %2082 = vst [vmem:[%s2048 + $0x80] sm:$0xff] %v2081
                  %v2083 = vld [vmem:[%s2047 + $0x88] sm:$0xff]
                  %2084 = vst [vmem:[%s2048 + $0x88] sm:$0xff] %v2083
                  %v2085 = vld [vmem:[%s2047 + $0x90] sm:$0xff]
                  %2086 = vst [vmem:[%s2048 + $0x90] sm:$0xff] %v2085
                  %v2087 = vld [vmem:[%s2047 + $0x98] sm:$0xff]
                  %2088 = vst [vmem:[%s2048 + $0x98] sm:$0xff] %v2087
                  %v2089 = vld [vmem:[%s2047 + $0xa0] sm:$0xff]
                  %2090 = vst [vmem:[%s2048 + $0xa0] sm:$0xff] %v2089
                  %v2091 = vld [vmem:[%s2047 + $0xa8] sm:$0xff]
                  %2092 = vst [vmem:[%s2048 + $0xa8] sm:$0xff] %v2091
                  %v2093 = vld [vmem:[%s2047 + $0xb0] sm:$0xff]
                  %2094 = vst [vmem:[%s2048 + $0xb0] sm:$0xff] %v2093
                  %v2095 = vld [vmem:[%s2047 + $0xb8] sm:$0xff]
                  %2096 = vst [vmem:[%s2048 + $0xb8] sm:$0xff] %v2095
                  %v2097 = vld [vmem:[%s2047 + $0xc0] sm:$0xff]
                  %2098 = vst [vmem:[%s2048 + $0xc0] sm:$0xff] %v2097
                  %v2099 = vld [vmem:[%s2047 + $0xc8] sm:$0xff]
                  %2100 = vst [vmem:[%s2048 + $0xc8] sm:$0xff] %v2099
                  %v2101 = vld [vmem:[%s2047 + $0xd0] sm:$0xff]
                  %2102 = vst [vmem:[%s2048 + $0xd0] sm:$0xff] %v2101
                  %v2103 = vld [vmem:[%s2047 + $0xd8] sm:$0xff]
                  %2104 = vst [vmem:[%s2048 + $0xd8] sm:$0xff] %v2103
                  %v2105 = vld [vmem:[%s2047 + $0xe0] sm:$0xff]
                  %2106 = vst [vmem:[%s2048 + $0xe0] sm:$0xff] %v2105
                  %v2107 = vld [vmem:[%s2047 + $0xe8] sm:$0xff]
                  %2108 = vst [vmem:[%s2048 + $0xe8] sm:$0xff] %v2107
                  %v2109 = vld [vmem:[%s2047 + $0xf0] sm:$0xff]
                  %2110 = vst [vmem:[%s2048 + $0xf0] sm:$0xff] %v2109
                  %v2111 = vld [vmem:[%s2047 + $0xf8] sm:$0xff]
                  %2112 = vst [vmem:[%s2048 + $0xf8] sm:$0xff] %v2111
                  %v2113 = vld [vmem:[%s2047 + $0x100] sm:$0xff]
                  %2114 = vst [vmem:[%s2048 + $0x100] sm:$0xff] %v2113
                  %v2115 = vld [vmem:[%s2047 + $0x108] sm:$0xff]
                  %2116 = vst [vmem:[%s2048 + $0x108] sm:$0xff] %v2115
                  %v2117 = vld [vmem:[%s2047 + $0x110] sm:$0xff]
                  %2118 = vst [vmem:[%s2048 + $0x110] sm:$0xff] %v2117
                  %v2119 = vld [vmem:[%s2047 + $0x118] sm:$0xff]
                  %2120 = vst [vmem:[%s2048 + $0x118] sm:$0xff] %v2119
                  %v2121 = vld [vmem:[%s2047 + $0x120] sm:$0xff]
                  %2122 = vst [vmem:[%s2048 + $0x120] sm:$0xff] %v2121
                  %v2123 = vld [vmem:[%s2047 + $0x128] sm:$0xff]
                  %2124 = vst [vmem:[%s2048 + $0x128] sm:$0xff] %v2123
                  %v2125 = vld [vmem:[%s2047 + $0x130] sm:$0xff]
                  %2126 = vst [vmem:[%s2048 + $0x130] sm:$0xff] %v2125
                  %v2127 = vld [vmem:[%s2047 + $0x138] sm:$0xff]
                  %2128 = vst [vmem:[%s2048 + $0x138] sm:$0xff] %v2127
                  %v2129 = vld [vmem:[%s2047 + $0x140] sm:$0xff]
                  %2130 = vst [vmem:[%s2048 + $0x140] sm:$0xff] %v2129
                  %v2131 = vld [vmem:[%s2047 + $0x148] sm:$0xff]
                  %2132 = vst [vmem:[%s2048 + $0x148] sm:$0xff] %v2131
                  %v2133 = vld [vmem:[%s2047 + $0x150] sm:$0xff]
                  %2134 = vst [vmem:[%s2048 + $0x150] sm:$0xff] %v2133
                  %v2135 = vld [vmem:[%s2047 + $0x158] sm:$0xff]
                  %2136 = vst [vmem:[%s2048 + $0x158] sm:$0xff] %v2135
                  %v2137 = vld [vmem:[%s2047 + $0x160] sm:$0xff]
                  %2138 = vst [vmem:[%s2048 + $0x160] sm:$0xff] %v2137
                  %v2139 = vld [vmem:[%s2047 + $0x168] sm:$0xff]
                  %2140 = vst [vmem:[%s2048 + $0x168] sm:$0xff] %v2139
                  %v2141 = vld [vmem:[%s2047 + $0x170] sm:$0xff]
                  %2142 = vst [vmem:[%s2048 + $0x170] sm:$0xff] %v2141
                  %v2143 = vld [vmem:[%s2047 + $0x178] sm:$0xff]
                  %2144 = vst [vmem:[%s2048 + $0x178] sm:$0xff] %v2143
                  %v2145 = vld [vmem:[%s2047 + $0x180] sm:$0xff]
                  %2146 = vst [vmem:[%s2048 + $0x180] sm:$0xff] %v2145
                  %v2147 = vld [vmem:[%s2047 + $0x188] sm:$0xff]
                  %2148 = vst [vmem:[%s2048 + $0x188] sm:$0xff] %v2147
                  %v2149 = vld [vmem:[%s2047 + $0x190] sm:$0xff]
                  %2150 = vst [vmem:[%s2048 + $0x190] sm:$0xff] %v2149
                  %v2151 = vld [vmem:[%s2047 + $0x198] sm:$0xff]
                  %2152 = vst [vmem:[%s2048 + $0x198] sm:$0xff] %v2151
                  %v2153 = vld [vmem:[%s2047 + $0x1a0] sm:$0xff]
                  %2154 = vst [vmem:[%s2048 + $0x1a0] sm:$0xff] %v2153
                  %v2155 = vld [vmem:[%s2047 + $0x1a8] sm:$0xff]
                  %2156 = vst [vmem:[%s2048 + $0x1a8] sm:$0xff] %v2155
                  %v2157 = vld [vmem:[%s2047 + $0x1b0] sm:$0xff]
                  %2158 = vst [vmem:[%s2048 + $0x1b0] sm:$0xff] %v2157
                  %v2159 = vld [vmem:[%s2047 + $0x1b8] sm:$0xff]
                  %2160 = vst [vmem:[%s2048 + $0x1b8] sm:$0xff] %v2159
                  %v2161 = vld [vmem:[%s2047 + $0x1c0] sm:$0xff]
                  %2162 = vst [vmem:[%s2048 + $0x1c0] sm:$0xff] %v2161
                  %v2163 = vld [vmem:[%s2047 + $0x1c8] sm:$0xff]
                  %2164 = vst [vmem:[%s2048 + $0x1c8] sm:$0xff] %v2163
                  %v2165 = vld [vmem:[%s2047 + $0x1d0] sm:$0xff]
                  %2166 = vst [vmem:[%s2048 + $0x1d0] sm:$0xff] %v2165
                  %v2167 = vld [vmem:[%s2047 + $0x1d8] sm:$0xff]
                  %2168 = vst [vmem:[%s2048 + $0x1d8] sm:$0xff] %v2167
                  %v2169 = vld [vmem:[%s2047 + $0x1e0] sm:$0xff]
                  %2170 = vst [vmem:[%s2048 + $0x1e0] sm:$0xff] %v2169
                  %v2171 = vld [vmem:[%s2047 + $0x1e8] sm:$0xff]
                  %2172 = vst [vmem:[%s2048 + $0x1e8] sm:$0xff] %v2171
                  %v2173 = vld [vmem:[%s2047 + $0x1f0] sm:$0xff]
                  %2174 = vst [vmem:[%s2048 + $0x1f0] sm:$0xff] %v2173
                  %v2175 = vld [vmem:[%s2047 + $0x1f8] sm:$0xff]
                  %2176 = vst [vmem:[%s2048 + $0x1f8] sm:$0xff] %v2175
                  %s2177 = sadd.s32 1, %s2046
                  %p2178 = scmp.ge.s32.totalorder %s2177, %s2037
                  %s2179 = scalar_select %p2178, 0, %s2177
                  %s2180 = smul.u32 %s2179, 512
                  %s2181 = smul.u32 %s2179, 512
                  %s2182 = scalar_lea.vmem %s1811, %s2180 [#allocation3]
                  %s2183 = scalar_lea.vmem %s1822, %s2181
                $region148: #{two_heads_forward.5} parent=142 // loop_footer
                  %s2043 = sadd.s32 %s2041, 1
                $region149: #{two_heads_forward.5} parent=142 // loop_footer_branch
                  %2040 = sbr.rel target = $region145
                $region150: #{two_heads_forward.5} parent=142 // loop_exit
                  _
                %s2184 = sshrl.u32 %s2036, 6
                %s2185 = sand.u32 %s2036, 63
                %s2186 = smul.u32 %s2184, 64
                %s2187 = smul.u32 128, %s2186
                %s2188 = sshra.s32 %s2187, 4
                %s2189 = scalar_lea.vmem %s1811, %s2188 [#allocation3]
                %s2190 = smul.u32 128, %s2186
                %s2191 = sshra.s32 %s2190, 4
                %s2192 = scalar_lea.vmem %s1822, %s2191
                // While loop
                $region151: #{two_heads_forward.5} parent=142 // loop_pre_header
                  _
                $region152: #{two_heads_forward.5} parent=142 // loop_header
                  %s2196 = sphi 0, %s2198
                  %p2197 = scmp.ge.s32.totalorder %s2196, %s2185
                  %s2201 = sphi 0, %s2208
                  %s2202 = sphi %s2189, %s2211
                  %s2203 = sphi %s2192, %s2212
                $region153: #{two_heads_forward.5} parent=142 // loop_header_branch
                  %2200 = sbr.rel (%p2197) target = $region157
                $region154: #{two_heads_forward.5} parent=142 // loop_body
                  %v2204 = vld [vmem:[%s2202] sm:$0xff]
                  %2205 = vst [vmem:[%s2203] sm:$0xff] %v2204
                  %s2206 = sadd.s32 1, %s2201
                  %p2207 = scmp.ge.s32.totalorder %s2206, %s2185
                  %s2208 = scalar_select %p2207, 0, %s2206
                  %s2209 = smul.u32 %s2208, 8
                  %s2210 = smul.u32 %s2208, 8
                  %s2211 = scalar_lea.vmem %s2189, %s2209 [#allocation3]
                  %s2212 = scalar_lea.vmem %s2192, %s2210
                $region155: #{two_heads_forward.5} parent=142 // loop_footer
                  %s2198 = sadd.s32 %s2196, 1
                $region156: #{two_heads_forward.5} parent=142 // loop_footer_branch
                  %2195 = sbr.rel target = $region152
                $region157: #{two_heads_forward.5} parent=142 // loop_exit
                  _
                %s2213 = sshll.u32 1, %s2031
                %s2214 = ssub.s32 %s2213, 1
                loop: start=0, step=1, limit=1
                $region158: #{two_heads_forward.5} parent=142 // loop_pre_header
                  _
                $region159: #{two_heads_forward.5} parent=142 // loop_header
                  %s2216 = sphi 0, %s2220
                  %p2217 = scmp.ge.s32.totalorder %s2216, 1
                  %s2221 = sphi %s2033, %s2033
                  %s2222 = sphi %s2035, %s2035
                $region160: #{two_heads_forward.5} parent=142 // loop_header_branch
                  %2219 = sbr.rel (%p2217) target = $region164
                $region161: #{two_heads_forward.5} parent=142 // loop_body
                  %v2223 = vld [vmem:[%s2221] sm:%s2214]
                  %2224 = vst [vmem:[%s2222] sm:%s2214] %v2223
                $region162: #{two_heads_forward.5} parent=142 // loop_footer
                  %s2220 = sadd.s32 1, %s2216
                $region163: #{two_heads_forward.5} parent=142 // loop_footer_branch
                  %2215 = sbr.rel target = $region159
                $region164: #{two_heads_forward.5} parent=142 // loop_exit
                  _
              $region143: #{two_heads_forward.5} parent=109 // pred_fallthru
                _
            $region110: #{two_heads_forward.5} parent=105 // pred_fallthru
              _
            // Predicated region
            $region111: #{two_heads_forward.5} parent=105 // pred_check
              %p1831 = pneg %p1827
            $region112: #{two_heads_forward.5} parent=105 // pred_check_branch
              %1833 = sbr.rel (%p1831) target = $region114
            $region113: #{two_heads_forward.5} parent=105 // pred_region
              %s1834 = sshll.u32 1, %s1823
              %s1835 = ssub.s32 %s1834, 1
              loop: start=0, step=1, limit=1
              $region115: #{two_heads_forward.5} parent=113 // loop_pre_header
                _
              $region116: #{two_heads_forward.5} parent=113 // loop_header
                %s1837 = sphi 0, %s1841
                %p1838 = scmp.ge.s32.totalorder %s1837, 1
                %s1842 = sphi %s1811, %s1811
                %s1843 = sphi %s1822, %s1822
              $region117: #{two_heads_forward.5} parent=113 // loop_header_branch
                %1840 = sbr.rel (%p1838) target = $region121
              $region118: #{two_heads_forward.5} parent=113 // loop_body
                %v1844 = vld [vmem:[%s1842] sm:%s1835]
                %1845 = vst [vmem:[%s1843] sm:%s1835] %v1844
              $region119: #{two_heads_forward.5} parent=113 // loop_footer
                %s1841 = sadd.s32 1, %s1837
              $region120: #{two_heads_forward.5} parent=113 // loop_footer_branch
                %1836 = sbr.rel target = $region116
              $region121: #{two_heads_forward.5} parent=113 // loop_exit
                _
            $region114: #{two_heads_forward.5} parent=105 // pred_fallthru
              _
          $region106: #{two_heads_forward.5} parent=101 // pred_fallthru
            _
          %2225 = vnop
        $region102: #{two_heads_forward.5} parent=93 // pred_fallthru
          _
      $region94: #{two_heads_forward.5} parent=5 // pred_fallthru
        _
      %p2226 = scmp.le.s32.totalorder 2, %s9
      // Predicated region
      $region165: #{two_heads_forward.5} parent=5 // pred_check
        %p2227 = pneg %p2226
      $region166: #{two_heads_forward.5} parent=5 // pred_check_branch
        %2229 = sbr.rel (%p2227) target = $region168
      $region167: #{two_heads_forward.5} parent=5 // pred_region
        %s2230 = ssub.s32 %s9, 2
        // Predicated region
        $region169: #{two_heads_forward.5} parent=167 // pred_check
          %p2231 = pneg %p106
        $region170: #{two_heads_forward.5} parent=167 // pred_check_branch
          %2233 = sbr.rel (%p2231) target = $region172
        $region171: #{two_heads_forward.5} parent=167 // pred_region
          %s2234 = sand.u32 %s91, 1
          %s2235 = sand.u32 %s91, 1
          %s2236 = smul.addr %s2235, 120
          %s2237 = scalar_lea.vmem [#allocation3], %s2236
        $region172: #{two_heads_forward.5} parent=167 // pred_fallthru
          _
      $region168: #{two_heads_forward.5} parent=5 // pred_fallthru
        _
    $region6: #{two_heads_forward.5} parent=1 // loop_footer
      %s13 = sadd.s32 1, %s9
    $region7: #{two_heads_forward.5} parent=1 // loop_footer_branch
      %8 = sbr.rel target = $region3
    $region8: #{two_heads_forward.5} parent=1 // loop_exit
      _

// kernel: two_heads_forward.6
$region0: #{two_heads_forward.6}
  #allocation0 [shape = 'u32[]', space=smem, size = 0x4, offset = 0x4, fixed_abs, tag = 'smem constant byte address 0x4 - core index']
  #allocation1 [shape = 'u32[144,128]{1,0:T(1,128)}', space=vmem, size = 0x12000, scoped, tag = 'internal scratch']
  %s0 = inlined_call_operand.vmem [shape: f32[8,200], index: 0, kind: input, shape index: {}]
  %s1 = inlined_call_operand.vmem [shape: f32[8,1], index: 1, kind: input, shape index: {}]
  %s2 = inlined_call_operand.vmem [shape: f32[200,782], index: 2, kind: input, shape index: {}]
  %s3 = inlined_call_operand.vmem [shape: f32[8,782], index: 3, kind: output, shape index: {}]
  %s4 = sld [smem:[#allocation0]]
  $region22: #{two_heads_forward.6} parent=0
    _
  %s6 = ssub.s32 1, %s4
  %s7 = scalar_select 0, %s6, %s4
  // Predicated region
  $region2: #{two_heads_forward.6} parent=0 // pred_check
    _
  $region3: #{two_heads_forward.6} parent=0 // pred_check_branch
    %9 = sbr.rel (0) target = $region5
  $region4: #{two_heads_forward.6} parent=0 // pred_region
    _
  $region5: #{two_heads_forward.6} parent=0 // pred_fallthru
    _
  // Predicated region
  $region6: #{two_heads_forward.6} parent=0 // pred_check
    _
  $region7: #{two_heads_forward.6} parent=0 // pred_check_branch
    %11 = sbr.rel (0) target = $region9
  $region8: #{two_heads_forward.6} parent=0 // pred_region
    _
  $region9: #{two_heads_forward.6} parent=0 // pred_fallthru
    _
  // Predicated region
  $region10: #{two_heads_forward.6} parent=0 // pred_check
    _
  $region11: #{two_heads_forward.6} parent=0 // pred_check_branch
    %13 = sbr.rel (0) target = $region13
  $region12: #{two_heads_forward.6} parent=0 // pred_region
    _
  $region13: #{two_heads_forward.6} parent=0 // pred_fallthru
    _
  %v14 = vld [vmem:[%s0] sm:$0xff]
  %v15 = vld [vmem:[%s0 + $0x8] sm:$0xff]
  %v16 = vld [vmem:[%s2] sm:$0xff]
  %v17 = vld [vmem:[%s2 + $0x8] sm:$0xff]
  %v18 = vld [vmem:[%s2 + $0x10] sm:$0xff]
  %v19 = vld [vmem:[%s2 + $0x18] sm:$0xff]
  %v20 = vld [vmem:[%s2 + $0x20] sm:$0xff]
  %v21 = vld [vmem:[%s2 + $0x28] sm:$0xff]
  %v22 = vld [vmem:[%s2 + $0x30] sm:$0xff]
  %v23 = vld [vmem:[%s2 + $0x38] sm:$0xff]
  %v24 = vld [vmem:[%s2 + $0x40] sm:$0xff]
  %v25 = vld [vmem:[%s2 + $0x48] sm:$0xff]
  %v26 = vld [vmem:[%s2 + $0x50] sm:$0xff]
  %v27 = vld [vmem:[%s2 + $0x58] sm:$0xff]
  %v28 = vld [vmem:[%s2 + $0x60] sm:$0xff]
  %v29 = vld [vmem:[%s2 + $0x68] sm:$0xff]
  %v30 = vld [vmem:[%s2 + $0x70] sm:$0xff]
  %v31 = vld [vmem:[%s2 + $0x78] sm:$0xff]
  %v32 = vld [vmem:[%s2 + $0x80] sm:$0xff]
  %v33 = vld [vmem:[%s2 + $0x88] sm:$0xff]
  %v34 = vld [vmem:[%s2 + $0x90] sm:$0xff]
  %v35 = vld [vmem:[%s2 + $0x98] sm:$0xff]
  %v36 = vld [vmem:[%s2 + $0xa0] sm:$0xff]
  %v37 = vld [vmem:[%s2 + $0xa8] sm:$0xff]
  %v38 = vld [vmem:[%s2 + $0xb0] sm:$0xff]
  %v39 = vld [vmem:[%s2 + $0xb8] sm:$0xff]
  %v40 = vld [vmem:[%s2 + $0xc0] sm:$0xff]
  %v41 = vld [vmem:[%s2 + $0xc8] sm:$0xff]
  %v42 = vld [vmem:[%s2 + $0xd0] sm:$0xff]
  %v43 = vld [vmem:[%s2 + $0xd8] sm:$0xff]
  %v44 = vld [vmem:[%s2 + $0xe0] sm:$0xff]
  %v45 = vld [vmem:[%s2 + $0xe8] sm:$0xff]
  %v46 = vld [vmem:[%s2 + $0xf0] sm:$0xff]
  %v47 = vld [vmem:[%s2 + $0xf8] sm:$0xff]
  %v48 = vld [vmem:[%s2 + $0x100] sm:$0xff]
  %v49 = vld [vmem:[%s2 + $0x108] sm:$0xff]
  %v50 = vld [vmem:[%s2 + $0x110] sm:$0xff]
  %v51 = vld [vmem:[%s2 + $0x118] sm:$0xff]
  %v52 = vld [vmem:[%s2 + $0x120] sm:$0xff]
  %v53 = vld [vmem:[%s2 + $0x128] sm:$0xff]
  %v54 = vld [vmem:[%s2 + $0x130] sm:$0xff]
  %v55 = vld [vmem:[%s2 + $0x138] sm:$0xff]
  %v56 = vld [vmem:[%s2 + $0x140] sm:$0xff]
  %v57 = vld [vmem:[%s2 + $0x148] sm:$0xff]
  %v58 = vld [vmem:[%s2 + $0x150] sm:$0xff]
  %v59 = vld [vmem:[%s2 + $0x158] sm:$0xff]
  %v60 = vld [vmem:[%s2 + $0x160] sm:$0xff]
  %v61 = vld [vmem:[%s2 + $0x168] sm:$0xff]
  %v62 = vld [vmem:[%s2 + $0x170] sm:$0xff]
  %v63 = vld [vmem:[%s2 + $0x178] sm:$0xff]
  %v64 = vld [vmem:[%s2 + $0x180] sm:$0xff]
  %v65 = vld [vmem:[%s2 + $0x188] sm:$0xff]
  %v66 = vld [vmem:[%s2 + $0x190] sm:$0xff]
  %v67 = vld [vmem:[%s2 + $0x198] sm:$0xff]
  %v68 = vld [vmem:[%s2 + $0x1a0] sm:$0xff]
  %v69 = vld [vmem:[%s2 + $0x1a8] sm:$0xff]
  %v70 = vld [vmem:[%s2 + $0x1b0] sm:$0xff]
  %v71 = vld [vmem:[%s2 + $0x1b8] sm:$0xff]
  %v72 = vld [vmem:[%s2 + $0x1c0] sm:$0xff]
  %v73 = vld [vmem:[%s2 + $0x1c8] sm:$0xff]
  %v74 = vld [vmem:[%s2 + $0x1d0] sm:$0xff]
  %v75 = vld [vmem:[%s2 + $0x1d8] sm:$0xff]
  %v76 = vld [vmem:[%s2 + $0x1e0] sm:$0xff]
  %v77 = vld [vmem:[%s2 + $0x1e8] sm:$0xff]
  %v78 = vld [vmem:[%s2 + $0x1f0] sm:$0xff]
  %v79 = vld [vmem:[%s2 + $0x1f8] sm:$0xff]
  %v80 = vld [vmem:[%s2 + $0x200] sm:$0xff]
  %v81 = vld [vmem:[%s2 + $0x208] sm:$0xff]
  %v82 = vld [vmem:[%s2 + $0x210] sm:$0xff]
  %v83 = vld [vmem:[%s2 + $0x218] sm:$0xff]
  %v84 = vld [vmem:[%s2 + $0x220] sm:$0xff]
  %v85 = vld [vmem:[%s2 + $0x228] sm:$0xff]
  %v86 = vld [vmem:[%s2 + $0x230] sm:$0xff]
  %v87 = vld [vmem:[%s2 + $0x238] sm:$0xff]
  %v88 = vld [vmem:[%s2 + $0x240] sm:$0xff]
  %v89 = vld [vmem:[%s2 + $0x248] sm:$0xff]
  %v90 = vld [vmem:[%s2 + $0x250] sm:$0xff]
  %v91 = vld [vmem:[%s2 + $0x258] sm:$0xff]
  %v92 = vld [vmem:[%s2 + $0x260] sm:$0xff]
  %v93 = vld [vmem:[%s2 + $0x268] sm:$0xff]
  %v94 = vld [vmem:[%s2 + $0x270] sm:$0xff]
  %v95 = vld [vmem:[%s2 + $0x278] sm:$0xff]
  %v96 = vld [vmem:[%s2 + $0x280] sm:$0xff]
  %v97 = vld [vmem:[%s2 + $0x288] sm:$0xff]
  %v98 = vld [vmem:[%s2 + $0x290] sm:$0xff]
  %v99 = vld [vmem:[%s2 + $0x298] sm:$0xff]
  %v100 = vld [vmem:[%s2 + $0x2a0] sm:$0xff]
  %v101 = vld [vmem:[%s2 + $0x2a8] sm:$0xff]
  %v102 = vld [vmem:[%s2 + $0x2b0] sm:$0xff]
  %v103 = vld [vmem:[%s2 + $0x2b8] sm:$0xff]
  %v104 = vld [vmem:[%s2 + $0x2c0] sm:$0xff]
  %v105 = vld [vmem:[%s2 + $0x2c8] sm:$0xff]
  %v106 = vld [vmem:[%s2 + $0x2d0] sm:$0xff]
  %v107 = vld [vmem:[%s2 + $0x2d8] sm:$0xff]
  %v108 = vld [vmem:[%s2 + $0x2e0] sm:$0xff]
  %v109 = vld [vmem:[%s2 + $0x2e8] sm:$0xff]
  %v110 = vld [vmem:[%s2 + $0x2f0] sm:$0xff]
  %v111 = vld [vmem:[%s2 + $0x2f8] sm:$0xff]
  %v112 = vld [vmem:[%s2 + $0x300] sm:$0xff]
  %v113 = vld [vmem:[%s2 + $0x308] sm:$0xff]
  %v114 = vld [vmem:[%s2 + $0x310] sm:$0xff]
  %v115 = vld [vmem:[%s2 + $0x318] sm:$0xff]
  %v116 = vld [vmem:[%s2 + $0x320] sm:$0xff]
  %v117 = vld [vmem:[%s2 + $0x328] sm:$0xff]
  %v118 = vld [vmem:[%s2 + $0x330] sm:$0xff]
  %v119 = vld [vmem:[%s2 + $0x338] sm:$0xff]
  %v120 = vld [vmem:[%s2 + $0x340] sm:$0xff]
  %v121 = vld [vmem:[%s2 + $0x348] sm:$0xff]
  %v122 = vld [vmem:[%s2 + $0x350] sm:$0xff]
  %v123 = vld [vmem:[%s2 + $0x358] sm:$0xff]
  %v124 = vld [vmem:[%s2 + $0x360] sm:$0xff]
  %v125 = vld [vmem:[%s2 + $0x368] sm:$0xff]
  %v126 = vld [vmem:[%s2 + $0x370] sm:$0xff]
  %v127 = vld [vmem:[%s2 + $0x378] sm:$0xff]
  %v128 = vld [vmem:[%s2 + $0x380] sm:$0xff]
  %v129 = vld [vmem:[%s2 + $0x388] sm:$0xff]
  %v130 = vld [vmem:[%s2 + $0x390] sm:$0xff]
  %v131 = vld [vmem:[%s2 + $0x398] sm:$0xff]
  %v132 = vld [vmem:[%s2 + $0x3a0] sm:$0xff]
  %v133 = vld [vmem:[%s2 + $0x3a8] sm:$0xff]
  %v134 = vld [vmem:[%s2 + $0x3b0] sm:$0xff]
  %v135 = vld [vmem:[%s2 + $0x3b8] sm:$0xff]
  %v136 = vld [vmem:[%s2 + $0x3c0] sm:$0xff]
  %v137 = vld [vmem:[%s2 + $0x3c8] sm:$0xff]
  %v138 = vld [vmem:[%s2 + $0x3d0] sm:$0xff]
  %v139 = vld [vmem:[%s2 + $0x3d8] sm:$0xff]
  %v140 = vld [vmem:[%s2 + $0x3e0] sm:$0xff]
  %v141 = vld [vmem:[%s2 + $0x3e8] sm:$0xff]
  %v142 = vld [vmem:[%s2 + $0x3f0] sm:$0xff]
  %v143 = vld [vmem:[%s2 + $0x3f8] sm:$0xff]
  %v144 = vld [vmem:[%s2 + $0x400] sm:$0xff]
  %v145 = vld [vmem:[%s2 + $0x408] sm:$0xff]
  %v146 = vld [vmem:[%s2 + $0x410] sm:$0xff]
  %v147 = vld [vmem:[%s2 + $0x418] sm:$0xff]
  %v148 = vld [vmem:[%s2 + $0x420] sm:$0xff]
  %v149 = vld [vmem:[%s2 + $0x428] sm:$0xff]
  %v150 = vld [vmem:[%s2 + $0x430] sm:$0xff]
  %v151 = vld [vmem:[%s2 + $0x438] sm:$0xff]
  %v152 = vld [vmem:[%s2 + $0x440] sm:$0xff]
  %v153 = vld [vmem:[%s2 + $0x448] sm:$0xff]
  %v154 = vld [vmem:[%s2 + $0x450] sm:$0xff]
  %v155 = vld [vmem:[%s2 + $0x458] sm:$0xff]
  %v156 = vld [vmem:[%s2 + $0x460] sm:$0xff]
  %v157 = vld [vmem:[%s2 + $0x468] sm:$0xff]
  %v158 = vld [vmem:[%s2 + $0x470] sm:$0xff]
  %v159 = vld [vmem:[%s2 + $0x478] sm:$0xff]
  %v160 = vld [vmem:[%s2 + $0x480] sm:$0xff]
  %v161 = vld [vmem:[%s2 + $0x488] sm:$0xff]
  %v162 = vld [vmem:[%s2 + $0x490] sm:$0xff]
  %v163 = vld [vmem:[%s2 + $0x498] sm:$0xff]
  %v164 = vld [vmem:[%s2 + $0x4a0] sm:$0xff]
  %v165 = vld [vmem:[%s2 + $0x4a8] sm:$0xff]
  %v166 = vld [vmem:[%s2 + $0x4b0] sm:$0xff]
  %v167 = vld [vmem:[%s2 + $0x4b8] sm:$0xff]
  %v168 = vld [vmem:[%s2 + $0x4c0] sm:$0xff]
  %v169 = vld [vmem:[%s2 + $0x4c8] sm:$0xff]
  %v170 = vld [vmem:[%s2 + $0x4d0] sm:$0xff]
  %v171 = vld [vmem:[%s2 + $0x4d8] sm:$0xff]
  %v172 = vld [vmem:[%s2 + $0x4e0] sm:$0xff]
  %v173 = vld [vmem:[%s2 + $0x4e8] sm:$0xff]
  %v174 = vld [vmem:[%s2 + $0x4f0] sm:$0xff]
  %v175 = vld [vmem:[%s2 + $0x4f8] sm:$0xff]
  %v176 = vld [vmem:[%s2 + $0x500] sm:$0xff]
  %v177 = vld [vmem:[%s2 + $0x508] sm:$0xff]
  %v178 = vld [vmem:[%s2 + $0x510] sm:$0xff]
  %v179 = vld [vmem:[%s2 + $0x518] sm:$0xff]
  %v180 = vld [vmem:[%s2 + $0x520] sm:$0xff]
  %v181 = vld [vmem:[%s2 + $0x528] sm:$0xff]
  %v182 = vld [vmem:[%s2 + $0x530] sm:$0xff]
  %v183 = vld [vmem:[%s2 + $0x538] sm:$0xff]
  %v184 = vld [vmem:[%s2 + $0x540] sm:$0xff]
  %v185 = vld [vmem:[%s2 + $0x548] sm:$0xff]
  %v186 = vld [vmem:[%s2 + $0x550] sm:$0xff]
  %v187 = vld [vmem:[%s2 + $0x558] sm:$0xff]
  %v188 = vld [vmem:[%s2 + $0x560] sm:$0xff]
  %v189 = vld [vmem:[%s2 + $0x568] sm:$0xff]
  %v190 = vld [vmem:[%s2 + $0x570] sm:$0xff]
  %v191 = vld [vmem:[%s1] sm:$0xff]
  %193 = vset.pattern.permute.xlu0 0
  %194 = vperm.xlu0 %193, %v191
  %v195 = vpop.permute.xlu0 %194
  %vm197 = vcmask 588800
  %v199 = vsel %vm197, %v15, 0
  %201 = vmatprep.subr.mxu0 %v122
  %202 = vmatpush1.msra.mxu0 %v121
  %203 = vmatprep.subr.mxu0 %v115
  %204 = vmatpush1.msra.mxu0 %v114
  %205 = vmatprep.subr.mxu0 %v108
  %206 = vmatpush1.msra.mxu0 %v107
  %207 = vmatprep.subr.mxu0 %v101
  %208 = vmatpush1.msra.mxu0 %v100
  %209 = vmatprep.subr.mxu0 %v94
  %210 = vmatpush1.msra.mxu0 %v93
  %211 = vmatprep.subr.mxu0 %v87
  %212 = vmatpush1.msra.mxu0 %v86
  %213 = vmatprep.subr.mxu0 %v80
  %214 = vmatpush1.msra.mxu0 %v79
  %215 = vmatprep.subr.mxu0 %v73
  %216 = vmatpush1.msra.mxu0 %v72
  %217 = vmatprep.subr.mxu0 %v66
  %218 = vmatpush1.msra.mxu0 %v65
  %219 = vmatprep.subr.mxu0 %v59
  %220 = vmatpush1.msra.mxu0 %v58
  %221 = vmatprep.subr.mxu0 %v52
  %222 = vmatpush1.msra.mxu0 %v51
  %223 = vmatprep.subr.mxu0 %v45
  %224 = vmatpush1.msra.mxu0 %v44
  %225 = vmatprep.subr.mxu0 %v38
  %226 = vmatpush1.msra.mxu0 %v37
  %227 = vmatprep.subr.mxu0 %v31
  %228 = vmatpush1.msra.mxu0 %v30
  %229 = vmatprep.subr.mxu0 %v24
  %230 = vmatpush1.msra.mxu0 %v23
  %231 = vmatprep.subr.mxu0 %v17
  %232 = vmatpush1.msra.mxu0 %v16
  %233 = vmatprep.subr.mxu0 0.0
  %234 = vmatpush2.msra.mxu0 0.0
  %235 = vmatprep.subr.mxu0 0.0
  %236 = vmatpush2.msra.mxu0 0.0
  %237 = vmatprep.subr.mxu0 0.0
  %238 = vmatpush2.msra.mxu0 0.0
  %239 = vmatprep.subr.mxu0 0.0
  %240 = vmatpush2.msra.mxu0 0.0
  %241 = vmatprep.subr.mxu0 0.0
  %242 = vmatpush2.msra.mxu0 0.0
  %243 = vmatprep.subr.mxu0 0.0
  %244 = vmatpush2.msra.mxu0 0.0
  %245 = vmatprep.subr.mxu0 0.0
  %246 = vmatpush2.msra.mxu0 0.0
  %247 = vmatprep.subr.mxu0 %v185
  %248 = vmatpush2.msra.mxu0 %v184
  %249 = vmatprep.subr.mxu0 %v178
  %250 = vmatpush2.msra.mxu0 %v177
  %251 = vmatprep.subr.mxu0 %v171
  %252 = vmatpush2.msra.mxu0 %v170
  %253 = vmatprep.subr.mxu0 %v164
  %254 = vmatpush2.msra.mxu0 %v163
  %255 = vmatprep.subr.mxu0 %v157
  %256 = vmatpush2.msra.mxu0 %v156
  %257 = vmatprep.subr.mxu0 %v150
  %258 = vmatpush2.msra.mxu0 %v149
  %259 = vmatprep.subr.mxu0 %v143
  %260 = vmatpush2.msra.mxu0 %v142
  %261 = vmatprep.subr.mxu0 %v136
  %262 = vmatpush2.msra.mxu0 %v135
  %263 = vmatprep.subr.mxu0 %v129
  %264 = vmatpush2.msra.mxu0 %v128
  %265 = vmatprep.mubr.f32.mxu0 %v199
  %266 = vmatmul.mubr.f32.gmra.mxu0 %v14
  %v267 = vpop.f32.mrf.mxu0
  %v268 = vadd.f32 %v195, %v267
  %v269 = vpop.f32.mrf.mxu0
  %v270 = vadd.f32 %v195, %v269
  %271 = vdwg.mxu0
  %272 = vmatprep.subr.mxu0 %v124
  %273 = vmatpush1.msra.mxu0 %v123
  %274 = vmatprep.subr.mxu0 %v117
  %275 = vmatpush1.msra.mxu0 %v116
  %276 = vmatprep.subr.mxu0 %v110
  %277 = vmatpush1.msra.mxu0 %v109
  %278 = vmatprep.subr.mxu0 %v103
  %279 = vmatpush1.msra.mxu0 %v102
  %280 = vmatprep.subr.mxu0 %v96
  %281 = vmatpush1.msra.mxu0 %v95
  %282 = vmatprep.subr.mxu0 %v89
  %283 = vmatpush1.msra.mxu0 %v88
  %284 = vmatprep.subr.mxu0 %v82
  %285 = vmatpush1.msra.mxu0 %v81
  %286 = vmatprep.subr.mxu0 %v75
  %287 = vmatpush1.msra.mxu0 %v74
  %288 = vmatprep.subr.mxu0 %v68
  %289 = vmatpush1.msra.mxu0 %v67
  %290 = vmatprep.subr.mxu0 %v61
  %291 = vmatpush1.msra.mxu0 %v60
  %292 = vmatprep.subr.mxu0 %v54
  %293 = vmatpush1.msra.mxu0 %v53
  %294 = vmatprep.subr.mxu0 %v47
  %295 = vmatpush1.msra.mxu0 %v46
  %296 = vmatprep.subr.mxu0 %v40
  %297 = vmatpush1.msra.mxu0 %v39
  %298 = vmatprep.subr.mxu0 %v33
  %299 = vmatpush1.msra.mxu0 %v32
  %300 = vmatprep.subr.mxu0 %v26
  %301 = vmatpush1.msra.mxu0 %v25
  %302 = vmatprep.subr.mxu0 %v19
  %303 = vmatpush1.msra.mxu0 %v18
  %304 = vmatprep.subr.mxu0 0.0
  %305 = vmatpush2.msra.mxu0 0.0
  %306 = vmatprep.subr.mxu0 0.0
  %307 = vmatpush2.msra.mxu0 0.0
  %308 = vmatprep.subr.mxu0 0.0
  %309 = vmatpush2.msra.mxu0 0.0
  %310 = vmatprep.subr.mxu0 0.0
  %311 = vmatpush2.msra.mxu0 0.0
  %312 = vmatprep.subr.mxu0 0.0
  %313 = vmatpush2.msra.mxu0 0.0
  %314 = vmatprep.subr.mxu0 0.0
  %315 = vmatpush2.msra.mxu0 0.0
  %316 = vmatprep.subr.mxu0 0.0
  %317 = vmatpush2.msra.mxu0 0.0
  %318 = vmatprep.subr.mxu0 %v187
  %319 = vmatpush2.msra.mxu0 %v186
  %320 = vmatprep.subr.mxu0 %v180
  %321 = vmatpush2.msra.mxu0 %v179
  %322 = vmatprep.subr.mxu0 %v173
  %323 = vmatpush2.msra.mxu0 %v172
  %324 = vmatprep.subr.mxu0 %v166
  %325 = vmatpush2.msra.mxu0 %v165
  %326 = vmatprep.subr.mxu0 %v159
  %327 = vmatpush2.msra.mxu0 %v158
  %328 = vmatprep.subr.mxu0 %v152
  %329 = vmatpush2.msra.mxu0 %v151
  %330 = vmatprep.subr.mxu0 %v145
  %331 = vmatpush2.msra.mxu0 %v144
  %332 = vmatprep.subr.mxu0 %v138
  %333 = vmatpush2.msra.mxu0 %v137
  %334 = vmatprep.subr.mxu0 %v131
  %335 = vmatpush2.msra.mxu0 %v130
  %336 = vmatprep.mubr.f32.mxu0 %v199
  %337 = vmatmul.mubr.f32.gmra.mxu0 %v14
  %v338 = vpop.f32.mrf.mxu0
  %v339 = vadd.f32 %v195, %v338
  %v340 = vpop.f32.mrf.mxu0
  %v341 = vadd.f32 %v195, %v340
  %342 = vdwg.mxu0
  %343 = vmatprep.subr.mxu0 %v126
  %344 = vmatpush1.msra.mxu0 %v125
  %345 = vmatprep.subr.mxu0 %v119
  %346 = vmatpush1.msra.mxu0 %v118
  %347 = vmatprep.subr.mxu0 %v112
  %348 = vmatpush1.msra.mxu0 %v111
  %349 = vmatprep.subr.mxu0 %v105
  %350 = vmatpush1.msra.mxu0 %v104
  %351 = vmatprep.subr.mxu0 %v98
  %352 = vmatpush1.msra.mxu0 %v97
  %353 = vmatprep.subr.mxu0 %v91
  %354 = vmatpush1.msra.mxu0 %v90
  %355 = vmatprep.subr.mxu0 %v84
  %356 = vmatpush1.msra.mxu0 %v83
  %357 = vmatprep.subr.mxu0 %v77
  %358 = vmatpush1.msra.mxu0 %v76
  %359 = vmatprep.subr.mxu0 %v70
  %360 = vmatpush1.msra.mxu0 %v69
  %361 = vmatprep.subr.mxu0 %v63
  %362 = vmatpush1.msra.mxu0 %v62
  %363 = vmatprep.subr.mxu0 %v56
  %364 = vmatpush1.msra.mxu0 %v55
  %365 = vmatprep.subr.mxu0 %v49
  %366 = vmatpush1.msra.mxu0 %v48
  %367 = vmatprep.subr.mxu0 %v42
  %368 = vmatpush1.msra.mxu0 %v41
  %369 = vmatprep.subr.mxu0 %v35
  %370 = vmatpush1.msra.mxu0 %v34
  %371 = vmatprep.subr.mxu0 %v28
  %372 = vmatpush1.msra.mxu0 %v27
  %373 = vmatprep.subr.mxu0 %v21
  %374 = vmatpush1.msra.mxu0 %v20
  %375 = vmatprep.subr.mxu0 0.0
  %376 = vmatpush2.msra.mxu0 0.0
  %377 = vmatprep.subr.mxu0 0.0
  %378 = vmatpush2.msra.mxu0 0.0
  %379 = vmatprep.subr.mxu0 0.0
  %380 = vmatpush2.msra.mxu0 0.0
  %381 = vmatprep.subr.mxu0 0.0
  %382 = vmatpush2.msra.mxu0 0.0
  %383 = vmatprep.subr.mxu0 0.0
  %384 = vmatpush2.msra.mxu0 0.0
  %385 = vmatprep.subr.mxu0 0.0
  %386 = vmatpush2.msra.mxu0 0.0
  %387 = vmatprep.subr.mxu0 0.0
  %388 = vmatpush2.msra.mxu0 0.0
  %389 = vmatprep.subr.mxu0 %v189
  %390 = vmatpush2.msra.mxu0 %v188
  %391 = vmatprep.subr.mxu0 %v182
  %392 = vmatpush2.msra.mxu0 %v181
  %393 = vmatprep.subr.mxu0 %v175
  %394 = vmatpush2.msra.mxu0 %v174
  %395 = vmatprep.subr.mxu0 %v168
  %396 = vmatpush2.msra.mxu0 %v167
  %397 = vmatprep.subr.mxu0 %v161
  %398 = vmatpush2.msra.mxu0 %v160
  %399 = vmatprep.subr.mxu0 %v154
  %400 = vmatpush2.msra.mxu0 %v153
  %401 = vmatprep.subr.mxu0 %v147
  %402 = vmatpush2.msra.mxu0 %v146
  %403 = vmatprep.subr.mxu0 %v140
  %404 = vmatpush2.msra.mxu0 %v139
  %405 = vmatprep.subr.mxu0 %v133
  %406 = vmatpush2.msra.mxu0 %v132
  %407 = vmatprep.mubr.f32.mxu0 %v199
  %408 = vmatmul.mubr.f32.gmra.mxu0 %v14
  %v409 = vpop.f32.mrf.mxu0
  %v410 = vadd.f32 %v195, %v409
  %v411 = vpop.f32.mrf.mxu0
  %v412 = vadd.f32 %v195, %v411
  %413 = vdwg.mxu0
  %414 = vmatprep.subr.mxu0 0.0
  %415 = vmatpush1.msra.mxu0 %v127
  %416 = vmatprep.subr.mxu0 0.0
  %417 = vmatpush1.msra.mxu0 %v120
  %418 = vmatprep.subr.mxu0 0.0
  %419 = vmatpush1.msra.mxu0 %v113
  %420 = vmatprep.subr.mxu0 0.0
  %421 = vmatpush1.msra.mxu0 %v106
  %422 = vmatprep.subr.mxu0 0.0
  %423 = vmatpush1.msra.mxu0 %v99
  %424 = vmatprep.subr.mxu0 0.0
  %425 = vmatpush1.msra.mxu0 %v92
  %426 = vmatprep.subr.mxu0 0.0
  %427 = vmatpush1.msra.mxu0 %v85
  %428 = vmatprep.subr.mxu0 0.0
  %429 = vmatpush1.msra.mxu0 %v78
  %430 = vmatprep.subr.mxu0 0.0
  %431 = vmatpush1.msra.mxu0 %v71
  %432 = vmatprep.subr.mxu0 0.0
  %433 = vmatpush1.msra.mxu0 %v64
  %434 = vmatprep.subr.mxu0 0.0
  %435 = vmatpush1.msra.mxu0 %v57
  %436 = vmatprep.subr.mxu0 0.0
  %437 = vmatpush1.msra.mxu0 %v50
  %438 = vmatprep.subr.mxu0 0.0
  %439 = vmatpush1.msra.mxu0 %v43
  %440 = vmatprep.subr.mxu0 0.0
  %441 = vmatpush1.msra.mxu0 %v36
  %442 = vmatprep.subr.mxu0 0.0
  %443 = vmatpush1.msra.mxu0 %v29
  %444 = vmatprep.subr.mxu0 0.0
  %445 = vmatpush1.msra.mxu0 %v22
  %446 = vmatprep.subr.mxu0 0.0
  %447 = vmatpush2.msra.mxu0 0.0
  %448 = vmatprep.subr.mxu0 0.0
  %449 = vmatpush2.msra.mxu0 0.0
  %450 = vmatprep.subr.mxu0 0.0
  %451 = vmatpush2.msra.mxu0 0.0
  %452 = vmatprep.subr.mxu0 0.0
  %453 = vmatpush2.msra.mxu0 0.0
  %454 = vmatprep.subr.mxu0 0.0
  %455 = vmatpush2.msra.mxu0 0.0
  %456 = vmatprep.subr.mxu0 0.0
  %457 = vmatpush2.msra.mxu0 0.0
  %458 = vmatprep.subr.mxu0 0.0
  %459 = vmatpush2.msra.mxu0 0.0
  %460 = vmatprep.subr.mxu0 0.0
  %461 = vmatpush2.msra.mxu0 %v190
  %462 = vmatprep.subr.mxu0 0.0
  %463 = vmatpush2.msra.mxu0 %v183
  %464 = vmatprep.subr.mxu0 0.0
  %465 = vmatpush2.msra.mxu0 %v176
  %466 = vmatprep.subr.mxu0 0.0
  %467 = vmatpush2.msra.mxu0 %v169
  %468 = vmatprep.subr.mxu0 0.0
  %469 = vmatpush2.msra.mxu0 %v162
  %470 = vmatprep.subr.mxu0 0.0
  %471 = vmatpush2.msra.mxu0 %v155
  %472 = vmatprep.subr.mxu0 0.0
  %473 = vmatpush2.msra.mxu0 %v148
  %474 = vmatprep.subr.mxu0 0.0
  %475 = vmatpush2.msra.mxu0 %v141
  %476 = vmatprep.subr.mxu0 0.0
  %477 = vmatpush2.msra.mxu0 %v134
  %478 = vmatprep.mubr.f32.mxu0 %v199
  %479 = vmatmul.mubr.f32.gmra.mxu0 %v14
  %v480 = vpop.f32.mrf.mxu0
  %v481 = vadd.f32 %v195, %v480
  %v482 = vpop.f32.mrf.mxu0
  %483 = vdwg.mxu0
  %v484 = vmax.f32 %v268, 0.0
  %v485 = vmax.f32 %v270, 0.0
  %v486 = vmax.f32 %v339, 0.0
  %v487 = vmax.f32 %v341, 0.0
  %v488 = vmax.f32 %v410, 0.0
  %v489 = vmax.f32 %v412, 0.0
  %v490 = vmax.f32 %v481, 0.0
  %491 = vst [vmem:[%s3] sm:$0xff] %v484
  %492 = vst [vmem:[%s3 + $0x8] sm:$0xff] %v485
  %493 = vst [vmem:[%s3 + $0x10] sm:$0xff] %v486
  %494 = vst [vmem:[%s3 + $0x18] sm:$0xff] %v487
  %495 = vst [vmem:[%s3 + $0x20] sm:$0xff] %v488
  %496 = vst [vmem:[%s3 + $0x28] sm:$0xff] %v489
  %vm497 = vcmask 113664
  %498 = vst.msk [vmem:[%s3 + $0x30] sm:$0xff] %vm497, %v490
  // Predicated region
  $region14: #{two_heads_forward.6} parent=0 // pred_check
    _
  $region15: #{two_heads_forward.6} parent=0 // pred_check_branch
    %500 = sbr.rel (0) target = $region17
  $region16: #{two_heads_forward.6} parent=0 // pred_region
    _
  $region17: #{two_heads_forward.6} parent=0 // pred_fallthru
    _
  // Predicated region
  $region18: #{two_heads_forward.6} parent=0 // pred_check
    _
  $region19: #{two_heads_forward.6} parent=0 // pred_check_branch
    %502 = sbr.rel (0) target = $region21
  $region20: #{two_heads_forward.6} parent=0 // pred_region
    _
  $region21: #{two_heads_forward.6} parent=0 // pred_fallthru
    _

// kernel: two_heads_forward.7
$region0: #{two_heads_forward.7}
  #allocation0 [shape = 'u32[]', space=smem, size = 0x4, offset = 0x4, fixed_abs, tag = 'smem constant byte address 0x4 - core index']
  #allocation1 [shape = 'u32[144,128]{1,0:T(1,128)}', space=vmem, size = 0x12000, scoped, tag = 'internal scratch']
  %s0 = inlined_call_operand.vmem [shape: f32[2,3128], index: 0, kind: input, shape index: {}]
  %s1 = inlined_call_operand.vmem [shape: f32[3128,256], index: 1, kind: input, shape index: {}]
  %s2 = inlined_call_operand.vmem [shape: f32[1,256], index: 2, kind: input, shape index: {}]
  %s3 = inlined_call_operand.vmem [shape: f32[256,256], index: 3, kind: input, shape index: {}]
  %s4 = inlined_call_operand.vmem [shape: f32[1,256], index: 4, kind: input, shape index: {}]
  %s5 = inlined_call_operand.vmem [shape: f32[256,7], index: 5, kind: input, shape index: {}]
  %s6 = inlined_call_operand.vmem [shape: f32[1,7], index: 6, kind: input, shape index: {}]
  %s7 = inlined_call_operand.vmem [shape: f32[2,7], index: 7, kind: output, shape index: {}]
  %s8 = sld [smem:[#allocation0]]
  $region38: #{two_heads_forward.7} parent=0
    _
  %s10 = ssub.s32 1, %s8
  %s11 = scalar_select 0, %s10, %s8
  // Predicated region
  $region2: #{two_heads_forward.7} parent=0 // pred_check
    _
  $region3: #{two_heads_forward.7} parent=0 // pred_check_branch
    %13 = sbr.rel (0) target = $region5
  $region4: #{two_heads_forward.7} parent=0 // pred_region
    _
  $region5: #{two_heads_forward.7} parent=0 // pred_fallthru
    _
  // Predicated region
  $region6: #{two_heads_forward.7} parent=0 // pred_check
    _
  $region7: #{two_heads_forward.7} parent=0 // pred_check_branch
    %15 = sbr.rel (0) target = $region9
  $region8: #{two_heads_forward.7} parent=0 // pred_region
    _
  $region9: #{two_heads_forward.7} parent=0 // pred_fallthru
    _
  // Predicated region
  $region10: #{two_heads_forward.7} parent=0 // pred_check
    _
  $region11: #{two_heads_forward.7} parent=0 // pred_check_branch
    %17 = sbr.rel (0) target = $region13
  $region12: #{two_heads_forward.7} parent=0 // pred_region
    _
  $region13: #{two_heads_forward.7} parent=0 // pred_fallthru
    _
  // Predicated region
  $region14: #{two_heads_forward.7} parent=0 // pred_check
    _
  $region15: #{two_heads_forward.7} parent=0 // pred_check_branch
    %19 = sbr.rel (0) target = $region17
  $region16: #{two_heads_forward.7} parent=0 // pred_region
    _
  $region17: #{two_heads_forward.7} parent=0 // pred_fallthru
    _
  // Predicated region
  $region18: #{two_heads_forward.7} parent=0 // pred_check
    _
  $region19: #{two_heads_forward.7} parent=0 // pred_check_branch
    %21 = sbr.rel (0) target = $region21
  $region20: #{two_heads_forward.7} parent=0 // pred_region
    _
  $region21: #{two_heads_forward.7} parent=0 // pred_fallthru
    _
  // Predicated region
  $region22: #{two_heads_forward.7} parent=0 // pred_check
    _
  $region23: #{two_heads_forward.7} parent=0 // pred_check_branch
    %23 = sbr.rel (0) target = $region25
  $region24: #{two_heads_forward.7} parent=0 // pred_region
    _
  $region25: #{two_heads_forward.7} parent=0 // pred_fallthru
    _
  // Predicated region
  $region26: #{two_heads_forward.7} parent=0 // pred_check
    _
  $region27: #{two_heads_forward.7} parent=0 // pred_check_branch
    %25 = sbr.rel (0) target = $region29
  $region28: #{two_heads_forward.7} parent=0 // pred_region
    _
  $region29: #{two_heads_forward.7} parent=0 // pred_fallthru
    _
  %v26 = vld [vmem:[%s0] sm:$0xff]
  %v27 = vld [vmem:[%s0 + $0x8] sm:$0xff]
  %v28 = vld [vmem:[%s0 + $0x10] sm:$0xff]
  %v29 = vld [vmem:[%s0 + $0x18] sm:$0xff]
  %v30 = vld [vmem:[%s0 + $0x20] sm:$0xff]
  %v31 = vld [vmem:[%s0 + $0x28] sm:$0xff]
  %v32 = vld [vmem:[%s0 + $0x30] sm:$0x3]
  %v33 = vld [vmem:[%s1] sm:$0xff]
  %v34 = vld [vmem:[%s1 + $0x8] sm:$0xff]
  %v35 = vld [vmem:[%s1 + $0x10] sm:$0xff]
  %v36 = vld [vmem:[%s1 + $0x18] sm:$0xff]
  %v37 = vld [vmem:[%s1 + $0x20] sm:$0xff]
  %v38 = vld [vmem:[%s1 + $0x28] sm:$0xff]
  %v39 = vld [vmem:[%s1 + $0x30] sm:$0xff]
  %v40 = vld [vmem:[%s1 + $0x38] sm:$0xff]
  %v41 = vld [vmem:[%s1 + $0x40] sm:$0xff]
  %v42 = vld [vmem:[%s1 + $0x48] sm:$0xff]
  %v43 = vld [vmem:[%s1 + $0x50] sm:$0xff]
  %v44 = vld [vmem:[%s1 + $0x58] sm:$0xff]
  %v45 = vld [vmem:[%s1 + $0x60] sm:$0xff]
  %v46 = vld [vmem:[%s1 + $0x68] sm:$0xff]
  %v47 = vld [vmem:[%s1 + $0x70] sm:$0xff]
  %v48 = vld [vmem:[%s1 + $0x78] sm:$0xff]
  %v49 = vld [vmem:[%s1 + $0x80] sm:$0xff]
  %v50 = vld [vmem:[%s1 + $0x88] sm:$0xff]
  %v51 = vld [vmem:[%s1 + $0x90] sm:$0xff]
  %v52 = vld [vmem:[%s1 + $0x98] sm:$0xff]
  %v53 = vld [vmem:[%s1 + $0xa0] sm:$0xff]
  %v54 = vld [vmem:[%s1 + $0xa8] sm:$0xff]
  %v55 = vld [vmem:[%s1 + $0xb0] sm:$0xff]
  %v56 = vld [vmem:[%s1 + $0xb8] sm:$0xff]
  %v57 = vld [vmem:[%s1 + $0xc0] sm:$0xff]
  %v58 = vld [vmem:[%s1 + $0xc8] sm:$0xff]
  %v59 = vld [vmem:[%s1 + $0xd0] sm:$0xff]
  %v60 = vld [vmem:[%s1 + $0xd8] sm:$0xff]
  %v61 = vld [vmem:[%s1 + $0xe0] sm:$0xff]
  %v62 = vld [vmem:[%s1 + $0xe8] sm:$0xff]
  %v63 = vld [vmem:[%s1 + $0xf0] sm:$0xff]
  %v64 = vld [vmem:[%s1 + $0xf8] sm:$0xff]
  %v65 = vld [vmem:[%s1 + $0x100] sm:$0xff]
  %v66 = vld [vmem:[%s1 + $0x108] sm:$0xff]
  %v67 = vld [vmem:[%s1 + $0x110] sm:$0xff]
  %v68 = vld [vmem:[%s1 + $0x118] sm:$0xff]
  %v69 = vld [vmem:[%s1 + $0x120] sm:$0xff]
  %v70 = vld [vmem:[%s1 + $0x128] sm:$0xff]
  %v71 = vld [vmem:[%s1 + $0x130] sm:$0xff]
  %v72 = vld [vmem:[%s1 + $0x138] sm:$0xff]
  %v73 = vld [vmem:[%s1 + $0x140] sm:$0xff]
  %v74 = vld [vmem:[%s1 + $0x148] sm:$0xff]
  %v75 = vld [vmem:[%s1 + $0x150] sm:$0xff]
  %v76 = vld [vmem:[%s1 + $0x158] sm:$0xff]
  %v77 = vld [vmem:[%s1 + $0x160] sm:$0xff]
  %v78 = vld [vmem:[%s1 + $0x168] sm:$0xff]
  %v79 = vld [vmem:[%s1 + $0x170] sm:$0xff]
  %v80 = vld [vmem:[%s1 + $0x178] sm:$0xff]
  %v81 = vld [vmem:[%s1 + $0x180] sm:$0xff]
  %v82 = vld [vmem:[%s1 + $0x188] sm:$0xff]
  %v83 = vld [vmem:[%s1 + $0x190] sm:$0xff]
  %v84 = vld [vmem:[%s1 + $0x198] sm:$0xff]
  %v85 = vld [vmem:[%s1 + $0x1a0] sm:$0xff]
  %v86 = vld [vmem:[%s1 + $0x1a8] sm:$0xff]
  %v87 = vld [vmem:[%s1 + $0x1b0] sm:$0xff]
  %v88 = vld [vmem:[%s1 + $0x1b8] sm:$0xff]
  %v89 = vld [vmem:[%s1 + $0x1c0] sm:$0xff]
  %v90 = vld [vmem:[%s1 + $0x1c8] sm:$0xff]
  %v91 = vld [vmem:[%s1 + $0x1d0] sm:$0xff]
  %v92 = vld [vmem:[%s1 + $0x1d8] sm:$0xff]
  %v93 = vld [vmem:[%s1 + $0x1e0] sm:$0xff]
  %v94 = vld [vmem:[%s1 + $0x1e8] sm:$0xff]
  %v95 = vld [vmem:[%s1 + $0x1f0] sm:$0xff]
  %v96 = vld [vmem:[%s1 + $0x1f8] sm:$0xff]
  %v97 = vld [vmem:[%s1 + $0x200] sm:$0xff]
  %v98 = vld [vmem:[%s1 + $0x208] sm:$0xff]
  %v99 = vld [vmem:[%s1 + $0x210] sm:$0xff]
  %v100 = vld [vmem:[%s1 + $0x218] sm:$0xff]
  %v101 = vld [vmem:[%s1 + $0x220] sm:$0xff]
  %v102 = vld [vmem:[%s1 + $0x228] sm:$0xff]
  %v103 = vld [vmem:[%s1 + $0x230] sm:$0xff]
  %v104 = vld [vmem:[%s1 + $0x238] sm:$0xff]
  %v105 = vld [vmem:[%s1 + $0x240] sm:$0xff]
  %v106 = vld [vmem:[%s1 + $0x248] sm:$0xff]
  %v107 = vld [vmem:[%s1 + $0x250] sm:$0xff]
  %v108 = vld [vmem:[%s1 + $0x258] sm:$0xff]
  %v109 = vld [vmem:[%s1 + $0x260] sm:$0xff]
  %v110 = vld [vmem:[%s1 + $0x268] sm:$0xff]
  %v111 = vld [vmem:[%s1 + $0x270] sm:$0xff]
  %v112 = vld [vmem:[%s1 + $0x278] sm:$0xff]
  %v113 = vld [vmem:[%s1 + $0x280] sm:$0xff]
  %v114 = vld [vmem:[%s1 + $0x288] sm:$0xff]
  %v115 = vld [vmem:[%s1 + $0x290] sm:$0xff]
  %v116 = vld [vmem:[%s1 + $0x298] sm:$0xff]
  %v117 = vld [vmem:[%s1 + $0x2a0] sm:$0xff]
  %v118 = vld [vmem:[%s1 + $0x2a8] sm:$0xff]
  %v119 = vld [vmem:[%s1 + $0x2b0] sm:$0xff]
  %v120 = vld [vmem:[%s1 + $0x2b8] sm:$0xff]
  %v121 = vld [vmem:[%s1 + $0x2c0] sm:$0xff]
  %v122 = vld [vmem:[%s1 + $0x2c8] sm:$0xff]
  %v123 = vld [vmem:[%s1 + $0x2d0] sm:$0xff]
  %v124 = vld [vmem:[%s1 + $0x2d8] sm:$0xff]
  %v125 = vld [vmem:[%s1 + $0x2e0] sm:$0xff]
  %v126 = vld [vmem:[%s1 + $0x2e8] sm:$0xff]
  %v127 = vld [vmem:[%s1 + $0x2f0] sm:$0xff]
  %v128 = vld [vmem:[%s1 + $0x2f8] sm:$0xff]
  %v129 = vld [vmem:[%s1 + $0x300] sm:$0xff]
  %v130 = vld [vmem:[%s1 + $0x308] sm:$0xff]
  %v131 = vld [vmem:[%s1 + $0x310] sm:$0xff]
  %v132 = vld [vmem:[%s1 + $0x318] sm:$0xff]
  %v133 = vld [vmem:[%s1 + $0x320] sm:$0xff]
  %v134 = vld [vmem:[%s1 + $0x328] sm:$0xff]
  %v135 = vld [vmem:[%s1 + $0x330] sm:$0xff]
  %v136 = vld [vmem:[%s1 + $0x338] sm:$0xff]
  %v137 = vld [vmem:[%s1 + $0x340] sm:$0xff]
  %v138 = vld [vmem:[%s1 + $0x348] sm:$0xff]
  %v139 = vld [vmem:[%s1 + $0x350] sm:$0xff]
  %v140 = vld [vmem:[%s1 + $0x358] sm:$0xff]
  %v141 = vld [vmem:[%s1 + $0x360] sm:$0xff]
  %v142 = vld [vmem:[%s1 + $0x368] sm:$0xff]
  %v143 = vld [vmem:[%s1 + $0x370] sm:$0xff]
  %v144 = vld [vmem:[%s1 + $0x378] sm:$0xff]
  %v145 = vld [vmem:[%s1 + $0x380] sm:$0xff]
  %v146 = vld [vmem:[%s1 + $0x388] sm:$0xff]
  %v147 = vld [vmem:[%s1 + $0x390] sm:$0xff]
  %v148 = vld [vmem:[%s1 + $0x398] sm:$0xff]
  %v149 = vld [vmem:[%s1 + $0x3a0] sm:$0xff]
  %v150 = vld [vmem:[%s1 + $0x3a8] sm:$0xff]
  %v151 = vld [vmem:[%s1 + $0x3b0] sm:$0xff]
  %v152 = vld [vmem:[%s1 + $0x3b8] sm:$0xff]
  %v153 = vld [vmem:[%s1 + $0x3c0] sm:$0xff]
  %v154 = vld [vmem:[%s1 + $0x3c8] sm:$0xff]
  %v155 = vld [vmem:[%s1 + $0x3d0] sm:$0xff]
  %v156 = vld [vmem:[%s1 + $0x3d8] sm:$0xff]
  %v157 = vld [vmem:[%s1 + $0x3e0] sm:$0xff]
  %v158 = vld [vmem:[%s1 + $0x3e8] sm:$0xff]
  %v159 = vld [vmem:[%s1 + $0x3f0] sm:$0xff]
  %v160 = vld [vmem:[%s1 + $0x3f8] sm:$0xff]
  %v161 = vld [vmem:[%s1 + $0x400] sm:$0xff]
  %v162 = vld [vmem:[%s1 + $0x408] sm:$0xff]
  %v163 = vld [vmem:[%s1 + $0x410] sm:$0xff]
  %v164 = vld [vmem:[%s1 + $0x418] sm:$0xff]
  %v165 = vld [vmem:[%s1 + $0x420] sm:$0xff]
  %v166 = vld [vmem:[%s1 + $0x428] sm:$0xff]
  %v167 = vld [vmem:[%s1 + $0x430] sm:$0xff]
  %v168 = vld [vmem:[%s1 + $0x438] sm:$0xff]
  %v169 = vld [vmem:[%s1 + $0x440] sm:$0xff]
  %v170 = vld [vmem:[%s1 + $0x448] sm:$0xff]
  %v171 = vld [vmem:[%s1 + $0x450] sm:$0xff]
  %v172 = vld [vmem:[%s1 + $0x458] sm:$0xff]
  %v173 = vld [vmem:[%s1 + $0x460] sm:$0xff]
  %v174 = vld [vmem:[%s1 + $0x468] sm:$0xff]
  %v175 = vld [vmem:[%s1 + $0x470] sm:$0xff]
  %v176 = vld [vmem:[%s1 + $0x478] sm:$0xff]
  %v177 = vld [vmem:[%s1 + $0x480] sm:$0xff]
  %v178 = vld [vmem:[%s1 + $0x488] sm:$0xff]
  %v179 = vld [vmem:[%s1 + $0x490] sm:$0xff]
  %v180 = vld [vmem:[%s1 + $0x498] sm:$0xff]
  %v181 = vld [vmem:[%s1 + $0x4a0] sm:$0xff]
  %v182 = vld [vmem:[%s1 + $0x4a8] sm:$0xff]
  %v183 = vld [vmem:[%s1 + $0x4b0] sm:$0xff]
  %v184 = vld [vmem:[%s1 + $0x4b8] sm:$0xff]
  %v185 = vld [vmem:[%s1 + $0x4c0] sm:$0xff]
  %v186 = vld [vmem:[%s1 + $0x4c8] sm:$0xff]
  %v187 = vld [vmem:[%s1 + $0x4d0] sm:$0xff]
  %v188 = vld [vmem:[%s1 + $0x4d8] sm:$0xff]
  %v189 = vld [vmem:[%s1 + $0x4e0] sm:$0xff]
  %v190 = vld [vmem:[%s1 + $0x4e8] sm:$0xff]
  %v191 = vld [vmem:[%s1 + $0x4f0] sm:$0xff]
  %v192 = vld [vmem:[%s1 + $0x4f8] sm:$0xff]
  %v193 = vld [vmem:[%s1 + $0x500] sm:$0xff]
  %v194 = vld [vmem:[%s1 + $0x508] sm:$0xff]
  %v195 = vld [vmem:[%s1 + $0x510] sm:$0xff]
  %v196 = vld [vmem:[%s1 + $0x518] sm:$0xff]
  %v197 = vld [vmem:[%s1 + $0x520] sm:$0xff]
  %v198 = vld [vmem:[%s1 + $0x528] sm:$0xff]
  %v199 = vld [vmem:[%s1 + $0x530] sm:$0xff]
  %v200 = vld [vmem:[%s1 + $0x538] sm:$0xff]
  %v201 = vld [vmem:[%s1 + $0x540] sm:$0xff]
  %v202 = vld [vmem:[%s1 + $0x548] sm:$0xff]
  %v203 = vld [vmem:[%s1 + $0x550] sm:$0xff]
  %v204 = vld [vmem:[%s1 + $0x558] sm:$0xff]
  %v205 = vld [vmem:[%s1 + $0x560] sm:$0xff]
  %v206 = vld [vmem:[%s1 + $0x568] sm:$0xff]
  %v207 = vld [vmem:[%s1 + $0x570] sm:$0xff]
  %v208 = vld [vmem:[%s1 + $0x578] sm:$0xff]
  %v209 = vld [vmem:[%s1 + $0x580] sm:$0xff]
  %v210 = vld [vmem:[%s1 + $0x588] sm:$0xff]
  %v211 = vld [vmem:[%s1 + $0x590] sm:$0xff]
  %v212 = vld [vmem:[%s1 + $0x598] sm:$0xff]
  %v213 = vld [vmem:[%s1 + $0x5a0] sm:$0xff]
  %v214 = vld [vmem:[%s1 + $0x5a8] sm:$0xff]
  %v215 = vld [vmem:[%s1 + $0x5b0] sm:$0xff]
  %v216 = vld [vmem:[%s1 + $0x5b8] sm:$0xff]
  %v217 = vld [vmem:[%s1 + $0x5c0] sm:$0xff]
  %v218 = vld [vmem:[%s1 + $0x5c8] sm:$0xff]
  %v219 = vld [vmem:[%s1 + $0x5d0] sm:$0xff]
  %v220 = vld [vmem:[%s1 + $0x5d8] sm:$0xff]
  %v221 = vld [vmem:[%s1 + $0x5e0] sm:$0xff]
  %v222 = vld [vmem:[%s1 + $0x5e8] sm:$0xff]
  %v223 = vld [vmem:[%s1 + $0x5f0] sm:$0xff]
  %v224 = vld [vmem:[%s1 + $0x5f8] sm:$0xff]
  %v225 = vld [vmem:[%s1 + $0x600] sm:$0xff]
  %v226 = vld [vmem:[%s1 + $0x608] sm:$0xff]
  %v227 = vld [vmem:[%s1 + $0x610] sm:$0xff]
  %v228 = vld [vmem:[%s1 + $0x618] sm:$0xff]
  %v229 = vld [vmem:[%s1 + $0x620] sm:$0xff]
  %v230 = vld [vmem:[%s1 + $0x628] sm:$0xff]
  %v231 = vld [vmem:[%s1 + $0x630] sm:$0xff]
  %v232 = vld [vmem:[%s1 + $0x638] sm:$0xff]
  %v233 = vld [vmem:[%s1 + $0x640] sm:$0xff]
  %v234 = vld [vmem:[%s1 + $0x648] sm:$0xff]
  %v235 = vld [vmem:[%s1 + $0x650] sm:$0xff]
  %v236 = vld [vmem:[%s1 + $0x658] sm:$0xff]
  %v237 = vld [vmem:[%s1 + $0x660] sm:$0xff]
  %v238 = vld [vmem:[%s1 + $0x668] sm:$0xff]
  %v239 = vld [vmem:[%s1 + $0x670] sm:$0xff]
  %v240 = vld [vmem:[%s1 + $0x678] sm:$0xff]
  %v241 = vld [vmem:[%s1 + $0x680] sm:$0xff]
  %v242 = vld [vmem:[%s1 + $0x688] sm:$0xff]
  %v243 = vld [vmem:[%s1 + $0x690] sm:$0xff]
  %v244 = vld [vmem:[%s1 + $0x698] sm:$0xff]
  %v245 = vld [vmem:[%s1 + $0x6a0] sm:$0xff]
  %v246 = vld [vmem:[%s1 + $0x6a8] sm:$0xff]
  %v247 = vld [vmem:[%s1 + $0x6b0] sm:$0xff]
  %v248 = vld [vmem:[%s1 + $0x6b8] sm:$0xff]
  %v249 = vld [vmem:[%s1 + $0x6c0] sm:$0xff]
  %v250 = vld [vmem:[%s1 + $0x6c8] sm:$0xff]
  %v251 = vld [vmem:[%s1 + $0x6d0] sm:$0xff]
  %v252 = vld [vmem:[%s1 + $0x6d8] sm:$0xff]
  %v253 = vld [vmem:[%s1 + $0x6e0] sm:$0xff]
  %v254 = vld [vmem:[%s1 + $0x6e8] sm:$0xff]
  %v255 = vld [vmem:[%s1 + $0x6f0] sm:$0xff]
  %v256 = vld [vmem:[%s1 + $0x6f8] sm:$0xff]
  %v257 = vld [vmem:[%s1 + $0x700] sm:$0xff]
  %v258 = vld [vmem:[%s1 + $0x708] sm:$0xff]
  %v259 = vld [vmem:[%s1 + $0x710] sm:$0xff]
  %v260 = vld [vmem:[%s1 + $0x718] sm:$0xff]
  %v261 = vld [vmem:[%s1 + $0x720] sm:$0xff]
  %v262 = vld [vmem:[%s1 + $0x728] sm:$0xff]
  %v263 = vld [vmem:[%s1 + $0x730] sm:$0xff]
  %v264 = vld [vmem:[%s1 + $0x738] sm:$0xff]
  %v265 = vld [vmem:[%s1 + $0x740] sm:$0xff]
  %v266 = vld [vmem:[%s1 + $0x748] sm:$0xff]
  %v267 = vld [vmem:[%s1 + $0x750] sm:$0xff]
  %v268 = vld [vmem:[%s1 + $0x758] sm:$0xff]
  %v269 = vld [vmem:[%s1 + $0x760] sm:$0xff]
  %v270 = vld [vmem:[%s1 + $0x768] sm:$0xff]
  %v271 = vld [vmem:[%s1 + $0x770] sm:$0xff]
  %v272 = vld [vmem:[%s1 + $0x778] sm:$0xff]
  %v273 = vld [vmem:[%s1 + $0x780] sm:$0xff]
  %v274 = vld [vmem:[%s1 + $0x788] sm:$0xff]
  %v275 = vld [vmem:[%s1 + $0x790] sm:$0xff]
  %v276 = vld [vmem:[%s1 + $0x798] sm:$0xff]
  %v277 = vld [vmem:[%s1 + $0x7a0] sm:$0xff]
  %v278 = vld [vmem:[%s1 + $0x7a8] sm:$0xff]
  %v279 = vld [vmem:[%s1 + $0x7b0] sm:$0xff]
  %v280 = vld [vmem:[%s1 + $0x7b8] sm:$0xff]
  %v281 = vld [vmem:[%s1 + $0x7c0] sm:$0xff]
  %v282 = vld [vmem:[%s1 + $0x7c8] sm:$0xff]
  %v283 = vld [vmem:[%s1 + $0x7d0] sm:$0xff]
  %v284 = vld [vmem:[%s1 + $0x7d8] sm:$0xff]
  %v285 = vld [vmem:[%s1 + $0x7e0] sm:$0xff]
  %v286 = vld [vmem:[%s1 + $0x7e8] sm:$0xff]
  %v287 = vld [vmem:[%s1 + $0x7f0] sm:$0xff]
  %v288 = vld [vmem:[%s1 + $0x7f8] sm:$0xff]
  %v289 = vld [vmem:[%s1 + $0x800] sm:$0xff]
  %v290 = vld [vmem:[%s1 + $0x808] sm:$0xff]
  %v291 = vld [vmem:[%s1 + $0x810] sm:$0xff]
  %v292 = vld [vmem:[%s1 + $0x818] sm:$0xff]
  %v293 = vld [vmem:[%s1 + $0x820] sm:$0xff]
  %v294 = vld [vmem:[%s1 + $0x828] sm:$0xff]
  %v295 = vld [vmem:[%s1 + $0x830] sm:$0xff]
  %v296 = vld [vmem:[%s1 + $0x838] sm:$0xff]
  %v297 = vld [vmem:[%s1 + $0x840] sm:$0xff]
  %v298 = vld [vmem:[%s1 + $0x848] sm:$0xff]
  %v299 = vld [vmem:[%s1 + $0x850] sm:$0xff]
  %v300 = vld [vmem:[%s1 + $0x858] sm:$0xff]
  %v301 = vld [vmem:[%s1 + $0x860] sm:$0xff]
  %v302 = vld [vmem:[%s1 + $0x868] sm:$0xff]
  %v303 = vld [vmem:[%s1 + $0x870] sm:$0xff]
  %v304 = vld [vmem:[%s1 + $0x878] sm:$0xff]
  %v305 = vld [vmem:[%s1 + $0x880] sm:$0xff]
  %v306 = vld [vmem:[%s1 + $0x888] sm:$0xff]
  %v307 = vld [vmem:[%s1 + $0x890] sm:$0xff]
  %v308 = vld [vmem:[%s1 + $0x898] sm:$0xff]
  %v309 = vld [vmem:[%s1 + $0x8a0] sm:$0xff]
  %v310 = vld [vmem:[%s1 + $0x8a8] sm:$0xff]
  %v311 = vld [vmem:[%s1 + $0x8b0] sm:$0xff]
  %v312 = vld [vmem:[%s1 + $0x8b8] sm:$0xff]
  %v313 = vld [vmem:[%s1 + $0x8c0] sm:$0xff]
  %v314 = vld [vmem:[%s1 + $0x8c8] sm:$0xff]
  %v315 = vld [vmem:[%s1 + $0x8d0] sm:$0xff]
  %v316 = vld [vmem:[%s1 + $0x8d8] sm:$0xff]
  %v317 = vld [vmem:[%s1 + $0x8e0] sm:$0xff]
  %v318 = vld [vmem:[%s1 + $0x8e8] sm:$0xff]
  %v319 = vld [vmem:[%s1 + $0x8f0] sm:$0xff]
  %v320 = vld [vmem:[%s1 + $0x8f8] sm:$0xff]
  %v321 = vld [vmem:[%s1 + $0x900] sm:$0xff]
  %v322 = vld [vmem:[%s1 + $0x908] sm:$0xff]
  %v323 = vld [vmem:[%s1 + $0x910] sm:$0xff]
  %v324 = vld [vmem:[%s1 + $0x918] sm:$0xff]
  %v325 = vld [vmem:[%s1 + $0x920] sm:$0xff]
  %v326 = vld [vmem:[%s1 + $0x928] sm:$0xff]
  %v327 = vld [vmem:[%s1 + $0x930] sm:$0xff]
  %v328 = vld [vmem:[%s1 + $0x938] sm:$0xff]
  %v329 = vld [vmem:[%s1 + $0x940] sm:$0xff]
  %v330 = vld [vmem:[%s1 + $0x948] sm:$0xff]
  %v331 = vld [vmem:[%s1 + $0x950] sm:$0xff]
  %v332 = vld [vmem:[%s1 + $0x958] sm:$0xff]
  %v333 = vld [vmem:[%s1 + $0x960] sm:$0xff]
  %v334 = vld [vmem:[%s1 + $0x968] sm:$0xff]
  %v335 = vld [vmem:[%s1 + $0x970] sm:$0xff]
  %v336 = vld [vmem:[%s1 + $0x978] sm:$0xff]
  %v337 = vld [vmem:[%s1 + $0x980] sm:$0xff]
  %v338 = vld [vmem:[%s1 + $0x988] sm:$0xff]
  %v339 = vld [vmem:[%s1 + $0x990] sm:$0xff]
  %v340 = vld [vmem:[%s1 + $0x998] sm:$0xff]
  %v341 = vld [vmem:[%s1 + $0x9a0] sm:$0xff]
  %v342 = vld [vmem:[%s1 + $0x9a8] sm:$0xff]
  %v343 = vld [vmem:[%s1 + $0x9b0] sm:$0xff]
  %v344 = vld [vmem:[%s1 + $0x9b8] sm:$0xff]
  %v345 = vld [vmem:[%s1 + $0x9c0] sm:$0xff]
  %v346 = vld [vmem:[%s1 + $0x9c8] sm:$0xff]
  %v347 = vld [vmem:[%s1 + $0x9d0] sm:$0xff]
  %v348 = vld [vmem:[%s1 + $0x9d8] sm:$0xff]
  %v349 = vld [vmem:[%s1 + $0x9e0] sm:$0xff]
  %v350 = vld [vmem:[%s1 + $0x9e8] sm:$0xff]
  %v351 = vld [vmem:[%s1 + $0x9f0] sm:$0xff]
  %v352 = vld [vmem:[%s1 + $0x9f8] sm:$0xff]
  %v353 = vld [vmem:[%s1 + $0xa00] sm:$0xff]
  %v354 = vld [vmem:[%s1 + $0xa08] sm:$0xff]
  %v355 = vld [vmem:[%s1 + $0xa10] sm:$0xff]
  %v356 = vld [vmem:[%s1 + $0xa18] sm:$0xff]
  %v357 = vld [vmem:[%s1 + $0xa20] sm:$0xff]
  %v358 = vld [vmem:[%s1 + $0xa28] sm:$0xff]
  %v359 = vld [vmem:[%s1 + $0xa30] sm:$0xff]
  %v360 = vld [vmem:[%s1 + $0xa38] sm:$0xff]
  %v361 = vld [vmem:[%s1 + $0xa40] sm:$0xff]
  %v362 = vld [vmem:[%s1 + $0xa48] sm:$0xff]
  %v363 = vld [vmem:[%s1 + $0xa50] sm:$0xff]
  %v364 = vld [vmem:[%s1 + $0xa58] sm:$0xff]
  %v365 = vld [vmem:[%s1 + $0xa60] sm:$0xff]
  %v366 = vld [vmem:[%s1 + $0xa68] sm:$0xff]
  %v367 = vld [vmem:[%s1 + $0xa70] sm:$0xff]
  %v368 = vld [vmem:[%s1 + $0xa78] sm:$0xff]
  %v369 = vld [vmem:[%s1 + $0xa80] sm:$0xff]
  %v370 = vld [vmem:[%s1 + $0xa88] sm:$0xff]
  %v371 = vld [vmem:[%s1 + $0xa90] sm:$0xff]
  %v372 = vld [vmem:[%s1 + $0xa98] sm:$0xff]
  %v373 = vld [vmem:[%s1 + $0xaa0] sm:$0xff]
  %v374 = vld [vmem:[%s1 + $0xaa8] sm:$0xff]
  %v375 = vld [vmem:[%s1 + $0xab0] sm:$0xff]
  %v376 = vld [vmem:[%s1 + $0xab8] sm:$0xff]
  %v377 = vld [vmem:[%s1 + $0xac0] sm:$0xff]
  %v378 = vld [vmem:[%s1 + $0xac8] sm:$0xff]
  %v379 = vld [vmem:[%s1 + $0xad0] sm:$0xff]
  %v380 = vld [vmem:[%s1 + $0xad8] sm:$0xff]
  %v381 = vld [vmem:[%s1 + $0xae0] sm:$0xff]
  %v382 = vld [vmem:[%s1 + $0xae8] sm:$0xff]
  %v383 = vld [vmem:[%s1 + $0xaf0] sm:$0xff]
  %v384 = vld [vmem:[%s1 + $0xaf8] sm:$0xff]
  %v385 = vld [vmem:[%s1 + $0xb00] sm:$0xff]
  %v386 = vld [vmem:[%s1 + $0xb08] sm:$0xff]
  %v387 = vld [vmem:[%s1 + $0xb10] sm:$0xff]
  %v388 = vld [vmem:[%s1 + $0xb18] sm:$0xff]
  %v389 = vld [vmem:[%s1 + $0xb20] sm:$0xff]
  %v390 = vld [vmem:[%s1 + $0xb28] sm:$0xff]
  %v391 = vld [vmem:[%s1 + $0xb30] sm:$0xff]
  %v392 = vld [vmem:[%s1 + $0xb38] sm:$0xff]
  %v393 = vld [vmem:[%s1 + $0xb40] sm:$0xff]
  %v394 = vld [vmem:[%s1 + $0xb48] sm:$0xff]
  %v395 = vld [vmem:[%s1 + $0xb50] sm:$0xff]
  %v396 = vld [vmem:[%s1 + $0xb58] sm:$0xff]
  %v397 = vld [vmem:[%s1 + $0xb60] sm:$0xff]
  %v398 = vld [vmem:[%s1 + $0xb68] sm:$0xff]
  %v399 = vld [vmem:[%s1 + $0xb70] sm:$0xff]
  %v400 = vld [vmem:[%s1 + $0xb78] sm:$0xff]
  %v401 = vld [vmem:[%s1 + $0xb80] sm:$0xff]
  %v402 = vld [vmem:[%s1 + $0xb88] sm:$0xff]
  %v403 = vld [vmem:[%s1 + $0xb90] sm:$0xff]
  %v404 = vld [vmem:[%s1 + $0xb98] sm:$0xff]
  %v405 = vld [vmem:[%s1 + $0xba0] sm:$0xff]
  %v406 = vld [vmem:[%s1 + $0xba8] sm:$0xff]
  %v407 = vld [vmem:[%s1 + $0xbb0] sm:$0xff]
  %v408 = vld [vmem:[%s1 + $0xbb8] sm:$0xff]
  %v409 = vld [vmem:[%s1 + $0xbc0] sm:$0xff]
  %v410 = vld [vmem:[%s1 + $0xbc8] sm:$0xff]
  %v411 = vld [vmem:[%s1 + $0xbd0] sm:$0xff]
  %v412 = vld [vmem:[%s1 + $0xbd8] sm:$0xff]
  %v413 = vld [vmem:[%s1 + $0xbe0] sm:$0xff]
  %v414 = vld [vmem:[%s1 + $0xbe8] sm:$0xff]
  %v415 = vld [vmem:[%s1 + $0xbf0] sm:$0xff]
  %v416 = vld [vmem:[%s1 + $0xbf8] sm:$0xff]
  %v417 = vld [vmem:[%s1 + $0xc00] sm:$0xff]
  %v418 = vld [vmem:[%s1 + $0xc08] sm:$0xff]
  %v419 = vld [vmem:[%s1 + $0xc10] sm:$0xff]
  %v420 = vld [vmem:[%s1 + $0xc18] sm:$0xff]
  %v421 = vld [vmem:[%s1 + $0xc20] sm:$0xff]
  %v422 = vld [vmem:[%s1 + $0xc28] sm:$0xff]
  %v423 = vld [vmem:[%s1 + $0xc30] sm:$0xff]
  %v424 = vld [vmem:[%s1 + $0xc38] sm:$0xff]
  %v425 = vld [vmem:[%s1 + $0xc40] sm:$0xff]
  %v426 = vld [vmem:[%s1 + $0xc48] sm:$0xff]
  %v427 = vld [vmem:[%s1 + $0xc50] sm:$0xff]
  %v428 = vld [vmem:[%s1 + $0xc58] sm:$0xff]
  %v429 = vld [vmem:[%s1 + $0xc60] sm:$0xff]
  %v430 = vld [vmem:[%s1 + $0xc68] sm:$0xff]
  %v431 = vld [vmem:[%s1 + $0xc70] sm:$0xff]
  %v432 = vld [vmem:[%s1 + $0xc78] sm:$0xff]
  %v433 = vld [vmem:[%s1 + $0xc80] sm:$0xff]
  %v434 = vld [vmem:[%s1 + $0xc88] sm:$0xff]
  %v435 = vld [vmem:[%s1 + $0xc90] sm:$0xff]
  %v436 = vld [vmem:[%s1 + $0xc98] sm:$0xff]
  %v437 = vld [vmem:[%s1 + $0xca0] sm:$0xff]
  %v438 = vld [vmem:[%s1 + $0xca8] sm:$0xff]
  %v439 = vld [vmem:[%s1 + $0xcb0] sm:$0xff]
  %v440 = vld [vmem:[%s1 + $0xcb8] sm:$0xff]
  %v441 = vld [vmem:[%s1 + $0xcc0] sm:$0xff]
  %v442 = vld [vmem:[%s1 + $0xcc8] sm:$0xff]
  %v443 = vld [vmem:[%s1 + $0xcd0] sm:$0xff]
  %v444 = vld [vmem:[%s1 + $0xcd8] sm:$0xff]
  %v445 = vld [vmem:[%s1 + $0xce0] sm:$0xff]
  %v446 = vld [vmem:[%s1 + $0xce8] sm:$0xff]
  %v447 = vld [vmem:[%s1 + $0xcf0] sm:$0xff]
  %v448 = vld [vmem:[%s1 + $0xcf8] sm:$0xff]
  %v449 = vld [vmem:[%s1 + $0xd00] sm:$0xff]
  %v450 = vld [vmem:[%s1 + $0xd08] sm:$0xff]
  %v451 = vld [vmem:[%s1 + $0xd10] sm:$0xff]
  %v452 = vld [vmem:[%s1 + $0xd18] sm:$0xff]
  %v453 = vld [vmem:[%s1 + $0xd20] sm:$0xff]
  %v454 = vld [vmem:[%s1 + $0xd28] sm:$0xff]
  %v455 = vld [vmem:[%s1 + $0xd30] sm:$0xff]
  %v456 = vld [vmem:[%s1 + $0xd38] sm:$0xff]
  %v457 = vld [vmem:[%s1 + $0xd40] sm:$0xff]
  %v458 = vld [vmem:[%s1 + $0xd48] sm:$0xff]
  %v459 = vld [vmem:[%s1 + $0xd50] sm:$0xff]
  %v460 = vld [vmem:[%s1 + $0xd58] sm:$0xff]
  %v461 = vld [vmem:[%s1 + $0xd60] sm:$0xff]
  %v462 = vld [vmem:[%s1 + $0xd68] sm:$0xff]
  %v463 = vld [vmem:[%s1 + $0xd70] sm:$0xff]
  %v464 = vld [vmem:[%s1 + $0xd78] sm:$0xff]
  %v465 = vld [vmem:[%s1 + $0xd80] sm:$0xff]
  %v466 = vld [vmem:[%s1 + $0xd88] sm:$0xff]
  %v467 = vld [vmem:[%s1 + $0xd90] sm:$0xff]
  %v468 = vld [vmem:[%s1 + $0xd98] sm:$0xff]
  %v469 = vld [vmem:[%s1 + $0xda0] sm:$0xff]
  %v470 = vld [vmem:[%s1 + $0xda8] sm:$0xff]
  %v471 = vld [vmem:[%s1 + $0xdb0] sm:$0xff]
  %v472 = vld [vmem:[%s1 + $0xdb8] sm:$0xff]
  %v473 = vld [vmem:[%s1 + $0xdc0] sm:$0xff]
  %v474 = vld [vmem:[%s1 + $0xdc8] sm:$0xff]
  %v475 = vld [vmem:[%s1 + $0xdd0] sm:$0xff]
  %v476 = vld [vmem:[%s1 + $0xdd8] sm:$0xff]
  %v477 = vld [vmem:[%s1 + $0xde0] sm:$0xff]
  %v478 = vld [vmem:[%s1 + $0xde8] sm:$0xff]
  %v479 = vld [vmem:[%s1 + $0xdf0] sm:$0xff]
  %v480 = vld [vmem:[%s1 + $0xdf8] sm:$0xff]
  %v481 = vld [vmem:[%s1 + $0xe00] sm:$0xff]
  %v482 = vld [vmem:[%s1 + $0xe08] sm:$0xff]
  %v483 = vld [vmem:[%s1 + $0xe10] sm:$0xff]
  %v484 = vld [vmem:[%s1 + $0xe18] sm:$0xff]
  %v485 = vld [vmem:[%s1 + $0xe20] sm:$0xff]
  %v486 = vld [vmem:[%s1 + $0xe28] sm:$0xff]
  %v487 = vld [vmem:[%s1 + $0xe30] sm:$0xff]
  %v488 = vld [vmem:[%s1 + $0xe38] sm:$0xff]
  %v489 = vld [vmem:[%s1 + $0xe40] sm:$0xff]
  %v490 = vld [vmem:[%s1 + $0xe48] sm:$0xff]
  %v491 = vld [vmem:[%s1 + $0xe50] sm:$0xff]
  %v492 = vld [vmem:[%s1 + $0xe58] sm:$0xff]
  %v493 = vld [vmem:[%s1 + $0xe60] sm:$0xff]
  %v494 = vld [vmem:[%s1 + $0xe68] sm:$0xff]
  %v495 = vld [vmem:[%s1 + $0xe70] sm:$0xff]
  %v496 = vld [vmem:[%s1 + $0xe78] sm:$0xff]
  %v497 = vld [vmem:[%s1 + $0xe80] sm:$0xff]
  %v498 = vld [vmem:[%s1 + $0xe88] sm:$0xff]
  %v499 = vld [vmem:[%s1 + $0xe90] sm:$0xff]
  %v500 = vld [vmem:[%s1 + $0xe98] sm:$0xff]
  %v501 = vld [vmem:[%s1 + $0xea0] sm:$0xff]
  %v502 = vld [vmem:[%s1 + $0xea8] sm:$0xff]
  %v503 = vld [vmem:[%s1 + $0xeb0] sm:$0xff]
  %v504 = vld [vmem:[%s1 + $0xeb8] sm:$0xff]
  %v505 = vld [vmem:[%s1 + $0xec0] sm:$0xff]
  %v506 = vld [vmem:[%s1 + $0xec8] sm:$0xff]
  %v507 = vld [vmem:[%s1 + $0xed0] sm:$0xff]
  %v508 = vld [vmem:[%s1 + $0xed8] sm:$0xff]
  %v509 = vld [vmem:[%s1 + $0xee0] sm:$0xff]
  %v510 = vld [vmem:[%s1 + $0xee8] sm:$0xff]
  %v511 = vld [vmem:[%s1 + $0xef0] sm:$0xff]
  %v512 = vld [vmem:[%s1 + $0xef8] sm:$0xff]
  %v513 = vld [vmem:[%s1 + $0xf00] sm:$0xff]
  %v514 = vld [vmem:[%s1 + $0xf08] sm:$0xff]
  %v515 = vld [vmem:[%s1 + $0xf10] sm:$0xff]
  %v516 = vld [vmem:[%s1 + $0xf18] sm:$0xff]
  %v517 = vld [vmem:[%s1 + $0xf20] sm:$0xff]
  %v518 = vld [vmem:[%s1 + $0xf28] sm:$0xff]
  %v519 = vld [vmem:[%s1 + $0xf30] sm:$0xff]
  %v520 = vld [vmem:[%s1 + $0xf38] sm:$0xff]
  %v521 = vld [vmem:[%s1 + $0xf40] sm:$0xff]
  %v522 = vld [vmem:[%s1 + $0xf48] sm:$0xff]
  %v523 = vld [vmem:[%s1 + $0xf50] sm:$0xff]
  %v524 = vld [vmem:[%s1 + $0xf58] sm:$0xff]
  %v525 = vld [vmem:[%s1 + $0xf60] sm:$0xff]
  %v526 = vld [vmem:[%s1 + $0xf68] sm:$0xff]
  %v527 = vld [vmem:[%s1 + $0xf70] sm:$0xff]
  %v528 = vld [vmem:[%s1 + $0xf78] sm:$0xff]
  %v529 = vld [vmem:[%s1 + $0xf80] sm:$0xff]
  %v530 = vld [vmem:[%s1 + $0xf88] sm:$0xff]
  %v531 = vld [vmem:[%s1 + $0xf90] sm:$0xff]
  %v532 = vld [vmem:[%s1 + $0xf98] sm:$0xff]
  %v533 = vld [vmem:[%s1 + $0xfa0] sm:$0xff]
  %v534 = vld [vmem:[%s1 + $0xfa8] sm:$0xff]
  %v535 = vld [vmem:[%s1 + $0xfb0] sm:$0xff]
  %v536 = vld [vmem:[%s1 + $0xfb8] sm:$0xff]
  %v537 = vld [vmem:[%s1 + $0xfc0] sm:$0xff]
  %v538 = vld [vmem:[%s1 + $0xfc8] sm:$0xff]
  %v539 = vld [vmem:[%s1 + $0xfd0] sm:$0xff]
  %v540 = vld [vmem:[%s1 + $0xfd8] sm:$0xff]
  %v541 = vld [vmem:[%s1 + $0xfe0] sm:$0xff]
  %v542 = vld [vmem:[%s1 + $0xfe8] sm:$0xff]
  %v543 = vld [vmem:[%s1 + $0xff0] sm:$0xff]
  %v544 = vld [vmem:[%s1 + $0xff8] sm:$0xff]
  %v545 = vld [vmem:[%s1 + $0x1000] sm:$0xff]
  %v546 = vld [vmem:[%s1 + $0x1008] sm:$0xff]
  %v547 = vld [vmem:[%s1 + $0x1010] sm:$0xff]
  %v548 = vld [vmem:[%s1 + $0x1018] sm:$0xff]
  %v549 = vld [vmem:[%s1 + $0x1020] sm:$0xff]
  %v550 = vld [vmem:[%s1 + $0x1028] sm:$0xff]
  %v551 = vld [vmem:[%s1 + $0x1030] sm:$0xff]
  %v552 = vld [vmem:[%s1 + $0x1038] sm:$0xff]
  %v553 = vld [vmem:[%s1 + $0x1040] sm:$0xff]
  %v554 = vld [vmem:[%s1 + $0x1048] sm:$0xff]
  %v555 = vld [vmem:[%s1 + $0x1050] sm:$0xff]
  %v556 = vld [vmem:[%s1 + $0x1058] sm:$0xff]
  %v557 = vld [vmem:[%s1 + $0x1060] sm:$0xff]
  %v558 = vld [vmem:[%s1 + $0x1068] sm:$0xff]
  %v559 = vld [vmem:[%s1 + $0x1070] sm:$0xff]
  %v560 = vld [vmem:[%s1 + $0x1078] sm:$0xff]
  %v561 = vld [vmem:[%s1 + $0x1080] sm:$0xff]
  %v562 = vld [vmem:[%s1 + $0x1088] sm:$0xff]
  %v563 = vld [vmem:[%s1 + $0x1090] sm:$0xff]
  %v564 = vld [vmem:[%s1 + $0x1098] sm:$0xff]
  %v565 = vld [vmem:[%s1 + $0x10a0] sm:$0xff]
  %v566 = vld [vmem:[%s1 + $0x10a8] sm:$0xff]
  %v567 = vld [vmem:[%s1 + $0x10b0] sm:$0xff]
  %v568 = vld [vmem:[%s1 + $0x10b8] sm:$0xff]
  %v569 = vld [vmem:[%s1 + $0x10c0] sm:$0xff]
  %v570 = vld [vmem:[%s1 + $0x10c8] sm:$0xff]
  %v571 = vld [vmem:[%s1 + $0x10d0] sm:$0xff]
  %v572 = vld [vmem:[%s1 + $0x10d8] sm:$0xff]
  %v573 = vld [vmem:[%s1 + $0x10e0] sm:$0xff]
  %v574 = vld [vmem:[%s1 + $0x10e8] sm:$0xff]
  %v575 = vld [vmem:[%s1 + $0x10f0] sm:$0xff]
  %v576 = vld [vmem:[%s1 + $0x10f8] sm:$0xff]
  %v577 = vld [vmem:[%s1 + $0x1100] sm:$0xff]
  %v578 = vld [vmem:[%s1 + $0x1108] sm:$0xff]
  %v579 = vld [vmem:[%s1 + $0x1110] sm:$0xff]
  %v580 = vld [vmem:[%s1 + $0x1118] sm:$0xff]
  %v581 = vld [vmem:[%s1 + $0x1120] sm:$0xff]
  %v582 = vld [vmem:[%s1 + $0x1128] sm:$0xff]
  %v583 = vld [vmem:[%s1 + $0x1130] sm:$0xff]
  %v584 = vld [vmem:[%s1 + $0x1138] sm:$0xff]
  %v585 = vld [vmem:[%s1 + $0x1140] sm:$0xff]
  %v586 = vld [vmem:[%s1 + $0x1148] sm:$0xff]
  %v587 = vld [vmem:[%s1 + $0x1150] sm:$0xff]
  %v588 = vld [vmem:[%s1 + $0x1158] sm:$0xff]
  %v589 = vld [vmem:[%s1 + $0x1160] sm:$0xff]
  %v590 = vld [vmem:[%s1 + $0x1168] sm:$0xff]
  %v591 = vld [vmem:[%s1 + $0x1170] sm:$0xff]
  %v592 = vld [vmem:[%s1 + $0x1178] sm:$0xff]
  %v593 = vld [vmem:[%s1 + $0x1180] sm:$0xff]
  %v594 = vld [vmem:[%s1 + $0x1188] sm:$0xff]
  %v595 = vld [vmem:[%s1 + $0x1190] sm:$0xff]
  %v596 = vld [vmem:[%s1 + $0x1198] sm:$0xff]
  %v597 = vld [vmem:[%s1 + $0x11a0] sm:$0xff]
  %v598 = vld [vmem:[%s1 + $0x11a8] sm:$0xff]
  %v599 = vld [vmem:[%s1 + $0x11b0] sm:$0xff]
  %v600 = vld [vmem:[%s1 + $0x11b8] sm:$0xff]
  %v601 = vld [vmem:[%s1 + $0x11c0] sm:$0xff]
  %v602 = vld [vmem:[%s1 + $0x11c8] sm:$0xff]
  %v603 = vld [vmem:[%s1 + $0x11d0] sm:$0xff]
  %v604 = vld [vmem:[%s1 + $0x11d8] sm:$0xff]
  %v605 = vld [vmem:[%s1 + $0x11e0] sm:$0xff]
  %v606 = vld [vmem:[%s1 + $0x11e8] sm:$0xff]
  %v607 = vld [vmem:[%s1 + $0x11f0] sm:$0xff]
  %v608 = vld [vmem:[%s1 + $0x11f8] sm:$0xff]
  %v609 = vld [vmem:[%s1 + $0x1200] sm:$0xff]
  %v610 = vld [vmem:[%s1 + $0x1208] sm:$0xff]
  %v611 = vld [vmem:[%s1 + $0x1210] sm:$0xff]
  %v612 = vld [vmem:[%s1 + $0x1218] sm:$0xff]
  %v613 = vld [vmem:[%s1 + $0x1220] sm:$0xff]
  %v614 = vld [vmem:[%s1 + $0x1228] sm:$0xff]
  %v615 = vld [vmem:[%s1 + $0x1230] sm:$0xff]
  %v616 = vld [vmem:[%s1 + $0x1238] sm:$0xff]
  %v617 = vld [vmem:[%s1 + $0x1240] sm:$0xff]
  %v618 = vld [vmem:[%s1 + $0x1248] sm:$0xff]
  %v619 = vld [vmem:[%s1 + $0x1250] sm:$0xff]
  %v620 = vld [vmem:[%s1 + $0x1258] sm:$0xff]
  %v621 = vld [vmem:[%s1 + $0x1260] sm:$0xff]
  %v622 = vld [vmem:[%s1 + $0x1268] sm:$0xff]
  %v623 = vld [vmem:[%s1 + $0x1270] sm:$0xff]
  %v624 = vld [vmem:[%s1 + $0x1278] sm:$0xff]
  %v625 = vld [vmem:[%s1 + $0x1280] sm:$0xff]
  %v626 = vld [vmem:[%s1 + $0x1288] sm:$0xff]
  %v627 = vld [vmem:[%s1 + $0x1290] sm:$0xff]
  %v628 = vld [vmem:[%s1 + $0x1298] sm:$0xff]
  %v629 = vld [vmem:[%s1 + $0x12a0] sm:$0xff]
  %v630 = vld [vmem:[%s1 + $0x12a8] sm:$0xff]
  %v631 = vld [vmem:[%s1 + $0x12b0] sm:$0xff]
  %v632 = vld [vmem:[%s1 + $0x12b8] sm:$0xff]
  %v633 = vld [vmem:[%s1 + $0x12c0] sm:$0xff]
  %v634 = vld [vmem:[%s1 + $0x12c8] sm:$0xff]
  %v635 = vld [vmem:[%s1 + $0x12d0] sm:$0xff]
  %v636 = vld [vmem:[%s1 + $0x12d8] sm:$0xff]
  %v637 = vld [vmem:[%s1 + $0x12e0] sm:$0xff]
  %v638 = vld [vmem:[%s1 + $0x12e8] sm:$0xff]
  %v639 = vld [vmem:[%s1 + $0x12f0] sm:$0xff]
  %v640 = vld [vmem:[%s1 + $0x12f8] sm:$0xff]
  %v641 = vld [vmem:[%s1 + $0x1300] sm:$0xff]
  %v642 = vld [vmem:[%s1 + $0x1308] sm:$0xff]
  %v643 = vld [vmem:[%s1 + $0x1310] sm:$0xff]
  %v644 = vld [vmem:[%s1 + $0x1318] sm:$0xff]
  %v645 = vld [vmem:[%s1 + $0x1320] sm:$0xff]
  %v646 = vld [vmem:[%s1 + $0x1328] sm:$0xff]
  %v647 = vld [vmem:[%s1 + $0x1330] sm:$0xff]
  %v648 = vld [vmem:[%s1 + $0x1338] sm:$0xff]
  %v649 = vld [vmem:[%s1 + $0x1340] sm:$0xff]
  %v650 = vld [vmem:[%s1 + $0x1348] sm:$0xff]
  %v651 = vld [vmem:[%s1 + $0x1350] sm:$0xff]
  %v652 = vld [vmem:[%s1 + $0x1358] sm:$0xff]
  %v653 = vld [vmem:[%s1 + $0x1360] sm:$0xff]
  %v654 = vld [vmem:[%s1 + $0x1368] sm:$0xff]
  %v655 = vld [vmem:[%s1 + $0x1370] sm:$0xff]
  %v656 = vld [vmem:[%s1 + $0x1378] sm:$0xff]
  %v657 = vld [vmem:[%s1 + $0x1380] sm:$0xff]
  %v658 = vld [vmem:[%s1 + $0x1388] sm:$0xff]
  %v659 = vld [vmem:[%s1 + $0x1390] sm:$0xff]
  %v660 = vld [vmem:[%s1 + $0x1398] sm:$0xff]
  %v661 = vld [vmem:[%s1 + $0x13a0] sm:$0xff]
  %v662 = vld [vmem:[%s1 + $0x13a8] sm:$0xff]
  %v663 = vld [vmem:[%s1 + $0x13b0] sm:$0xff]
  %v664 = vld [vmem:[%s1 + $0x13b8] sm:$0xff]
  %v665 = vld [vmem:[%s1 + $0x13c0] sm:$0xff]
  %v666 = vld [vmem:[%s1 + $0x13c8] sm:$0xff]
  %v667 = vld [vmem:[%s1 + $0x13d0] sm:$0xff]
  %v668 = vld [vmem:[%s1 + $0x13d8] sm:$0xff]
  %v669 = vld [vmem:[%s1 + $0x13e0] sm:$0xff]
  %v670 = vld [vmem:[%s1 + $0x13e8] sm:$0xff]
  %v671 = vld [vmem:[%s1 + $0x13f0] sm:$0xff]
  %v672 = vld [vmem:[%s1 + $0x13f8] sm:$0xff]
  %v673 = vld [vmem:[%s1 + $0x1400] sm:$0xff]
  %v674 = vld [vmem:[%s1 + $0x1408] sm:$0xff]
  %v675 = vld [vmem:[%s1 + $0x1410] sm:$0xff]
  %v676 = vld [vmem:[%s1 + $0x1418] sm:$0xff]
  %v677 = vld [vmem:[%s1 + $0x1420] sm:$0xff]
  %v678 = vld [vmem:[%s1 + $0x1428] sm:$0xff]
  %v679 = vld [vmem:[%s1 + $0x1430] sm:$0xff]
  %v680 = vld [vmem:[%s1 + $0x1438] sm:$0xff]
  %v681 = vld [vmem:[%s1 + $0x1440] sm:$0xff]
  %v682 = vld [vmem:[%s1 + $0x1448] sm:$0xff]
  %v683 = vld [vmem:[%s1 + $0x1450] sm:$0xff]
  %v684 = vld [vmem:[%s1 + $0x1458] sm:$0xff]
  %v685 = vld [vmem:[%s1 + $0x1460] sm:$0xff]
  %v686 = vld [vmem:[%s1 + $0x1468] sm:$0xff]
  %v687 = vld [vmem:[%s1 + $0x1470] sm:$0xff]
  %v688 = vld [vmem:[%s1 + $0x1478] sm:$0xff]
  %v689 = vld [vmem:[%s1 + $0x1480] sm:$0xff]
  %v690 = vld [vmem:[%s1 + $0x1488] sm:$0xff]
  %v691 = vld [vmem:[%s1 + $0x1490] sm:$0xff]
  %v692 = vld [vmem:[%s1 + $0x1498] sm:$0xff]
  %v693 = vld [vmem:[%s1 + $0x14a0] sm:$0xff]
  %v694 = vld [vmem:[%s1 + $0x14a8] sm:$0xff]
  %v695 = vld [vmem:[%s1 + $0x14b0] sm:$0xff]
  %v696 = vld [vmem:[%s1 + $0x14b8] sm:$0xff]
  %v697 = vld [vmem:[%s1 + $0x14c0] sm:$0xff]
  %v698 = vld [vmem:[%s1 + $0x14c8] sm:$0xff]
  %v699 = vld [vmem:[%s1 + $0x14d0] sm:$0xff]
  %v700 = vld [vmem:[%s1 + $0x14d8] sm:$0xff]
  %v701 = vld [vmem:[%s1 + $0x14e0] sm:$0xff]
  %v702 = vld [vmem:[%s1 + $0x14e8] sm:$0xff]
  %v703 = vld [vmem:[%s1 + $0x14f0] sm:$0xff]
  %v704 = vld [vmem:[%s1 + $0x14f8] sm:$0xff]
  %v705 = vld [vmem:[%s1 + $0x1500] sm:$0xff]
  %v706 = vld [vmem:[%s1 + $0x1508] sm:$0xff]
  %v707 = vld [vmem:[%s1 + $0x1510] sm:$0xff]
  %v708 = vld [vmem:[%s1 + $0x1518] sm:$0xff]
  %v709 = vld [vmem:[%s1 + $0x1520] sm:$0xff]
  %v710 = vld [vmem:[%s1 + $0x1528] sm:$0xff]
  %v711 = vld [vmem:[%s1 + $0x1530] sm:$0xff]
  %v712 = vld [vmem:[%s1 + $0x1538] sm:$0xff]
  %v713 = vld [vmem:[%s1 + $0x1540] sm:$0xff]
  %v714 = vld [vmem:[%s1 + $0x1548] sm:$0xff]
  %v715 = vld [vmem:[%s1 + $0x1550] sm:$0xff]
  %v716 = vld [vmem:[%s1 + $0x1558] sm:$0xff]
  %v717 = vld [vmem:[%s1 + $0x1560] sm:$0xff]
  %v718 = vld [vmem:[%s1 + $0x1568] sm:$0xff]
  %v719 = vld [vmem:[%s1 + $0x1570] sm:$0xff]
  %v720 = vld [vmem:[%s1 + $0x1578] sm:$0xff]
  %v721 = vld [vmem:[%s1 + $0x1580] sm:$0xff]
  %v722 = vld [vmem:[%s1 + $0x1588] sm:$0xff]
  %v723 = vld [vmem:[%s1 + $0x1590] sm:$0xff]
  %v724 = vld [vmem:[%s1 + $0x1598] sm:$0xff]
  %v725 = vld [vmem:[%s1 + $0x15a0] sm:$0xff]
  %v726 = vld [vmem:[%s1 + $0x15a8] sm:$0xff]
  %v727 = vld [vmem:[%s1 + $0x15b0] sm:$0xff]
  %v728 = vld [vmem:[%s1 + $0x15b8] sm:$0xff]
  %v729 = vld [vmem:[%s1 + $0x15c0] sm:$0xff]
  %v730 = vld [vmem:[%s1 + $0x15c8] sm:$0xff]
  %v731 = vld [vmem:[%s1 + $0x15d0] sm:$0xff]
  %v732 = vld [vmem:[%s1 + $0x15d8] sm:$0xff]
  %v733 = vld [vmem:[%s1 + $0x15e0] sm:$0xff]
  %v734 = vld [vmem:[%s1 + $0x15e8] sm:$0xff]
  %v735 = vld [vmem:[%s1 + $0x15f0] sm:$0xff]
  %v736 = vld [vmem:[%s1 + $0x15f8] sm:$0xff]
  %v737 = vld [vmem:[%s1 + $0x1600] sm:$0xff]
  %v738 = vld [vmem:[%s1 + $0x1608] sm:$0xff]
  %v739 = vld [vmem:[%s1 + $0x1610] sm:$0xff]
  %v740 = vld [vmem:[%s1 + $0x1618] sm:$0xff]
  %v741 = vld [vmem:[%s1 + $0x1620] sm:$0xff]
  %v742 = vld [vmem:[%s1 + $0x1628] sm:$0xff]
  %v743 = vld [vmem:[%s1 + $0x1630] sm:$0xff]
  %v744 = vld [vmem:[%s1 + $0x1638] sm:$0xff]
  %v745 = vld [vmem:[%s1 + $0x1640] sm:$0xff]
  %v746 = vld [vmem:[%s1 + $0x1648] sm:$0xff]
  %v747 = vld [vmem:[%s1 + $0x1650] sm:$0xff]
  %v748 = vld [vmem:[%s1 + $0x1658] sm:$0xff]
  %v749 = vld [vmem:[%s1 + $0x1660] sm:$0xff]
  %v750 = vld [vmem:[%s1 + $0x1668] sm:$0xff]
  %v751 = vld [vmem:[%s1 + $0x1670] sm:$0xff]
  %v752 = vld [vmem:[%s1 + $0x1678] sm:$0xff]
  %v753 = vld [vmem:[%s1 + $0x1680] sm:$0xff]
  %v754 = vld [vmem:[%s1 + $0x1688] sm:$0xff]
  %v755 = vld [vmem:[%s1 + $0x1690] sm:$0xff]
  %v756 = vld [vmem:[%s1 + $0x1698] sm:$0xff]
  %v757 = vld [vmem:[%s1 + $0x16a0] sm:$0xff]
  %v758 = vld [vmem:[%s1 + $0x16a8] sm:$0xff]
  %v759 = vld [vmem:[%s1 + $0x16b0] sm:$0xff]
  %v760 = vld [vmem:[%s1 + $0x16b8] sm:$0xff]
  %v761 = vld [vmem:[%s1 + $0x16c0] sm:$0xff]
  %v762 = vld [vmem:[%s1 + $0x16c8] sm:$0xff]
  %v763 = vld [vmem:[%s1 + $0x16d0] sm:$0xff]
  %v764 = vld [vmem:[%s1 + $0x16d8] sm:$0xff]
  %v765 = vld [vmem:[%s1 + $0x16e0] sm:$0xff]
  %v766 = vld [vmem:[%s1 + $0x16e8] sm:$0xff]
  %v767 = vld [vmem:[%s1 + $0x16f0] sm:$0xff]
  %v768 = vld [vmem:[%s1 + $0x16f8] sm:$0xff]
  %v769 = vld [vmem:[%s1 + $0x1700] sm:$0xff]
  %v770 = vld [vmem:[%s1 + $0x1708] sm:$0xff]
  %v771 = vld [vmem:[%s1 + $0x1710] sm:$0xff]
  %v772 = vld [vmem:[%s1 + $0x1718] sm:$0xff]
  %v773 = vld [vmem:[%s1 + $0x1720] sm:$0xff]
  %v774 = vld [vmem:[%s1 + $0x1728] sm:$0xff]
  %v775 = vld [vmem:[%s1 + $0x1730] sm:$0xff]
  %v776 = vld [vmem:[%s1 + $0x1738] sm:$0xff]
  %v777 = vld [vmem:[%s1 + $0x1740] sm:$0xff]
  %v778 = vld [vmem:[%s1 + $0x1748] sm:$0xff]
  %v779 = vld [vmem:[%s1 + $0x1750] sm:$0xff]
  %v780 = vld [vmem:[%s1 + $0x1758] sm:$0xff]
  %v781 = vld [vmem:[%s1 + $0x1760] sm:$0xff]
  %v782 = vld [vmem:[%s1 + $0x1768] sm:$0xff]
  %v783 = vld [vmem:[%s1 + $0x1770] sm:$0xff]
  %v784 = vld [vmem:[%s1 + $0x1778] sm:$0xff]
  %v785 = vld [vmem:[%s1 + $0x1780] sm:$0xff]
  %v786 = vld [vmem:[%s1 + $0x1788] sm:$0xff]
  %v787 = vld [vmem:[%s1 + $0x1790] sm:$0xff]
  %v788 = vld [vmem:[%s1 + $0x1798] sm:$0xff]
  %v789 = vld [vmem:[%s1 + $0x17a0] sm:$0xff]
  %v790 = vld [vmem:[%s1 + $0x17a8] sm:$0xff]
  %v791 = vld [vmem:[%s1 + $0x17b0] sm:$0xff]
  %v792 = vld [vmem:[%s1 + $0x17b8] sm:$0xff]
  %v793 = vld [vmem:[%s1 + $0x17c0] sm:$0xff]
  %v794 = vld [vmem:[%s1 + $0x17c8] sm:$0xff]
  %v795 = vld [vmem:[%s1 + $0x17d0] sm:$0xff]
  %v796 = vld [vmem:[%s1 + $0x17d8] sm:$0xff]
  %v797 = vld [vmem:[%s1 + $0x17e0] sm:$0xff]
  %v798 = vld [vmem:[%s1 + $0x17e8] sm:$0xff]
  %v799 = vld [vmem:[%s1 + $0x17f0] sm:$0xff]
  %v800 = vld [vmem:[%s1 + $0x17f8] sm:$0xff]
  %v801 = vld [vmem:[%s1 + $0x1800] sm:$0xff]
  %v802 = vld [vmem:[%s1 + $0x1808] sm:$0xff]
  %v803 = vld [vmem:[%s1 + $0x1810] sm:$0xff]
  %v804 = vld [vmem:[%s1 + $0x1818] sm:$0xff]
  %v805 = vld [vmem:[%s1 + $0x1820] sm:$0xff]
  %v806 = vld [vmem:[%s1 + $0x1828] sm:$0xff]
  %v807 = vld [vmem:[%s1 + $0x1830] sm:$0xff]
  %v808 = vld [vmem:[%s1 + $0x1838] sm:$0xff]
  %v809 = vld [vmem:[%s1 + $0x1840] sm:$0xff]
  %v810 = vld [vmem:[%s1 + $0x1848] sm:$0xff]
  %v811 = vld [vmem:[%s1 + $0x1850] sm:$0xff]
  %v812 = vld [vmem:[%s1 + $0x1858] sm:$0xff]
  %v813 = vld [vmem:[%s1 + $0x1860] sm:$0xff]
  %v814 = vld [vmem:[%s1 + $0x1868] sm:$0xff]
  %v815 = vld [vmem:[%s2] sm:$0x3]
  %v817 = vlaneseq
  %v818 = vshrl.u32 %v817, 7
  %v819 = vsub.s32 0, %v818
  %v820 = vrot.slane %v815, %v819
  %v821 = vlaneseq
  %v822 = vshrl.u32 %v821, 7
  %v823 = vsub.s32 1, %v822
  %v824 = vrot.slane %v815, %v823
  %v834 = vcombine.high %v26, %v26
  %v836 = vunpack.c.l.s4 1983009808
  %v837 = vunpack.c.0.s8 %v836
  %v838 = vlaneseq
  %v839 = vshrl.u32 %v838, 7
  %v840 = vsub.s32 %v837, %v839
  %v841 = vrot.slane %v26, %v840
  %v843 = vunpack.c.l.s4 1983009808
  %v844 = vunpack.c.0.s8 %v843
  %v845 = vlaneseq
  %v846 = vshrl.u32 %v845, 7
  %v847 = vsub.s32 %v844, %v846
  %v848 = vrot.slane %v834, %v847
  %v849 = vcombine.high %v841, %v841
  %v850 = vcombine.high %v848, %v848
  %v851 = vcombine.high %v27, %v27
  %v853 = vunpack.c.l.s4 1983009808
  %v854 = vunpack.c.0.s8 %v853
  %v855 = vlaneseq
  %v856 = vshrl.u32 %v855, 7
  %v857 = vsub.s32 %v854, %v856
  %v858 = vrot.slane %v27, %v857
  %v860 = vunpack.c.l.s4 1983009808
  %v861 = vunpack.c.0.s8 %v860
  %v862 = vlaneseq
  %v863 = vshrl.u32 %v862, 7
  %v864 = vsub.s32 %v861, %v863
  %v865 = vrot.slane %v851, %v864
  %v866 = vcombine.high %v858, %v858
  %v867 = vcombine.high %v865, %v865
  %v868 = vcombine.high %v28, %v28
  %v870 = vunpack.c.l.s4 1983009808
  %v871 = vunpack.c.0.s8 %v870
  %v872 = vlaneseq
  %v873 = vshrl.u32 %v872, 7
  %v874 = vsub.s32 %v871, %v873
  %v875 = vrot.slane %v28, %v874
  %v877 = vunpack.c.l.s4 1983009808
  %v878 = vunpack.c.0.s8 %v877
  %v879 = vlaneseq
  %v880 = vshrl.u32 %v879, 7
  %v881 = vsub.s32 %v878, %v880
  %v882 = vrot.slane %v868, %v881
  %v883 = vcombine.high %v875, %v875
  %v884 = vcombine.high %v882, %v882
  %v885 = vcombine.high %v29, %v29
  %v887 = vunpack.c.l.s4 1983009808
  %v888 = vunpack.c.0.s8 %v887
  %v889 = vlaneseq
  %v890 = vshrl.u32 %v889, 7
  %v891 = vsub.s32 %v888, %v890
  %v892 = vrot.slane %v29, %v891
  %v894 = vunpack.c.l.s4 1983009808
  %v895 = vunpack.c.0.s8 %v894
  %v896 = vlaneseq
  %v897 = vshrl.u32 %v896, 7
  %v898 = vsub.s32 %v895, %v897
  %v899 = vrot.slane %v885, %v898
  %v900 = vcombine.high %v892, %v892
  %v901 = vcombine.high %v899, %v899
  %v902 = vcombine.high %v30, %v30
  %v904 = vunpack.c.l.s4 1983009808
  %v905 = vunpack.c.0.s8 %v904
  %v906 = vlaneseq
  %v907 = vshrl.u32 %v906, 7
  %v908 = vsub.s32 %v905, %v907
  %v909 = vrot.slane %v30, %v908
  %v911 = vunpack.c.l.s4 1983009808
  %v912 = vunpack.c.0.s8 %v911
  %v913 = vlaneseq
  %v914 = vshrl.u32 %v913, 7
  %v915 = vsub.s32 %v912, %v914
  %v916 = vrot.slane %v902, %v915
  %v917 = vcombine.high %v909, %v909
  %v918 = vcombine.high %v916, %v916
  %v919 = vcombine.high %v31, %v31
  %v921 = vunpack.c.l.s4 1983009808
  %v922 = vunpack.c.0.s8 %v921
  %v923 = vlaneseq
  %v924 = vshrl.u32 %v923, 7
  %v925 = vsub.s32 %v922, %v924
  %v926 = vrot.slane %v31, %v925
  %v928 = vunpack.c.l.s4 1983009808
  %v929 = vunpack.c.0.s8 %v928
  %v930 = vlaneseq
  %v931 = vshrl.u32 %v930, 7
  %v932 = vsub.s32 %v929, %v931
  %v933 = vrot.slane %v919, %v932
  %v934 = vcombine.high %v926, %v926
  %v935 = vcombine.high %v933, %v933
  %v937 = vunpack.c.l.s4 1983009808
  %v938 = vunpack.c.0.s8 %v937
  %v939 = vlaneseq
  %v940 = vshrl.u32 %v939, 7
  %v941 = vsub.s32 %v938, %v940
  %v942 = vrot.slane %v32, %v941
  %vm967 = vcmask 457728
  %v968 = vsel %vm967, %v942, 0
  %970 = vmatprep.subr.mxu0 %v64
  %971 = vmatpush1.msra.mxu0 %v63
  %972 = vmatprep.subr.mxu0 %v62
  %973 = vmatpush1.msra.mxu0 %v61
  %974 = vmatprep.subr.mxu0 %v60
  %975 = vmatpush1.msra.mxu0 %v59
  %976 = vmatprep.subr.mxu0 %v58
  %977 = vmatpush1.msra.mxu0 %v57
  %978 = vmatprep.subr.mxu0 %v56
  %979 = vmatpush1.msra.mxu0 %v55
  %980 = vmatprep.subr.mxu0 %v54
  %981 = vmatpush1.msra.mxu0 %v53
  %982 = vmatprep.subr.mxu0 %v52
  %983 = vmatpush1.msra.mxu0 %v51
  %984 = vmatprep.subr.mxu0 %v50
  %985 = vmatpush1.msra.mxu0 %v49
  %986 = vmatprep.subr.mxu0 %v48
  %987 = vmatpush1.msra.mxu0 %v47
  %988 = vmatprep.subr.mxu0 %v46
  %989 = vmatpush1.msra.mxu0 %v45
  %990 = vmatprep.subr.mxu0 %v44
  %991 = vmatpush1.msra.mxu0 %v43
  %992 = vmatprep.subr.mxu0 %v42
  %993 = vmatpush1.msra.mxu0 %v41
  %994 = vmatprep.subr.mxu0 %v40
  %995 = vmatpush1.msra.mxu0 %v39
  %996 = vmatprep.subr.mxu0 %v38
  %997 = vmatpush1.msra.mxu0 %v37
  %998 = vmatprep.subr.mxu0 %v36
  %999 = vmatpush1.msra.mxu0 %v35
  %1000 = vmatprep.subr.mxu0 %v34
  %1001 = vmatpush1.msra.mxu0 %v33
  %1002 = vmatprep.subr.mxu0 %v96
  %1003 = vmatpush2.msra.mxu0 %v95
  %1004 = vmatprep.subr.mxu0 %v94
  %1005 = vmatpush2.msra.mxu0 %v93
  %1006 = vmatprep.subr.mxu0 %v92
  %1007 = vmatpush2.msra.mxu0 %v91
  %1008 = vmatprep.subr.mxu0 %v90
  %1009 = vmatpush2.msra.mxu0 %v89
  %1010 = vmatprep.subr.mxu0 %v88
  %1011 = vmatpush2.msra.mxu0 %v87
  %1012 = vmatprep.subr.mxu0 %v86
  %1013 = vmatpush2.msra.mxu0 %v85
  %1014 = vmatprep.subr.mxu0 %v84
  %1015 = vmatpush2.msra.mxu0 %v83
  %1016 = vmatprep.subr.mxu0 %v82
  %1017 = vmatpush2.msra.mxu0 %v81
  %1018 = vmatprep.subr.mxu0 %v80
  %1019 = vmatpush2.msra.mxu0 %v79
  %1020 = vmatprep.subr.mxu0 %v78
  %1021 = vmatpush2.msra.mxu0 %v77
  %1022 = vmatprep.subr.mxu0 %v76
  %1023 = vmatpush2.msra.mxu0 %v75
  %1024 = vmatprep.subr.mxu0 %v74
  %1025 = vmatpush2.msra.mxu0 %v73
  %1026 = vmatprep.subr.mxu0 %v72
  %1027 = vmatpush2.msra.mxu0 %v71
  %1028 = vmatprep.subr.mxu0 %v70
  %1029 = vmatpush2.msra.mxu0 %v69
  %1030 = vmatprep.subr.mxu0 %v68
  %1031 = vmatpush2.msra.mxu0 %v67
  %1032 = vmatprep.subr.mxu0 %v66
  %1033 = vmatpush2.msra.mxu0 %v65
  %1034 = vmatprep.mubr.f32.mxu0 %v849
  %1035 = vmatmul.mubr.f32.gmra.mxu0 %v841
  %v1036 = vpop.f32.mrf.mxu0
  %v1037 = vadd.f32 %v820, %v1036
  %v1038 = vpop.f32.mrf.mxu0
  %v1039 = vadd.f32 %v824, %v1038
  %1040 = vdwg.mxu0
  %1041 = vmatprep.subr.mxu0 %v128
  %1042 = vmatpush1.msra.mxu0 %v127
  %1043 = vmatprep.subr.mxu0 %v126
  %1044 = vmatpush1.msra.mxu0 %v125
  %1045 = vmatprep.subr.mxu0 %v124
  %1046 = vmatpush1.msra.mxu0 %v123
  %1047 = vmatprep.subr.mxu0 %v122
  %1048 = vmatpush1.msra.mxu0 %v121
  %1049 = vmatprep.subr.mxu0 %v120
  %1050 = vmatpush1.msra.mxu0 %v119
  %1051 = vmatprep.subr.mxu0 %v118
  %1052 = vmatpush1.msra.mxu0 %v117
  %1053 = vmatprep.subr.mxu0 %v116
  %1054 = vmatpush1.msra.mxu0 %v115
  %1055 = vmatprep.subr.mxu0 %v114
  %1056 = vmatpush1.msra.mxu0 %v113
  %1057 = vmatprep.subr.mxu0 %v112
  %1058 = vmatpush1.msra.mxu0 %v111
  %1059 = vmatprep.subr.mxu0 %v110
  %1060 = vmatpush1.msra.mxu0 %v109
  %1061 = vmatprep.subr.mxu0 %v108
  %1062 = vmatpush1.msra.mxu0 %v107
  %1063 = vmatprep.subr.mxu0 %v106
  %1064 = vmatpush1.msra.mxu0 %v105
  %1065 = vmatprep.subr.mxu0 %v104
  %1066 = vmatpush1.msra.mxu0 %v103
  %1067 = vmatprep.subr.mxu0 %v102
  %1068 = vmatpush1.msra.mxu0 %v101
  %1069 = vmatprep.subr.mxu0 %v100
  %1070 = vmatpush1.msra.mxu0 %v99
  %1071 = vmatprep.subr.mxu0 %v98
  %1072 = vmatpush1.msra.mxu0 %v97
  %1073 = vmatprep.subr.mxu0 %v160
  %1074 = vmatpush2.msra.mxu0 %v159
  %1075 = vmatprep.subr.mxu0 %v158
  %1076 = vmatpush2.msra.mxu0 %v157
  %1077 = vmatprep.subr.mxu0 %v156
  %1078 = vmatpush2.msra.mxu0 %v155
  %1079 = vmatprep.subr.mxu0 %v154
  %1080 = vmatpush2.msra.mxu0 %v153
  %1081 = vmatprep.subr.mxu0 %v152
  %1082 = vmatpush2.msra.mxu0 %v151
  %1083 = vmatprep.subr.mxu0 %v150
  %1084 = vmatpush2.msra.mxu0 %v149
  %1085 = vmatprep.subr.mxu0 %v148
  %1086 = vmatpush2.msra.mxu0 %v147
  %1087 = vmatprep.subr.mxu0 %v146
  %1088 = vmatpush2.msra.mxu0 %v145
  %1089 = vmatprep.subr.mxu0 %v144
  %1090 = vmatpush2.msra.mxu0 %v143
  %1091 = vmatprep.subr.mxu0 %v142
  %1092 = vmatpush2.msra.mxu0 %v141
  %1093 = vmatprep.subr.mxu0 %v140
  %1094 = vmatpush2.msra.mxu0 %v139
  %1095 = vmatprep.subr.mxu0 %v138
  %1096 = vmatpush2.msra.mxu0 %v137
  %1097 = vmatprep.subr.mxu0 %v136
  %1098 = vmatpush2.msra.mxu0 %v135
  %1099 = vmatprep.subr.mxu0 %v134
  %1100 = vmatpush2.msra.mxu0 %v133
  %1101 = vmatprep.subr.mxu0 %v132
  %1102 = vmatpush2.msra.mxu0 %v131
  %1103 = vmatprep.subr.mxu0 %v130
  %1104 = vmatpush2.msra.mxu0 %v129
  %1105 = vmatprep.mubr.f32.mxu0 %v850
  %1106 = vmatmul.mubr.f32.gmra.mxu0 %v848
  %v1107 = vpop.f32.mrf.mxu0
  %v1108 = vadd.f32 %v1037, %v1107
  %v1109 = vpop.f32.mrf.mxu0
  %v1110 = vadd.f32 %v1039, %v1109
  %1111 = vdwg.mxu0
  %1112 = vmatprep.subr.mxu0 %v192
  %1113 = vmatpush1.msra.mxu0 %v191
  %1114 = vmatprep.subr.mxu0 %v190
  %1115 = vmatpush1.msra.mxu0 %v189
  %1116 = vmatprep.subr.mxu0 %v188
  %1117 = vmatpush1.msra.mxu0 %v187
  %1118 = vmatprep.subr.mxu0 %v186
  %1119 = vmatpush1.msra.mxu0 %v185
  %1120 = vmatprep.subr.mxu0 %v184
  %1121 = vmatpush1.msra.mxu0 %v183
  %1122 = vmatprep.subr.mxu0 %v182
  %1123 = vmatpush1.msra.mxu0 %v181
  %1124 = vmatprep.subr.mxu0 %v180
  %1125 = vmatpush1.msra.mxu0 %v179
  %1126 = vmatprep.subr.mxu0 %v178
  %1127 = vmatpush1.msra.mxu0 %v177
  %1128 = vmatprep.subr.mxu0 %v176
  %1129 = vmatpush1.msra.mxu0 %v175
  %1130 = vmatprep.subr.mxu0 %v174
  %1131 = vmatpush1.msra.mxu0 %v173
  %1132 = vmatprep.subr.mxu0 %v172
  %1133 = vmatpush1.msra.mxu0 %v171
  %1134 = vmatprep.subr.mxu0 %v170
  %1135 = vmatpush1.msra.mxu0 %v169
  %1136 = vmatprep.subr.mxu0 %v168
  %1137 = vmatpush1.msra.mxu0 %v167
  %1138 = vmatprep.subr.mxu0 %v166
  %1139 = vmatpush1.msra.mxu0 %v165
  %1140 = vmatprep.subr.mxu0 %v164
  %1141 = vmatpush1.msra.mxu0 %v163
  %1142 = vmatprep.subr.mxu0 %v162
  %1143 = vmatpush1.msra.mxu0 %v161
  %1144 = vmatprep.subr.mxu0 %v224
  %1145 = vmatpush2.msra.mxu0 %v223
  %1146 = vmatprep.subr.mxu0 %v222
  %1147 = vmatpush2.msra.mxu0 %v221
  %1148 = vmatprep.subr.mxu0 %v220
  %1149 = vmatpush2.msra.mxu0 %v219
  %1150 = vmatprep.subr.mxu0 %v218
  %1151 = vmatpush2.msra.mxu0 %v217
  %1152 = vmatprep.subr.mxu0 %v216
  %1153 = vmatpush2.msra.mxu0 %v215
  %1154 = vmatprep.subr.mxu0 %v214
  %1155 = vmatpush2.msra.mxu0 %v213
  %1156 = vmatprep.subr.mxu0 %v212
  %1157 = vmatpush2.msra.mxu0 %v211
  %1158 = vmatprep.subr.mxu0 %v210
  %1159 = vmatpush2.msra.mxu0 %v209
  %1160 = vmatprep.subr.mxu0 %v208
  %1161 = vmatpush2.msra.mxu0 %v207
  %1162 = vmatprep.subr.mxu0 %v206
  %1163 = vmatpush2.msra.mxu0 %v205
  %1164 = vmatprep.subr.mxu0 %v204
  %1165 = vmatpush2.msra.mxu0 %v203
  %1166 = vmatprep.subr.mxu0 %v202
  %1167 = vmatpush2.msra.mxu0 %v201
  %1168 = vmatprep.subr.mxu0 %v200
  %1169 = vmatpush2.msra.mxu0 %v199
  %1170 = vmatprep.subr.mxu0 %v198
  %1171 = vmatpush2.msra.mxu0 %v197
  %1172 = vmatprep.subr.mxu0 %v196
  %1173 = vmatpush2.msra.mxu0 %v195
  %1174 = vmatprep.subr.mxu0 %v194
  %1175 = vmatpush2.msra.mxu0 %v193
  %1176 = vmatprep.mubr.f32.mxu0 %v866
  %1177 = vmatmul.mubr.f32.gmra.mxu0 %v858
  %v1178 = vpop.f32.mrf.mxu0
  %v1179 = vadd.f32 %v1108, %v1178
  %v1180 = vpop.f32.mrf.mxu0
  %v1181 = vadd.f32 %v1110, %v1180
  %1182 = vdwg.mxu0
  %1183 = vmatprep.subr.mxu0 %v256
  %1184 = vmatpush1.msra.mxu0 %v255
  %1185 = vmatprep.subr.mxu0 %v254
  %1186 = vmatpush1.msra.mxu0 %v253
  %1187 = vmatprep.subr.mxu0 %v252
  %1188 = vmatpush1.msra.mxu0 %v251
  %1189 = vmatprep.subr.mxu0 %v250
  %1190 = vmatpush1.msra.mxu0 %v249
  %1191 = vmatprep.subr.mxu0 %v248
  %1192 = vmatpush1.msra.mxu0 %v247
  %1193 = vmatprep.subr.mxu0 %v246
  %1194 = vmatpush1.msra.mxu0 %v245
  %1195 = vmatprep.subr.mxu0 %v244
  %1196 = vmatpush1.msra.mxu0 %v243
  %1197 = vmatprep.subr.mxu0 %v242
  %1198 = vmatpush1.msra.mxu0 %v241
  %1199 = vmatprep.subr.mxu0 %v240
  %1200 = vmatpush1.msra.mxu0 %v239
  %1201 = vmatprep.subr.mxu0 %v238
  %1202 = vmatpush1.msra.mxu0 %v237
  %1203 = vmatprep.subr.mxu0 %v236
  %1204 = vmatpush1.msra.mxu0 %v235
  %1205 = vmatprep.subr.mxu0 %v234
  %1206 = vmatpush1.msra.mxu0 %v233
  %1207 = vmatprep.subr.mxu0 %v232
  %1208 = vmatpush1.msra.mxu0 %v231
  %1209 = vmatprep.subr.mxu0 %v230
  %1210 = vmatpush1.msra.mxu0 %v229
  %1211 = vmatprep.subr.mxu0 %v228
  %1212 = vmatpush1.msra.mxu0 %v227
  %1213 = vmatprep.subr.mxu0 %v226
  %1214 = vmatpush1.msra.mxu0 %v225
  %1215 = vmatprep.subr.mxu0 %v288
  %1216 = vmatpush2.msra.mxu0 %v287
  %1217 = vmatprep.subr.mxu0 %v286
  %1218 = vmatpush2.msra.mxu0 %v285
  %1219 = vmatprep.subr.mxu0 %v284
  %1220 = vmatpush2.msra.mxu0 %v283
  %1221 = vmatprep.subr.mxu0 %v282
  %1222 = vmatpush2.msra.mxu0 %v281
  %1223 = vmatprep.subr.mxu0 %v280
  %1224 = vmatpush2.msra.mxu0 %v279
  %1225 = vmatprep.subr.mxu0 %v278
  %1226 = vmatpush2.msra.mxu0 %v277
  %1227 = vmatprep.subr.mxu0 %v276
  %1228 = vmatpush2.msra.mxu0 %v275
  %1229 = vmatprep.subr.mxu0 %v274
  %1230 = vmatpush2.msra.mxu0 %v273
  %1231 = vmatprep.subr.mxu0 %v272
  %1232 = vmatpush2.msra.mxu0 %v271
  %1233 = vmatprep.subr.mxu0 %v270
  %1234 = vmatpush2.msra.mxu0 %v269
  %1235 = vmatprep.subr.mxu0 %v268
  %1236 = vmatpush2.msra.mxu0 %v267
  %1237 = vmatprep.subr.mxu0 %v266
  %1238 = vmatpush2.msra.mxu0 %v265
  %1239 = vmatprep.subr.mxu0 %v264
  %1240 = vmatpush2.msra.mxu0 %v263
  %1241 = vmatprep.subr.mxu0 %v262
  %1242 = vmatpush2.msra.mxu0 %v261
  %1243 = vmatprep.subr.mxu0 %v260
  %1244 = vmatpush2.msra.mxu0 %v259
  %1245 = vmatprep.subr.mxu0 %v258
  %1246 = vmatpush2.msra.mxu0 %v257
  %1247 = vmatprep.mubr.f32.mxu0 %v867
  %1248 = vmatmul.mubr.f32.gmra.mxu0 %v865
  %v1249 = vpop.f32.mrf.mxu0
  %v1250 = vadd.f32 %v1179, %v1249
  %v1251 = vpop.f32.mrf.mxu0
  %v1252 = vadd.f32 %v1181, %v1251
  %1253 = vdwg.mxu0
  %1254 = vmatprep.subr.mxu0 %v320
  %1255 = vmatpush1.msra.mxu0 %v319
  %1256 = vmatprep.subr.mxu0 %v318
  %1257 = vmatpush1.msra.mxu0 %v317
  %1258 = vmatprep.subr.mxu0 %v316
  %1259 = vmatpush1.msra.mxu0 %v315
  %1260 = vmatprep.subr.mxu0 %v314
  %1261 = vmatpush1.msra.mxu0 %v313
  %1262 = vmatprep.subr.mxu0 %v312
  %1263 = vmatpush1.msra.mxu0 %v311
  %1264 = vmatprep.subr.mxu0 %v310
  %1265 = vmatpush1.msra.mxu0 %v309
  %1266 = vmatprep.subr.mxu0 %v308
  %1267 = vmatpush1.msra.mxu0 %v307
  %1268 = vmatprep.subr.mxu0 %v306
  %1269 = vmatpush1.msra.mxu0 %v305
  %1270 = vmatprep.subr.mxu0 %v304
  %1271 = vmatpush1.msra.mxu0 %v303
  %1272 = vmatprep.subr.mxu0 %v302
  %1273 = vmatpush1.msra.mxu0 %v301
  %1274 = vmatprep.subr.mxu0 %v300
  %1275 = vmatpush1.msra.mxu0 %v299
  %1276 = vmatprep.subr.mxu0 %v298
  %1277 = vmatpush1.msra.mxu0 %v297
  %1278 = vmatprep.subr.mxu0 %v296
  %1279 = vmatpush1.msra.mxu0 %v295
  %1280 = vmatprep.subr.mxu0 %v294
  %1281 = vmatpush1.msra.mxu0 %v293
  %1282 = vmatprep.subr.mxu0 %v292
  %1283 = vmatpush1.msra.mxu0 %v291
  %1284 = vmatprep.subr.mxu0 %v290
  %1285 = vmatpush1.msra.mxu0 %v289
  %1286 = vmatprep.subr.mxu0 %v352
  %1287 = vmatpush2.msra.mxu0 %v351
  %1288 = vmatprep.subr.mxu0 %v350
  %1289 = vmatpush2.msra.mxu0 %v349
  %1290 = vmatprep.subr.mxu0 %v348
  %1291 = vmatpush2.msra.mxu0 %v347
  %1292 = vmatprep.subr.mxu0 %v346
  %1293 = vmatpush2.msra.mxu0 %v345
  %1294 = vmatprep.subr.mxu0 %v344
  %1295 = vmatpush2.msra.mxu0 %v343
  %1296 = vmatprep.subr.mxu0 %v342
  %1297 = vmatpush2.msra.mxu0 %v341
  %1298 = vmatprep.subr.mxu0 %v340
  %1299 = vmatpush2.msra.mxu0 %v339
  %1300 = vmatprep.subr.mxu0 %v338
  %1301 = vmatpush2.msra.mxu0 %v337
  %1302 = vmatprep.subr.mxu0 %v336
  %1303 = vmatpush2.msra.mxu0 %v335
  %1304 = vmatprep.subr.mxu0 %v334
  %1305 = vmatpush2.msra.mxu0 %v333
  %1306 = vmatprep.subr.mxu0 %v332
  %1307 = vmatpush2.msra.mxu0 %v331
  %1308 = vmatprep.subr.mxu0 %v330
  %1309 = vmatpush2.msra.mxu0 %v329
  %1310 = vmatprep.subr.mxu0 %v328
  %1311 = vmatpush2.msra.mxu0 %v327
  %1312 = vmatprep.subr.mxu0 %v326
  %1313 = vmatpush2.msra.mxu0 %v325
  %1314 = vmatprep.subr.mxu0 %v324
  %1315 = vmatpush2.msra.mxu0 %v323
  %1316 = vmatprep.subr.mxu0 %v322
  %1317 = vmatpush2.msra.mxu0 %v321
  %1318 = vmatprep.mubr.f32.mxu0 %v883
  %1319 = vmatmul.mubr.f32.gmra.mxu0 %v875
  %v1320 = vpop.f32.mrf.mxu0
  %v1321 = vadd.f32 %v1250, %v1320
  %v1322 = vpop.f32.mrf.mxu0
  %v1323 = vadd.f32 %v1252, %v1322
  %1324 = vdwg.mxu0
  %1325 = vmatprep.subr.mxu0 %v384
  %1326 = vmatpush1.msra.mxu0 %v383
  %1327 = vmatprep.subr.mxu0 %v382
  %1328 = vmatpush1.msra.mxu0 %v381
  %1329 = vmatprep.subr.mxu0 %v380
  %1330 = vmatpush1.msra.mxu0 %v379
  %1331 = vmatprep.subr.mxu0 %v378
  %1332 = vmatpush1.msra.mxu0 %v377
  %1333 = vmatprep.subr.mxu0 %v376
  %1334 = vmatpush1.msra.mxu0 %v375
  %1335 = vmatprep.subr.mxu0 %v374
  %1336 = vmatpush1.msra.mxu0 %v373
  %1337 = vmatprep.subr.mxu0 %v372
  %1338 = vmatpush1.msra.mxu0 %v371
  %1339 = vmatprep.subr.mxu0 %v370
  %1340 = vmatpush1.msra.mxu0 %v369
  %1341 = vmatprep.subr.mxu0 %v368
  %1342 = vmatpush1.msra.mxu0 %v367
  %1343 = vmatprep.subr.mxu0 %v366
  %1344 = vmatpush1.msra.mxu0 %v365
  %1345 = vmatprep.subr.mxu0 %v364
  %1346 = vmatpush1.msra.mxu0 %v363
  %1347 = vmatprep.subr.mxu0 %v362
  %1348 = vmatpush1.msra.mxu0 %v361
  %1349 = vmatprep.subr.mxu0 %v360
  %1350 = vmatpush1.msra.mxu0 %v359
  %1351 = vmatprep.subr.mxu0 %v358
  %1352 = vmatpush1.msra.mxu0 %v357
  %1353 = vmatprep.subr.mxu0 %v356
  %1354 = vmatpush1.msra.mxu0 %v355
  %1355 = vmatprep.subr.mxu0 %v354
  %1356 = vmatpush1.msra.mxu0 %v353
  %1357 = vmatprep.subr.mxu0 %v416
  %1358 = vmatpush2.msra.mxu0 %v415
  %1359 = vmatprep.subr.mxu0 %v414
  %1360 = vmatpush2.msra.mxu0 %v413
  %1361 = vmatprep.subr.mxu0 %v412
  %1362 = vmatpush2.msra.mxu0 %v411
  %1363 = vmatprep.subr.mxu0 %v410
  %1364 = vmatpush2.msra.mxu0 %v409
  %1365 = vmatprep.subr.mxu0 %v408
  %1366 = vmatpush2.msra.mxu0 %v407
  %1367 = vmatprep.subr.mxu0 %v406
  %1368 = vmatpush2.msra.mxu0 %v405
  %1369 = vmatprep.subr.mxu0 %v404
  %1370 = vmatpush2.msra.mxu0 %v403
  %1371 = vmatprep.subr.mxu0 %v402
  %1372 = vmatpush2.msra.mxu0 %v401
  %1373 = vmatprep.subr.mxu0 %v400
  %1374 = vmatpush2.msra.mxu0 %v399
  %1375 = vmatprep.subr.mxu0 %v398
  %1376 = vmatpush2.msra.mxu0 %v397
  %1377 = vmatprep.subr.mxu0 %v396
  %1378 = vmatpush2.msra.mxu0 %v395
  %1379 = vmatprep.subr.mxu0 %v394
  %1380 = vmatpush2.msra.mxu0 %v393
  %1381 = vmatprep.subr.mxu0 %v392
  %1382 = vmatpush2.msra.mxu0 %v391
  %1383 = vmatprep.subr.mxu0 %v390
  %1384 = vmatpush2.msra.mxu0 %v389
  %1385 = vmatprep.subr.mxu0 %v388
  %1386 = vmatpush2.msra.mxu0 %v387
  %1387 = vmatprep.subr.mxu0 %v386
  %1388 = vmatpush2.msra.mxu0 %v385
  %1389 = vmatprep.mubr.f32.mxu0 %v884
  %1390 = vmatmul.mubr.f32.gmra.mxu0 %v882
  %v1391 = vpop.f32.mrf.mxu0
  %v1392 = vadd.f32 %v1321, %v1391
  %v1393 = vpop.f32.mrf.mxu0
  %v1394 = vadd.f32 %v1323, %v1393
  %1395 = vdwg.mxu0
  %1396 = vmatprep.subr.mxu0 %v448
  %1397 = vmatpush1.msra.mxu0 %v447
  %1398 = vmatprep.subr.mxu0 %v446
  %1399 = vmatpush1.msra.mxu0 %v445
  %1400 = vmatprep.subr.mxu0 %v444
  %1401 = vmatpush1.msra.mxu0 %v443
  %1402 = vmatprep.subr.mxu0 %v442
  %1403 = vmatpush1.msra.mxu0 %v441
  %1404 = vmatprep.subr.mxu0 %v440
  %1405 = vmatpush1.msra.mxu0 %v439
  %1406 = vmatprep.subr.mxu0 %v438
  %1407 = vmatpush1.msra.mxu0 %v437
  %1408 = vmatprep.subr.mxu0 %v436
  %1409 = vmatpush1.msra.mxu0 %v435
  %1410 = vmatprep.subr.mxu0 %v434
  %1411 = vmatpush1.msra.mxu0 %v433
  %1412 = vmatprep.subr.mxu0 %v432
  %1413 = vmatpush1.msra.mxu0 %v431
  %1414 = vmatprep.subr.mxu0 %v430
  %1415 = vmatpush1.msra.mxu0 %v429
  %1416 = vmatprep.subr.mxu0 %v428
  %1417 = vmatpush1.msra.mxu0 %v427
  %1418 = vmatprep.subr.mxu0 %v426
  %1419 = vmatpush1.msra.mxu0 %v425
  %1420 = vmatprep.subr.mxu0 %v424
  %1421 = vmatpush1.msra.mxu0 %v423
  %1422 = vmatprep.subr.mxu0 %v422
  %1423 = vmatpush1.msra.mxu0 %v421
  %1424 = vmatprep.subr.mxu0 %v420
  %1425 = vmatpush1.msra.mxu0 %v419
  %1426 = vmatprep.subr.mxu0 %v418
  %1427 = vmatpush1.msra.mxu0 %v417
  %1428 = vmatprep.subr.mxu0 %v480
  %1429 = vmatpush2.msra.mxu0 %v479
  %1430 = vmatprep.subr.mxu0 %v478
  %1431 = vmatpush2.msra.mxu0 %v477
  %1432 = vmatprep.subr.mxu0 %v476
  %1433 = vmatpush2.msra.mxu0 %v475
  %1434 = vmatprep.subr.mxu0 %v474
  %1435 = vmatpush2.msra.mxu0 %v473
  %1436 = vmatprep.subr.mxu0 %v472
  %1437 = vmatpush2.msra.mxu0 %v471
  %1438 = vmatprep.subr.mxu0 %v470
  %1439 = vmatpush2.msra.mxu0 %v469
  %1440 = vmatprep.subr.mxu0 %v468
  %1441 = vmatpush2.msra.mxu0 %v467
  %1442 = vmatprep.subr.mxu0 %v466
  %1443 = vmatpush2.msra.mxu0 %v465
  %1444 = vmatprep.subr.mxu0 %v464
  %1445 = vmatpush2.msra.mxu0 %v463
  %1446 = vmatprep.subr.mxu0 %v462
  %1447 = vmatpush2.msra.mxu0 %v461
  %1448 = vmatprep.subr.mxu0 %v460
  %1449 = vmatpush2.msra.mxu0 %v459
  %1450 = vmatprep.subr.mxu0 %v458
  %1451 = vmatpush2.msra.mxu0 %v457
  %1452 = vmatprep.subr.mxu0 %v456
  %1453 = vmatpush2.msra.mxu0 %v455
  %1454 = vmatprep.subr.mxu0 %v454
  %1455 = vmatpush2.msra.mxu0 %v453
  %1456 = vmatprep.subr.mxu0 %v452
  %1457 = vmatpush2.msra.mxu0 %v451
  %1458 = vmatprep.subr.mxu0 %v450
  %1459 = vmatpush2.msra.mxu0 %v449
  %1460 = vmatprep.mubr.f32.mxu0 %v900
  %1461 = vmatmul.mubr.f32.gmra.mxu0 %v892
  %v1462 = vpop.f32.mrf.mxu0
  %v1463 = vadd.f32 %v1392, %v1462
  %v1464 = vpop.f32.mrf.mxu0
  %v1465 = vadd.f32 %v1394, %v1464
  %1466 = vdwg.mxu0
  %1467 = vmatprep.subr.mxu0 %v512
  %1468 = vmatpush1.msra.mxu0 %v511
  %1469 = vmatprep.subr.mxu0 %v510
  %1470 = vmatpush1.msra.mxu0 %v509
  %1471 = vmatprep.subr.mxu0 %v508
  %1472 = vmatpush1.msra.mxu0 %v507
  %1473 = vmatprep.subr.mxu0 %v506
  %1474 = vmatpush1.msra.mxu0 %v505
  %1475 = vmatprep.subr.mxu0 %v504
  %1476 = vmatpush1.msra.mxu0 %v503
  %1477 = vmatprep.subr.mxu0 %v502
  %1478 = vmatpush1.msra.mxu0 %v501
  %1479 = vmatprep.subr.mxu0 %v500
  %1480 = vmatpush1.msra.mxu0 %v499
  %1481 = vmatprep.subr.mxu0 %v498
  %1482 = vmatpush1.msra.mxu0 %v497
  %1483 = vmatprep.subr.mxu0 %v496
  %1484 = vmatpush1.msra.mxu0 %v495
  %1485 = vmatprep.subr.mxu0 %v494
  %1486 = vmatpush1.msra.mxu0 %v493
  %1487 = vmatprep.subr.mxu0 %v492
  %1488 = vmatpush1.msra.mxu0 %v491
  %1489 = vmatprep.subr.mxu0 %v490
  %1490 = vmatpush1.msra.mxu0 %v489
  %1491 = vmatprep.subr.mxu0 %v488
  %1492 = vmatpush1.msra.mxu0 %v487
  %1493 = vmatprep.subr.mxu0 %v486
  %1494 = vmatpush1.msra.mxu0 %v485
  %1495 = vmatprep.subr.mxu0 %v484
  %1496 = vmatpush1.msra.mxu0 %v483
  %1497 = vmatprep.subr.mxu0 %v482
  %1498 = vmatpush1.msra.mxu0 %v481
  %1499 = vmatprep.subr.mxu0 %v544
  %1500 = vmatpush2.msra.mxu0 %v543
  %1501 = vmatprep.subr.mxu0 %v542
  %1502 = vmatpush2.msra.mxu0 %v541
  %1503 = vmatprep.subr.mxu0 %v540
  %1504 = vmatpush2.msra.mxu0 %v539
  %1505 = vmatprep.subr.mxu0 %v538
  %1506 = vmatpush2.msra.mxu0 %v537
  %1507 = vmatprep.subr.mxu0 %v536
  %1508 = vmatpush2.msra.mxu0 %v535
  %1509 = vmatprep.subr.mxu0 %v534
  %1510 = vmatpush2.msra.mxu0 %v533
  %1511 = vmatprep.subr.mxu0 %v532
  %1512 = vmatpush2.msra.mxu0 %v531
  %1513 = vmatprep.subr.mxu0 %v530
  %1514 = vmatpush2.msra.mxu0 %v529
  %1515 = vmatprep.subr.mxu0 %v528
  %1516 = vmatpush2.msra.mxu0 %v527
  %1517 = vmatprep.subr.mxu0 %v526
  %1518 = vmatpush2.msra.mxu0 %v525
  %1519 = vmatprep.subr.mxu0 %v524
  %1520 = vmatpush2.msra.mxu0 %v523
  %1521 = vmatprep.subr.mxu0 %v522
  %1522 = vmatpush2.msra.mxu0 %v521
  %1523 = vmatprep.subr.mxu0 %v520
  %1524 = vmatpush2.msra.mxu0 %v519
  %1525 = vmatprep.subr.mxu0 %v518
  %1526 = vmatpush2.msra.mxu0 %v517
  %1527 = vmatprep.subr.mxu0 %v516
  %1528 = vmatpush2.msra.mxu0 %v515
  %1529 = vmatprep.subr.mxu0 %v514
  %1530 = vmatpush2.msra.mxu0 %v513
  %1531 = vmatprep.mubr.f32.mxu0 %v901
  %1532 = vmatmul.mubr.f32.gmra.mxu0 %v899
  %v1533 = vpop.f32.mrf.mxu0
  %v1534 = vadd.f32 %v1463, %v1533
  %v1535 = vpop.f32.mrf.mxu0
  %v1536 = vadd.f32 %v1465, %v1535
  %1537 = vdwg.mxu0
  %1538 = vmatprep.subr.mxu0 %v576
  %1539 = vmatpush1.msra.mxu0 %v575
  %1540 = vmatprep.subr.mxu0 %v574
  %1541 = vmatpush1.msra.mxu0 %v573
  %1542 = vmatprep.subr.mxu0 %v572
  %1543 = vmatpush1.msra.mxu0 %v571
  %1544 = vmatprep.subr.mxu0 %v570
  %1545 = vmatpush1.msra.mxu0 %v569
  %1546 = vmatprep.subr.mxu0 %v568
  %1547 = vmatpush1.msra.mxu0 %v567
  %1548 = vmatprep.subr.mxu0 %v566
  %1549 = vmatpush1.msra.mxu0 %v565
  %1550 = vmatprep.subr.mxu0 %v564
  %1551 = vmatpush1.msra.mxu0 %v563
  %1552 = vmatprep.subr.mxu0 %v562
  %1553 = vmatpush1.msra.mxu0 %v561
  %1554 = vmatprep.subr.mxu0 %v560
  %1555 = vmatpush1.msra.mxu0 %v559
  %1556 = vmatprep.subr.mxu0 %v558
  %1557 = vmatpush1.msra.mxu0 %v557
  %1558 = vmatprep.subr.mxu0 %v556
  %1559 = vmatpush1.msra.mxu0 %v555
  %1560 = vmatprep.subr.mxu0 %v554
  %1561 = vmatpush1.msra.mxu0 %v553
  %1562 = vmatprep.subr.mxu0 %v552
  %1563 = vmatpush1.msra.mxu0 %v551
  %1564 = vmatprep.subr.mxu0 %v550
  %1565 = vmatpush1.msra.mxu0 %v549
  %1566 = vmatprep.subr.mxu0 %v548
  %1567 = vmatpush1.msra.mxu0 %v547
  %1568 = vmatprep.subr.mxu0 %v546
  %1569 = vmatpush1.msra.mxu0 %v545
  %1570 = vmatprep.subr.mxu0 %v608
  %1571 = vmatpush2.msra.mxu0 %v607
  %1572 = vmatprep.subr.mxu0 %v606
  %1573 = vmatpush2.msra.mxu0 %v605
  %1574 = vmatprep.subr.mxu0 %v604
  %1575 = vmatpush2.msra.mxu0 %v603
  %1576 = vmatprep.subr.mxu0 %v602
  %1577 = vmatpush2.msra.mxu0 %v601
  %1578 = vmatprep.subr.mxu0 %v600
  %1579 = vmatpush2.msra.mxu0 %v599
  %1580 = vmatprep.subr.mxu0 %v598
  %1581 = vmatpush2.msra.mxu0 %v597
  %1582 = vmatprep.subr.mxu0 %v596
  %1583 = vmatpush2.msra.mxu0 %v595
  %1584 = vmatprep.subr.mxu0 %v594
  %1585 = vmatpush2.msra.mxu0 %v593
  %1586 = vmatprep.subr.mxu0 %v592
  %1587 = vmatpush2.msra.mxu0 %v591
  %1588 = vmatprep.subr.mxu0 %v590
  %1589 = vmatpush2.msra.mxu0 %v589
  %1590 = vmatprep.subr.mxu0 %v588
  %1591 = vmatpush2.msra.mxu0 %v587
  %1592 = vmatprep.subr.mxu0 %v586
  %1593 = vmatpush2.msra.mxu0 %v585
  %1594 = vmatprep.subr.mxu0 %v584
  %1595 = vmatpush2.msra.mxu0 %v583
  %1596 = vmatprep.subr.mxu0 %v582
  %1597 = vmatpush2.msra.mxu0 %v581
  %1598 = vmatprep.subr.mxu0 %v580
  %1599 = vmatpush2.msra.mxu0 %v579
  %1600 = vmatprep.subr.mxu0 %v578
  %1601 = vmatpush2.msra.mxu0 %v577
  %1602 = vmatprep.mubr.f32.mxu0 %v917
  %1603 = vmatmul.mubr.f32.gmra.mxu0 %v909
  %v1604 = vpop.f32.mrf.mxu0
  %v1605 = vadd.f32 %v1534, %v1604
  %v1606 = vpop.f32.mrf.mxu0
  %v1607 = vadd.f32 %v1536, %v1606
  %1608 = vdwg.mxu0
  %1609 = vmatprep.subr.mxu0 %v640
  %1610 = vmatpush1.msra.mxu0 %v639
  %1611 = vmatprep.subr.mxu0 %v638
  %1612 = vmatpush1.msra.mxu0 %v637
  %1613 = vmatprep.subr.mxu0 %v636
  %1614 = vmatpush1.msra.mxu0 %v635
  %1615 = vmatprep.subr.mxu0 %v634
  %1616 = vmatpush1.msra.mxu0 %v633
  %1617 = vmatprep.subr.mxu0 %v632
  %1618 = vmatpush1.msra.mxu0 %v631
  %1619 = vmatprep.subr.mxu0 %v630
  %1620 = vmatpush1.msra.mxu0 %v629
  %1621 = vmatprep.subr.mxu0 %v628
  %1622 = vmatpush1.msra.mxu0 %v627
  %1623 = vmatprep.subr.mxu0 %v626
  %1624 = vmatpush1.msra.mxu0 %v625
  %1625 = vmatprep.subr.mxu0 %v624
  %1626 = vmatpush1.msra.mxu0 %v623
  %1627 = vmatprep.subr.mxu0 %v622
  %1628 = vmatpush1.msra.mxu0 %v621
  %1629 = vmatprep.subr.mxu0 %v620
  %1630 = vmatpush1.msra.mxu0 %v619
  %1631 = vmatprep.subr.mxu0 %v618
  %1632 = vmatpush1.msra.mxu0 %v617
  %1633 = vmatprep.subr.mxu0 %v616
  %1634 = vmatpush1.msra.mxu0 %v615
  %1635 = vmatprep.subr.mxu0 %v614
  %1636 = vmatpush1.msra.mxu0 %v613
  %1637 = vmatprep.subr.mxu0 %v612
  %1638 = vmatpush1.msra.mxu0 %v611
  %1639 = vmatprep.subr.mxu0 %v610
  %1640 = vmatpush1.msra.mxu0 %v609
  %1641 = vmatprep.subr.mxu0 %v672
  %1642 = vmatpush2.msra.mxu0 %v671
  %1643 = vmatprep.subr.mxu0 %v670
  %1644 = vmatpush2.msra.mxu0 %v669
  %1645 = vmatprep.subr.mxu0 %v668
  %1646 = vmatpush2.msra.mxu0 %v667
  %1647 = vmatprep.subr.mxu0 %v666
  %1648 = vmatpush2.msra.mxu0 %v665
  %1649 = vmatprep.subr.mxu0 %v664
  %1650 = vmatpush2.msra.mxu0 %v663
  %1651 = vmatprep.subr.mxu0 %v662
  %1652 = vmatpush2.msra.mxu0 %v661
  %1653 = vmatprep.subr.mxu0 %v660
  %1654 = vmatpush2.msra.mxu0 %v659
  %1655 = vmatprep.subr.mxu0 %v658
  %1656 = vmatpush2.msra.mxu0 %v657
  %1657 = vmatprep.subr.mxu0 %v656
  %1658 = vmatpush2.msra.mxu0 %v655
  %1659 = vmatprep.subr.mxu0 %v654
  %1660 = vmatpush2.msra.mxu0 %v653
  %1661 = vmatprep.subr.mxu0 %v652
  %1662 = vmatpush2.msra.mxu0 %v651
  %1663 = vmatprep.subr.mxu0 %v650
  %1664 = vmatpush2.msra.mxu0 %v649
  %1665 = vmatprep.subr.mxu0 %v648
  %1666 = vmatpush2.msra.mxu0 %v647
  %1667 = vmatprep.subr.mxu0 %v646
  %1668 = vmatpush2.msra.mxu0 %v645
  %1669 = vmatprep.subr.mxu0 %v644
  %1670 = vmatpush2.msra.mxu0 %v643
  %1671 = vmatprep.subr.mxu0 %v642
  %1672 = vmatpush2.msra.mxu0 %v641
  %1673 = vmatprep.mubr.f32.mxu0 %v918
  %1674 = vmatmul.mubr.f32.gmra.mxu0 %v916
  %v1675 = vpop.f32.mrf.mxu0
  %v1676 = vadd.f32 %v1605, %v1675
  %v1677 = vpop.f32.mrf.mxu0
  %v1678 = vadd.f32 %v1607, %v1677
  %1679 = vdwg.mxu0
  %1680 = vmatprep.subr.mxu0 %v704
  %1681 = vmatpush1.msra.mxu0 %v703
  %1682 = vmatprep.subr.mxu0 %v702
  %1683 = vmatpush1.msra.mxu0 %v701
  %1684 = vmatprep.subr.mxu0 %v700
  %1685 = vmatpush1.msra.mxu0 %v699
  %1686 = vmatprep.subr.mxu0 %v698
  %1687 = vmatpush1.msra.mxu0 %v697
  %1688 = vmatprep.subr.mxu0 %v696
  %1689 = vmatpush1.msra.mxu0 %v695
  %1690 = vmatprep.subr.mxu0 %v694
  %1691 = vmatpush1.msra.mxu0 %v693
  %1692 = vmatprep.subr.mxu0 %v692
  %1693 = vmatpush1.msra.mxu0 %v691
  %1694 = vmatprep.subr.mxu0 %v690
  %1695 = vmatpush1.msra.mxu0 %v689
  %1696 = vmatprep.subr.mxu0 %v688
  %1697 = vmatpush1.msra.mxu0 %v687
  %1698 = vmatprep.subr.mxu0 %v686
  %1699 = vmatpush1.msra.mxu0 %v685
  %1700 = vmatprep.subr.mxu0 %v684
  %1701 = vmatpush1.msra.mxu0 %v683
  %1702 = vmatprep.subr.mxu0 %v682
  %1703 = vmatpush1.msra.mxu0 %v681
  %1704 = vmatprep.subr.mxu0 %v680
  %1705 = vmatpush1.msra.mxu0 %v679
  %1706 = vmatprep.subr.mxu0 %v678
  %1707 = vmatpush1.msra.mxu0 %v677
  %1708 = vmatprep.subr.mxu0 %v676
  %1709 = vmatpush1.msra.mxu0 %v675
  %1710 = vmatprep.subr.mxu0 %v674
  %1711 = vmatpush1.msra.mxu0 %v673
  %1712 = vmatprep.subr.mxu0 %v736
  %1713 = vmatpush2.msra.mxu0 %v735
  %1714 = vmatprep.subr.mxu0 %v734
  %1715 = vmatpush2.msra.mxu0 %v733
  %1716 = vmatprep.subr.mxu0 %v732
  %1717 = vmatpush2.msra.mxu0 %v731
  %1718 = vmatprep.subr.mxu0 %v730
  %1719 = vmatpush2.msra.mxu0 %v729
  %1720 = vmatprep.subr.mxu0 %v728
  %1721 = vmatpush2.msra.mxu0 %v727
  %1722 = vmatprep.subr.mxu0 %v726
  %1723 = vmatpush2.msra.mxu0 %v725
  %1724 = vmatprep.subr.mxu0 %v724
  %1725 = vmatpush2.msra.mxu0 %v723
  %1726 = vmatprep.subr.mxu0 %v722
  %1727 = vmatpush2.msra.mxu0 %v721
  %1728 = vmatprep.subr.mxu0 %v720
  %1729 = vmatpush2.msra.mxu0 %v719
  %1730 = vmatprep.subr.mxu0 %v718
  %1731 = vmatpush2.msra.mxu0 %v717
  %1732 = vmatprep.subr.mxu0 %v716
  %1733 = vmatpush2.msra.mxu0 %v715
  %1734 = vmatprep.subr.mxu0 %v714
  %1735 = vmatpush2.msra.mxu0 %v713
  %1736 = vmatprep.subr.mxu0 %v712
  %1737 = vmatpush2.msra.mxu0 %v711
  %1738 = vmatprep.subr.mxu0 %v710
  %1739 = vmatpush2.msra.mxu0 %v709
  %1740 = vmatprep.subr.mxu0 %v708
  %1741 = vmatpush2.msra.mxu0 %v707
  %1742 = vmatprep.subr.mxu0 %v706
  %1743 = vmatpush2.msra.mxu0 %v705
  %1744 = vmatprep.mubr.f32.mxu0 %v934
  %1745 = vmatmul.mubr.f32.gmra.mxu0 %v926
  %v1746 = vpop.f32.mrf.mxu0
  %v1747 = vadd.f32 %v1676, %v1746
  %v1748 = vpop.f32.mrf.mxu0
  %v1749 = vadd.f32 %v1678, %v1748
  %1750 = vdwg.mxu0
  %1751 = vmatprep.subr.mxu0 %v768
  %1752 = vmatpush1.msra.mxu0 %v767
  %1753 = vmatprep.subr.mxu0 %v766
  %1754 = vmatpush1.msra.mxu0 %v765
  %1755 = vmatprep.subr.mxu0 %v764
  %1756 = vmatpush1.msra.mxu0 %v763
  %1757 = vmatprep.subr.mxu0 %v762
  %1758 = vmatpush1.msra.mxu0 %v761
  %1759 = vmatprep.subr.mxu0 %v760
  %1760 = vmatpush1.msra.mxu0 %v759
  %1761 = vmatprep.subr.mxu0 %v758
  %1762 = vmatpush1.msra.mxu0 %v757
  %1763 = vmatprep.subr.mxu0 %v756
  %1764 = vmatpush1.msra.mxu0 %v755
  %1765 = vmatprep.subr.mxu0 %v754
  %1766 = vmatpush1.msra.mxu0 %v753
  %1767 = vmatprep.subr.mxu0 %v752
  %1768 = vmatpush1.msra.mxu0 %v751
  %1769 = vmatprep.subr.mxu0 %v750
  %1770 = vmatpush1.msra.mxu0 %v749
  %1771 = vmatprep.subr.mxu0 %v748
  %1772 = vmatpush1.msra.mxu0 %v747
  %1773 = vmatprep.subr.mxu0 %v746
  %1774 = vmatpush1.msra.mxu0 %v745
  %1775 = vmatprep.subr.mxu0 %v744
  %1776 = vmatpush1.msra.mxu0 %v743
  %1777 = vmatprep.subr.mxu0 %v742
  %1778 = vmatpush1.msra.mxu0 %v741
  %1779 = vmatprep.subr.mxu0 %v740
  %1780 = vmatpush1.msra.mxu0 %v739
  %1781 = vmatprep.subr.mxu0 %v738
  %1782 = vmatpush1.msra.mxu0 %v737
  %1783 = vmatprep.subr.mxu0 %v800
  %1784 = vmatpush2.msra.mxu0 %v799
  %1785 = vmatprep.subr.mxu0 %v798
  %1786 = vmatpush2.msra.mxu0 %v797
  %1787 = vmatprep.subr.mxu0 %v796
  %1788 = vmatpush2.msra.mxu0 %v795
  %1789 = vmatprep.subr.mxu0 %v794
  %1790 = vmatpush2.msra.mxu0 %v793
  %1791 = vmatprep.subr.mxu0 %v792
  %1792 = vmatpush2.msra.mxu0 %v791
  %1793 = vmatprep.subr.mxu0 %v790
  %1794 = vmatpush2.msra.mxu0 %v789
  %1795 = vmatprep.subr.mxu0 %v788
  %1796 = vmatpush2.msra.mxu0 %v787
  %1797 = vmatprep.subr.mxu0 %v786
  %1798 = vmatpush2.msra.mxu0 %v785
  %1799 = vmatprep.subr.mxu0 %v784
  %1800 = vmatpush2.msra.mxu0 %v783
  %1801 = vmatprep.subr.mxu0 %v782
  %1802 = vmatpush2.msra.mxu0 %v781
  %1803 = vmatprep.subr.mxu0 %v780
  %1804 = vmatpush2.msra.mxu0 %v779
  %1805 = vmatprep.subr.mxu0 %v778
  %1806 = vmatpush2.msra.mxu0 %v777
  %1807 = vmatprep.subr.mxu0 %v776
  %1808 = vmatpush2.msra.mxu0 %v775
  %1809 = vmatprep.subr.mxu0 %v774
  %1810 = vmatpush2.msra.mxu0 %v773
  %1811 = vmatprep.subr.mxu0 %v772
  %1812 = vmatpush2.msra.mxu0 %v771
  %1813 = vmatprep.subr.mxu0 %v770
  %1814 = vmatpush2.msra.mxu0 %v769
  %1815 = vmatprep.mubr.f32.mxu0 %v935
  %1816 = vmatmul.mubr.f32.gmra.mxu0 %v933
  %v1817 = vpop.f32.mrf.mxu0
  %v1818 = vadd.f32 %v1747, %v1817
  %v1819 = vpop.f32.mrf.mxu0
  %v1820 = vadd.f32 %v1749, %v1819
  %1821 = vdwg.mxu0
  %1822 = vmatprep.subr.mxu0 0.0
  %1823 = vmatpush1.msra.mxu0 0.0
  %1824 = vmatprep.subr.mxu0 0.0
  %1825 = vmatpush1.msra.mxu0 0.0
  %1826 = vmatprep.subr.mxu0 0.0
  %1827 = vmatpush1.msra.mxu0 0.0
  %1828 = vmatprep.subr.mxu0 0.0
  %1829 = vmatpush1.msra.mxu0 0.0
  %1830 = vmatprep.subr.mxu0 0.0
  %1831 = vmatpush1.msra.mxu0 0.0
  %1832 = vmatprep.subr.mxu0 0.0
  %1833 = vmatpush1.msra.mxu0 0.0
  %1834 = vmatprep.subr.mxu0 0.0
  %1835 = vmatpush1.msra.mxu0 0.0
  %1836 = vmatprep.subr.mxu0 0.0
  %1837 = vmatpush1.msra.mxu0 0.0
  %1838 = vmatprep.subr.mxu0 0.0
  %1839 = vmatpush1.msra.mxu0 0.0
  %1840 = vmatprep.subr.mxu0 %v814
  %1841 = vmatpush1.msra.mxu0 %v813
  %1842 = vmatprep.subr.mxu0 %v812
  %1843 = vmatpush1.msra.mxu0 %v811
  %1844 = vmatprep.subr.mxu0 %v810
  %1845 = vmatpush1.msra.mxu0 %v809
  %1846 = vmatprep.subr.mxu0 %v808
  %1847 = vmatpush1.msra.mxu0 %v807
  %1848 = vmatprep.subr.mxu0 %v806
  %1849 = vmatpush1.msra.mxu0 %v805
  %1850 = vmatprep.subr.mxu0 %v804
  %1851 = vmatpush1.msra.mxu0 %v803
  %1852 = vmatprep.subr.mxu0 %v802
  %1853 = vmatpush1.msra.mxu0 %v801
  %1854 = vmatprep.subr.mxu0 0.0
  %1855 = vmatpush2.msra.mxu0 0.0
  %1856 = vmatprep.subr.mxu0 0.0
  %1857 = vmatpush2.msra.mxu0 0.0
  %1858 = vmatprep.subr.mxu0 0.0
  %1859 = vmatpush2.msra.mxu0 0.0
  %1860 = vmatprep.subr.mxu0 0.0
  %1861 = vmatpush2.msra.mxu0 0.0
  %1862 = vmatprep.subr.mxu0 0.0
  %1863 = vmatpush2.msra.mxu0 0.0
  %1864 = vmatprep.subr.mxu0 0.0
  %1865 = vmatpush2.msra.mxu0 0.0
  %1866 = vmatprep.subr.mxu0 0.0
  %1867 = vmatpush2.msra.mxu0 0.0
  %1868 = vmatprep.subr.mxu0 0.0
  %1869 = vmatpush2.msra.mxu0 0.0
  %1870 = vmatprep.subr.mxu0 0.0
  %1871 = vmatpush2.msra.mxu0 0.0
  %1872 = vmatprep.subr.mxu0 0.0
  %1873 = vmatpush2.msra.mxu0 0.0
  %1874 = vmatprep.subr.mxu0 0.0
  %1875 = vmatpush2.msra.mxu0 0.0
  %1876 = vmatprep.subr.mxu0 0.0
  %1877 = vmatpush2.msra.mxu0 0.0
  %1878 = vmatprep.subr.mxu0 0.0
  %1879 = vmatpush2.msra.mxu0 0.0
  %1880 = vmatprep.subr.mxu0 0.0
  %1881 = vmatpush2.msra.mxu0 0.0
  %1882 = vmatprep.subr.mxu0 0.0
  %1883 = vmatpush2.msra.mxu0 0.0
  %1884 = vmatprep.subr.mxu0 0.0
  %1885 = vmatpush2.msra.mxu0 0.0
  %1886 = vmatprep.mubr.f32.mxu0 0.0
  %1887 = vmatmul.mubr.f32.gmra.mxu0 %v968
  %v1888 = vpop.f32.mrf.mxu0
  %v1889 = vadd.f32 %v1818, %v1888
  %v1890 = vpop.f32.mrf.mxu0
  %v1891 = vadd.f32 %v1820, %v1890
  %1892 = vdwg.mxu0
  %v1893 = vmax.f32 %v1889, 0.0
  %v1894 = vmax.f32 %v1891, 0.0
  %v1895 = vld [vmem:[%s3] sm:$0xff]
  %v1896 = vld [vmem:[%s3 + $0x8] sm:$0xff]
  %v1897 = vld [vmem:[%s3 + $0x10] sm:$0xff]
  %v1898 = vld [vmem:[%s3 + $0x18] sm:$0xff]
  %v1899 = vld [vmem:[%s3 + $0x20] sm:$0xff]
  %v1900 = vld [vmem:[%s3 + $0x28] sm:$0xff]
  %v1901 = vld [vmem:[%s3 + $0x30] sm:$0xff]
  %v1902 = vld [vmem:[%s3 + $0x38] sm:$0xff]
  %v1903 = vld [vmem:[%s3 + $0x40] sm:$0xff]
  %v1904 = vld [vmem:[%s3 + $0x48] sm:$0xff]
  %v1905 = vld [vmem:[%s3 + $0x50] sm:$0xff]
  %v1906 = vld [vmem:[%s3 + $0x58] sm:$0xff]
  %v1907 = vld [vmem:[%s3 + $0x60] sm:$0xff]
  %v1908 = vld [vmem:[%s3 + $0x68] sm:$0xff]
  %v1909 = vld [vmem:[%s3 + $0x70] sm:$0xff]
  %v1910 = vld [vmem:[%s3 + $0x78] sm:$0xff]
  %v1911 = vld [vmem:[%s3 + $0x80] sm:$0xff]
  %v1912 = vld [vmem:[%s3 + $0x88] sm:$0xff]
  %v1913 = vld [vmem:[%s3 + $0x90] sm:$0xff]
  %v1914 = vld [vmem:[%s3 + $0x98] sm:$0xff]
  %v1915 = vld [vmem:[%s3 + $0xa0] sm:$0xff]
  %v1916 = vld [vmem:[%s3 + $0xa8] sm:$0xff]
  %v1917 = vld [vmem:[%s3 + $0xb0] sm:$0xff]
  %v1918 = vld [vmem:[%s3 + $0xb8] sm:$0xff]
  %v1919 = vld [vmem:[%s3 + $0xc0] sm:$0xff]
  %v1920 = vld [vmem:[%s3 + $0xc8] sm:$0xff]
  %v1921 = vld [vmem:[%s3 + $0xd0] sm:$0xff]
  %v1922 = vld [vmem:[%s3 + $0xd8] sm:$0xff]
  %v1923 = vld [vmem:[%s3 + $0xe0] sm:$0xff]
  %v1924 = vld [vmem:[%s3 + $0xe8] sm:$0xff]
  %v1925 = vld [vmem:[%s3 + $0xf0] sm:$0xff]
  %v1926 = vld [vmem:[%s3 + $0xf8] sm:$0xff]
  %v1927 = vld [vmem:[%s3 + $0x100] sm:$0xff]
  %v1928 = vld [vmem:[%s3 + $0x108] sm:$0xff]
  %v1929 = vld [vmem:[%s3 + $0x110] sm:$0xff]
  %v1930 = vld [vmem:[%s3 + $0x118] sm:$0xff]
  %v1931 = vld [vmem:[%s3 + $0x120] sm:$0xff]
  %v1932 = vld [vmem:[%s3 + $0x128] sm:$0xff]
  %v1933 = vld [vmem:[%s3 + $0x130] sm:$0xff]
  %v1934 = vld [vmem:[%s3 + $0x138] sm:$0xff]
  %v1935 = vld [vmem:[%s3 + $0x140] sm:$0xff]
  %v1936 = vld [vmem:[%s3 + $0x148] sm:$0xff]
  %v1937 = vld [vmem:[%s3 + $0x150] sm:$0xff]
  %v1938 = vld [vmem:[%s3 + $0x158] sm:$0xff]
  %v1939 = vld [vmem:[%s3 + $0x160] sm:$0xff]
  %v1940 = vld [vmem:[%s3 + $0x168] sm:$0xff]
  %v1941 = vld [vmem:[%s3 + $0x170] sm:$0xff]
  %v1942 = vld [vmem:[%s3 + $0x178] sm:$0xff]
  %v1943 = vld [vmem:[%s3 + $0x180] sm:$0xff]
  %v1944 = vld [vmem:[%s3 + $0x188] sm:$0xff]
  %v1945 = vld [vmem:[%s3 + $0x190] sm:$0xff]
  %v1946 = vld [vmem:[%s3 + $0x198] sm:$0xff]
  %v1947 = vld [vmem:[%s3 + $0x1a0] sm:$0xff]
  %v1948 = vld [vmem:[%s3 + $0x1a8] sm:$0xff]
  %v1949 = vld [vmem:[%s3 + $0x1b0] sm:$0xff]
  %v1950 = vld [vmem:[%s3 + $0x1b8] sm:$0xff]
  %v1951 = vld [vmem:[%s3 + $0x1c0] sm:$0xff]
  %v1952 = vld [vmem:[%s3 + $0x1c8] sm:$0xff]
  %v1953 = vld [vmem:[%s3 + $0x1d0] sm:$0xff]
  %v1954 = vld [vmem:[%s3 + $0x1d8] sm:$0xff]
  %v1955 = vld [vmem:[%s3 + $0x1e0] sm:$0xff]
  %v1956 = vld [vmem:[%s3 + $0x1e8] sm:$0xff]
  %v1957 = vld [vmem:[%s3 + $0x1f0] sm:$0xff]
  %v1958 = vld [vmem:[%s3 + $0x1f8] sm:$0xff]
  %v1959 = vld [vmem:[%s4] sm:$0x3]
  %v1961 = vlaneseq
  %v1962 = vshrl.u32 %v1961, 7
  %v1963 = vsub.s32 0, %v1962
  %v1964 = vrot.slane %v1959, %v1963
  %v1965 = vlaneseq
  %v1966 = vshrl.u32 %v1965, 7
  %v1967 = vsub.s32 1, %v1966
  %v1968 = vrot.slane %v1959, %v1967
  %1971 = vmatprep.subr.mxu0 %v1926
  %1972 = vmatpush1.msra.mxu0 %v1925
  %1973 = vmatprep.subr.mxu0 %v1924
  %1974 = vmatpush1.msra.mxu0 %v1923
  %1975 = vmatprep.subr.mxu0 %v1922
  %1976 = vmatpush1.msra.mxu0 %v1921
  %1977 = vmatprep.subr.mxu0 %v1920
  %1978 = vmatpush1.msra.mxu0 %v1919
  %1979 = vmatprep.subr.mxu0 %v1918
  %1980 = vmatpush1.msra.mxu0 %v1917
  %1981 = vmatprep.subr.mxu0 %v1916
  %1982 = vmatpush1.msra.mxu0 %v1915
  %1983 = vmatprep.subr.mxu0 %v1914
  %1984 = vmatpush1.msra.mxu0 %v1913
  %1985 = vmatprep.subr.mxu0 %v1912
  %1986 = vmatpush1.msra.mxu0 %v1911
  %1987 = vmatprep.subr.mxu0 %v1910
  %1988 = vmatpush1.msra.mxu0 %v1909
  %1989 = vmatprep.subr.mxu0 %v1908
  %1990 = vmatpush1.msra.mxu0 %v1907
  %1991 = vmatprep.subr.mxu0 %v1906
  %1992 = vmatpush1.msra.mxu0 %v1905
  %1993 = vmatprep.subr.mxu0 %v1904
  %1994 = vmatpush1.msra.mxu0 %v1903
  %1995 = vmatprep.subr.mxu0 %v1902
  %1996 = vmatpush1.msra.mxu0 %v1901
  %1997 = vmatprep.subr.mxu0 %v1900
  %1998 = vmatpush1.msra.mxu0 %v1899
  %1999 = vmatprep.subr.mxu0 %v1898
  %2000 = vmatpush1.msra.mxu0 %v1897
  %2001 = vmatprep.subr.mxu0 %v1896
  %2002 = vmatpush1.msra.mxu0 %v1895
  %2003 = vmatprep.subr.mxu0 %v1958
  %2004 = vmatpush2.msra.mxu0 %v1957
  %2005 = vmatprep.subr.mxu0 %v1956
  %2006 = vmatpush2.msra.mxu0 %v1955
  %2007 = vmatprep.subr.mxu0 %v1954
  %2008 = vmatpush2.msra.mxu0 %v1953
  %2009 = vmatprep.subr.mxu0 %v1952
  %2010 = vmatpush2.msra.mxu0 %v1951
  %2011 = vmatprep.subr.mxu0 %v1950
  %2012 = vmatpush2.msra.mxu0 %v1949
  %2013 = vmatprep.subr.mxu0 %v1948
  %2014 = vmatpush2.msra.mxu0 %v1947
  %2015 = vmatprep.subr.mxu0 %v1946
  %2016 = vmatpush2.msra.mxu0 %v1945
  %2017 = vmatprep.subr.mxu0 %v1944
  %2018 = vmatpush2.msra.mxu0 %v1943
  %2019 = vmatprep.subr.mxu0 %v1942
  %2020 = vmatpush2.msra.mxu0 %v1941
  %2021 = vmatprep.subr.mxu0 %v1940
  %2022 = vmatpush2.msra.mxu0 %v1939
  %2023 = vmatprep.subr.mxu0 %v1938
  %2024 = vmatpush2.msra.mxu0 %v1937
  %2025 = vmatprep.subr.mxu0 %v1936
  %2026 = vmatpush2.msra.mxu0 %v1935
  %2027 = vmatprep.subr.mxu0 %v1934
  %2028 = vmatpush2.msra.mxu0 %v1933
  %2029 = vmatprep.subr.mxu0 %v1932
  %2030 = vmatpush2.msra.mxu0 %v1931
  %2031 = vmatprep.subr.mxu0 %v1930
  %2032 = vmatpush2.msra.mxu0 %v1929
  %2033 = vmatprep.subr.mxu0 %v1928
  %2034 = vmatpush2.msra.mxu0 %v1927
  %2035 = vmatprep.mubr.f32.mxu0 %v1894
  %2036 = vmatmul.mubr.f32.gmra.mxu0 %v1893
  %v2037 = vpop.f32.mrf.mxu0
  %v2038 = vadd.f32 %v1964, %v2037
  %v2039 = vpop.f32.mrf.mxu0
  %v2040 = vadd.f32 %v1968, %v2039
  %2041 = vdwg.mxu0
  %v2042 = vmax.f32 %v2038, 0.0
  %v2043 = vmax.f32 %v2040, 0.0
  %v2044 = vld [vmem:[%s5] sm:$0xff]
  %v2045 = vld [vmem:[%s5 + $0x8] sm:$0xff]
  %v2046 = vld [vmem:[%s5 + $0x10] sm:$0xff]
  %v2047 = vld [vmem:[%s5 + $0x18] sm:$0xff]
  %v2048 = vld [vmem:[%s5 + $0x20] sm:$0xff]
  %v2049 = vld [vmem:[%s5 + $0x28] sm:$0xff]
  %v2050 = vld [vmem:[%s5 + $0x30] sm:$0xff]
  %v2051 = vld [vmem:[%s5 + $0x38] sm:$0xff]
  %v2052 = vld [vmem:[%s5 + $0x40] sm:$0xff]
  %v2053 = vld [vmem:[%s5 + $0x48] sm:$0xff]
  %v2054 = vld [vmem:[%s5 + $0x50] sm:$0xff]
  %v2055 = vld [vmem:[%s5 + $0x58] sm:$0xff]
  %v2056 = vld [vmem:[%s5 + $0x60] sm:$0xff]
  %v2057 = vld [vmem:[%s5 + $0x68] sm:$0xff]
  %v2058 = vld [vmem:[%s5 + $0x70] sm:$0xff]
  %v2059 = vld [vmem:[%s5 + $0x78] sm:$0xff]
  %v2060 = vld [vmem:[%s5 + $0x80] sm:$0xff]
  %v2061 = vld [vmem:[%s5 + $0x88] sm:$0xff]
  %v2062 = vld [vmem:[%s5 + $0x90] sm:$0xff]
  %v2063 = vld [vmem:[%s5 + $0x98] sm:$0xff]
  %v2064 = vld [vmem:[%s5 + $0xa0] sm:$0xff]
  %v2065 = vld [vmem:[%s5 + $0xa8] sm:$0xff]
  %v2066 = vld [vmem:[%s5 + $0xb0] sm:$0xff]
  %v2067 = vld [vmem:[%s5 + $0xb8] sm:$0xff]
  %v2068 = vld [vmem:[%s5 + $0xc0] sm:$0xff]
  %v2069 = vld [vmem:[%s5 + $0xc8] sm:$0xff]
  %v2070 = vld [vmem:[%s5 + $0xd0] sm:$0xff]
  %v2071 = vld [vmem:[%s5 + $0xd8] sm:$0xff]
  %v2072 = vld [vmem:[%s5 + $0xe0] sm:$0xff]
  %v2073 = vld [vmem:[%s5 + $0xe8] sm:$0xff]
  %v2074 = vld [vmem:[%s5 + $0xf0] sm:$0xff]
  %v2075 = vld [vmem:[%s5 + $0xf8] sm:$0xff]
  %v2076 = vld [vmem:[%s6] sm:$0x1]
  %v2078 = vlaneseq
  %v2079 = vshrl.u32 %v2078, 7
  %v2080 = vsub.s32 0, %v2079
  %v2081 = vrot.slane %v2076, %v2080
  %2083 = vmatprep.subr.mxu0 0.0
  %2084 = vmatpush1.msra.mxu0 %v2059
  %2085 = vmatprep.subr.mxu0 0.0
  %2086 = vmatpush1.msra.mxu0 %v2058
  %2087 = vmatprep.subr.mxu0 0.0
  %2088 = vmatpush1.msra.mxu0 %v2057
  %2089 = vmatprep.subr.mxu0 0.0
  %2090 = vmatpush1.msra.mxu0 %v2056
  %2091 = vmatprep.subr.mxu0 0.0
  %2092 = vmatpush1.msra.mxu0 %v2055
  %2093 = vmatprep.subr.mxu0 0.0
  %2094 = vmatpush1.msra.mxu0 %v2054
  %2095 = vmatprep.subr.mxu0 0.0
  %2096 = vmatpush1.msra.mxu0 %v2053
  %2097 = vmatprep.subr.mxu0 0.0
  %2098 = vmatpush1.msra.mxu0 %v2052
  %2099 = vmatprep.subr.mxu0 0.0
  %2100 = vmatpush1.msra.mxu0 %v2051
  %2101 = vmatprep.subr.mxu0 0.0
  %2102 = vmatpush1.msra.mxu0 %v2050
  %2103 = vmatprep.subr.mxu0 0.0
  %2104 = vmatpush1.msra.mxu0 %v2049
  %2105 = vmatprep.subr.mxu0 0.0
  %2106 = vmatpush1.msra.mxu0 %v2048
  %2107 = vmatprep.subr.mxu0 0.0
  %2108 = vmatpush1.msra.mxu0 %v2047
  %2109 = vmatprep.subr.mxu0 0.0
  %2110 = vmatpush1.msra.mxu0 %v2046
  %2111 = vmatprep.subr.mxu0 0.0
  %2112 = vmatpush1.msra.mxu0 %v2045
  %2113 = vmatprep.subr.mxu0 0.0
  %2114 = vmatpush1.msra.mxu0 %v2044
  %2115 = vmatprep.subr.mxu0 0.0
  %2116 = vmatpush2.msra.mxu0 %v2075
  %2117 = vmatprep.subr.mxu0 0.0
  %2118 = vmatpush2.msra.mxu0 %v2074
  %2119 = vmatprep.subr.mxu0 0.0
  %2120 = vmatpush2.msra.mxu0 %v2073
  %2121 = vmatprep.subr.mxu0 0.0
  %2122 = vmatpush2.msra.mxu0 %v2072
  %2123 = vmatprep.subr.mxu0 0.0
  %2124 = vmatpush2.msra.mxu0 %v2071
  %2125 = vmatprep.subr.mxu0 0.0
  %2126 = vmatpush2.msra.mxu0 %v2070
  %2127 = vmatprep.subr.mxu0 0.0
  %2128 = vmatpush2.msra.mxu0 %v2069
  %2129 = vmatprep.subr.mxu0 0.0
  %2130 = vmatpush2.msra.mxu0 %v2068
  %2131 = vmatprep.subr.mxu0 0.0
  %2132 = vmatpush2.msra.mxu0 %v2067
  %2133 = vmatprep.subr.mxu0 0.0
  %2134 = vmatpush2.msra.mxu0 %v2066
  %2135 = vmatprep.subr.mxu0 0.0
  %2136 = vmatpush2.msra.mxu0 %v2065
  %2137 = vmatprep.subr.mxu0 0.0
  %2138 = vmatpush2.msra.mxu0 %v2064
  %2139 = vmatprep.subr.mxu0 0.0
  %2140 = vmatpush2.msra.mxu0 %v2063
  %2141 = vmatprep.subr.mxu0 0.0
  %2142 = vmatpush2.msra.mxu0 %v2062
  %2143 = vmatprep.subr.mxu0 0.0
  %2144 = vmatpush2.msra.mxu0 %v2061
  %2145 = vmatprep.subr.mxu0 0.0
  %2146 = vmatpush2.msra.mxu0 %v2060
  %2147 = vmatprep.mubr.f32.mxu0 %v2043
  %2148 = vmatmul.mubr.f32.gmra.mxu0 %v2042
  %v2149 = vpop.f32.mrf.mxu0
  %v2150 = vadd.f32 %v2081, %v2149
  %v2151 = vpop.f32.mrf.mxu0
  %2152 = vdwg.mxu0
  %vm2153 = vcmask 41984
  %v2154 = vsel %vm2153, %v2150, -inf
  %2155 = vmax.xlane.f32.xlu0 %v2154
  %v2156 = vpop.xlane.xlu0 %2155
  %v2157 = vsub.f32 %v2150, %v2156
  %v2158 = vmul.f32 %v2157, 1.442695
  %v2159 = vpow.pop %v2158
  %v2160 = vsel %vm2153, %v2159, 0.0
  %2161 = vadd.xlane.f32.xlu0 %v2160
  %v2162 = vpop.xlane.xlu0 %2161
  %v2163 = vrcp.pop %v2162
  %v2164 = vmul.f32 %v2159, %v2163
  %2165 = vst.msk [vmem:[%s7] sm:$0x3] %vm2153, %v2164
  %vm2166 = vcmask 50224
  %2167 = vst.msk [vmem:[%s7] sm:$0x3] %vm2166, %v2150
  // Predicated region
  $region30: #{two_heads_forward.7} parent=0 // pred_check
    _
  $region31: #{two_heads_forward.7} parent=0 // pred_check_branch
    %2169 = sbr.rel (0) target = $region33
  $region32: #{two_heads_forward.7} parent=0 // pred_region
    _
  $region33: #{two_heads_forward.7} parent=0 // pred_fallthru
    _
  // Predicated region
  $region34: #{two_heads_forward.7} parent=0 // pred_check
    _
  $region35: #{two_heads_forward.7} parent=0 // pred_check_branch
    %2171 = sbr.rel (0) target = $region37
  $region36: #{two_heads_forward.7} parent=0 // pred_region
    _
  $region37: #{two_heads_forward.7} parent=0 // pred_fallthru
    _

</llo_original>
